<compile_context>
chip_gen: v5e
topology: v5e:2x2
jax: 0.10.0
libtpu: 0.0.40
codegen_flags: <defaults>
</compile_context>

<pallas_src>
import jax
import jax.numpy as jnp
from jax import lax
from jax.experimental import pallas as pl
from jax.experimental.pallas import tpu as pltpu

N_ACTIONS = 4  # stands in for env.action_space.n


# ---------------------------------------------------------------------------
# Kernel 1: conv1 (im2col matmul) + bias + ReLU + MaxPool3d(2,2), fused.
# grid = (B, 6).  Each step consumes the bf16 patches for 8 consecutive conv
# output rows (both depth planes) and emits 4 fully pooled rows of (24, 6).
# ---------------------------------------------------------------------------
def _conv1_pool_kernel(p_ref, w_ref, b_ref, sel_ref, o_ref):
    w = w_ref[...]                       # (512, 6)  bf16
    bias = b_ref[...]                    # (1, 6)    f32
    sel = sel_ref[...]                   # (24, 48)  f32, sel[j, 2j] = 1
    for g in range(4):                   # pooled output rows handled this step
        m = None
        for od in range(2):              # conv depth plane (pooled away)
            for j in range(2):           # oh inside the 2-row pooling window
                patch = p_ref[0, od, 2 * g + j, :, :]            # (49, 512)
                y = jnp.dot(patch, w, preferred_element_type=jnp.float32)
                y = jnp.maximum(y + bias, 0.0)                   # (49, 6)
                m = y if m is None else jnp.maximum(m, y)
        mm = jnp.maximum(m[0:48, :], m[1:49, :])                 # (48, 6)
        # select even ow positions -> (2,2,2) max-pool window complete
        o_ref[0, g, :, :] = jnp.dot(sel, mm,
                                    preferred_element_type=jnp.float32)


def conv1_pool(p1, w1m, b1row, sel24):
    B = p1.shape[0]
    return pl.pallas_call(
        _conv1_pool_kernel,
        out_shape=jax.ShapeDtypeStruct((B, 24, 24, 6), jnp.float32),
        grid=(B, 6),
        in_specs=[
            pl.BlockSpec((1, 2, 8, 49, 512), lambda b, t: (b, 0, t, 0, 0)),
            pl.BlockSpec((512, 6), lambda b, t: (0, 0)),
            pl.BlockSpec((1, 6), lambda b, t: (0, 0)),
            pl.BlockSpec((24, 48), lambda b, t: (0, 0)),
        ],
        out_specs=pl.BlockSpec((1, 4, 24, 6), lambda b, t: (b, t, 0, 0)),
        compiler_params=pltpu.CompilerParams(
            dimension_semantics=("parallel", "parallel")),
    )(p1, w1m, b1row, sel24)


# ---------------------------------------------------------------------------
# Kernel 2: conv2 + ReLU + MaxPool3d(2,2)-on-4D + fc1 + ReLU + fc2, fused.
# Single grid step; everything lives in VMEM; batch is unrolled (B is tiny).
# Pool-2 pools channel pairs and 2x2 spatial windows; its "gather" into the
# 128-vector that feeds fc1 is folded into G (fc1 weights scattered to the
# pooled source positions 34*hh + 2*ww, zeros elsewhere).
# ---------------------------------------------------------------------------
def _tail_kernel(p2_ref, w2_ref, b2_ref, g_ref, bfc1_ref, wfc2_ref, bfc2_ref,
                 o_ref):
    w2 = w2_ref[...]                                      # (384, 4)
    out_rows = []
    for b in range(p2_ref.shape[0]):                      # static unroll over B
        y2 = jnp.dot(p2_ref[b, :, :], w2,
                     preferred_element_type=jnp.float32)  # (289, 4)
        y2 = jnp.maximum(y2 + b2_ref[...], 0.0)
        h = bfc1_ref[...]                                 # (1, 64)
        for dc in range(2):
            # max over the channel pair (2*dc, 2*dc+1)
            cm = jnp.maximum(y2[:, 2 * dc:2 * dc + 1],
                             y2[:, 2 * dc + 1:2 * dc + 2])        # (289, 1)
            # max over the 2x2 spatial window: row offsets {0, 1, 17, 18}
            sm = jnp.maximum(jnp.maximum(cm[0:256, :], cm[1:257, :]),
                             jnp.maximum(cm[17:273, :], cm[18:274, :]))
            # fc1 contribution (G is zero at non-pooled positions)
            h = h + jnp.sum(g_ref[dc, :, :] * sm, axis=0, keepdims=True)
        h = jnp.maximum(h, 0.0)                           # ReLU(fc1)
        out_rows.append(jnp.dot(h, wfc2_ref[...],
                                preferred_element_type=jnp.float32)
                        + bfc2_ref[...])                  # (1, N)
    o_ref[...] = jnp.concatenate(out_rows, axis=0)


def tail_fused(p2, w2m, b2row, g_mat, bfc1row, wfc2t, bfc2row):
    B = p2.shape[0]
    n_out = wfc2t.shape[1]
    args = (p2, w2m, b2row, g_mat, bfc1row, wfc2t, bfc2row)

    def full_spec(shape):
        nd = len(shape)
        return pl.BlockSpec(shape, lambda i, nd=nd: (0,) * nd)

    return pl.pallas_call(
        _tail_kernel,
        out_shape=jax.ShapeDtypeStruct((B, n_out), jnp.float32),
        grid=(1,),
        in_specs=[full_spec(a.shape) for a in args],
        out_specs=full_spec((B, n_out)),
    )(*args)


# ---------------------------------------------------------------------------
# DQN forward (Pallas kernels + thin XLA glue for im2col / weight re-layout)
# ---------------------------------------------------------------------------
def dqn_forward(params, x):
    # x: (B, 3, 64, 64, 1) float32
    B = x.shape[0]
    x3 = x[..., 0]                                        # (B, 3, 64, 64)

    # conv1 im2col patches in bf16 (halves the dominant HBM traffic):
    # p1[b, od, oh, ow, (kd*16+kh)*16+kw] = x[b, od+kd, oh+kh, ow+kw]
    od = jnp.arange(2); kd = jnp.arange(2)
    oh = jnp.arange(49); kh = jnp.arange(16)
    ow = jnp.arange(49); kw = jnp.arange(16)
    DI = od[:, None, None, None, None, None] + kd[None, None, None, :, None, None]
    HI = oh[None, :, None, None, None, None] + kh[None, None, None, None, :, None]
    WI = ow[None, None, :, None, None, None] + kw[None, None, None, None, None, :]
    p1 = x3[:, DI, HI, WI].reshape(B, 2, 49, 49, 512).astype(jnp.bfloat16)

    w1m = params["w1"].reshape(6, 512).T.astype(jnp.bfloat16)      # (512, 6)
    sel24 = jnp.zeros((24, 48), jnp.float32)
    sel24 = sel24.at[jnp.arange(24), 2 * jnp.arange(24)].set(1.0)

    # fused conv1 + ReLU + MaxPool3d  -> channels-last (B, 24, 24, 6)
    pooled1 = conv1_pool(p1, w1m, params["b1"].reshape(1, 6), sel24)

    # conv2 im2col patches: p2[b, oh*17+ow, c*64 + kh*8 + kw]
    o2 = jnp.arange(17); k2 = jnp.arange(8)
    HI2 = o2[:, None, None, None] + k2[None, None, :, None]
    WI2 = o2[None, :, None, None] + k2[None, None, None, :]
    p2 = pooled1[:, HI2, WI2, :]                          # (B,17,17,8,8,6)
    p2 = p2.transpose(0, 1, 2, 5, 3, 4).reshape(B, 289, 384)

    w2m = params["w2"].reshape(4, 384).T                  # (384, 4)

    # fc1 weights scattered to pool-2 source positions:
    # G[dc, 34*hh + 2*ww, n] = wfc1[n, dc*64 + hh*8 + ww]
    wfc1_r = params["wfc1"].T.reshape(2, 8, 8, 64)
    rows = 34 * jnp.arange(8)[:, None] + 2 * jnp.arange(8)[None, :]
    g_mat = jnp.zeros((2, 256, 64), jnp.float32).at[:, rows, :].set(wfc1_r)

    # fused conv2 + ReLU + pool2 + fc1 + ReLU + fc2  -> (B, N_ACTIONS)
    return tail_fused(p2, w2m, params["b2"].reshape(1, 4), g_mat,
                      params["bfc1"].reshape(1, 64), params["wfc2"].T,
                      params["bfc2"].reshape(1, -1))


# ---------------------------------------------------------------------------
# Pure-JAX reference (mirrors the PyTorch forward exactly) for validation
# ---------------------------------------------------------------------------
def reference_forward(params, x):
    xx = x[:, None, :, :, :, 0]                                     # (B,1,3,64,64)
    y = lax.conv_general_dilated(xx, params["w1"], (1, 1, 1), "VALID",
                                 dimension_numbers=("NCDHW", "OIDHW", "NCDHW"))
    y = jnp.maximum(y + params["b1"][None, :, None, None, None], 0.0)
    y = lax.reduce_window(y, -jnp.inf, lax.max,
                          (1, 1, 2, 2, 2), (1, 1, 2, 2, 2), "VALID")
    y = y[:, :, 0]                                                  # squeeze(2)
    y = lax.conv_general_dilated(y, params["w2"], (1, 1), "VALID",
                                 dimension_numbers=("NCHW", "OIHW", "NCHW"))
    y = jnp.maximum(y + params["b2"][None, :, None, None], 0.0)
    y = lax.reduce_window(y, -jnp.inf, lax.max, (1, 2, 2, 2), (1, 2, 2, 2), "VALID")
    y = y.reshape(y.shape[0], -1)
    y = jnp.maximum(y @ params["wfc1"].T + params["bfc1"], 0.0)
    return y @ params["wfc2"].T + params["bfc2"]


if __name__ == "__main__":
    key = jax.random.PRNGKey(0)
    ks = jax.random.split(key, 9)
    # Deterministic synthetic parameters (shapes from the module's __init__).
    params = {
        "w1": 0.05 * jax.random.normal(ks[0], (6, 1, 2, 16, 16), jnp.float32),
        "b1": 0.05 * jax.random.normal(ks[1], (6,), jnp.float32),
        "w2": 0.05 * jax.random.normal(ks[2], (4, 6, 8, 8), jnp.float32),
        "b2": 0.05 * jax.random.normal(ks[3], (4,), jnp.float32),
        "wfc1": 0.05 * jax.random.normal(ks[4], (64, 128), jnp.float32),
        "bfc1": 0.05 * jax.random.normal(ks[5], (64,), jnp.float32),
        "wfc2": 0.05 * jax.random.normal(ks[6], (N_ACTIONS, 64), jnp.float32),
        "bfc2": 0.05 * jax.random.normal(ks[7], (N_ACTIONS,), jnp.float32),
    }

    B = 2
    x = jax.random.normal(ks[8], (B, 3, 64, 64, 1), jnp.float32)

    out = jax.block_until_ready(jax.jit(dqn_forward)(params, x))
    ref = jax.block_until_ready(jax.jit(reference_forward)(params, x))

    assert out.shape == (B, N_ACTIONS), out.shape
    if not jnp.allclose(out, ref, atol=5e-2, rtol=5e-2):
        raise AssertionError(
            "mismatch vs reference, max abs diff = "
            f"{float(jnp.max(jnp.abs(out - ref)))}")
    print("KERNEL_OK")
</pallas_src>

<mosaic_0001>
module attributes {stable_mosaic.version = 11 : i64} {
  func.func @_conv1_pool_kernel(%arg0: i32, %arg1: i32, %arg2: memref<1x2x8x49x512xbf16, #tpu.memory_space<vmem>>, %arg3: memref<512x6xbf16, #tpu.memory_space<vmem>>, %arg4: memref<1x6xf32, #tpu.memory_space<vmem>>, %arg5: memref<24x48xf32, #tpu.memory_space<vmem>>, %arg6: memref<1x4x24x6xf32, #tpu.memory_space<vmem>>) attributes {dimension_semantics = [#tpu.dimension_semantics<parallel>, #tpu.dimension_semantics<parallel>], iteration_bounds = array<i64: 2, 6>, scalar_prefetch = 0 : i64, scratch_operands = 0 : i64, tpu.core_type = #tpu.core_type<tc>, window_params = [{transform_indices = @transform_0, window_bounds = array<i64: 1, 2, 8, 49, 512>}, {pipeline_mode = #tpu.pipeline_mode<synchronous>, transform_indices = @transform_1, window_bounds = array<i64: 512, 6>}, {pipeline_mode = #tpu.pipeline_mode<synchronous>, transform_indices = @transform_2, window_bounds = array<i64: 1, 6>}, {pipeline_mode = #tpu.pipeline_mode<synchronous>, transform_indices = @transform_3, window_bounds = array<i64: 24, 48>}, {transform_indices = @transform_4, window_bounds = array<i64: 1, 4, 24, 6>}]} {
    %c0 = arith.constant 0 : index
    %c0_0 = arith.constant 0 : index
    %0 = vector.load %arg3[%c0, %c0_0] : memref<512x6xbf16, #tpu.memory_space<vmem>>, vector<512x6xbf16>
    %c0_1 = arith.constant 0 : index
    %c0_2 = arith.constant 0 : index
    %1 = vector.load %arg4[%c0_1, %c0_2] : memref<1x6xf32, #tpu.memory_space<vmem>>, vector<1x6xf32>
    %c0_3 = arith.constant 0 : index
    %c0_4 = arith.constant 0 : index
    %2 = vector.load %arg5[%c0_3, %c0_4] : memref<24x48xf32, #tpu.memory_space<vmem>>, vector<24x48xf32>
    %c0_5 = arith.constant 0 : index
    %c0_6 = arith.constant 0 : index
    %c0_7 = arith.constant 0 : index
    %c0_8 = arith.constant 0 : index
    %c0_9 = arith.constant 0 : index
    %3 = vector.load %arg2[%c0_5, %c0_6, %c0_7, %c0_8, %c0_9] : memref<1x2x8x49x512xbf16, #tpu.memory_space<vmem>>, vector<1x1x1x49x512xbf16>
    %4 = vector.shape_cast %3 : vector<1x1x1x49x512xbf16> to vector<49x512xbf16>
    %cst = arith.constant dense<0.000000e+00> : vector<49x6xf32>
    %5 = tpu.matmul %4, %0, %cst {dimension_numbers = #tpu.dot_dimension_numbers<[1], [0], [0], [1], [0, 0, 1, 1], [], []>} : vector<49x512xbf16>, vector<512x6xbf16>, vector<49x6xf32> -> vector<49x6xf32>
    %6 = vector.broadcast %1 : vector<1x6xf32> to vector<49x6xf32>
    %7 = arith.addf %5, %6 : vector<49x6xf32>
    %cst_10 = arith.constant 0.000000e+00 : f32
    %8 = vector.broadcast %cst_10 : f32 to vector<49x6xf32>
    %9 = arith.maximumf %7, %8 : vector<49x6xf32>
    %c0_11 = arith.constant 0 : index
    %c0_12 = arith.constant 0 : index
    %c1 = arith.constant 1 : index
    %c0_13 = arith.constant 0 : index
    %c0_14 = arith.constant 0 : index
    %10 = vector.load %arg2[%c0_11, %c0_12, %c1, %c0_13, %c0_14] : memref<1x2x8x49x512xbf16, #tpu.memory_space<vmem>>, vector<1x1x1x49x512xbf16>
    %11 = vector.shape_cast %10 : vector<1x1x1x49x512xbf16> to vector<49x512xbf16>
    %cst_15 = arith.constant dense<0.000000e+00> : vector<49x6xf32>
    %12 = tpu.matmul %11, %0, %cst_15 {dimension_numbers = #tpu.dot_dimension_numbers<[1], [0], [0], [1], [0, 0, 1, 1], [], []>} : vector<49x512xbf16>, vector<512x6xbf16>, vector<49x6xf32> -> vector<49x6xf32>
    %13 = vector.broadcast %1 : vector<1x6xf32> to vector<49x6xf32>
    %14 = arith.addf %12, %13 : vector<49x6xf32>
    %cst_16 = arith.constant 0.000000e+00 : f32
    %15 = vector.broadcast %cst_16 : f32 to vector<49x6xf32>
    %16 = arith.maximumf %14, %15 : vector<49x6xf32>
    %17 = arith.maximumf %9, %16 : vector<49x6xf32>
    %c0_17 = arith.constant 0 : index
    %c1_18 = arith.constant 1 : index
    %c0_19 = arith.constant 0 : index
    %c0_20 = arith.constant 0 : index
    %c0_21 = arith.constant 0 : index
    %18 = vector.load %arg2[%c0_17, %c1_18, %c0_19, %c0_20, %c0_21] : memref<1x2x8x49x512xbf16, #tpu.memory_space<vmem>>, vector<1x1x1x49x512xbf16>
    %19 = vector.shape_cast %18 : vector<1x1x1x49x512xbf16> to vector<49x512xbf16>
    %cst_22 = arith.constant dense<0.000000e+00> : vector<49x6xf32>
    %20 = tpu.matmul %19, %0, %cst_22 {dimension_numbers = #tpu.dot_dimension_numbers<[1], [0], [0], [1], [0, 0, 1, 1], [], []>} : vector<49x512xbf16>, vector<512x6xbf16>, vector<49x6xf32> -> vector<49x6xf32>
    %21 = vector.broadcast %1 : vector<1x6xf32> to vector<49x6xf32>
    %22 = arith.addf %20, %21 : vector<49x6xf32>
    %cst_23 = arith.constant 0.000000e+00 : f32
    %23 = vector.broadcast %cst_23 : f32 to vector<49x6xf32>
    %24 = arith.maximumf %22, %23 : vector<49x6xf32>
    %25 = arith.maximumf %17, %24 : vector<49x6xf32>
    %c0_24 = arith.constant 0 : index
    %c1_25 = arith.constant 1 : index
    %c1_26 = arith.constant 1 : index
    %c0_27 = arith.constant 0 : index
    %c0_28 = arith.constant 0 : index
    %26 = vector.load %arg2[%c0_24, %c1_25, %c1_26, %c0_27, %c0_28] : memref<1x2x8x49x512xbf16, #tpu.memory_space<vmem>>, vector<1x1x1x49x512xbf16>
    %27 = vector.shape_cast %26 : vector<1x1x1x49x512xbf16> to vector<49x512xbf16>
    %cst_29 = arith.constant dense<0.000000e+00> : vector<49x6xf32>
    %28 = tpu.matmul %27, %0, %cst_29 {dimension_numbers = #tpu.dot_dimension_numbers<[1], [0], [0], [1], [0, 0, 1, 1], [], []>} : vector<49x512xbf16>, vector<512x6xbf16>, vector<49x6xf32> -> vector<49x6xf32>
    %29 = vector.broadcast %1 : vector<1x6xf32> to vector<49x6xf32>
    %30 = arith.addf %28, %29 : vector<49x6xf32>
    %cst_30 = arith.constant 0.000000e+00 : f32
    %31 = vector.broadcast %cst_30 : f32 to vector<49x6xf32>
    %32 = arith.maximumf %30, %31 : vector<49x6xf32>
    %33 = arith.maximumf %25, %32 : vector<49x6xf32>
    %34 = vector.extract_strided_slice %33 {offsets = [0, 0], sizes = [48, 6], strides = [1, 1]} : vector<49x6xf32> to vector<48x6xf32>
    %35 = vector.extract_strided_slice %33 {offsets = [1, 0], sizes = [48, 6], strides = [1, 1]} : vector<49x6xf32> to vector<48x6xf32>
    %36 = arith.maximumf %34, %35 : vector<48x6xf32>
    %cst_31 = arith.constant dense<0.000000e+00> : vector<24x6xf32>
    %37 = tpu.matmul %2, %36, %cst_31 {dimension_numbers = #tpu.dot_dimension_numbers<[1], [0], [0], [1], [0, 0, 1, 1], [], []>} : vector<24x48xf32>, vector<48x6xf32>, vector<24x6xf32> -> vector<24x6xf32>
    %c0_32 = arith.constant 0 : index
    %c0_33 = arith.constant 0 : index
    %c0_34 = arith.constant 0 : index
    %c0_35 = arith.constant 0 : index
    %38 = vector.load %arg6[%c0_32, %c0_33, %c0_34, %c0_35] : memref<1x4x24x6xf32, #tpu.memory_space<vmem>>, vector<1x1x24x6xf32>
    %39 = vector.shape_cast %38 : vector<1x1x24x6xf32> to vector<24x6xf32>
    %40 = vector.shape_cast %37 : vector<24x6xf32> to vector<1x1x24x6xf32>
    tpu.vector_store %arg6[%c0_32, %c0_33, %c0_34, %c0_35], %40 {strides = array<i32>} : memref<1x4x24x6xf32, #tpu.memory_space<vmem>>, vector<1x1x24x6xf32>,
    %c0_36 = arith.constant 0 : index
    %c0_37 = arith.constant 0 : index
    %c2 = arith.constant 2 : index
    %c0_38 = arith.constant 0 : index
    %c0_39 = arith.constant 0 : index
    %41 = vector.load %arg2[%c0_36, %c0_37, %c2, %c0_38, %c0_39] : memref<1x2x8x49x512xbf16, #tpu.memory_space<vmem>>, vector<1x1x1x49x512xbf16>
    %42 = vector.shape_cast %41 : vector<1x1x1x49x512xbf16> to vector<49x512xbf16>
    %cst_40 = arith.constant dense<0.000000e+00> : vector<49x6xf32>
    %43 = tpu.matmul %42, %0, %cst_40 {dimension_numbers = #tpu.dot_dimension_numbers<[1], [0], [0], [1], [0, 0, 1, 1], [], []>} : vector<49x512xbf16>, vector<512x6xbf16>, vector<49x6xf32> -> vector<49x6xf32>
    %44 = vector.broadcast %1 : vector<1x6xf32> to vector<49x6xf32>
    %45 = arith.addf %43, %44 : vector<49x6xf32>
    %cst_41 = arith.constant 0.000000e+00 : f32
    %46 = vector.broadcast %cst_41 : f32 to vector<49x6xf32>
    %47 = arith.maximumf %45, %46 : vector<49x6xf32>
    %c0_42 = arith.constant 0 : index
    %c0_43 = arith.constant 0 : index
    %c3 = arith.constant 3 : index
    %c0_44 = arith.constant 0 : index
    %c0_45 = arith.constant 0 : index
    %48 = vector.load %arg2[%c0_42, %c0_43, %c3, %c0_44, %c0_45] : memref<1x2x8x49x512xbf16, #tpu.memory_space<vmem>>, vector<1x1x1x49x512xbf16>
    %49 = vector.shape_cast %48 : vector<1x1x1x49x512xbf16> to vector<49x512xbf16>
    %cst_46 = arith.constant dense<0.000000e+00> : vector<49x6xf32>
    %50 = tpu.matmul %49, %0, %cst_46 {dimension_numbers = #tpu.dot_dimension_numbers<[1], [0], [0], [1], [0, 0, 1, 1], [], []>} : vector<49x512xbf16>, vector<512x6xbf16>, vector<49x6xf32> -> vector<49x6xf32>
    %51 = vector.broadcast %1 : vector<1x6xf32> to vector<49x6xf32>
    %52 = arith.addf %50, %51 : vector<49x6xf32>
    %cst_47 = arith.constant 0.000000e+00 : f32
    %53 = vector.broadcast %cst_47 : f32 to vector<49x6xf32>
    %54 = arith.maximumf %52, %53 : vector<49x6xf32>
    %55 = arith.maximumf %47, %54 : vector<49x6xf32>
    %c0_48 = arith.constant 0 : index
    %c1_49 = arith.constant 1 : index
    %c2_50 = arith.constant 2 : index
    %c0_51 = arith.constant 0 : index
    %c0_52 = arith.constant 0 : index
    %56 = vector.load %arg2[%c0_48, %c1_49, %c2_50, %c0_51, %c0_52] : memref<1x2x8x49x512xbf16, #tpu.memory_space<vmem>>, vector<1x1x1x49x512xbf16>
    %57 = vector.shape_cast %56 : vector<1x1x1x49x512xbf16> to vector<49x512xbf16>
    %cst_53 = arith.constant dense<0.000000e+00> : vector<49x6xf32>
    %58 = tpu.matmul %57, %0, %cst_53 {dimension_numbers = #tpu.dot_dimension_numbers<[1], [0], [0], [1], [0, 0, 1, 1], [], []>} : vector<49x512xbf16>, vector<512x6xbf16>, vector<49x6xf32> -> vector<49x6xf32>
    %59 = vector.broadcast %1 : vector<1x6xf32> to vector<49x6xf32>
    %60 = arith.addf %58, %59 : vector<49x6xf32>
    %cst_54 = arith.constant 0.000000e+00 : f32
    %61 = vector.broadcast %cst_54 : f32 to vector<49x6xf32>
    %62 = arith.maximumf %60, %61 : vector<49x6xf32>
    %63 = arith.maximumf %55, %62 : vector<49x6xf32>
    %c0_55 = arith.constant 0 : index
    %c1_56 = arith.constant 1 : index
    %c3_57 = arith.constant 3 : index
    %c0_58 = arith.constant 0 : index
    %c0_59 = arith.constant 0 : index
    %64 = vector.load %arg2[%c0_55, %c1_56, %c3_57, %c0_58, %c0_59] : memref<1x2x8x49x512xbf16, #tpu.memory_space<vmem>>, vector<1x1x1x49x512xbf16>
    %65 = vector.shape_cast %64 : vector<1x1x1x49x512xbf16> to vector<49x512xbf16>
    %cst_60 = arith.constant dense<0.000000e+00> : vector<49x6xf32>
    %66 = tpu.matmul %65, %0, %cst_60 {dimension_numbers = #tpu.dot_dimension_numbers<[1], [0], [0], [1], [0, 0, 1, 1], [], []>} : vector<49x512xbf16>, vector<512x6xbf16>, vector<49x6xf32> -> vector<49x6xf32>
    %67 = vector.broadcast %1 : vector<1x6xf32> to vector<49x6xf32>
    %68 = arith.addf %66, %67 : vector<49x6xf32>
    %cst_61 = arith.constant 0.000000e+00 : f32
    %69 = vector.broadcast %cst_61 : f32 to vector<49x6xf32>
    %70 = arith.maximumf %68, %69 : vector<49x6xf32>
    %71 = arith.maximumf %63, %70 : vector<49x6xf32>
    %72 = vector.extract_strided_slice %71 {offsets = [0, 0], sizes = [48, 6], strides = [1, 1]} : vector<49x6xf32> to vector<48x6xf32>
    %73 = vector.extract_strided_slice %71 {offsets = [1, 0], sizes = [48, 6], strides = [1, 1]} : vector<49x6xf32> to vector<48x6xf32>
    %74 = arith.maximumf %72, %73 : vector<48x6xf32>
    %cst_62 = arith.constant dense<0.000000e+00> : vector<24x6xf32>
    %75 = tpu.matmul %2, %74, %cst_62 {dimension_numbers = #tpu.dot_dimension_numbers<[1], [0], [0], [1], [0, 0, 1, 1], [], []>} : vector<24x48xf32>, vector<48x6xf32>, vector<24x6xf32> -> vector<24x6xf32>
    %c0_63 = arith.constant 0 : index
    %c1_64 = arith.constant 1 : index
    %c0_65 = arith.constant 0 : index
    %c0_66 = arith.constant 0 : index
    %76 = vector.load %arg6[%c0_63, %c1_64, %c0_65, %c0_66] : memref<1x4x24x6xf32, #tpu.memory_space<vmem>>, vector<1x1x24x6xf32>
    %77 = vector.shape_cast %76 : vector<1x1x24x6xf32> to vector<24x6xf32>
    %78 = vector.shape_cast %75 : vector<24x6xf32> to vector<1x1x24x6xf32>
    tpu.vector_store %arg6[%c0_63, %c1_64, %c0_65, %c0_66], %78 {strides = array<i32>} : memref<1x4x24x6xf32, #tpu.memory_space<vmem>>, vector<1x1x24x6xf32>,
    %c0_67 = arith.constant 0 : index
    %c0_68 = arith.constant 0 : index
    %c4 = arith.constant 4 : index
    %c0_69 = arith.constant 0 : index
    %c0_70 = arith.constant 0 : index
    %79 = vector.load %arg2[%c0_67, %c0_68, %c4, %c0_69, %c0_70] : memref<1x2x8x49x512xbf16, #tpu.memory_space<vmem>>, vector<1x1x1x49x512xbf16>
    %80 = vector.shape_cast %79 : vector<1x1x1x49x512xbf16> to vector<49x512xbf16>
    %cst_71 = arith.constant dense<0.000000e+00> : vector<49x6xf32>
    %81 = tpu.matmul %80, %0, %cst_71 {dimension_numbers = #tpu.dot_dimension_numbers<[1], [0], [0], [1], [0, 0, 1, 1], [], []>} : vector<49x512xbf16>, vector<512x6xbf16>, vector<49x6xf32> -> vector<49x6xf32>
    %82 = vector.broadcast %1 : vector<1x6xf32> to vector<49x6xf32>
    %83 = arith.addf %81, %82 : vector<49x6xf32>
    %cst_72 = arith.constant 0.000000e+00 : f32
    %84 = vector.broadcast %cst_72 : f32 to vector<49x6xf32>
    %85 = arith.maximumf %83, %84 : vector<49x6xf32>
    %c0_73 = arith.constant 0 : index
    %c0_74 = arith.constant 0 : index
    %c5 = arith.constant 5 : index
    %c0_75 = arith.constant 0 : index
    %c0_76 = arith.constant 0 : index
    %86 = vector.load %arg2[%c0_73, %c0_74, %c5, %c0_75, %c0_76] : memref<1x2x8x49x512xbf16, #tpu.memory_space<vmem>>, vector<1x1x1x49x512xbf16>
    %87 = vector.shape_cast %86 : vector<1x1x1x49x512xbf16> to vector<49x512xbf16>
    %cst_77 = arith.constant dense<0.000000e+00> : vector<49x6xf32>
    %88 = tpu.matmul %87, %0, %cst_77 {dimension_numbers = #tpu.dot_dimension_numbers<[1], [0], [0], [1], [0, 0, 1, 1], [], []>} : vector<49x512xbf16>, vector<512x6xbf16>, vector<49x6xf32> -> vector<49x6xf32>
    %89 = vector.broadcast %1 : vector<1x6xf32> to vector<49x6xf32>
    %90 = arith.addf %88, %89 : vector<49x6xf32>
    %cst_78 = arith.constant 0.000000e+00 : f32
    %91 = vector.broadcast %cst_78 : f32 to vector<49x6xf32>
    %92 = arith.maximumf %90, %91 : vector<49x6xf32>
    %93 = arith.maximumf %85, %92 : vector<49x6xf32>
    %c0_79 = arith.constant 0 : index
    %c1_80 = arith.constant 1 : index
    %c4_81 = arith.constant 4 : index
    %c0_82 = arith.constant 0 : index
    %c0_83 = arith.constant 0 : index
    %94 = vector.load %arg2[%c0_79, %c1_80, %c4_81, %c0_82, %c0_83] : memref<1x2x8x49x512xbf16, #tpu.memory_space<vmem>>, vector<1x1x1x49x512xbf16>
    %95 = vector.shape_cast %94 : vector<1x1x1x49x512xbf16> to vector<49x512xbf16>
    %cst_84 = arith.constant dense<0.000000e+00> : vector<49x6xf32>
    %96 = tpu.matmul %95, %0, %cst_84 {dimension_numbers = #tpu.dot_dimension_numbers<[1], [0], [0], [1], [0, 0, 1, 1], [], []>} : vector<49x512xbf16>, vector<512x6xbf16>, vector<49x6xf32> -> vector<49x6xf32>
    %97 = vector.broadcast %1 : vector<1x6xf32> to vector<49x6xf32>
    %98 = arith.addf %96, %97 : vector<49x6xf32>
    %cst_85 = arith.constant 0.000000e+00 : f32
    %99 = vector.broadcast %cst_85 : f32 to vector<49x6xf32>
    %100 = arith.maximumf %98, %99 : vector<49x6xf32>
    %101 = arith.maximumf %93, %100 : vector<49x6xf32>
    %c0_86 = arith.constant 0 : index
    %c1_87 = arith.constant 1 : index
    %c5_88 = arith.constant 5 : index
    %c0_89 = arith.constant 0 : index
    %c0_90 = arith.constant 0 : index
    %102 = vector.load %arg2[%c0_86, %c1_87, %c5_88, %c0_89, %c0_90] : memref<1x2x8x49x512xbf16, #tpu.memory_space<vmem>>, vector<1x1x1x49x512xbf16>
    %103 = vector.shape_cast %102 : vector<1x1x1x49x512xbf16> to vector<49x512xbf16>
    %cst_91 = arith.constant dense<0.000000e+00> : vector<49x6xf32>
    %104 = tpu.matmul %103, %0, %cst_91 {dimension_numbers = #tpu.dot_dimension_numbers<[1], [0], [0], [1], [0, 0, 1, 1], [], []>} : vector<49x512xbf16>, vector<512x6xbf16>, vector<49x6xf32> -> vector<49x6xf32>
    %105 = vector.broadcast %1 : vector<1x6xf32> to vector<49x6xf32>
    %106 = arith.addf %104, %105 : vector<49x6xf32>
    %cst_92 = arith.constant 0.000000e+00 : f32
    %107 = vector.broadcast %cst_92 : f32 to vector<49x6xf32>
    %108 = arith.maximumf %106, %107 : vector<49x6xf32>
    %109 = arith.maximumf %101, %108 : vector<49x6xf32>
    %110 = vector.extract_strided_slice %109 {offsets = [0, 0], sizes = [48, 6], strides = [1, 1]} : vector<49x6xf32> to vector<48x6xf32>
    %111 = vector.extract_strided_slice %109 {offsets = [1, 0], sizes = [48, 6], strides = [1, 1]} : vector<49x6xf32> to vector<48x6xf32>
    %112 = arith.maximumf %110, %111 : vector<48x6xf32>
    %cst_93 = arith.constant dense<0.000000e+00> : vector<24x6xf32>
    %113 = tpu.matmul %2, %112, %cst_93 {dimension_numbers = #tpu.dot_dimension_numbers<[1], [0], [0], [1], [0, 0, 1, 1], [], []>} : vector<24x48xf32>, vector<48x6xf32>, vector<24x6xf32> -> vector<24x6xf32>
    %c0_94 = arith.constant 0 : index
    %c2_95 = arith.constant 2 : index
    %c0_96 = arith.constant 0 : index
    %c0_97 = arith.constant 0 : index
    %114 = vector.load %arg6[%c0_94, %c2_95, %c0_96, %c0_97] : memref<1x4x24x6xf32, #tpu.memory_space<vmem>>, vector<1x1x24x6xf32>
    %115 = vector.shape_cast %114 : vector<1x1x24x6xf32> to vector<24x6xf32>
    %116 = vector.shape_cast %113 : vector<24x6xf32> to vector<1x1x24x6xf32>
    tpu.vector_store %arg6[%c0_94, %c2_95, %c0_96, %c0_97], %116 {strides = array<i32>} : memref<1x4x24x6xf32, #tpu.memory_space<vmem>>, vector<1x1x24x6xf32>,
    %c0_98 = arith.constant 0 : index
    %c0_99 = arith.constant 0 : index
    %c6 = arith.constant 6 : index
    %c0_100 = arith.constant 0 : index
    %c0_101 = arith.constant 0 : index
    %117 = vector.load %arg2[%c0_98, %c0_99, %c6, %c0_100, %c0_101] : memref<1x2x8x49x512xbf16, #tpu.memory_space<vmem>>, vector<1x1x1x49x512xbf16>
    %118 = vector.shape_cast %117 : vector<1x1x1x49x512xbf16> to vector<49x512xbf16>
    %cst_102 = arith.constant dense<0.000000e+00> : vector<49x6xf32>
    %119 = tpu.matmul %118, %0, %cst_102 {dimension_numbers = #tpu.dot_dimension_numbers<[1], [0], [0], [1], [0, 0, 1, 1], [], []>} : vector<49x512xbf16>, vector<512x6xbf16>, vector<49x6xf32> -> vector<49x6xf32>
    %120 = vector.broadcast %1 : vector<1x6xf32> to vector<49x6xf32>
    %121 = arith.addf %119, %120 : vector<49x6xf32>
    %cst_103 = arith.constant 0.000000e+00 : f32
    %122 = vector.broadcast %cst_103 : f32 to vector<49x6xf32>
    %123 = arith.maximumf %121, %122 : vector<49x6xf32>
    %c0_104 = arith.constant 0 : index
    %c0_105 = arith.constant 0 : index
    %c7 = arith.constant 7 : index
    %c0_106 = arith.constant 0 : index
    %c0_107 = arith.constant 0 : index
    %124 = vector.load %arg2[%c0_104, %c0_105, %c7, %c0_106, %c0_107] : memref<1x2x8x49x512xbf16, #tpu.memory_space<vmem>>, vector<1x1x1x49x512xbf16>
    %125 = vector.shape_cast %124 : vector<1x1x1x49x512xbf16> to vector<49x512xbf16>
    %cst_108 = arith.constant dense<0.000000e+00> : vector<49x6xf32>
    %126 = tpu.matmul %125, %0, %cst_108 {dimension_numbers = #tpu.dot_dimension_numbers<[1], [0], [0], [1], [0, 0, 1, 1], [], []>} : vector<49x512xbf16>, vector<512x6xbf16>, vector<49x6xf32> -> vector<49x6xf32>
    %127 = vector.broadcast %1 : vector<1x6xf32> to vector<49x6xf32>
    %128 = arith.addf %126, %127 : vector<49x6xf32>
    %cst_109 = arith.constant 0.000000e+00 : f32
    %129 = vector.broadcast %cst_109 : f32 to vector<49x6xf32>
    %130 = arith.maximumf %128, %129 : vector<49x6xf32>
    %131 = arith.maximumf %123, %130 : vector<49x6xf32>
    %c0_110 = arith.constant 0 : index
    %c1_111 = arith.constant 1 : index
    %c6_112 = arith.constant 6 : index
    %c0_113 = arith.constant 0 : index
    %c0_114 = arith.constant 0 : index
    %132 = vector.load %arg2[%c0_110, %c1_111, %c6_112, %c0_113, %c0_114] : memref<1x2x8x49x512xbf16, #tpu.memory_space<vmem>>, vector<1x1x1x49x512xbf16>
    %133 = vector.shape_cast %132 : vector<1x1x1x49x512xbf16> to vector<49x512xbf16>
    %cst_115 = arith.constant dense<0.000000e+00> : vector<49x6xf32>
    %134 = tpu.matmul %133, %0, %cst_115 {dimension_numbers = #tpu.dot_dimension_numbers<[1], [0], [0], [1], [0, 0, 1, 1], [], []>} : vector<49x512xbf16>, vector<512x6xbf16>, vector<49x6xf32> -> vector<49x6xf32>
    %135 = vector.broadcast %1 : vector<1x6xf32> to vector<49x6xf32>
    %136 = arith.addf %134, %135 : vector<49x6xf32>
    %cst_116 = arith.constant 0.000000e+00 : f32
    %137 = vector.broadcast %cst_116 : f32 to vector<49x6xf32>
    %138 = arith.maximumf %136, %137 : vector<49x6xf32>
    %139 = arith.maximumf %131, %138 : vector<49x6xf32>
    %c0_117 = arith.constant 0 : index
    %c1_118 = arith.constant 1 : index
    %c7_119 = arith.constant 7 : index
    %c0_120 = arith.constant 0 : index
    %c0_121 = arith.constant 0 : index
    %140 = vector.load %arg2[%c0_117, %c1_118, %c7_119, %c0_120, %c0_121] : memref<1x2x8x49x512xbf16, #tpu.memory_space<vmem>>, vector<1x1x1x49x512xbf16>
    %141 = vector.shape_cast %140 : vector<1x1x1x49x512xbf16> to vector<49x512xbf16>
    %cst_122 = arith.constant dense<0.000000e+00> : vector<49x6xf32>
    %142 = tpu.matmul %141, %0, %cst_122 {dimension_numbers = #tpu.dot_dimension_numbers<[1], [0], [0], [1], [0, 0, 1, 1], [], []>} : vector<49x512xbf16>, vector<512x6xbf16>, vector<49x6xf32> -> vector<49x6xf32>
    %143 = vector.broadcast %1 : vector<1x6xf32> to vector<49x6xf32>
    %144 = arith.addf %142, %143 : vector<49x6xf32>
    %cst_123 = arith.constant 0.000000e+00 : f32
    %145 = vector.broadcast %cst_123 : f32 to vector<49x6xf32>
    %146 = arith.maximumf %144, %145 : vector<49x6xf32>
    %147 = arith.maximumf %139, %146 : vector<49x6xf32>
    %148 = vector.extract_strided_slice %147 {offsets = [0, 0], sizes = [48, 6], strides = [1, 1]} : vector<49x6xf32> to vector<48x6xf32>
    %149 = vector.extract_strided_slice %147 {offsets = [1, 0], sizes = [48, 6], strides = [1, 1]} : vector<49x6xf32> to vector<48x6xf32>
    %150 = arith.maximumf %148, %149 : vector<48x6xf32>
    %cst_124 = arith.constant dense<0.000000e+00> : vector<24x6xf32>
    %151 = tpu.matmul %2, %150, %cst_124 {dimension_numbers = #tpu.dot_dimension_numbers<[1], [0], [0], [1], [0, 0, 1, 1], [], []>} : vector<24x48xf32>, vector<48x6xf32>, vector<24x6xf32> -> vector<24x6xf32>
    %c0_125 = arith.constant 0 : index
    %c3_126 = arith.constant 3 : index
    %c0_127 = arith.constant 0 : index
    %c0_128 = arith.constant 0 : index
    %152 = vector.load %arg6[%c0_125, %c3_126, %c0_127, %c0_128] : memref<1x4x24x6xf32, #tpu.memory_space<vmem>>, vector<1x1x24x6xf32>
    %153 = vector.shape_cast %152 : vector<1x1x24x6xf32> to vector<24x6xf32>
    %154 = vector.shape_cast %151 : vector<24x6xf32> to vector<1x1x24x6xf32>
    tpu.vector_store %arg6[%c0_125, %c3_126, %c0_127, %c0_128], %154 {strides = array<i32>} : memref<1x4x24x6xf32, #tpu.memory_space<vmem>>, vector<1x1x24x6xf32>,
    return
  }
  func.func @transform_0(%arg0: i32, %arg1: i32) -> (i32, i32, i32, i32, i32) {
    %c0_i32 = arith.constant 0 : i32
    %c0_i32_0 = arith.constant 0 : i32
    %c0_i32_1 = arith.constant 0 : i32
    %c0_i32_2 = arith.constant 0 : i32
    return %arg0, %c0_i32, %arg1, %c0_i32_0, %c0_i32_1 : i32, i32, i32, i32, i32
  }
  func.func @transform_1(%arg0: i32, %arg1: i32) -> (i32, i32) {
    %c0_i32 = arith.constant 0 : i32
    %c0_i32_0 = arith.constant 0 : i32
    %c0_i32_1 = arith.constant 0 : i32
    return %c0_i32, %c0_i32_0 : i32, i32
  }
  func.func @transform_2(%arg0: i32, %arg1: i32) -> (i32, i32) {
    %c0_i32 = arith.constant 0 : i32
    %c0_i32_0 = arith.constant 0 : i32
    %c0_i32_1 = arith.constant 0 : i32
    return %c0_i32, %c0_i32_0 : i32, i32
  }
  func.func @transform_3(%arg0: i32, %arg1: i32) -> (i32, i32) {
    %c0_i32 = arith.constant 0 : i32
    %c0_i32_0 = arith.constant 0 : i32
    %c0_i32_1 = arith.constant 0 : i32
    return %c0_i32, %c0_i32_0 : i32, i32
  }
  func.func @transform_4(%arg0: i32, %arg1: i32) -> (i32, i32, i32, i32) {
    %c0_i32 = arith.constant 0 : i32
    %c0_i32_0 = arith.constant 0 : i32
    %c0_i32_1 = arith.constant 0 : i32
    return %arg0, %arg1, %c0_i32, %c0_i32_0 : i32, i32, i32, i32
  }
}

module attributes {stable_mosaic.version = 11 : i64} {
  func.func @_tail_kernel(%arg0: i32, %arg1: memref<2x289x384xf32, #tpu.memory_space<vmem>>, %arg2: memref<384x4xf32, #tpu.memory_space<vmem>>, %arg3: memref<1x4xf32, #tpu.memory_space<vmem>>, %arg4: memref<2x256x64xf32, #tpu.memory_space<vmem>>, %arg5: memref<1x64xf32, #tpu.memory_space<vmem>>, %arg6: memref<64x4xf32, #tpu.memory_space<vmem>>, %arg7: memref<1x4xf32, #tpu.memory_space<vmem>>, %arg8: memref<2x4xf32, #tpu.memory_space<vmem>>) attributes {dimension_semantics = [#tpu.dimension_semantics<arbitrary>], iteration_bounds = array<i64: 1>, scalar_prefetch = 0 : i64, scratch_operands = 0 : i64, tpu.core_type = #tpu.core_type<tc>, window_params = [{pipeline_mode = #tpu.pipeline_mode<synchronous>, transform_indices = @transform_0, window_bounds = array<i64: 2, 289, 384>}, {pipeline_mode = #tpu.pipeline_mode<synchronous>, transform_indices = @transform_1, window_bounds = array<i64: 384, 4>}, {pipeline_mode = #tpu.pipeline_mode<synchronous>, transform_indices = @transform_2, window_bounds = array<i64: 1, 4>}, {pipeline_mode = #tpu.pipeline_mode<synchronous>, transform_indices = @transform_3, window_bounds = array<i64: 2, 256, 64>}, {pipeline_mode = #tpu.pipeline_mode<synchronous>, transform_indices = @transform_4, window_bounds = array<i64: 1, 64>}, {pipeline_mode = #tpu.pipeline_mode<synchronous>, transform_indices = @transform_5, window_bounds = array<i64: 64, 4>}, {pipeline_mode = #tpu.pipeline_mode<synchronous>, transform_indices = @transform_6, window_bounds = array<i64: 1, 4>}, {pipeline_mode = #tpu.pipeline_mode<synchronous>, transform_indices = @transform_7, window_bounds = array<i64: 2, 4>}]} {
    %c0 = arith.constant 0 : index
    %c0_0 = arith.constant 0 : index
    %0 = vector.load %arg2[%c0, %c0_0] : memref<384x4xf32, #tpu.memory_space<vmem>>, vector<384x4xf32>
    %c0_1 = arith.constant 0 : index
    %c0_2 = arith.constant 0 : index
    %c0_3 = arith.constant 0 : index
    %1 = vector.load %arg1[%c0_1, %c0_2, %c0_3] : memref<2x289x384xf32, #tpu.memory_space<vmem>>, vector<1x289x384xf32>
    %2 = vector.shape_cast %1 : vector<1x289x384xf32> to vector<289x384xf32>
    %cst = arith.constant dense<0.000000e+00> : vector<289x4xf32>
    %3 = tpu.matmul %2, %0, %cst {dimension_numbers = #tpu.dot_dimension_numbers<[1], [0], [0], [1], [0, 0, 1, 1], [], []>} : vector<289x384xf32>, vector<384x4xf32>, vector<289x4xf32> -> vector<289x4xf32>
    %c0_4 = arith.constant 0 : index
    %c0_5 = arith.constant 0 : index
    %4 = vector.load %arg3[%c0_4, %c0_5] : memref<1x4xf32, #tpu.memory_space<vmem>>, vector<1x4xf32>
    %5 = vector.broadcast %4 : vector<1x4xf32> to vector<289x4xf32>
    %6 = arith.addf %3, %5 : vector<289x4xf32>
    %cst_6 = arith.constant 0.000000e+00 : f32
    %7 = vector.broadcast %cst_6 : f32 to vector<289x4xf32>
    %8 = arith.maximumf %6, %7 : vector<289x4xf32>
    %c0_7 = arith.constant 0 : index
    %c0_8 = arith.constant 0 : index
    %9 = vector.load %arg5[%c0_7, %c0_8] : memref<1x64xf32, #tpu.memory_space<vmem>>, vector<1x64xf32>
    %10 = vector.extract_strided_slice %8 {offsets = [0, 0], sizes = [289, 1], strides = [1, 1]} : vector<289x4xf32> to vector<289x1xf32>
    %11 = vector.extract_strided_slice %8 {offsets = [0, 1], sizes = [289, 1], strides = [1, 1]} : vector<289x4xf32> to vector<289x1xf32>
    %12 = arith.maximumf %10, %11 : vector<289x1xf32>
    %13 = vector.extract_strided_slice %12 {offsets = [0, 0], sizes = [256, 1], strides = [1, 1]} : vector<289x1xf32> to vector<256x1xf32>
    %14 = vector.extract_strided_slice %12 {offsets = [1, 0], sizes = [256, 1], strides = [1, 1]} : vector<289x1xf32> to vector<256x1xf32>
    %15 = arith.maximumf %13, %14 : vector<256x1xf32>
    %16 = vector.extract_strided_slice %12 {offsets = [17, 0], sizes = [256, 1], strides = [1, 1]} : vector<289x1xf32> to vector<256x1xf32>
    %17 = vector.extract_strided_slice %12 {offsets = [18, 0], sizes = [256, 1], strides = [1, 1]} : vector<289x1xf32> to vector<256x1xf32>
    %18 = arith.maximumf %16, %17 : vector<256x1xf32>
    %19 = arith.maximumf %15, %18 : vector<256x1xf32>
    %c0_9 = arith.constant 0 : index
    %c0_10 = arith.constant 0 : index
    %c0_11 = arith.constant 0 : index
    %20 = vector.load %arg4[%c0_9, %c0_10, %c0_11] : memref<2x256x64xf32, #tpu.memory_space<vmem>>, vector<1x256x64xf32>
    %21 = vector.shape_cast %20 : vector<1x256x64xf32> to vector<256x64xf32>
    %22 = vector.broadcast %19 : vector<256x1xf32> to vector<256x64xf32>
    %23 = arith.mulf %21, %22 : vector<256x64xf32>
    %cst_12 = arith.constant dense<0.000000e+00> : vector<64xf32>
    %24 = vector.multi_reduction <add>, %23, %cst_12 [0] : vector<256x64xf32> to vector<64xf32>
    %25 = vector.shape_cast %24 : vector<64xf32> to vector<1x64xf32>
    %26 = arith.addf %9, %25 : vector<1x64xf32>
    %27 = vector.extract_strided_slice %8 {offsets = [0, 2], sizes = [289, 1], strides = [1, 1]} : vector<289x4xf32> to vector<289x1xf32>
    %28 = vector.extract_strided_slice %8 {offsets = [0, 3], sizes = [289, 1], strides = [1, 1]} : vector<289x4xf32> to vector<289x1xf32>
    %29 = arith.maximumf %27, %28 : vector<289x1xf32>
    %30 = vector.extract_strided_slice %29 {offsets = [0, 0], sizes = [256, 1], strides = [1, 1]} : vector<289x1xf32> to vector<256x1xf32>
    %31 = vector.extract_strided_slice %29 {offsets = [1, 0], sizes = [256, 1], strides = [1, 1]} : vector<289x1xf32> to vector<256x1xf32>
    %32 = arith.maximumf %30, %31 : vector<256x1xf32>
    %33 = vector.extract_strided_slice %29 {offsets = [17, 0], sizes = [256, 1], strides = [1, 1]} : vector<289x1xf32> to vector<256x1xf32>
    %34 = vector.extract_strided_slice %29 {offsets = [18, 0], sizes = [256, 1], strides = [1, 1]} : vector<289x1xf32> to vector<256x1xf32>
    %35 = arith.maximumf %33, %34 : vector<256x1xf32>
    %36 = arith.maximumf %32, %35 : vector<256x1xf32>
    %c1 = arith.constant 1 : index
    %c0_13 = arith.constant 0 : index
    %c0_14 = arith.constant 0 : index
    %37 = vector.load %arg4[%c1, %c0_13, %c0_14] : memref<2x256x64xf32, #tpu.memory_space<vmem>>, vector<1x256x64xf32>
    %38 = vector.shape_cast %37 : vector<1x256x64xf32> to vector<256x64xf32>
    %39 = vector.broadcast %36 : vector<256x1xf32> to vector<256x64xf32>
    %40 = arith.mulf %38, %39 : vector<256x64xf32>
    %cst_15 = arith.constant dense<0.000000e+00> : vector<64xf32>
    %41 = vector.multi_reduction <add>, %40, %cst_15 [0] : vector<256x64xf32> to vector<64xf32>
    %42 = vector.shape_cast %41 : vector<64xf32> to vector<1x64xf32>
    %43 = arith.addf %26, %42 : vector<1x64xf32>
    %cst_16 = arith.constant 0.000000e+00 : f32
    %44 = vector.broadcast %cst_16 : f32 to vector<1x64xf32>
    %45 = arith.maximumf %43, %44 : vector<1x64xf32>
    %c0_17 = arith.constant 0 : index
    %c0_18 = arith.constant 0 : index
    %46 = vector.load %arg6[%c0_17, %c0_18] : memref<64x4xf32, #tpu.memory_space<vmem>>, vector<64x4xf32>
    %cst_19 = arith.constant dense<0.000000e+00> : vector<1x4xf32>
    %47 = tpu.matmul %45, %46, %cst_19 {dimension_numbers = #tpu.dot_dimension_numbers<[1], [0], [0], [1], [0, 0, 1, 1], [], []>} : vector<1x64xf32>, vector<64x4xf32>, vector<1x4xf32> -> vector<1x4xf32>
    %c0_20 = arith.constant 0 : index
    %c0_21 = arith.constant 0 : index
    %48 = vector.load %arg7[%c0_20, %c0_21] : memref<1x4xf32, #tpu.memory_space<vmem>>, vector<1x4xf32>
    %49 = arith.addf %47, %48 : vector<1x4xf32>
    %c1_22 = arith.constant 1 : index
    %c0_23 = arith.constant 0 : index
    %c0_24 = arith.constant 0 : index
    %50 = vector.load %arg1[%c1_22, %c0_23, %c0_24] : memref<2x289x384xf32, #tpu.memory_space<vmem>>, vector<1x289x384xf32>
    %51 = vector.shape_cast %50 : vector<1x289x384xf32> to vector<289x384xf32>
    %cst_25 = arith.constant dense<0.000000e+00> : vector<289x4xf32>
    %52 = tpu.matmul %51, %0, %cst_25 {dimension_numbers = #tpu.dot_dimension_numbers<[1], [0], [0], [1], [0, 0, 1, 1], [], []>} : vector<289x384xf32>, vector<384x4xf32>, vector<289x4xf32> -> vector<289x4xf32>
    %c0_26 = arith.constant 0 : index
    %c0_27 = arith.constant 0 : index
    %53 = vector.load %arg3[%c0_26, %c0_27] : memref<1x4xf32, #tpu.memory_space<vmem>>, vector<1x4xf32>
    %54 = vector.broadcast %53 : vector<1x4xf32> to vector<289x4xf32>
    %55 = arith.addf %52, %54 : vector<289x4xf32>
    %cst_28 = arith.constant 0.000000e+00 : f32
    %56 = vector.broadcast %cst_28 : f32 to vector<289x4xf32>
    %57 = arith.maximumf %55, %56 : vector<289x4xf32>
    %c0_29 = arith.constant 0 : index
    %c0_30 = arith.constant 0 : index
    %58 = vector.load %arg5[%c0_29, %c0_30] : memref<1x64xf32, #tpu.memory_space<vmem>>, vector<1x64xf32>
    %59 = vector.extract_strided_slice %57 {offsets = [0, 0], sizes = [289, 1], strides = [1, 1]} : vector<289x4xf32> to vector<289x1xf32>
    %60 = vector.extract_strided_slice %57 {offsets = [0, 1], sizes = [289, 1], strides = [1, 1]} : vector<289x4xf32> to vector<289x1xf32>
    %61 = arith.maximumf %59, %60 : vector<289x1xf32>
    %62 = vector.extract_strided_slice %61 {offsets = [0, 0], sizes = [256, 1], strides = [1, 1]} : vector<289x1xf32> to vector<256x1xf32>
    %63 = vector.extract_strided_slice %61 {offsets = [1, 0], sizes = [256, 1], strides = [1, 1]} : vector<289x1xf32> to vector<256x1xf32>
    %64 = arith.maximumf %62, %63 : vector<256x1xf32>
    %65 = vector.extract_strided_slice %61 {offsets = [17, 0], sizes = [256, 1], strides = [1, 1]} : vector<289x1xf32> to vector<256x1xf32>
    %66 = vector.extract_strided_slice %61 {offsets = [18, 0], sizes = [256, 1], strides = [1, 1]} : vector<289x1xf32> to vector<256x1xf32>
    %67 = arith.maximumf %65, %66 : vector<256x1xf32>
    %68 = arith.maximumf %64, %67 : vector<256x1xf32>
    %c0_31 = arith.constant 0 : index
    %c0_32 = arith.constant 0 : index
    %c0_33 = arith.constant 0 : index
    %69 = vector.load %arg4[%c0_31, %c0_32, %c0_33] : memref<2x256x64xf32, #tpu.memory_space<vmem>>, vector<1x256x64xf32>
    %70 = vector.shape_cast %69 : vector<1x256x64xf32> to vector<256x64xf32>
    %71 = vector.broadcast %68 : vector<256x1xf32> to vector<256x64xf32>
    %72 = arith.mulf %70, %71 : vector<256x64xf32>
    %cst_34 = arith.constant dense<0.000000e+00> : vector<64xf32>
    %73 = vector.multi_reduction <add>, %72, %cst_34 [0] : vector<256x64xf32> to vector<64xf32>
    %74 = vector.shape_cast %73 : vector<64xf32> to vector<1x64xf32>
    %75 = arith.addf %58, %74 : vector<1x64xf32>
    %76 = vector.extract_strided_slice %57 {offsets = [0, 2], sizes = [289, 1], strides = [1, 1]} : vector<289x4xf32> to vector<289x1xf32>
    %77 = vector.extract_strided_slice %57 {offsets = [0, 3], sizes = [289, 1], strides = [1, 1]} : vector<289x4xf32> to vector<289x1xf32>
    %78 = arith.maximumf %76, %77 : vector<289x1xf32>
    %79 = vector.extract_strided_slice %78 {offsets = [0, 0], sizes = [256, 1], strides = [1, 1]} : vector<289x1xf32> to vector<256x1xf32>
    %80 = vector.extract_strided_slice %78 {offsets = [1, 0], sizes = [256, 1], strides = [1, 1]} : vector<289x1xf32> to vector<256x1xf32>
    %81 = arith.maximumf %79, %80 : vector<256x1xf32>
    %82 = vector.extract_strided_slice %78 {offsets = [17, 0], sizes = [256, 1], strides = [1, 1]} : vector<289x1xf32> to vector<256x1xf32>
    %83 = vector.extract_strided_slice %78 {offsets = [18, 0], sizes = [256, 1], strides = [1, 1]} : vector<289x1xf32> to vector<256x1xf32>
    %84 = arith.maximumf %82, %83 : vector<256x1xf32>
    %85 = arith.maximumf %81, %84 : vector<256x1xf32>
    %c1_35 = arith.constant 1 : index
    %c0_36 = arith.constant 0 : index
    %c0_37 = arith.constant 0 : index
    %86 = vector.load %arg4[%c1_35, %c0_36, %c0_37] : memref<2x256x64xf32, #tpu.memory_space<vmem>>, vector<1x256x64xf32>
    %87 = vector.shape_cast %86 : vector<1x256x64xf32> to vector<256x64xf32>
    %88 = vector.broadcast %85 : vector<256x1xf32> to vector<256x64xf32>
    %89 = arith.mulf %87, %88 : vector<256x64xf32>
    %cst_38 = arith.constant dense<0.000000e+00> : vector<64xf32>
    %90 = vector.multi_reduction <add>, %89, %cst_38 [0] : vector<256x64xf32> to vector<64xf32>
    %91 = vector.shape_cast %90 : vector<64xf32> to vector<1x64xf32>
    %92 = arith.addf %75, %91 : vector<1x64xf32>
    %cst_39 = arith.constant 0.000000e+00 : f32
    %93 = vector.broadcast %cst_39 : f32 to vector<1x64xf32>
    %94 = arith.maximumf %92, %93 : vector<1x64xf32>
    %c0_40 = arith.constant 0 : index
    %c0_41 = arith.constant 0 : index
    %95 = vector.load %arg6[%c0_40, %c0_41] : memref<64x4xf32, #tpu.memory_space<vmem>>, vector<64x4xf32>
    %cst_42 = arith.constant dense<0.000000e+00> : vector<1x4xf32>
    %96 = tpu.matmul %94, %95, %cst_42 {dimension_numbers = #tpu.dot_dimension_numbers<[1], [0], [0], [1], [0, 0, 1, 1], [], []>} : vector<1x64xf32>, vector<64x4xf32>, vector<1x4xf32> -> vector<1x4xf32>
    %c0_43 = arith.constant 0 : index
    %c0_44 = arith.constant 0 : index
    %97 = vector.load %arg7[%c0_43, %c0_44] : memref<1x4xf32, #tpu.memory_space<vmem>>, vector<1x4xf32>
    %98 = arith.addf %96, %97 : vector<1x4xf32>
    %99 = tpu.concatenate %49, %98 in 0 : vector<1x4xf32>, vector<1x4xf32> -> vector<2x4xf32>
    %c0_45 = arith.constant 0 : index
    %c0_46 = arith.constant 0 : index
    %100 = vector.load %arg8[%c0_45, %c0_46] : memref<2x4xf32, #tpu.memory_space<vmem>>, vector<2x4xf32>
    tpu.vector_store %arg8[%c0_45, %c0_46], %99 {strides = array<i32>} : memref<2x4xf32, #tpu.memory_space<vmem>>, vector<2x4xf32>,
    return
  }
  func.func @transform_0(%arg0: i32) -> (i32, i32, i32) {
    %c0_i32 = arith.constant 0 : i32
    %c0_i32_0 = arith.constant 0 : i32
    %c0_i32_1 = arith.constant 0 : i32
    %c0_i32_2 = arith.constant 0 : i32
    return %c0_i32, %c0_i32_0, %c0_i32_1 : i32, i32, i32
  }
  func.func @transform_1(%arg0: i32) -> (i32, i32) {
    %c0_i32 = arith.constant 0 : i32
    %c0_i32_0 = arith.constant 0 : i32
    %c0_i32_1 = arith.constant 0 : i32
    return %c0_i32, %c0_i32_0 : i32, i32
  }
  func.func @transform_2(%arg0: i32) -> (i32, i32) {
    %c0_i32 = arith.constant 0 : i32
    %c0_i32_0 = arith.constant 0 : i32
    %c0_i32_1 = arith.constant 0 : i32
    return %c0_i32, %c0_i32_0 : i32, i32
  }
  func.func @transform_3(%arg0: i32) -> (i32, i32, i32) {
    %c0_i32 = arith.constant 0 : i32
    %c0_i32_0 = arith.constant 0 : i32
    %c0_i32_1 = arith.constant 0 : i32
    %c0_i32_2 = arith.constant 0 : i32
    return %c0_i32, %c0_i32_0, %c0_i32_1 : i32, i32, i32
  }
  func.func @transform_4(%arg0: i32) -> (i32, i32) {
    %c0_i32 = arith.constant 0 : i32
    %c0_i32_0 = arith.constant 0 : i32
    %c0_i32_1 = arith.constant 0 : i32
    return %c0_i32, %c0_i32_0 : i32, i32
  }
  func.func @transform_5(%arg0: i32) -> (i32, i32) {
    %c0_i32 = arith.constant 0 : i32
    %c0_i32_0 = arith.constant 0 : i32
    %c0_i32_1 = arith.constant 0 : i32
    return %c0_i32, %c0_i32_0 : i32, i32
  }
  func.func @transform_6(%arg0: i32) -> (i32, i32) {
    %c0_i32 = arith.constant 0 : i32
    %c0_i32_0 = arith.constant 0 : i32
    %c0_i32_1 = arith.constant 0 : i32
    return %c0_i32, %c0_i32_0 : i32, i32
  }
  func.func @transform_7(%arg0: i32) -> (i32, i32) {
    %c0_i32 = arith.constant 0 : i32
    %c0_i32_0 = arith.constant 0 : i32
    %c0_i32_1 = arith.constant 0 : i32
    return %c0_i32, %c0_i32_0 : i32, i32
  }
}

</mosaic_0001>

<llo_original>
// kernel: dqn_forward.2
$region0: #{dqn_forward.2}
  #allocation0 [shape = 'u32[]', space=smem, size = 0x4, offset = 0x4, fixed_abs, tag = 'smem constant byte address 0x4 - core index']
  #allocation1 [shape = 'u32[72,128]{1,0:T(1,128)}', space=vmem, size = 0x9000, scoped, tag = 'internal scratch']
  %s0 = inlined_call_operand.vmem [shape: bf16[2,2,49,49,512], index: 0, kind: input, shape index: {}]
  %s1 = inlined_call_operand.vmem [shape: bf16[512,6], index: 1, kind: input, shape index: {}]
  %s2 = inlined_call_operand.vmem [shape: f32[1,6], index: 2, kind: input, shape index: {}]
  %s3 = inlined_call_operand.vmem [shape: f32[24,48], index: 3, kind: input, shape index: {}]
  %s4 = inlined_call_operand.vmem [shape: f32[2,24,24,6], index: 4, kind: output, shape index: {}]
  %s5 = sld [smem:[#allocation0]]
  $region79: #{dqn_forward.2} parent=0
    _
  %s7 = ssub.s32 1, %s5
  %s8 = scalar_select 0, %s7, %s5
  $region1: #{dqn_forward.2} parent=0
    #allocation2 [shape = 'u8[1835008]{0}', space=vmem, size = 0x1c0000, scoped, tag = 'input window, operand 0']
    loop: start=0, step=1, limit=14
    $region2: #{dqn_forward.2} parent=1 // loop_pre_header
      _
    $region3: #{dqn_forward.2} parent=1 // loop_header
      %s10 = sphi 0, %s14
      %p11 = scmp.ge.s32.totalorder %s10, 14
      %s17 = sphi 0, %s29
      %s18 = sphi 0, %s25
      %s19 = sphi 0, %s17
      %s20 = sphi 0, %s18
      %s21 = sphi 0, %s19
      %s22 = sphi 0, %s20
      %s34 = sphi 0, %s36
      %s37 = sphi 0, %s34
      %s38 = sphi 0, %s37
      %s54 = sphi 0, %s38
      %s58 = sphi 0, %s58
      %s60 = sphi 0, %s58
      %s61 = sphi 0, %s60
      %s75 = sphi 0, %s61
      %s79 = sphi 0, %s79
      %s81 = sphi 0, %s79
      %s82 = sphi 0, %s81
      %s96 = sphi 0, %s82
      %s100 = sphi 0, %s100
      %s102 = sphi 0, %s100
      %s103 = sphi 0, %s102
      %s117 = sphi 0, %s103
      %s125 = sphi 0, %s127
      %s128 = sphi 0, %s125
      %s129 = sphi 0, %s128
      %s145 = sphi 0, %s129
    $region4: #{dqn_forward.2} parent=1 // loop_header_branch
      %13 = sbr.rel (%p11) target = $region8
    $region5: #{dqn_forward.2} parent=1 // loop_body
      %s15 = ssub.s32 %s10, 1
      %s16 = ssub.s32 %s10, 2
      %s23 = sadd.s32 1, %s18
      %p24 = scmp.ge.s32.totalorder %s23, 6
      %s25 = scalar_select %p24, 0, %s23
      %s26 = sadd.s32 1, %s17
      %s27 = scalar_select %p24, %s26, %s17
      %p28 = scmp.ge.s32.totalorder %s27, 2
      %s29 = scalar_select %p28, 0, %s27
      %s30 = ssub.s32 %s17, %s29
      %s31 = ssub.s32 %s18, %s25
      %s32 = sor.u32 %s30, %s31
      %p33 = scmp.eq.s32.totalorder %s32, 0
      %s35 = sadd.s32 %s34, 1
      %s36 = scalar_select %p33, %s34, %s35
      %p39 = pneg %p33
      %p40 = scmp.eq.s32.totalorder %s10, 11
      %p41 = por %p39, %p40
      %p42 = scmp.ne.s32.totalorder %s34, %s37
      %p43 = scmp.eq.s32.totalorder %s10, 0
      %p44 = por %p42, %p43
      %p45 = scmp.ne.s32.totalorder %s34, %s37
      %p46 = scmp.eq.s32.totalorder %s15, 11
      %p47 = por %p45, %p46
      %p48 = scmp.ne.s32.totalorder %s37, %s38
      %p49 = scmp.eq.s32.totalorder %s15, 0
      %p50 = por %p48, %p49
      %p51 = scmp.ne.s32.totalorder %s37, %s38
      %p52 = scmp.eq.s32.totalorder %s16, 11
      %p53 = por %p51, %p52
      %p55 = scmp.ne.s32.totalorder %s38, %s54
      %p56 = scmp.eq.s32.totalorder %s16, 0
      %p57 = por %p55, %p56
      %s59 = sadd.s32 %s58, 1
      %p62 = scmp.eq.s32.totalorder %s10, 11
      %p63 = scmp.ne.s32.totalorder %s58, %s60
      %p64 = scmp.eq.s32.totalorder %s10, 0
      %p65 = por %p63, %p64
      %p66 = scmp.ne.s32.totalorder %s58, %s60
      %p67 = scmp.eq.s32.totalorder %s15, 11
      %p68 = por %p66, %p67
      %p69 = scmp.ne.s32.totalorder %s60, %s61
      %p70 = scmp.eq.s32.totalorder %s15, 0
      %p71 = por %p69, %p70
      %p72 = scmp.ne.s32.totalorder %s60, %s61
      %p73 = scmp.eq.s32.totalorder %s16, 11
      %p74 = por %p72, %p73
      %p76 = scmp.ne.s32.totalorder %s61, %s75
      %p77 = scmp.eq.s32.totalorder %s16, 0
      %p78 = por %p76, %p77
      %s80 = sadd.s32 %s79, 1
      %p83 = scmp.eq.s32.totalorder %s10, 11
      %p84 = scmp.ne.s32.totalorder %s79, %s81
      %p85 = scmp.eq.s32.totalorder %s10, 0
      %p86 = por %p84, %p85
      %p87 = scmp.ne.s32.totalorder %s79, %s81
      %p88 = scmp.eq.s32.totalorder %s15, 11
      %p89 = por %p87, %p88
      %p90 = scmp.ne.s32.totalorder %s81, %s82
      %p91 = scmp.eq.s32.totalorder %s15, 0
      %p92 = por %p90, %p91
      %p93 = scmp.ne.s32.totalorder %s81, %s82
      %p94 = scmp.eq.s32.totalorder %s16, 11
      %p95 = por %p93, %p94
      %p97 = scmp.ne.s32.totalorder %s82, %s96
      %p98 = scmp.eq.s32.totalorder %s16, 0
      %p99 = por %p97, %p98
      %s101 = sadd.s32 %s100, 1
      %p104 = scmp.eq.s32.totalorder %s10, 11
      %p105 = scmp.ne.s32.totalorder %s100, %s102
      %p106 = scmp.eq.s32.totalorder %s10, 0
      %p107 = por %p105, %p106
      %p108 = scmp.ne.s32.totalorder %s100, %s102
      %p109 = scmp.eq.s32.totalorder %s15, 11
      %p110 = por %p108, %p109
      %p111 = scmp.ne.s32.totalorder %s102, %s103
      %p112 = scmp.eq.s32.totalorder %s15, 0
      %p113 = por %p111, %p112
      %p114 = scmp.ne.s32.totalorder %s102, %s103
      %p115 = scmp.eq.s32.totalorder %s16, 11
      %p116 = por %p114, %p115
      %p118 = scmp.ne.s32.totalorder %s103, %s117
      %p119 = scmp.eq.s32.totalorder %s16, 0
      %p120 = por %p118, %p119
      %s121 = ssub.s32 %s17, %s29
      %s122 = ssub.s32 %s18, %s25
      %s123 = sor.u32 %s121, %s122
      %p124 = scmp.eq.s32.totalorder %s123, 0
      %s126 = sadd.s32 %s125, 1
      %s127 = scalar_select %p124, %s125, %s126
      %p130 = pneg %p124
      %p131 = scmp.eq.s32.totalorder %s10, 11
      %p132 = por %p130, %p131
      %p133 = scmp.ne.s32.totalorder %s125, %s128
      %p134 = scmp.eq.s32.totalorder %s10, 0
      %p135 = por %p133, %p134
      %p136 = scmp.ne.s32.totalorder %s125, %s128
      %p137 = scmp.eq.s32.totalorder %s15, 11
      %p138 = por %p136, %p137
      %p139 = scmp.ne.s32.totalorder %s128, %s129
      %p140 = scmp.eq.s32.totalorder %s15, 0
      %p141 = por %p139, %p140
      %p142 = scmp.ne.s32.totalorder %s128, %s129
      %p143 = scmp.eq.s32.totalorder %s16, 11
      %p144 = por %p142, %p143
      %p146 = scmp.ne.s32.totalorder %s129, %s145
      %p147 = scmp.eq.s32.totalorder %s16, 0
      %p148 = por %p146, %p147
      %p149 = scmp.le.s32.totalorder 1, %s10
      %p150 = scmp.lt.s32.totalorder %s10, 13
      %p151 = pnand %p149, %p150
      %p152 = pneg %p151
      // Predicated region
      $region9: #{dqn_forward.2} parent=5 // pred_check
        _
      $region10: #{dqn_forward.2} parent=5 // pred_check_branch
        %154 = sbr.rel (%p151) target = $region12
      $region11: #{dqn_forward.2} parent=5 // pred_region
        %s155 = ssub.s32 %s10, 1
        // Predicated region
        $region13: #{dqn_forward.2} parent=11 // pred_check
          %p156 = pneg %p71
        $region14: #{dqn_forward.2} parent=11 // pred_check_branch
          %158 = sbr.rel (%p156) target = $region16
        $region15: #{dqn_forward.2} parent=11 // pred_region
          _
        $region16: #{dqn_forward.2} parent=11 // pred_fallthru
          _
        // Predicated region
        $region17: #{dqn_forward.2} parent=11 // pred_check
          %p159 = pneg %p92
        $region18: #{dqn_forward.2} parent=11 // pred_check_branch
          %161 = sbr.rel (%p159) target = $region20
        $region19: #{dqn_forward.2} parent=11 // pred_region
          _
        $region20: #{dqn_forward.2} parent=11 // pred_fallthru
          _
        // Predicated region
        $region21: #{dqn_forward.2} parent=11 // pred_check
          %p162 = pneg %p113
        $region22: #{dqn_forward.2} parent=11 // pred_check_branch
          %164 = sbr.rel (%p162) target = $region24
        $region23: #{dqn_forward.2} parent=11 // pred_region
          _
        $region24: #{dqn_forward.2} parent=11 // pred_fallthru
          _
      $region12: #{dqn_forward.2} parent=5 // pred_fallthru
        _
      %p165 = scmp.lt.s32.totalorder %s10, 12
      // Predicated region
      $region25: #{dqn_forward.2} parent=5 // pred_check
        %p166 = pneg %p165
      $region26: #{dqn_forward.2} parent=5 // pred_check_branch
        %168 = sbr.rel (%p166) target = $region28
      $region27: #{dqn_forward.2} parent=5 // pred_region
        // Predicated region
        $region29: #{dqn_forward.2} parent=27 // pred_check
          %p169 = pneg %p44
        $region30: #{dqn_forward.2} parent=27 // pred_check_branch
          %171 = sbr.rel (%p169) target = $region32
        $region31: #{dqn_forward.2} parent=27 // pred_region
          %s172 = sand.u32 %s34, 1
          %s173 = sand.u32 %s34, 1
          %s174 = smul.addr %s173, 1792
          %s175 = scalar_lea.vmem [#allocation2], %s174
          %s176 = smul.u32 8, %s18
          %s177 = ssub.s32 49, %s176
          %p178 = scmp.lt.s32.totalorder %s177, 8
          %s179 = scalar_select %p178, %s177, 8
          %s180 = smul.u32 8, %s179
          %s181 = smul.u32 %s180, 7
          %s182 = smul.u32 %s181, 4
          %p183 = scmp.ne.s32.totalorder 0, %s182
          %s184 = smul.addr %s176, 28
          %s185 = smul.addr %s17, 2744
          %s186 = sadd.s32 %s184, %s185
          %s187 = smul.addr %s186, 4
          %s188 = scalar_lea.vmem %s0, %s187
          %s189 = smul.u32 %s179, 7
          // Predicated region
          $region33: #{dqn_forward.2} parent=31 // pred_check
            %p190 = pneg %p183
          $region34: #{dqn_forward.2} parent=31 // pred_check_branch
            %192 = sbr.rel (%p190) target = $region36
          $region35: #{dqn_forward.2} parent=31 // pred_region
            // Predicated region
            $region37: #{dqn_forward.2} parent=35 // pred_check
              _
            $region38: #{dqn_forward.2} parent=35 // pred_check_branch
              %194 = sbr.rel (0) target = $region40
            $region39: #{dqn_forward.2} parent=35 // pred_region
              %s195 = sshrl.u32 %s189, 3
              // While loop
              $region41: #{dqn_forward.2} parent=39 // loop_pre_header
                _
              $region42: #{dqn_forward.2} parent=39 // loop_header
                %s197 = sphi 0, %s199
                %p198 = scmp.ge.s32.totalorder %s197, %s195
                %s202 = sphi 0, %s271
                %s203 = sphi %s188, %s274
                %s204 = sphi %s175, %s275
              $region43: #{dqn_forward.2} parent=39 // loop_header_branch
                %201 = sbr.rel (%p198) target = $region47
              $region44: #{dqn_forward.2} parent=39 // loop_body
                %v205 = vld [vmem:[%s203] sm:$0xff]
                %206 = vst [vmem:[%s204] sm:$0xff] %v205
                %v207 = vld [vmem:[%s203 + $0x10] sm:$0xff]
                %208 = vst [vmem:[%s204 + $0x10] sm:$0xff] %v207
                %v209 = vld [vmem:[%s203 + $0x20] sm:$0xff]
                %210 = vst [vmem:[%s204 + $0x20] sm:$0xff] %v209
                %v211 = vld [vmem:[%s203 + $0x30] sm:$0xff]
                %212 = vst [vmem:[%s204 + $0x30] sm:$0xff] %v211
                %v213 = vld [vmem:[%s203 + $0x40] sm:$0xff]
                %214 = vst [vmem:[%s204 + $0x40] sm:$0xff] %v213
                %v215 = vld [vmem:[%s203 + $0x50] sm:$0xff]
                %216 = vst [vmem:[%s204 + $0x50] sm:$0xff] %v215
                %v217 = vld [vmem:[%s203 + $0x60] sm:$0xff]
                %218 = vst [vmem:[%s204 + $0x60] sm:$0xff] %v217
                %v219 = vld [vmem:[%s203 + $0x70] sm:$0xff]
                %220 = vst [vmem:[%s204 + $0x70] sm:$0xff] %v219
                %v221 = vld [vmem:[%s203 + $0x8] sm:$0xff]
                %222 = vst [vmem:[%s204 + $0x8] sm:$0xff] %v221
                %v223 = vld [vmem:[%s203 + $0x18] sm:$0xff]
                %224 = vst [vmem:[%s204 + $0x18] sm:$0xff] %v223
                %v225 = vld [vmem:[%s203 + $0x28] sm:$0xff]
                %226 = vst [vmem:[%s204 + $0x28] sm:$0xff] %v225
                %v227 = vld [vmem:[%s203 + $0x38] sm:$0xff]
                %228 = vst [vmem:[%s204 + $0x38] sm:$0xff] %v227
                %v229 = vld [vmem:[%s203 + $0x48] sm:$0xff]
                %230 = vst [vmem:[%s204 + $0x48] sm:$0xff] %v229
                %v231 = vld [vmem:[%s203 + $0x58] sm:$0xff]
                %232 = vst [vmem:[%s204 + $0x58] sm:$0xff] %v231
                %v233 = vld [vmem:[%s203 + $0x68] sm:$0xff]
                %234 = vst [vmem:[%s204 + $0x68] sm:$0xff] %v233
                %v235 = vld [vmem:[%s203 + $0x78] sm:$0xff]
                %236 = vst [vmem:[%s204 + $0x78] sm:$0xff] %v235
                %v237 = vld [vmem:[%s203 + $0x1570] sm:$0xff]
                %238 = vst [vmem:[%s204 + $0x380] sm:$0xff] %v237
                %v239 = vld [vmem:[%s203 + $0x1580] sm:$0xff]
                %240 = vst [vmem:[%s204 + $0x390] sm:$0xff] %v239
                %v241 = vld [vmem:[%s203 + $0x1590] sm:$0xff]
                %242 = vst [vmem:[%s204 + $0x3a0] sm:$0xff] %v241
                %v243 = vld [vmem:[%s203 + $0x15a0] sm:$0xff]
                %244 = vst [vmem:[%s204 + $0x3b0] sm:$0xff] %v243
                %v245 = vld [vmem:[%s203 + $0x15b0] sm:$0xff]
                %246 = vst [vmem:[%s204 + $0x3c0] sm:$0xff] %v245
                %v247 = vld [vmem:[%s203 + $0x15c0] sm:$0xff]
                %248 = vst [vmem:[%s204 + $0x3d0] sm:$0xff] %v247
                %v249 = vld [vmem:[%s203 + $0x15d0] sm:$0xff]
                %250 = vst [vmem:[%s204 + $0x3e0] sm:$0xff] %v249
                %v251 = vld [vmem:[%s203 + $0x15e0] sm:$0xff]
                %252 = vst [vmem:[%s204 + $0x3f0] sm:$0xff] %v251
                %v253 = vld [vmem:[%s203 + $0x1578] sm:$0xff]
                %254 = vst [vmem:[%s204 + $0x388] sm:$0xff] %v253
                %v255 = vld [vmem:[%s203 + $0x1588] sm:$0xff]
                %256 = vst [vmem:[%s204 + $0x398] sm:$0xff] %v255
                %v257 = vld [vmem:[%s203 + $0x1598] sm:$0xff]
                %258 = vst [vmem:[%s204 + $0x3a8] sm:$0xff] %v257
                %v259 = vld [vmem:[%s203 + $0x15a8] sm:$0xff]
                %260 = vst [vmem:[%s204 + $0x3b8] sm:$0xff] %v259
                %v261 = vld [vmem:[%s203 + $0x15b8] sm:$0xff]
                %262 = vst [vmem:[%s204 + $0x3c8] sm:$0xff] %v261
                %v263 = vld [vmem:[%s203 + $0x15c8] sm:$0xff]
                %264 = vst [vmem:[%s204 + $0x3d8] sm:$0xff] %v263
                %v265 = vld [vmem:[%s203 + $0x15d8] sm:$0xff]
                %266 = vst [vmem:[%s204 + $0x3e8] sm:$0xff] %v265
                %v267 = vld [vmem:[%s203 + $0x15e8] sm:$0xff]
                %268 = vst [vmem:[%s204 + $0x3f8] sm:$0xff] %v267
                %s269 = sadd.s32 1, %s202
                %p270 = scmp.ge.s32.totalorder %s269, %s195
                %s271 = scalar_select %p270, 0, %s269
                %s272 = smul.u32 %s271, 128
                %s273 = smul.u32 %s271, 128
                %s274 = scalar_lea.vmem %s188, %s272
                %s275 = scalar_lea.vmem %s175, %s273 [#allocation2]
              $region45: #{dqn_forward.2} parent=39 // loop_footer
                %s199 = sadd.s32 %s197, 1
              $region46: #{dqn_forward.2} parent=39 // loop_footer_branch
                %196 = sbr.rel target = $region42
              $region47: #{dqn_forward.2} parent=39 // loop_exit
                _
              %s276 = sshrl.u32 %s189, 3
              %s277 = sand.u32 %s189, 7
              %s278 = smul.u32 %s276, 8
              %s279 = smul.u32 16, %s278
              %s280 = scalar_lea.vmem %s188, %s279
              %s281 = smul.u32 16, %s278
              %s282 = scalar_lea.vmem %s175, %s281 [#allocation2]
              // While loop
              $region48: #{dqn_forward.2} parent=39 // loop_pre_header
                _
              $region49: #{dqn_forward.2} parent=39 // loop_header
                %s284 = sphi 0, %s286
                %p285 = scmp.ge.s32.totalorder %s284, %s277
                %s289 = sphi 0, %s302
                %s290 = sphi %s280, %s305
                %s291 = sphi %s282, %s306
              $region50: #{dqn_forward.2} parent=39 // loop_header_branch
                %288 = sbr.rel (%p285) target = $region54
              $region51: #{dqn_forward.2} parent=39 // loop_body
                %v292 = vld [vmem:[%s290] sm:$0xff]
                %293 = vst [vmem:[%s291] sm:$0xff] %v292
                %v294 = vld [vmem:[%s290 + $0x8] sm:$0xff]
                %295 = vst [vmem:[%s291 + $0x8] sm:$0xff] %v294
                %v296 = vld [vmem:[%s290 + $0x1570] sm:$0xff]
                %297 = vst [vmem:[%s291 + $0x380] sm:$0xff] %v296
                %v298 = vld [vmem:[%s290 + $0x1578] sm:$0xff]
                %299 = vst [vmem:[%s291 + $0x388] sm:$0xff] %v298
                %s300 = sadd.s32 1, %s289
                %p301 = scmp.ge.s32.totalorder %s300, %s277
                %s302 = scalar_select %p301, 0, %s300
                %s303 = smul.u32 %s302, 16
                %s304 = smul.u32 %s302, 16
                %s305 = scalar_lea.vmem %s280, %s303
                %s306 = scalar_lea.vmem %s282, %s304 [#allocation2]
              $region52: #{dqn_forward.2} parent=39 // loop_footer
                %s286 = sadd.s32 %s284, 1
              $region53: #{dqn_forward.2} parent=39 // loop_footer_branch
                %283 = sbr.rel target = $region49
              $region54: #{dqn_forward.2} parent=39 // loop_exit
                _
            $region40: #{dqn_forward.2} parent=35 // pred_fallthru
              _
            // Predicated region
            $region55: #{dqn_forward.2} parent=35 // pred_check
              _
            $region56: #{dqn_forward.2} parent=35 // pred_check_branch
              %308 = sbr.rel target = $region58
            $region57: #{dqn_forward.2} parent=35 // pred_region
              _
            $region58: #{dqn_forward.2} parent=35 // pred_fallthru
              _
          $region36: #{dqn_forward.2} parent=31 // pred_fallthru
            _
          %309 = vnop
        $region32: #{dqn_forward.2} parent=27 // pred_fallthru
          _
      $region28: #{dqn_forward.2} parent=5 // pred_fallthru
        _
      %p310 = scmp.le.s32.totalorder 1, %s10
      %p311 = scmp.lt.s32.totalorder %s10, 13
      %p312 = pnand %p310, %p311
      %p313 = pneg %p312
      // Predicated region
      $region59: #{dqn_forward.2} parent=5 // pred_check
        _
      $region60: #{dqn_forward.2} parent=5 // pred_check_branch
        %315 = sbr.rel (%p312) target = $region62
      $region61: #{dqn_forward.2} parent=5 // pred_region
        %s316 = ssub.s32 %s10, 1
        %s317 = sand.u32 %s37, 1
        %s318 = sand.u32 %s37, 1
        %s319 = smul.addr %s318, 1792
        %s320 = scalar_lea.vmem [#allocation2], %s319
        // Predicated region
        $region63: #{dqn_forward.2} parent=61 // pred_check
          %p321 = pneg %p50
        $region64: #{dqn_forward.2} parent=61 // pred_check_branch
          %323 = sbr.rel (%p321) target = $region66
        $region65: #{dqn_forward.2} parent=61 // pred_region
          _
        $region66: #{dqn_forward.2} parent=61 // pred_fallthru
          _
        %s324 = sand.u32 %s37, 1
        %s325 = sand.u32 %s37, 1
        %s326 = smul.addr %s325, 1792
        %s327 = scalar_lea.vmem [#allocation2], %s326
        %p328 = pneg %p50
        %p329 = pneg %p47
        %p330 = pneg %p71
        %p331 = pneg %p68
        %p332 = pneg %p92
        %p333 = pneg %p89
        %p334 = pneg %p113
        %p335 = pneg %p110
        %p336 = pneg %p141
        %p337 = pneg %p138
        %s338 = smul.u32 4, %s20
        %p339 = scmp.lt.s32.totalorder %s19, 1
        %s340 = scalar_select %p339, %s19, 1
        %p341 = scmp.lt.s32.totalorder %s338, 23
        %s342 = scalar_select %p341, %s338, 23
        %s343 = smul.addr %s342, 3
        %s344 = smul.addr %s340, 72
        %s345 = sadd.s32 %s343, %s344
        %s346 = smul.addr %s345, 8
        %s347 = scalar_lea.vmem %s4, %s346
        %s348 = smul.u32 8, %s20
        %s349 = ssub.s32 49, %s348
        %p350 = scmp.lt.s32.totalorder %s349, 8
        %s351 = scalar_select %p350, %s349, 8
        %s352 = smul.u32 8, %s351
        %s353 = smul.u32 %s352, 7
        %s354 = smul.u32 %s353, 4
        %s355 = smul.u32 4, %s20
        %p356 = scmp.lt.s32.totalorder %s19, 1
        %s357 = scalar_select %p356, %s19, 1
        %p358 = scmp.lt.s32.totalorder %s355, 23
        %s359 = scalar_select %p358, %s355, 23
        %s360 = smul.addr %s359, 3
        %s361 = smul.addr %s357, 72
        %s362 = sadd.s32 %s360, %s361
        %s363 = smul.addr %s362, 8
        %s364 = scalar_lea.vmem %s4, %s363
        %s365 = smul.u32 4, %s20
        %v366 = vld [vmem:[%s1] sm:$0xf]
        %v367 = vld [vmem:[%s1 + $0x4] sm:$0xf]
        %v368 = vld [vmem:[%s1 + $0x8] sm:$0xf]
        %v369 = vld [vmem:[%s1 + $0xc] sm:$0xf]
        %v370 = vld [vmem:[%s1 + $0x10] sm:$0xf]
        %v371 = vld [vmem:[%s1 + $0x14] sm:$0xf]
        %v372 = vld [vmem:[%s1 + $0x18] sm:$0xf]
        %v373 = vld [vmem:[%s1 + $0x1c] sm:$0xf]
        %v374 = vld [vmem:[%s1 + $0x20] sm:$0xf]
        %v375 = vld [vmem:[%s1 + $0x24] sm:$0xf]
        %v376 = vld [vmem:[%s1 + $0x28] sm:$0xf]
        %v377 = vld [vmem:[%s1 + $0x2c] sm:$0xf]
        %v378 = vld [vmem:[%s1 + $0x30] sm:$0xf]
        %v379 = vld [vmem:[%s1 + $0x34] sm:$0xf]
        %v380 = vld [vmem:[%s1 + $0x38] sm:$0xf]
        %v381 = vld [vmem:[%s1 + $0x3c] sm:$0xf]
        %v382 = vld [vmem:[%s1 + $0x40] sm:$0xf]
        %v383 = vld [vmem:[%s1 + $0x44] sm:$0xf]
        %v384 = vld [vmem:[%s1 + $0x48] sm:$0xf]
        %v385 = vld [vmem:[%s1 + $0x4c] sm:$0xf]
        %v386 = vld [vmem:[%s1 + $0x50] sm:$0xf]
        %v387 = vld [vmem:[%s1 + $0x54] sm:$0xf]
        %v388 = vld [vmem:[%s1 + $0x58] sm:$0xf]
        %v389 = vld [vmem:[%s1 + $0x5c] sm:$0xf]
        %v390 = vld [vmem:[%s1 + $0x60] sm:$0xf]
        %v391 = vld [vmem:[%s1 + $0x64] sm:$0xf]
        %v392 = vld [vmem:[%s1 + $0x68] sm:$0xf]
        %v393 = vld [vmem:[%s1 + $0x6c] sm:$0xf]
        %v394 = vld [vmem:[%s1 + $0x70] sm:$0xf]
        %v395 = vld [vmem:[%s1 + $0x74] sm:$0xf]
        %v396 = vld [vmem:[%s1 + $0x78] sm:$0xf]
        %v397 = vld [vmem:[%s1 + $0x7c] sm:$0xf]
        %v398 = vld [vmem:[%s1 + $0x80] sm:$0xf]
        %v399 = vld [vmem:[%s1 + $0x84] sm:$0xf]
        %v400 = vld [vmem:[%s1 + $0x88] sm:$0xf]
        %v401 = vld [vmem:[%s1 + $0x8c] sm:$0xf]
        %v402 = vld [vmem:[%s1 + $0x90] sm:$0xf]
        %v403 = vld [vmem:[%s1 + $0x94] sm:$0xf]
        %v404 = vld [vmem:[%s1 + $0x98] sm:$0xf]
        %v405 = vld [vmem:[%s1 + $0x9c] sm:$0xf]
        %v406 = vld [vmem:[%s1 + $0xa0] sm:$0xf]
        %v407 = vld [vmem:[%s1 + $0xa4] sm:$0xf]
        %v408 = vld [vmem:[%s1 + $0xa8] sm:$0xf]
        %v409 = vld [vmem:[%s1 + $0xac] sm:$0xf]
        %v410 = vld [vmem:[%s1 + $0xb0] sm:$0xf]
        %v411 = vld [vmem:[%s1 + $0xb4] sm:$0xf]
        %v412 = vld [vmem:[%s1 + $0xb8] sm:$0xf]
        %v413 = vld [vmem:[%s1 + $0xbc] sm:$0xf]
        %v414 = vld [vmem:[%s1 + $0xc0] sm:$0xf]
        %v415 = vld [vmem:[%s1 + $0xc4] sm:$0xf]
        %v416 = vld [vmem:[%s1 + $0xc8] sm:$0xf]
        %v417 = vld [vmem:[%s1 + $0xcc] sm:$0xf]
        %v418 = vld [vmem:[%s1 + $0xd0] sm:$0xf]
        %v419 = vld [vmem:[%s1 + $0xd4] sm:$0xf]
        %v420 = vld [vmem:[%s1 + $0xd8] sm:$0xf]
        %v421 = vld [vmem:[%s1 + $0xdc] sm:$0xf]
        %v422 = vld [vmem:[%s1 + $0xe0] sm:$0xf]
        %v423 = vld [vmem:[%s1 + $0xe4] sm:$0xf]
        %v424 = vld [vmem:[%s1 + $0xe8] sm:$0xf]
        %v425 = vld [vmem:[%s1 + $0xec] sm:$0xf]
        %v426 = vld [vmem:[%s1 + $0xf0] sm:$0xf]
        %v427 = vld [vmem:[%s1 + $0xf4] sm:$0xf]
        %v428 = vld [vmem:[%s1 + $0xf8] sm:$0xf]
        %v429 = vld [vmem:[%s1 + $0xfc] sm:$0xf]
        %v430 = vld [vmem:[%s2] sm:$0x1]
        %v431 = vld [vmem:[%s3] sm:$0xff]
        %v432 = vld [vmem:[%s3 + $0x8] sm:$0xff]
        %v433 = vld [vmem:[%s3 + $0x10] sm:$0xff]
        %v434 = vld [vmem:[%s320] sm:$0xff]
        %v435 = vld [vmem:[%s320 + $0x8] sm:$0xff]
        %v436 = vld [vmem:[%s320 + $0x10] sm:$0xff]
        %v437 = vld [vmem:[%s320 + $0x18] sm:$0xff]
        %v438 = vld [vmem:[%s320 + $0x20] sm:$0xff]
        %v439 = vld [vmem:[%s320 + $0x28] sm:$0xff]
        %v440 = vld [vmem:[%s320 + $0x30] sm:$0xff]
        %v441 = vld [vmem:[%s320 + $0x38] sm:$0xff]
        %v442 = vld [vmem:[%s320 + $0x40] sm:$0xff]
        %v443 = vld [vmem:[%s320 + $0x48] sm:$0xff]
        %v444 = vld [vmem:[%s320 + $0x50] sm:$0xff]
        %v445 = vld [vmem:[%s320 + $0x58] sm:$0xff]
        %v446 = vld [vmem:[%s320 + $0x60] sm:$0x11]
        %v447 = vld [vmem:[%s320 + $0x68] sm:$0x11]
        %v449 = vperm.slane %v430, 0
        %v465 = vunpack.c.l.b16 %v434
        %v466 = vunpack.c.h.b16 %v434
        %v467 = vunpack.c.l.b16 %v435
        %v468 = vunpack.c.h.b16 %v435
        %v469 = vunpack.c.l.b16 %v436
        %v470 = vunpack.c.h.b16 %v436
        %v471 = vunpack.c.l.b16 %v437
        %v472 = vunpack.c.h.b16 %v437
        %v473 = vunpack.c.l.b16 %v438
        %v474 = vunpack.c.h.b16 %v438
        %v475 = vunpack.c.l.b16 %v439
        %v476 = vunpack.c.h.b16 %v439
        %v477 = vunpack.c.l.b16 %v440
        %v478 = vunpack.c.h.b16 %v440
        %v479 = vunpack.c.l.b16 %v441
        %v480 = vunpack.c.h.b16 %v441
        %v481 = vunpack.c.l.b16 %v442
        %v482 = vunpack.c.h.b16 %v442
        %v483 = vunpack.c.l.b16 %v443
        %v484 = vunpack.c.h.b16 %v443
        %v485 = vunpack.c.l.b16 %v444
        %v486 = vunpack.c.h.b16 %v444
        %v487 = vunpack.c.l.b16 %v445
        %v488 = vunpack.c.h.b16 %v445
        %v489 = vunpack.c.l.b16 %v446
        %v490 = vunpack.c.h.b16 %v446
        %v491 = vunpack.c.l.b16 %v447
        %v492 = vunpack.c.h.b16 %v447
        %v493 = vpack.c.b16 %v469, %v465
        %v494 = vpack.c.b16 %v470, %v466
        %v495 = vpack.c.b16 %v471, %v467
        %v496 = vpack.c.b16 %v472, %v468
        %v497 = vpack.c.b16 %v477, %v473
        %v498 = vpack.c.b16 %v478, %v474
        %v499 = vpack.c.b16 %v479, %v475
        %v500 = vpack.c.b16 %v480, %v476
        %v501 = vpack.c.b16 %v485, %v481
        %v502 = vpack.c.b16 %v486, %v482
        %v503 = vpack.c.b16 %v487, %v483
        %v504 = vpack.c.b16 %v488, %v484
        %v505 = vpack.c.b16 %v489, %v489
        %v506 = vpack.c.b16 %v490, %v490
        %v507 = vpack.c.b16 %v491, %v491
        %v508 = vpack.c.b16 %v492, %v492
        %v589 = vunpack.c.l.b16 %v366
        %v590 = vunpack.c.l.b16 %v367
        %v591 = vunpack.c.l.b16 %v368
        %v592 = vunpack.c.l.b16 %v369
        %v593 = vunpack.c.l.b16 %v370
        %v594 = vunpack.c.l.b16 %v371
        %v595 = vunpack.c.l.b16 %v372
        %v596 = vunpack.c.l.b16 %v373
        %v597 = vunpack.c.l.b16 %v374
        %v598 = vunpack.c.l.b16 %v375
        %v599 = vunpack.c.l.b16 %v376
        %v600 = vunpack.c.l.b16 %v377
        %v601 = vunpack.c.l.b16 %v378
        %v602 = vunpack.c.l.b16 %v379
        %v603 = vunpack.c.l.b16 %v380
        %v604 = vunpack.c.l.b16 %v381
        %v605 = vunpack.c.l.b16 %v382
        %v606 = vunpack.c.l.b16 %v383
        %v607 = vunpack.c.l.b16 %v384
        %v608 = vunpack.c.l.b16 %v385
        %v609 = vunpack.c.l.b16 %v386
        %v610 = vunpack.c.l.b16 %v387
        %v611 = vunpack.c.l.b16 %v388
        %v612 = vunpack.c.l.b16 %v389
        %v613 = vunpack.c.l.b16 %v390
        %v614 = vunpack.c.l.b16 %v391
        %v615 = vunpack.c.l.b16 %v392
        %v616 = vunpack.c.l.b16 %v393
        %v617 = vunpack.c.l.b16 %v394
        %v618 = vunpack.c.l.b16 %v395
        %v619 = vunpack.c.l.b16 %v396
        %v620 = vunpack.c.l.b16 %v397
        %v621 = vunpack.c.l.b16 %v398
        %v622 = vunpack.c.l.b16 %v399
        %v623 = vunpack.c.l.b16 %v400
        %v624 = vunpack.c.l.b16 %v401
        %v625 = vunpack.c.l.b16 %v402
        %v626 = vunpack.c.l.b16 %v403
        %v627 = vunpack.c.l.b16 %v404
        %v628 = vunpack.c.l.b16 %v405
        %v629 = vunpack.c.l.b16 %v406
        %v630 = vunpack.c.l.b16 %v407
        %v631 = vunpack.c.l.b16 %v408
        %v632 = vunpack.c.l.b16 %v409
        %v633 = vunpack.c.l.b16 %v410
        %v634 = vunpack.c.l.b16 %v411
        %v635 = vunpack.c.l.b16 %v412
        %v636 = vunpack.c.l.b16 %v413
        %v637 = vunpack.c.l.b16 %v414
        %v638 = vunpack.c.l.b16 %v415
        %v639 = vunpack.c.l.b16 %v416
        %v640 = vunpack.c.l.b16 %v417
        %v641 = vunpack.c.l.b16 %v418
        %v642 = vunpack.c.l.b16 %v419
        %v643 = vunpack.c.l.b16 %v420
        %v644 = vunpack.c.l.b16 %v421
        %v645 = vunpack.c.l.b16 %v422
        %v646 = vunpack.c.l.b16 %v423
        %v647 = vunpack.c.l.b16 %v424
        %v648 = vunpack.c.l.b16 %v425
        %v649 = vunpack.c.l.b16 %v426
        %v650 = vunpack.c.l.b16 %v427
        %v651 = vunpack.c.l.b16 %v428
        %v652 = vunpack.c.l.b16 %v429
        %v653 = vpack.c.b16 %v590, %v589
        %v654 = vpack.c.b16 %v592, %v591
        %v655 = vpack.c.b16 %v594, %v593
        %v656 = vpack.c.b16 %v596, %v595
        %v657 = vpack.c.b16 %v598, %v597
        %v658 = vpack.c.b16 %v600, %v599
        %v659 = vpack.c.b16 %v602, %v601
        %v660 = vpack.c.b16 %v604, %v603
        %v661 = vpack.c.b16 %v606, %v605
        %v662 = vpack.c.b16 %v608, %v607
        %v663 = vpack.c.b16 %v610, %v609
        %v664 = vpack.c.b16 %v612, %v611
        %v665 = vpack.c.b16 %v614, %v613
        %v666 = vpack.c.b16 %v616, %v615
        %v667 = vpack.c.b16 %v618, %v617
        %v668 = vpack.c.b16 %v620, %v619
        %v669 = vpack.c.b16 %v622, %v621
        %v670 = vpack.c.b16 %v624, %v623
        %v671 = vpack.c.b16 %v626, %v625
        %v672 = vpack.c.b16 %v628, %v627
        %v673 = vpack.c.b16 %v630, %v629
        %v674 = vpack.c.b16 %v632, %v631
        %v675 = vpack.c.b16 %v634, %v633
        %v676 = vpack.c.b16 %v636, %v635
        %v677 = vpack.c.b16 %v638, %v637
        %v678 = vpack.c.b16 %v640, %v639
        %v679 = vpack.c.b16 %v642, %v641
        %v680 = vpack.c.b16 %v644, %v643
        %v681 = vpack.c.b16 %v646, %v645
        %v682 = vpack.c.b16 %v648, %v647
        %v683 = vpack.c.b16 %v650, %v649
        %v684 = vpack.c.b16 %v652, %v651
        %717 = vmatpush.bf16.msra.mxu0 %v660
        %718 = vmatpush.bf16.msra.mxu0 %v659
        %719 = vmatpush.bf16.msra.mxu0 %v658
        %720 = vmatpush.bf16.msra.mxu0 %v657
        %721 = vmatpush.bf16.msra.mxu0 %v656
        %722 = vmatpush.bf16.msra.mxu0 %v655
        %723 = vmatpush.bf16.msra.mxu0 %v654
        %724 = vmatpush.bf16.msra.mxu0 %v653
        %725 = vmatmul.bf16.gmra.mxu0 %v493
        %v726 = vpop.f32.mrf.mxu0
        %v727 = vadd.f32 %v449, %v726
        %v728 = vpop.f32.mrf.mxu0
        %v729 = vadd.f32 %v449, %v728
        %730 = vmatmul.bf16.gmra.mxu0 %v497
        %v731 = vpop.f32.mrf.mxu0
        %v732 = vadd.f32 %v449, %v731
        %v733 = vpop.f32.mrf.mxu0
        %v734 = vadd.f32 %v449, %v733
        %735 = vmatmul.bf16.gmra.mxu0 %v501
        %v736 = vpop.f32.mrf.mxu0
        %v737 = vadd.f32 %v449, %v736
        %v738 = vpop.f32.mrf.mxu0
        %v739 = vadd.f32 %v449, %v738
        %740 = vmatmul.bf16.gmra.mxu0 %v505
        %v741 = vpop.f32.mrf.mxu0
        %v742 = vadd.f32 %v449, %v741
        %v743 = vpop.f32.mrf.mxu0
        %744 = vdwg.mxu0
        %745 = vmatpush.bf16.msra.mxu0 %v668
        %746 = vmatpush.bf16.msra.mxu0 %v667
        %747 = vmatpush.bf16.msra.mxu0 %v666
        %748 = vmatpush.bf16.msra.mxu0 %v665
        %749 = vmatpush.bf16.msra.mxu0 %v664
        %750 = vmatpush.bf16.msra.mxu0 %v663
        %751 = vmatpush.bf16.msra.mxu0 %v662
        %752 = vmatpush.bf16.msra.mxu0 %v661
        %753 = vmatmul.bf16.gmra.mxu0 %v494
        %v754 = vpop.f32.mrf.mxu0
        %v755 = vadd.f32 %v727, %v754
        %v756 = vpop.f32.mrf.mxu0
        %v757 = vadd.f32 %v729, %v756
        %758 = vmatmul.bf16.gmra.mxu0 %v498
        %v759 = vpop.f32.mrf.mxu0
        %v760 = vadd.f32 %v732, %v759
        %v761 = vpop.f32.mrf.mxu0
        %v762 = vadd.f32 %v734, %v761
        %763 = vmatmul.bf16.gmra.mxu0 %v502
        %v764 = vpop.f32.mrf.mxu0
        %v765 = vadd.f32 %v737, %v764
        %v766 = vpop.f32.mrf.mxu0
        %v767 = vadd.f32 %v739, %v766
        %768 = vmatmul.bf16.gmra.mxu0 %v506
        %v769 = vpop.f32.mrf.mxu0
        %v770 = vadd.f32 %v742, %v769
        %v771 = vpop.f32.mrf.mxu0
        %772 = vdwg.mxu0
        %773 = vmatpush.bf16.msra.mxu0 %v676
        %774 = vmatpush.bf16.msra.mxu0 %v675
        %775 = vmatpush.bf16.msra.mxu0 %v674
        %776 = vmatpush.bf16.msra.mxu0 %v673
        %777 = vmatpush.bf16.msra.mxu0 %v672
        %778 = vmatpush.bf16.msra.mxu0 %v671
        %779 = vmatpush.bf16.msra.mxu0 %v670
        %780 = vmatpush.bf16.msra.mxu0 %v669
        %781 = vmatmul.bf16.gmra.mxu0 %v495
        %v782 = vpop.f32.mrf.mxu0
        %v783 = vadd.f32 %v755, %v782
        %v784 = vpop.f32.mrf.mxu0
        %v785 = vadd.f32 %v757, %v784
        %786 = vmatmul.bf16.gmra.mxu0 %v499
        %v787 = vpop.f32.mrf.mxu0
        %v788 = vadd.f32 %v760, %v787
        %v789 = vpop.f32.mrf.mxu0
        %v790 = vadd.f32 %v762, %v789
        %791 = vmatmul.bf16.gmra.mxu0 %v503
        %v792 = vpop.f32.mrf.mxu0
        %v793 = vadd.f32 %v765, %v792
        %v794 = vpop.f32.mrf.mxu0
        %v795 = vadd.f32 %v767, %v794
        %796 = vmatmul.bf16.gmra.mxu0 %v507
        %v797 = vpop.f32.mrf.mxu0
        %v798 = vadd.f32 %v770, %v797
        %v799 = vpop.f32.mrf.mxu0
        %800 = vdwg.mxu0
        %801 = vmatpush.bf16.msra.mxu0 %v684
        %802 = vmatpush.bf16.msra.mxu0 %v683
        %803 = vmatpush.bf16.msra.mxu0 %v682
        %804 = vmatpush.bf16.msra.mxu0 %v681
        %805 = vmatpush.bf16.msra.mxu0 %v680
        %806 = vmatpush.bf16.msra.mxu0 %v679
        %807 = vmatpush.bf16.msra.mxu0 %v678
        %808 = vmatpush.bf16.msra.mxu0 %v677
        %809 = vmatmul.bf16.gmra.mxu0 %v496
        %v810 = vpop.f32.mrf.mxu0
        %v811 = vadd.f32 %v783, %v810
        %v812 = vpop.f32.mrf.mxu0
        %v813 = vadd.f32 %v785, %v812
        %814 = vmatmul.bf16.gmra.mxu0 %v500
        %v815 = vpop.f32.mrf.mxu0
        %v816 = vadd.f32 %v788, %v815
        %v817 = vpop.f32.mrf.mxu0
        %v818 = vadd.f32 %v790, %v817
        %819 = vmatmul.bf16.gmra.mxu0 %v504
        %v820 = vpop.f32.mrf.mxu0
        %v821 = vadd.f32 %v793, %v820
        %v822 = vpop.f32.mrf.mxu0
        %v823 = vadd.f32 %v795, %v822
        %824 = vmatmul.bf16.gmra.mxu0 %v508
        %v825 = vpop.f32.mrf.mxu0
        %v826 = vadd.f32 %v798, %v825
        %v827 = vpop.f32.mrf.mxu0
        %828 = vdwg.mxu0
        %v829 = vmax.f32 %v811, 0.0
        %v830 = vmax.f32 %v813, 0.0
        %v831 = vmax.f32 %v816, 0.0
        %v832 = vmax.f32 %v818, 0.0
        %v833 = vmax.f32 %v821, 0.0
        %v834 = vmax.f32 %v823, 0.0
        %v835 = vmax.f32 %v826, 0.0
        %s836 = scalar_lea.vmem %s320, 112 [#allocation2]
        %v837 = vld [vmem:[%s836] sm:$0xff]
        %v838 = vld [vmem:[%s836 + $0x8] sm:$0xff]
        %v839 = vld [vmem:[%s836 + $0x10] sm:$0xff]
        %v840 = vld [vmem:[%s836 + $0x18] sm:$0xff]
        %v841 = vld [vmem:[%s836 + $0x20] sm:$0xff]
        %v842 = vld [vmem:[%s836 + $0x28] sm:$0xff]
        %v843 = vld [vmem:[%s836 + $0x30] sm:$0xff]
        %v844 = vld [vmem:[%s836 + $0x38] sm:$0xff]
        %v845 = vld [vmem:[%s836 + $0x40] sm:$0xff]
        %v846 = vld [vmem:[%s836 + $0x48] sm:$0xff]
        %v847 = vld [vmem:[%s836 + $0x50] sm:$0xff]
        %v848 = vld [vmem:[%s836 + $0x58] sm:$0xff]
        %v849 = vld [vmem:[%s836 + $0x60] sm:$0x11]
        %v850 = vld [vmem:[%s836 + $0x68] sm:$0x11]
        %v865 = vunpack.c.l.b16 %v837
        %v866 = vunpack.c.h.b16 %v837
        %v867 = vunpack.c.l.b16 %v838
        %v868 = vunpack.c.h.b16 %v838
        %v869 = vunpack.c.l.b16 %v839
        %v870 = vunpack.c.h.b16 %v839
        %v871 = vunpack.c.l.b16 %v840
        %v872 = vunpack.c.h.b16 %v840
        %v873 = vunpack.c.l.b16 %v841
        %v874 = vunpack.c.h.b16 %v841
        %v875 = vunpack.c.l.b16 %v842
        %v876 = vunpack.c.h.b16 %v842
        %v877 = vunpack.c.l.b16 %v843
        %v878 = vunpack.c.h.b16 %v843
        %v879 = vunpack.c.l.b16 %v844
        %v880 = vunpack.c.h.b16 %v844
        %v881 = vunpack.c.l.b16 %v845
        %v882 = vunpack.c.h.b16 %v845
        %v883 = vunpack.c.l.b16 %v846
        %v884 = vunpack.c.h.b16 %v846
        %v885 = vunpack.c.l.b16 %v847
        %v886 = vunpack.c.h.b16 %v847
        %v887 = vunpack.c.l.b16 %v848
        %v888 = vunpack.c.h.b16 %v848
        %v889 = vunpack.c.l.b16 %v849
        %v890 = vunpack.c.h.b16 %v849
        %v891 = vunpack.c.l.b16 %v850
        %v892 = vunpack.c.h.b16 %v850
        %v893 = vpack.c.b16 %v869, %v865
        %v894 = vpack.c.b16 %v870, %v866
        %v895 = vpack.c.b16 %v871, %v867
        %v896 = vpack.c.b16 %v872, %v868
        %v897 = vpack.c.b16 %v877, %v873
        %v898 = vpack.c.b16 %v878, %v874
        %v899 = vpack.c.b16 %v879, %v875
        %v900 = vpack.c.b16 %v880, %v876
        %v901 = vpack.c.b16 %v885, %v881
        %v902 = vpack.c.b16 %v886, %v882
        %v903 = vpack.c.b16 %v887, %v883
        %v904 = vpack.c.b16 %v888, %v884
        %v905 = vpack.c.b16 %v889, %v889
        %v906 = vpack.c.b16 %v890, %v890
        %v907 = vpack.c.b16 %v891, %v891
        %v908 = vpack.c.b16 %v892, %v892
        %925 = vmatpush.bf16.msra.mxu0 %v660
        %926 = vmatpush.bf16.msra.mxu0 %v659
        %927 = vmatpush.bf16.msra.mxu0 %v658
        %928 = vmatpush.bf16.msra.mxu0 %v657
        %929 = vmatpush.bf16.msra.mxu0 %v656
        %930 = vmatpush.bf16.msra.mxu0 %v655
        %931 = vmatpush.bf16.msra.mxu0 %v654
        %932 = vmatpush.bf16.msra.mxu0 %v653
        %933 = vmatmul.bf16.gmra.mxu0 %v893
        %v934 = vpop.f32.mrf.mxu0
        %v935 = vadd.f32 %v449, %v934
        %v936 = vpop.f32.mrf.mxu0
        %v937 = vadd.f32 %v449, %v936
        %938 = vmatmul.bf16.gmra.mxu0 %v897
        %v939 = vpop.f32.mrf.mxu0
        %v940 = vadd.f32 %v449, %v939
        %v941 = vpop.f32.mrf.mxu0
        %v942 = vadd.f32 %v449, %v941
        %943 = vmatmul.bf16.gmra.mxu0 %v901
        %v944 = vpop.f32.mrf.mxu0
        %v945 = vadd.f32 %v449, %v944
        %v946 = vpop.f32.mrf.mxu0
        %v947 = vadd.f32 %v449, %v946
        %948 = vmatmul.bf16.gmra.mxu0 %v905
        %v949 = vpop.f32.mrf.mxu0
        %v950 = vadd.f32 %v449, %v949
        %v951 = vpop.f32.mrf.mxu0
        %952 = vdwg.mxu0
        %953 = vmatpush.bf16.msra.mxu0 %v668
        %954 = vmatpush.bf16.msra.mxu0 %v667
        %955 = vmatpush.bf16.msra.mxu0 %v666
        %956 = vmatpush.bf16.msra.mxu0 %v665
        %957 = vmatpush.bf16.msra.mxu0 %v664
        %958 = vmatpush.bf16.msra.mxu0 %v663
        %959 = vmatpush.bf16.msra.mxu0 %v662
        %960 = vmatpush.bf16.msra.mxu0 %v661
        %961 = vmatmul.bf16.gmra.mxu0 %v894
        %v962 = vpop.f32.mrf.mxu0
        %v963 = vadd.f32 %v935, %v962
        %v964 = vpop.f32.mrf.mxu0
        %v965 = vadd.f32 %v937, %v964
        %966 = vmatmul.bf16.gmra.mxu0 %v898
        %v967 = vpop.f32.mrf.mxu0
        %v968 = vadd.f32 %v940, %v967
        %v969 = vpop.f32.mrf.mxu0
        %v970 = vadd.f32 %v942, %v969
        %971 = vmatmul.bf16.gmra.mxu0 %v902
        %v972 = vpop.f32.mrf.mxu0
        %v973 = vadd.f32 %v945, %v972
        %v974 = vpop.f32.mrf.mxu0
        %v975 = vadd.f32 %v947, %v974
        %976 = vmatmul.bf16.gmra.mxu0 %v906
        %v977 = vpop.f32.mrf.mxu0
        %v978 = vadd.f32 %v950, %v977
        %v979 = vpop.f32.mrf.mxu0
        %980 = vdwg.mxu0
        %981 = vmatpush.bf16.msra.mxu0 %v676
        %982 = vmatpush.bf16.msra.mxu0 %v675
        %983 = vmatpush.bf16.msra.mxu0 %v674
        %984 = vmatpush.bf16.msra.mxu0 %v673
        %985 = vmatpush.bf16.msra.mxu0 %v672
        %986 = vmatpush.bf16.msra.mxu0 %v671
        %987 = vmatpush.bf16.msra.mxu0 %v670
        %988 = vmatpush.bf16.msra.mxu0 %v669
        %989 = vmatmul.bf16.gmra.mxu0 %v895
        %v990 = vpop.f32.mrf.mxu0
        %v991 = vadd.f32 %v963, %v990
        %v992 = vpop.f32.mrf.mxu0
        %v993 = vadd.f32 %v965, %v992
        %994 = vmatmul.bf16.gmra.mxu0 %v899
        %v995 = vpop.f32.mrf.mxu0
        %v996 = vadd.f32 %v968, %v995
        %v997 = vpop.f32.mrf.mxu0
        %v998 = vadd.f32 %v970, %v997
        %999 = vmatmul.bf16.gmra.mxu0 %v903
        %v1000 = vpop.f32.mrf.mxu0
        %v1001 = vadd.f32 %v973, %v1000
        %v1002 = vpop.f32.mrf.mxu0
        %v1003 = vadd.f32 %v975, %v1002
        %1004 = vmatmul.bf16.gmra.mxu0 %v907
        %v1005 = vpop.f32.mrf.mxu0
        %v1006 = vadd.f32 %v978, %v1005
        %v1007 = vpop.f32.mrf.mxu0
        %1008 = vdwg.mxu0
        %1009 = vmatpush.bf16.msra.mxu0 %v684
        %1010 = vmatpush.bf16.msra.mxu0 %v683
        %1011 = vmatpush.bf16.msra.mxu0 %v682
        %1012 = vmatpush.bf16.msra.mxu0 %v681
        %1013 = vmatpush.bf16.msra.mxu0 %v680
        %1014 = vmatpush.bf16.msra.mxu0 %v679
        %1015 = vmatpush.bf16.msra.mxu0 %v678
        %1016 = vmatpush.bf16.msra.mxu0 %v677
        %1017 = vmatmul.bf16.gmra.mxu0 %v896
        %v1018 = vpop.f32.mrf.mxu0
        %v1019 = vadd.f32 %v991, %v1018
        %v1020 = vpop.f32.mrf.mxu0
        %v1021 = vadd.f32 %v993, %v1020
        %1022 = vmatmul.bf16.gmra.mxu0 %v900
        %v1023 = vpop.f32.mrf.mxu0
        %v1024 = vadd.f32 %v996, %v1023
        %v1025 = vpop.f32.mrf.mxu0
        %v1026 = vadd.f32 %v998, %v1025
        %1027 = vmatmul.bf16.gmra.mxu0 %v904
        %v1028 = vpop.f32.mrf.mxu0
        %v1029 = vadd.f32 %v1001, %v1028
        %v1030 = vpop.f32.mrf.mxu0
        %v1031 = vadd.f32 %v1003, %v1030
        %1032 = vmatmul.bf16.gmra.mxu0 %v908
        %v1033 = vpop.f32.mrf.mxu0
        %v1034 = vadd.f32 %v1006, %v1033
        %v1035 = vpop.f32.mrf.mxu0
        %1036 = vdwg.mxu0
        %v1037 = vmax.f32 %v1019, 0.0
        %v1038 = vmax.f32 %v1021, 0.0
        %v1039 = vmax.f32 %v1024, 0.0
        %v1040 = vmax.f32 %v1026, 0.0
        %v1041 = vmax.f32 %v1029, 0.0
        %v1042 = vmax.f32 %v1031, 0.0
        %v1043 = vmax.f32 %v1034, 0.0
        %v1044 = vmax.f32 %v829, %v1037
        %v1045 = vmax.f32 %v830, %v1038
        %v1046 = vmax.f32 %v831, %v1039
        %v1047 = vmax.f32 %v832, %v1040
        %v1048 = vmax.f32 %v833, %v1041
        %v1049 = vmax.f32 %v834, %v1042
        %v1050 = vmax.f32 %v835, %v1043
        %s1051 = scalar_lea.vmem %s320, 896 [#allocation2]
        %v1052 = vld [vmem:[%s1051] sm:$0xff]
        %v1053 = vld [vmem:[%s1051 + $0x8] sm:$0xff]
        %v1054 = vld [vmem:[%s1051 + $0x10] sm:$0xff]
        %v1055 = vld [vmem:[%s1051 + $0x18] sm:$0xff]
        %v1056 = vld [vmem:[%s1051 + $0x20] sm:$0xff]
        %v1057 = vld [vmem:[%s1051 + $0x28] sm:$0xff]
        %v1058 = vld [vmem:[%s1051 + $0x30] sm:$0xff]
        %v1059 = vld [vmem:[%s1051 + $0x38] sm:$0xff]
        %v1060 = vld [vmem:[%s1051 + $0x40] sm:$0xff]
        %v1061 = vld [vmem:[%s1051 + $0x48] sm:$0xff]
        %v1062 = vld [vmem:[%s1051 + $0x50] sm:$0xff]
        %v1063 = vld [vmem:[%s1051 + $0x58] sm:$0xff]
        %v1064 = vld [vmem:[%s1051 + $0x60] sm:$0x11]
        %v1065 = vld [vmem:[%s1051 + $0x68] sm:$0x11]
        %v1080 = vunpack.c.l.b16 %v1052
        %v1081 = vunpack.c.h.b16 %v1052
        %v1082 = vunpack.c.l.b16 %v1053
        %v1083 = vunpack.c.h.b16 %v1053
        %v1084 = vunpack.c.l.b16 %v1054
        %v1085 = vunpack.c.h.b16 %v1054
        %v1086 = vunpack.c.l.b16 %v1055
        %v1087 = vunpack.c.h.b16 %v1055
        %v1088 = vunpack.c.l.b16 %v1056
        %v1089 = vunpack.c.h.b16 %v1056
        %v1090 = vunpack.c.l.b16 %v1057
        %v1091 = vunpack.c.h.b16 %v1057
        %v1092 = vunpack.c.l.b16 %v1058
        %v1093 = vunpack.c.h.b16 %v1058
        %v1094 = vunpack.c.l.b16 %v1059
        %v1095 = vunpack.c.h.b16 %v1059
        %v1096 = vunpack.c.l.b16 %v1060
        %v1097 = vunpack.c.h.b16 %v1060
        %v1098 = vunpack.c.l.b16 %v1061
        %v1099 = vunpack.c.h.b16 %v1061
        %v1100 = vunpack.c.l.b16 %v1062
        %v1101 = vunpack.c.h.b16 %v1062
        %v1102 = vunpack.c.l.b16 %v1063
        %v1103 = vunpack.c.h.b16 %v1063
        %v1104 = vunpack.c.l.b16 %v1064
        %v1105 = vunpack.c.h.b16 %v1064
        %v1106 = vunpack.c.l.b16 %v1065
        %v1107 = vunpack.c.h.b16 %v1065
        %v1108 = vpack.c.b16 %v1084, %v1080
        %v1109 = vpack.c.b16 %v1085, %v1081
        %v1110 = vpack.c.b16 %v1086, %v1082
        %v1111 = vpack.c.b16 %v1087, %v1083
        %v1112 = vpack.c.b16 %v1092, %v1088
        %v1113 = vpack.c.b16 %v1093, %v1089
        %v1114 = vpack.c.b16 %v1094, %v1090
        %v1115 = vpack.c.b16 %v1095, %v1091
        %v1116 = vpack.c.b16 %v1100, %v1096
        %v1117 = vpack.c.b16 %v1101, %v1097
        %v1118 = vpack.c.b16 %v1102, %v1098
        %v1119 = vpack.c.b16 %v1103, %v1099
        %v1120 = vpack.c.b16 %v1104, %v1104
        %v1121 = vpack.c.b16 %v1105, %v1105
        %v1122 = vpack.c.b16 %v1106, %v1106
        %v1123 = vpack.c.b16 %v1107, %v1107
        %1140 = vmatpush.bf16.msra.mxu0 %v660
        %1141 = vmatpush.bf16.msra.mxu0 %v659
        %1142 = vmatpush.bf16.msra.mxu0 %v658
        %1143 = vmatpush.bf16.msra.mxu0 %v657
        %1144 = vmatpush.bf16.msra.mxu0 %v656
        %1145 = vmatpush.bf16.msra.mxu0 %v655
        %1146 = vmatpush.bf16.msra.mxu0 %v654
        %1147 = vmatpush.bf16.msra.mxu0 %v653
        %1148 = vmatmul.bf16.gmra.mxu0 %v1108
        %v1149 = vpop.f32.mrf.mxu0
        %v1150 = vadd.f32 %v449, %v1149
        %v1151 = vpop.f32.mrf.mxu0
        %v1152 = vadd.f32 %v449, %v1151
        %1153 = vmatmul.bf16.gmra.mxu0 %v1112
        %v1154 = vpop.f32.mrf.mxu0
        %v1155 = vadd.f32 %v449, %v1154
        %v1156 = vpop.f32.mrf.mxu0
        %v1157 = vadd.f32 %v449, %v1156
        %1158 = vmatmul.bf16.gmra.mxu0 %v1116
        %v1159 = vpop.f32.mrf.mxu0
        %v1160 = vadd.f32 %v449, %v1159
        %v1161 = vpop.f32.mrf.mxu0
        %v1162 = vadd.f32 %v449, %v1161
        %1163 = vmatmul.bf16.gmra.mxu0 %v1120
        %v1164 = vpop.f32.mrf.mxu0
        %v1165 = vadd.f32 %v449, %v1164
        %v1166 = vpop.f32.mrf.mxu0
        %1167 = vdwg.mxu0
        %1168 = vmatpush.bf16.msra.mxu0 %v668
        %1169 = vmatpush.bf16.msra.mxu0 %v667
        %1170 = vmatpush.bf16.msra.mxu0 %v666
        %1171 = vmatpush.bf16.msra.mxu0 %v665
        %1172 = vmatpush.bf16.msra.mxu0 %v664
        %1173 = vmatpush.bf16.msra.mxu0 %v663
        %1174 = vmatpush.bf16.msra.mxu0 %v662
        %1175 = vmatpush.bf16.msra.mxu0 %v661
        %1176 = vmatmul.bf16.gmra.mxu0 %v1109
        %v1177 = vpop.f32.mrf.mxu0
        %v1178 = vadd.f32 %v1150, %v1177
        %v1179 = vpop.f32.mrf.mxu0
        %v1180 = vadd.f32 %v1152, %v1179
        %1181 = vmatmul.bf16.gmra.mxu0 %v1113
        %v1182 = vpop.f32.mrf.mxu0
        %v1183 = vadd.f32 %v1155, %v1182
        %v1184 = vpop.f32.mrf.mxu0
        %v1185 = vadd.f32 %v1157, %v1184
        %1186 = vmatmul.bf16.gmra.mxu0 %v1117
        %v1187 = vpop.f32.mrf.mxu0
        %v1188 = vadd.f32 %v1160, %v1187
        %v1189 = vpop.f32.mrf.mxu0
        %v1190 = vadd.f32 %v1162, %v1189
        %1191 = vmatmul.bf16.gmra.mxu0 %v1121
        %v1192 = vpop.f32.mrf.mxu0
        %v1193 = vadd.f32 %v1165, %v1192
        %v1194 = vpop.f32.mrf.mxu0
        %1195 = vdwg.mxu0
        %1196 = vmatpush.bf16.msra.mxu0 %v676
        %1197 = vmatpush.bf16.msra.mxu0 %v675
        %1198 = vmatpush.bf16.msra.mxu0 %v674
        %1199 = vmatpush.bf16.msra.mxu0 %v673
        %1200 = vmatpush.bf16.msra.mxu0 %v672
        %1201 = vmatpush.bf16.msra.mxu0 %v671
        %1202 = vmatpush.bf16.msra.mxu0 %v670
        %1203 = vmatpush.bf16.msra.mxu0 %v669
        %1204 = vmatmul.bf16.gmra.mxu0 %v1110
        %v1205 = vpop.f32.mrf.mxu0
        %v1206 = vadd.f32 %v1178, %v1205
        %v1207 = vpop.f32.mrf.mxu0
        %v1208 = vadd.f32 %v1180, %v1207
        %1209 = vmatmul.bf16.gmra.mxu0 %v1114
        %v1210 = vpop.f32.mrf.mxu0
        %v1211 = vadd.f32 %v1183, %v1210
        %v1212 = vpop.f32.mrf.mxu0
        %v1213 = vadd.f32 %v1185, %v1212
        %1214 = vmatmul.bf16.gmra.mxu0 %v1118
        %v1215 = vpop.f32.mrf.mxu0
        %v1216 = vadd.f32 %v1188, %v1215
        %v1217 = vpop.f32.mrf.mxu0
        %v1218 = vadd.f32 %v1190, %v1217
        %1219 = vmatmul.bf16.gmra.mxu0 %v1122
        %v1220 = vpop.f32.mrf.mxu0
        %v1221 = vadd.f32 %v1193, %v1220
        %v1222 = vpop.f32.mrf.mxu0
        %1223 = vdwg.mxu0
        %1224 = vmatpush.bf16.msra.mxu0 %v684
        %1225 = vmatpush.bf16.msra.mxu0 %v683
        %1226 = vmatpush.bf16.msra.mxu0 %v682
        %1227 = vmatpush.bf16.msra.mxu0 %v681
        %1228 = vmatpush.bf16.msra.mxu0 %v680
        %1229 = vmatpush.bf16.msra.mxu0 %v679
        %1230 = vmatpush.bf16.msra.mxu0 %v678
        %1231 = vmatpush.bf16.msra.mxu0 %v677
        %1232 = vmatmul.bf16.gmra.mxu0 %v1111
        %v1233 = vpop.f32.mrf.mxu0
        %v1234 = vadd.f32 %v1206, %v1233
        %v1235 = vpop.f32.mrf.mxu0
        %v1236 = vadd.f32 %v1208, %v1235
        %1237 = vmatmul.bf16.gmra.mxu0 %v1115
        %v1238 = vpop.f32.mrf.mxu0
        %v1239 = vadd.f32 %v1211, %v1238
        %v1240 = vpop.f32.mrf.mxu0
        %v1241 = vadd.f32 %v1213, %v1240
        %1242 = vmatmul.bf16.gmra.mxu0 %v1119
        %v1243 = vpop.f32.mrf.mxu0
        %v1244 = vadd.f32 %v1216, %v1243
        %v1245 = vpop.f32.mrf.mxu0
        %v1246 = vadd.f32 %v1218, %v1245
        %1247 = vmatmul.bf16.gmra.mxu0 %v1123
        %v1248 = vpop.f32.mrf.mxu0
        %v1249 = vadd.f32 %v1221, %v1248
        %v1250 = vpop.f32.mrf.mxu0
        %1251 = vdwg.mxu0
        %v1252 = vmax.f32 %v1234, 0.0
        %v1253 = vmax.f32 %v1236, 0.0
        %v1254 = vmax.f32 %v1239, 0.0
        %v1255 = vmax.f32 %v1241, 0.0
        %v1256 = vmax.f32 %v1244, 0.0
        %v1257 = vmax.f32 %v1246, 0.0
        %v1258 = vmax.f32 %v1249, 0.0
        %v1259 = vmax.f32 %v1044, %v1252
        %v1260 = vmax.f32 %v1045, %v1253
        %v1261 = vmax.f32 %v1046, %v1254
        %v1262 = vmax.f32 %v1047, %v1255
        %v1263 = vmax.f32 %v1048, %v1256
        %v1264 = vmax.f32 %v1049, %v1257
        %v1265 = vmax.f32 %v1050, %v1258
        %s1266 = scalar_lea.vmem %s320, 1008 [#allocation2]
        %v1267 = vld [vmem:[%s1266] sm:$0xff]
        %v1268 = vld [vmem:[%s1266 + $0x8] sm:$0xff]
        %v1269 = vld [vmem:[%s1266 + $0x10] sm:$0xff]
        %v1270 = vld [vmem:[%s1266 + $0x18] sm:$0xff]
        %v1271 = vld [vmem:[%s1266 + $0x20] sm:$0xff]
        %v1272 = vld [vmem:[%s1266 + $0x28] sm:$0xff]
        %v1273 = vld [vmem:[%s1266 + $0x30] sm:$0xff]
        %v1274 = vld [vmem:[%s1266 + $0x38] sm:$0xff]
        %v1275 = vld [vmem:[%s1266 + $0x40] sm:$0xff]
        %v1276 = vld [vmem:[%s1266 + $0x48] sm:$0xff]
        %v1277 = vld [vmem:[%s1266 + $0x50] sm:$0xff]
        %v1278 = vld [vmem:[%s1266 + $0x58] sm:$0xff]
        %v1279 = vld [vmem:[%s1266 + $0x60] sm:$0x11]
        %v1280 = vld [vmem:[%s1266 + $0x68] sm:$0x11]
        %v1295 = vunpack.c.l.b16 %v1267
        %v1296 = vunpack.c.h.b16 %v1267
        %v1297 = vunpack.c.l.b16 %v1268
        %v1298 = vunpack.c.h.b16 %v1268
        %v1299 = vunpack.c.l.b16 %v1269
        %v1300 = vunpack.c.h.b16 %v1269
        %v1301 = vunpack.c.l.b16 %v1270
        %v1302 = vunpack.c.h.b16 %v1270
        %v1303 = vunpack.c.l.b16 %v1271
        %v1304 = vunpack.c.h.b16 %v1271
        %v1305 = vunpack.c.l.b16 %v1272
        %v1306 = vunpack.c.h.b16 %v1272
        %v1307 = vunpack.c.l.b16 %v1273
        %v1308 = vunpack.c.h.b16 %v1273
        %v1309 = vunpack.c.l.b16 %v1274
        %v1310 = vunpack.c.h.b16 %v1274
        %v1311 = vunpack.c.l.b16 %v1275
        %v1312 = vunpack.c.h.b16 %v1275
        %v1313 = vunpack.c.l.b16 %v1276
        %v1314 = vunpack.c.h.b16 %v1276
        %v1315 = vunpack.c.l.b16 %v1277
        %v1316 = vunpack.c.h.b16 %v1277
        %v1317 = vunpack.c.l.b16 %v1278
        %v1318 = vunpack.c.h.b16 %v1278
        %v1319 = vunpack.c.l.b16 %v1279
        %v1320 = vunpack.c.h.b16 %v1279
        %v1321 = vunpack.c.l.b16 %v1280
        %v1322 = vunpack.c.h.b16 %v1280
        %v1323 = vpack.c.b16 %v1299, %v1295
        %v1324 = vpack.c.b16 %v1300, %v1296
        %v1325 = vpack.c.b16 %v1301, %v1297
        %v1326 = vpack.c.b16 %v1302, %v1298
        %v1327 = vpack.c.b16 %v1307, %v1303
        %v1328 = vpack.c.b16 %v1308, %v1304
        %v1329 = vpack.c.b16 %v1309, %v1305
        %v1330 = vpack.c.b16 %v1310, %v1306
        %v1331 = vpack.c.b16 %v1315, %v1311
        %v1332 = vpack.c.b16 %v1316, %v1312
        %v1333 = vpack.c.b16 %v1317, %v1313
        %v1334 = vpack.c.b16 %v1318, %v1314
        %v1335 = vpack.c.b16 %v1319, %v1319
        %v1336 = vpack.c.b16 %v1320, %v1320
        %v1337 = vpack.c.b16 %v1321, %v1321
        %v1338 = vpack.c.b16 %v1322, %v1322
        %1355 = vmatpush.bf16.msra.mxu0 %v660
        %1356 = vmatpush.bf16.msra.mxu0 %v659
        %1357 = vmatpush.bf16.msra.mxu0 %v658
        %1358 = vmatpush.bf16.msra.mxu0 %v657
        %1359 = vmatpush.bf16.msra.mxu0 %v656
        %1360 = vmatpush.bf16.msra.mxu0 %v655
        %1361 = vmatpush.bf16.msra.mxu0 %v654
        %1362 = vmatpush.bf16.msra.mxu0 %v653
        %1363 = vmatmul.bf16.gmra.mxu0 %v1323
        %v1364 = vpop.f32.mrf.mxu0
        %v1365 = vadd.f32 %v449, %v1364
        %v1366 = vpop.f32.mrf.mxu0
        %v1367 = vadd.f32 %v449, %v1366
        %1368 = vmatmul.bf16.gmra.mxu0 %v1327
        %v1369 = vpop.f32.mrf.mxu0
        %v1370 = vadd.f32 %v449, %v1369
        %v1371 = vpop.f32.mrf.mxu0
        %v1372 = vadd.f32 %v449, %v1371
        %1373 = vmatmul.bf16.gmra.mxu0 %v1331
        %v1374 = vpop.f32.mrf.mxu0
        %v1375 = vadd.f32 %v449, %v1374
        %v1376 = vpop.f32.mrf.mxu0
        %v1377 = vadd.f32 %v449, %v1376
        %1378 = vmatmul.bf16.gmra.mxu0 %v1335
        %v1379 = vpop.f32.mrf.mxu0
        %v1380 = vadd.f32 %v449, %v1379
        %v1381 = vpop.f32.mrf.mxu0
        %1382 = vdwg.mxu0
        %1383 = vmatpush.bf16.msra.mxu0 %v668
        %1384 = vmatpush.bf16.msra.mxu0 %v667
        %1385 = vmatpush.bf16.msra.mxu0 %v666
        %1386 = vmatpush.bf16.msra.mxu0 %v665
        %1387 = vmatpush.bf16.msra.mxu0 %v664
        %1388 = vmatpush.bf16.msra.mxu0 %v663
        %1389 = vmatpush.bf16.msra.mxu0 %v662
        %1390 = vmatpush.bf16.msra.mxu0 %v661
        %1391 = vmatmul.bf16.gmra.mxu0 %v1324
        %v1392 = vpop.f32.mrf.mxu0
        %v1393 = vadd.f32 %v1365, %v1392
        %v1394 = vpop.f32.mrf.mxu0
        %v1395 = vadd.f32 %v1367, %v1394
        %1396 = vmatmul.bf16.gmra.mxu0 %v1328
        %v1397 = vpop.f32.mrf.mxu0
        %v1398 = vadd.f32 %v1370, %v1397
        %v1399 = vpop.f32.mrf.mxu0
        %v1400 = vadd.f32 %v1372, %v1399
        %1401 = vmatmul.bf16.gmra.mxu0 %v1332
        %v1402 = vpop.f32.mrf.mxu0
        %v1403 = vadd.f32 %v1375, %v1402
        %v1404 = vpop.f32.mrf.mxu0
        %v1405 = vadd.f32 %v1377, %v1404
        %1406 = vmatmul.bf16.gmra.mxu0 %v1336
        %v1407 = vpop.f32.mrf.mxu0
        %v1408 = vadd.f32 %v1380, %v1407
        %v1409 = vpop.f32.mrf.mxu0
        %1410 = vdwg.mxu0
        %1411 = vmatpush.bf16.msra.mxu0 %v676
        %1412 = vmatpush.bf16.msra.mxu0 %v675
        %1413 = vmatpush.bf16.msra.mxu0 %v674
        %1414 = vmatpush.bf16.msra.mxu0 %v673
        %1415 = vmatpush.bf16.msra.mxu0 %v672
        %1416 = vmatpush.bf16.msra.mxu0 %v671
        %1417 = vmatpush.bf16.msra.mxu0 %v670
        %1418 = vmatpush.bf16.msra.mxu0 %v669
        %1419 = vmatmul.bf16.gmra.mxu0 %v1325
        %v1420 = vpop.f32.mrf.mxu0
        %v1421 = vadd.f32 %v1393, %v1420
        %v1422 = vpop.f32.mrf.mxu0
        %v1423 = vadd.f32 %v1395, %v1422
        %1424 = vmatmul.bf16.gmra.mxu0 %v1329
        %v1425 = vpop.f32.mrf.mxu0
        %v1426 = vadd.f32 %v1398, %v1425
        %v1427 = vpop.f32.mrf.mxu0
        %v1428 = vadd.f32 %v1400, %v1427
        %1429 = vmatmul.bf16.gmra.mxu0 %v1333
        %v1430 = vpop.f32.mrf.mxu0
        %v1431 = vadd.f32 %v1403, %v1430
        %v1432 = vpop.f32.mrf.mxu0
        %v1433 = vadd.f32 %v1405, %v1432
        %1434 = vmatmul.bf16.gmra.mxu0 %v1337
        %v1435 = vpop.f32.mrf.mxu0
        %v1436 = vadd.f32 %v1408, %v1435
        %v1437 = vpop.f32.mrf.mxu0
        %1438 = vdwg.mxu0
        %1439 = vmatpush.bf16.msra.mxu0 %v684
        %1440 = vmatpush.bf16.msra.mxu0 %v683
        %1441 = vmatpush.bf16.msra.mxu0 %v682
        %1442 = vmatpush.bf16.msra.mxu0 %v681
        %1443 = vmatpush.bf16.msra.mxu0 %v680
        %1444 = vmatpush.bf16.msra.mxu0 %v679
        %1445 = vmatpush.bf16.msra.mxu0 %v678
        %1446 = vmatpush.bf16.msra.mxu0 %v677
        %1447 = vmatmul.bf16.gmra.mxu0 %v1326
        %v1448 = vpop.f32.mrf.mxu0
        %v1449 = vadd.f32 %v1421, %v1448
        %v1450 = vpop.f32.mrf.mxu0
        %v1451 = vadd.f32 %v1423, %v1450
        %1452 = vmatmul.bf16.gmra.mxu0 %v1330
        %v1453 = vpop.f32.mrf.mxu0
        %v1454 = vadd.f32 %v1426, %v1453
        %v1455 = vpop.f32.mrf.mxu0
        %v1456 = vadd.f32 %v1428, %v1455
        %1457 = vmatmul.bf16.gmra.mxu0 %v1334
        %v1458 = vpop.f32.mrf.mxu0
        %v1459 = vadd.f32 %v1431, %v1458
        %v1460 = vpop.f32.mrf.mxu0
        %v1461 = vadd.f32 %v1433, %v1460
        %1462 = vmatmul.bf16.gmra.mxu0 %v1338
        %v1463 = vpop.f32.mrf.mxu0
        %v1464 = vadd.f32 %v1436, %v1463
        %v1465 = vpop.f32.mrf.mxu0
        %1466 = vdwg.mxu0
        %v1467 = vmax.f32 %v1449, 0.0
        %v1468 = vmax.f32 %v1451, 0.0
        %v1469 = vmax.f32 %v1454, 0.0
        %v1470 = vmax.f32 %v1456, 0.0
        %v1471 = vmax.f32 %v1459, 0.0
        %v1472 = vmax.f32 %v1461, 0.0
        %v1473 = vmax.f32 %v1464, 0.0
        %v1474 = vmax.f32 %v1259, %v1467
        %v1475 = vmax.f32 %v1260, %v1468
        %v1476 = vmax.f32 %v1261, %v1469
        %v1477 = vmax.f32 %v1262, %v1470
        %v1478 = vmax.f32 %v1263, %v1471
        %v1479 = vmax.f32 %v1264, %v1472
        %v1480 = vmax.f32 %v1265, %v1473
        %vm1488 = vcmask 1046528
        %v1489 = vrot.slane %v1474, 1
        %v1490 = vrot.slane %v1475, 1
        %v1491 = vsel %vm1488, %v1489, %v1490
        %v1492 = vrot.slane %v1476, 1
        %v1493 = vsel %vm1488, %v1490, %v1492
        %v1494 = vrot.slane %v1477, 1
        %v1495 = vsel %vm1488, %v1492, %v1494
        %v1496 = vrot.slane %v1478, 1
        %v1497 = vsel %vm1488, %v1494, %v1496
        %v1498 = vrot.slane %v1479, 1
        %v1499 = vsel %vm1488, %v1496, %v1498
        %v1500 = vrot.slane %v1480, 1
        %v1501 = vsel %vm1488, %v1498, %v1500
        %v1508 = vmax.f32 %v1474, %v1491
        %v1509 = vmax.f32 %v1475, %v1493
        %v1510 = vmax.f32 %v1476, %v1495
        %v1511 = vmax.f32 %v1477, %v1497
        %v1512 = vmax.f32 %v1478, %v1499
        %v1513 = vmax.f32 %v1479, %v1501
        %vm1514 = vcmask 392192
        %v1516 = vsel %vm1514, %v431, 0
        %v1519 = vsel %vm1514, %v432, 0
        %v1522 = vsel %vm1514, %v433, 0
        %1524 = vmatpush.msra.mxu0 0.0
        %1525 = vmatpush.msra.mxu0 0.0
        %1526 = vmatpush.msra.mxu0 0.0
        %1527 = vmatpush.msra.mxu0 0.0
        %1528 = vmatpush.msra.mxu0 0.0
        %1529 = vmatpush.msra.mxu0 0.0
        %1530 = vmatpush.msra.mxu0 0.0
        %1531 = vmatpush.msra.mxu0 0.0
        %1532 = vmatpush.msra.mxu0 0.0
        %1533 = vmatpush.msra.mxu0 0.0
        %1534 = vmatpush.msra.mxu0 %v1513
        %1535 = vmatpush.msra.mxu0 %v1512
        %1536 = vmatpush.msra.mxu0 %v1511
        %1537 = vmatpush.msra.mxu0 %v1510
        %1538 = vmatpush.msra.mxu0 %v1509
        %1539 = vmatpush.msra.mxu0 %v1508
        %1540 = vmatmul.f32.gmra.mxu0 %v1516
        %v1541 = vpop.f32.mrf.mxu0
        %v1542 = vadd.f32 0.0, %v1541
        %1543 = vmatmul.f32.gmra.mxu0 %v1519
        %v1544 = vpop.f32.mrf.mxu0
        %v1545 = vadd.f32 0.0, %v1544
        %1546 = vmatmul.f32.gmra.mxu0 %v1522
        %v1547 = vpop.f32.mrf.mxu0
        %v1548 = vadd.f32 0.0, %v1547
        %1549 = vdwg.mxu0
        %vm1550 = vcmask 48128
        %1551 = vst.msk [vmem:[%s364] sm:$0xff] %vm1550, %v1542
        %1552 = vst.msk [vmem:[%s364 + $0x8] sm:$0xff] %vm1550, %v1545
        %1553 = vst.msk [vmem:[%s364 + $0x10] sm:$0xff] %vm1550, %v1548
        %s1554 = scalar_lea.vmem %s320, 224 [#allocation2]
        %v1555 = vld [vmem:[%s1554] sm:$0xff]
        %v1556 = vld [vmem:[%s1554 + $0x8] sm:$0xff]
        %v1557 = vld [vmem:[%s1554 + $0x10] sm:$0xff]
        %v1558 = vld [vmem:[%s1554 + $0x18] sm:$0xff]
        %v1559 = vld [vmem:[%s1554 + $0x20] sm:$0xff]
        %v1560 = vld [vmem:[%s1554 + $0x28] sm:$0xff]
        %v1561 = vld [vmem:[%s1554 + $0x30] sm:$0xff]
        %v1562 = vld [vmem:[%s1554 + $0x38] sm:$0xff]
        %v1563 = vld [vmem:[%s1554 + $0x40] sm:$0xff]
        %v1564 = vld [vmem:[%s1554 + $0x48] sm:$0xff]
        %v1565 = vld [vmem:[%s1554 + $0x50] sm:$0xff]
        %v1566 = vld [vmem:[%s1554 + $0x58] sm:$0xff]
        %v1567 = vld [vmem:[%s1554 + $0x60] sm:$0x11]
        %v1568 = vld [vmem:[%s1554 + $0x68] sm:$0x11]
        %v1583 = vunpack.c.l.b16 %v1555
        %v1584 = vunpack.c.h.b16 %v1555
        %v1585 = vunpack.c.l.b16 %v1556
        %v1586 = vunpack.c.h.b16 %v1556
        %v1587 = vunpack.c.l.b16 %v1557
        %v1588 = vunpack.c.h.b16 %v1557
        %v1589 = vunpack.c.l.b16 %v1558
        %v1590 = vunpack.c.h.b16 %v1558
        %v1591 = vunpack.c.l.b16 %v1559
        %v1592 = vunpack.c.h.b16 %v1559
        %v1593 = vunpack.c.l.b16 %v1560
        %v1594 = vunpack.c.h.b16 %v1560
        %v1595 = vunpack.c.l.b16 %v1561
        %v1596 = vunpack.c.h.b16 %v1561
        %v1597 = vunpack.c.l.b16 %v1562
        %v1598 = vunpack.c.h.b16 %v1562
        %v1599 = vunpack.c.l.b16 %v1563
        %v1600 = vunpack.c.h.b16 %v1563
        %v1601 = vunpack.c.l.b16 %v1564
        %v1602 = vunpack.c.h.b16 %v1564
        %v1603 = vunpack.c.l.b16 %v1565
        %v1604 = vunpack.c.h.b16 %v1565
        %v1605 = vunpack.c.l.b16 %v1566
        %v1606 = vunpack.c.h.b16 %v1566
        %v1607 = vunpack.c.l.b16 %v1567
        %v1608 = vunpack.c.h.b16 %v1567
        %v1609 = vunpack.c.l.b16 %v1568
        %v1610 = vunpack.c.h.b16 %v1568
        %v1611 = vpack.c.b16 %v1587, %v1583
        %v1612 = vpack.c.b16 %v1588, %v1584
        %v1613 = vpack.c.b16 %v1589, %v1585
        %v1614 = vpack.c.b16 %v1590, %v1586
        %v1615 = vpack.c.b16 %v1595, %v1591
        %v1616 = vpack.c.b16 %v1596, %v1592
        %v1617 = vpack.c.b16 %v1597, %v1593
        %v1618 = vpack.c.b16 %v1598, %v1594
        %v1619 = vpack.c.b16 %v1603, %v1599
        %v1620 = vpack.c.b16 %v1604, %v1600
        %v1621 = vpack.c.b16 %v1605, %v1601
        %v1622 = vpack.c.b16 %v1606, %v1602
        %v1623 = vpack.c.b16 %v1607, %v1607
        %v1624 = vpack.c.b16 %v1608, %v1608
        %v1625 = vpack.c.b16 %v1609, %v1609
        %v1626 = vpack.c.b16 %v1610, %v1610
        %1643 = vmatpush.bf16.msra.mxu0 %v660
        %1644 = vmatpush.bf16.msra.mxu0 %v659
        %1645 = vmatpush.bf16.msra.mxu0 %v658
        %1646 = vmatpush.bf16.msra.mxu0 %v657
        %1647 = vmatpush.bf16.msra.mxu0 %v656
        %1648 = vmatpush.bf16.msra.mxu0 %v655
        %1649 = vmatpush.bf16.msra.mxu0 %v654
        %1650 = vmatpush.bf16.msra.mxu0 %v653
        %1651 = vmatmul.bf16.gmra.mxu0 %v1611
        %v1652 = vpop.f32.mrf.mxu0
        %v1653 = vadd.f32 %v449, %v1652
        %v1654 = vpop.f32.mrf.mxu0
        %v1655 = vadd.f32 %v449, %v1654
        %1656 = vmatmul.bf16.gmra.mxu0 %v1615
        %v1657 = vpop.f32.mrf.mxu0
        %v1658 = vadd.f32 %v449, %v1657
        %v1659 = vpop.f32.mrf.mxu0
        %v1660 = vadd.f32 %v449, %v1659
        %1661 = vmatmul.bf16.gmra.mxu0 %v1619
        %v1662 = vpop.f32.mrf.mxu0
        %v1663 = vadd.f32 %v449, %v1662
        %v1664 = vpop.f32.mrf.mxu0
        %v1665 = vadd.f32 %v449, %v1664
        %1666 = vmatmul.bf16.gmra.mxu0 %v1623
        %v1667 = vpop.f32.mrf.mxu0
        %v1668 = vadd.f32 %v449, %v1667
        %v1669 = vpop.f32.mrf.mxu0
        %1670 = vdwg.mxu0
        %1671 = vmatpush.bf16.msra.mxu0 %v668
        %1672 = vmatpush.bf16.msra.mxu0 %v667
        %1673 = vmatpush.bf16.msra.mxu0 %v666
        %1674 = vmatpush.bf16.msra.mxu0 %v665
        %1675 = vmatpush.bf16.msra.mxu0 %v664
        %1676 = vmatpush.bf16.msra.mxu0 %v663
        %1677 = vmatpush.bf16.msra.mxu0 %v662
        %1678 = vmatpush.bf16.msra.mxu0 %v661
        %1679 = vmatmul.bf16.gmra.mxu0 %v1612
        %v1680 = vpop.f32.mrf.mxu0
        %v1681 = vadd.f32 %v1653, %v1680
        %v1682 = vpop.f32.mrf.mxu0
        %v1683 = vadd.f32 %v1655, %v1682
        %1684 = vmatmul.bf16.gmra.mxu0 %v1616
        %v1685 = vpop.f32.mrf.mxu0
        %v1686 = vadd.f32 %v1658, %v1685
        %v1687 = vpop.f32.mrf.mxu0
        %v1688 = vadd.f32 %v1660, %v1687
        %1689 = vmatmul.bf16.gmra.mxu0 %v1620
        %v1690 = vpop.f32.mrf.mxu0
        %v1691 = vadd.f32 %v1663, %v1690
        %v1692 = vpop.f32.mrf.mxu0
        %v1693 = vadd.f32 %v1665, %v1692
        %1694 = vmatmul.bf16.gmra.mxu0 %v1624
        %v1695 = vpop.f32.mrf.mxu0
        %v1696 = vadd.f32 %v1668, %v1695
        %v1697 = vpop.f32.mrf.mxu0
        %1698 = vdwg.mxu0
        %1699 = vmatpush.bf16.msra.mxu0 %v676
        %1700 = vmatpush.bf16.msra.mxu0 %v675
        %1701 = vmatpush.bf16.msra.mxu0 %v674
        %1702 = vmatpush.bf16.msra.mxu0 %v673
        %1703 = vmatpush.bf16.msra.mxu0 %v672
        %1704 = vmatpush.bf16.msra.mxu0 %v671
        %1705 = vmatpush.bf16.msra.mxu0 %v670
        %1706 = vmatpush.bf16.msra.mxu0 %v669
        %1707 = vmatmul.bf16.gmra.mxu0 %v1613
        %v1708 = vpop.f32.mrf.mxu0
        %v1709 = vadd.f32 %v1681, %v1708
        %v1710 = vpop.f32.mrf.mxu0
        %v1711 = vadd.f32 %v1683, %v1710
        %1712 = vmatmul.bf16.gmra.mxu0 %v1617
        %v1713 = vpop.f32.mrf.mxu0
        %v1714 = vadd.f32 %v1686, %v1713
        %v1715 = vpop.f32.mrf.mxu0
        %v1716 = vadd.f32 %v1688, %v1715
        %1717 = vmatmul.bf16.gmra.mxu0 %v1621
        %v1718 = vpop.f32.mrf.mxu0
        %v1719 = vadd.f32 %v1691, %v1718
        %v1720 = vpop.f32.mrf.mxu0
        %v1721 = vadd.f32 %v1693, %v1720
        %1722 = vmatmul.bf16.gmra.mxu0 %v1625
        %v1723 = vpop.f32.mrf.mxu0
        %v1724 = vadd.f32 %v1696, %v1723
        %v1725 = vpop.f32.mrf.mxu0
        %1726 = vdwg.mxu0
        %1727 = vmatpush.bf16.msra.mxu0 %v684
        %1728 = vmatpush.bf16.msra.mxu0 %v683
        %1729 = vmatpush.bf16.msra.mxu0 %v682
        %1730 = vmatpush.bf16.msra.mxu0 %v681
        %1731 = vmatpush.bf16.msra.mxu0 %v680
        %1732 = vmatpush.bf16.msra.mxu0 %v679
        %1733 = vmatpush.bf16.msra.mxu0 %v678
        %1734 = vmatpush.bf16.msra.mxu0 %v677
        %1735 = vmatmul.bf16.gmra.mxu0 %v1614
        %v1736 = vpop.f32.mrf.mxu0
        %v1737 = vadd.f32 %v1709, %v1736
        %v1738 = vpop.f32.mrf.mxu0
        %v1739 = vadd.f32 %v1711, %v1738
        %1740 = vmatmul.bf16.gmra.mxu0 %v1618
        %v1741 = vpop.f32.mrf.mxu0
        %v1742 = vadd.f32 %v1714, %v1741
        %v1743 = vpop.f32.mrf.mxu0
        %v1744 = vadd.f32 %v1716, %v1743
        %1745 = vmatmul.bf16.gmra.mxu0 %v1622
        %v1746 = vpop.f32.mrf.mxu0
        %v1747 = vadd.f32 %v1719, %v1746
        %v1748 = vpop.f32.mrf.mxu0
        %v1749 = vadd.f32 %v1721, %v1748
        %1750 = vmatmul.bf16.gmra.mxu0 %v1626
        %v1751 = vpop.f32.mrf.mxu0
        %v1752 = vadd.f32 %v1724, %v1751
        %v1753 = vpop.f32.mrf.mxu0
        %1754 = vdwg.mxu0
        %v1755 = vmax.f32 %v1737, 0.0
        %v1756 = vmax.f32 %v1739, 0.0
        %v1757 = vmax.f32 %v1742, 0.0
        %v1758 = vmax.f32 %v1744, 0.0
        %v1759 = vmax.f32 %v1747, 0.0
        %v1760 = vmax.f32 %v1749, 0.0
        %v1761 = vmax.f32 %v1752, 0.0
        %s1762 = scalar_lea.vmem %s320, 336 [#allocation2]
        %v1763 = vld [vmem:[%s1762] sm:$0xff]
        %v1764 = vld [vmem:[%s1762 + $0x8] sm:$0xff]
        %v1765 = vld [vmem:[%s1762 + $0x10] sm:$0xff]
        %v1766 = vld [vmem:[%s1762 + $0x18] sm:$0xff]
        %v1767 = vld [vmem:[%s1762 + $0x20] sm:$0xff]
        %v1768 = vld [vmem:[%s1762 + $0x28] sm:$0xff]
        %v1769 = vld [vmem:[%s1762 + $0x30] sm:$0xff]
        %v1770 = vld [vmem:[%s1762 + $0x38] sm:$0xff]
        %v1771 = vld [vmem:[%s1762 + $0x40] sm:$0xff]
        %v1772 = vld [vmem:[%s1762 + $0x48] sm:$0xff]
        %v1773 = vld [vmem:[%s1762 + $0x50] sm:$0xff]
        %v1774 = vld [vmem:[%s1762 + $0x58] sm:$0xff]
        %v1775 = vld [vmem:[%s1762 + $0x60] sm:$0x11]
        %v1776 = vld [vmem:[%s1762 + $0x68] sm:$0x11]
        %v1791 = vunpack.c.l.b16 %v1763
        %v1792 = vunpack.c.h.b16 %v1763
        %v1793 = vunpack.c.l.b16 %v1764
        %v1794 = vunpack.c.h.b16 %v1764
        %v1795 = vunpack.c.l.b16 %v1765
        %v1796 = vunpack.c.h.b16 %v1765
        %v1797 = vunpack.c.l.b16 %v1766
        %v1798 = vunpack.c.h.b16 %v1766
        %v1799 = vunpack.c.l.b16 %v1767
        %v1800 = vunpack.c.h.b16 %v1767
        %v1801 = vunpack.c.l.b16 %v1768
        %v1802 = vunpack.c.h.b16 %v1768
        %v1803 = vunpack.c.l.b16 %v1769
        %v1804 = vunpack.c.h.b16 %v1769
        %v1805 = vunpack.c.l.b16 %v1770
        %v1806 = vunpack.c.h.b16 %v1770
        %v1807 = vunpack.c.l.b16 %v1771
        %v1808 = vunpack.c.h.b16 %v1771
        %v1809 = vunpack.c.l.b16 %v1772
        %v1810 = vunpack.c.h.b16 %v1772
        %v1811 = vunpack.c.l.b16 %v1773
        %v1812 = vunpack.c.h.b16 %v1773
        %v1813 = vunpack.c.l.b16 %v1774
        %v1814 = vunpack.c.h.b16 %v1774
        %v1815 = vunpack.c.l.b16 %v1775
        %v1816 = vunpack.c.h.b16 %v1775
        %v1817 = vunpack.c.l.b16 %v1776
        %v1818 = vunpack.c.h.b16 %v1776
        %v1819 = vpack.c.b16 %v1795, %v1791
        %v1820 = vpack.c.b16 %v1796, %v1792
        %v1821 = vpack.c.b16 %v1797, %v1793
        %v1822 = vpack.c.b16 %v1798, %v1794
        %v1823 = vpack.c.b16 %v1803, %v1799
        %v1824 = vpack.c.b16 %v1804, %v1800
        %v1825 = vpack.c.b16 %v1805, %v1801
        %v1826 = vpack.c.b16 %v1806, %v1802
        %v1827 = vpack.c.b16 %v1811, %v1807
        %v1828 = vpack.c.b16 %v1812, %v1808
        %v1829 = vpack.c.b16 %v1813, %v1809
        %v1830 = vpack.c.b16 %v1814, %v1810
        %v1831 = vpack.c.b16 %v1815, %v1815
        %v1832 = vpack.c.b16 %v1816, %v1816
        %v1833 = vpack.c.b16 %v1817, %v1817
        %v1834 = vpack.c.b16 %v1818, %v1818
        %1851 = vmatpush.bf16.msra.mxu0 %v660
        %1852 = vmatpush.bf16.msra.mxu0 %v659
        %1853 = vmatpush.bf16.msra.mxu0 %v658
        %1854 = vmatpush.bf16.msra.mxu0 %v657
        %1855 = vmatpush.bf16.msra.mxu0 %v656
        %1856 = vmatpush.bf16.msra.mxu0 %v655
        %1857 = vmatpush.bf16.msra.mxu0 %v654
        %1858 = vmatpush.bf16.msra.mxu0 %v653
        %1859 = vmatmul.bf16.gmra.mxu0 %v1819
        %v1860 = vpop.f32.mrf.mxu0
        %v1861 = vadd.f32 %v449, %v1860
        %v1862 = vpop.f32.mrf.mxu0
        %v1863 = vadd.f32 %v449, %v1862
        %1864 = vmatmul.bf16.gmra.mxu0 %v1823
        %v1865 = vpop.f32.mrf.mxu0
        %v1866 = vadd.f32 %v449, %v1865
        %v1867 = vpop.f32.mrf.mxu0
        %v1868 = vadd.f32 %v449, %v1867
        %1869 = vmatmul.bf16.gmra.mxu0 %v1827
        %v1870 = vpop.f32.mrf.mxu0
        %v1871 = vadd.f32 %v449, %v1870
        %v1872 = vpop.f32.mrf.mxu0
        %v1873 = vadd.f32 %v449, %v1872
        %1874 = vmatmul.bf16.gmra.mxu0 %v1831
        %v1875 = vpop.f32.mrf.mxu0
        %v1876 = vadd.f32 %v449, %v1875
        %v1877 = vpop.f32.mrf.mxu0
        %1878 = vdwg.mxu0
        %1879 = vmatpush.bf16.msra.mxu0 %v668
        %1880 = vmatpush.bf16.msra.mxu0 %v667
        %1881 = vmatpush.bf16.msra.mxu0 %v666
        %1882 = vmatpush.bf16.msra.mxu0 %v665
        %1883 = vmatpush.bf16.msra.mxu0 %v664
        %1884 = vmatpush.bf16.msra.mxu0 %v663
        %1885 = vmatpush.bf16.msra.mxu0 %v662
        %1886 = vmatpush.bf16.msra.mxu0 %v661
        %1887 = vmatmul.bf16.gmra.mxu0 %v1820
        %v1888 = vpop.f32.mrf.mxu0
        %v1889 = vadd.f32 %v1861, %v1888
        %v1890 = vpop.f32.mrf.mxu0
        %v1891 = vadd.f32 %v1863, %v1890
        %1892 = vmatmul.bf16.gmra.mxu0 %v1824
        %v1893 = vpop.f32.mrf.mxu0
        %v1894 = vadd.f32 %v1866, %v1893
        %v1895 = vpop.f32.mrf.mxu0
        %v1896 = vadd.f32 %v1868, %v1895
        %1897 = vmatmul.bf16.gmra.mxu0 %v1828
        %v1898 = vpop.f32.mrf.mxu0
        %v1899 = vadd.f32 %v1871, %v1898
        %v1900 = vpop.f32.mrf.mxu0
        %v1901 = vadd.f32 %v1873, %v1900
        %1902 = vmatmul.bf16.gmra.mxu0 %v1832
        %v1903 = vpop.f32.mrf.mxu0
        %v1904 = vadd.f32 %v1876, %v1903
        %v1905 = vpop.f32.mrf.mxu0
        %1906 = vdwg.mxu0
        %1907 = vmatpush.bf16.msra.mxu0 %v676
        %1908 = vmatpush.bf16.msra.mxu0 %v675
        %1909 = vmatpush.bf16.msra.mxu0 %v674
        %1910 = vmatpush.bf16.msra.mxu0 %v673
        %1911 = vmatpush.bf16.msra.mxu0 %v672
        %1912 = vmatpush.bf16.msra.mxu0 %v671
        %1913 = vmatpush.bf16.msra.mxu0 %v670
        %1914 = vmatpush.bf16.msra.mxu0 %v669
        %1915 = vmatmul.bf16.gmra.mxu0 %v1821
        %v1916 = vpop.f32.mrf.mxu0
        %v1917 = vadd.f32 %v1889, %v1916
        %v1918 = vpop.f32.mrf.mxu0
        %v1919 = vadd.f32 %v1891, %v1918
        %1920 = vmatmul.bf16.gmra.mxu0 %v1825
        %v1921 = vpop.f32.mrf.mxu0
        %v1922 = vadd.f32 %v1894, %v1921
        %v1923 = vpop.f32.mrf.mxu0
        %v1924 = vadd.f32 %v1896, %v1923
        %1925 = vmatmul.bf16.gmra.mxu0 %v1829
        %v1926 = vpop.f32.mrf.mxu0
        %v1927 = vadd.f32 %v1899, %v1926
        %v1928 = vpop.f32.mrf.mxu0
        %v1929 = vadd.f32 %v1901, %v1928
        %1930 = vmatmul.bf16.gmra.mxu0 %v1833
        %v1931 = vpop.f32.mrf.mxu0
        %v1932 = vadd.f32 %v1904, %v1931
        %v1933 = vpop.f32.mrf.mxu0
        %1934 = vdwg.mxu0
        %1935 = vmatpush.bf16.msra.mxu0 %v684
        %1936 = vmatpush.bf16.msra.mxu0 %v683
        %1937 = vmatpush.bf16.msra.mxu0 %v682
        %1938 = vmatpush.bf16.msra.mxu0 %v681
        %1939 = vmatpush.bf16.msra.mxu0 %v680
        %1940 = vmatpush.bf16.msra.mxu0 %v679
        %1941 = vmatpush.bf16.msra.mxu0 %v678
        %1942 = vmatpush.bf16.msra.mxu0 %v677
        %1943 = vmatmul.bf16.gmra.mxu0 %v1822
        %v1944 = vpop.f32.mrf.mxu0
        %v1945 = vadd.f32 %v1917, %v1944
        %v1946 = vpop.f32.mrf.mxu0
        %v1947 = vadd.f32 %v1919, %v1946
        %1948 = vmatmul.bf16.gmra.mxu0 %v1826
        %v1949 = vpop.f32.mrf.mxu0
        %v1950 = vadd.f32 %v1922, %v1949
        %v1951 = vpop.f32.mrf.mxu0
        %v1952 = vadd.f32 %v1924, %v1951
        %1953 = vmatmul.bf16.gmra.mxu0 %v1830
        %v1954 = vpop.f32.mrf.mxu0
        %v1955 = vadd.f32 %v1927, %v1954
        %v1956 = vpop.f32.mrf.mxu0
        %v1957 = vadd.f32 %v1929, %v1956
        %1958 = vmatmul.bf16.gmra.mxu0 %v1834
        %v1959 = vpop.f32.mrf.mxu0
        %v1960 = vadd.f32 %v1932, %v1959
        %v1961 = vpop.f32.mrf.mxu0
        %1962 = vdwg.mxu0
        %v1963 = vmax.f32 %v1945, 0.0
        %v1964 = vmax.f32 %v1947, 0.0
        %v1965 = vmax.f32 %v1950, 0.0
        %v1966 = vmax.f32 %v1952, 0.0
        %v1967 = vmax.f32 %v1955, 0.0
        %v1968 = vmax.f32 %v1957, 0.0
        %v1969 = vmax.f32 %v1960, 0.0
        %v1970 = vmax.f32 %v1755, %v1963
        %v1971 = vmax.f32 %v1756, %v1964
        %v1972 = vmax.f32 %v1757, %v1965
        %v1973 = vmax.f32 %v1758, %v1966
        %v1974 = vmax.f32 %v1759, %v1967
        %v1975 = vmax.f32 %v1760, %v1968
        %v1976 = vmax.f32 %v1761, %v1969
        %s1977 = scalar_lea.vmem %s320, 1120 [#allocation2]
        %v1978 = vld [vmem:[%s1977] sm:$0xff]
        %v1979 = vld [vmem:[%s1977 + $0x8] sm:$0xff]
        %v1980 = vld [vmem:[%s1977 + $0x10] sm:$0xff]
        %v1981 = vld [vmem:[%s1977 + $0x18] sm:$0xff]
        %v1982 = vld [vmem:[%s1977 + $0x20] sm:$0xff]
        %v1983 = vld [vmem:[%s1977 + $0x28] sm:$0xff]
        %v1984 = vld [vmem:[%s1977 + $0x30] sm:$0xff]
        %v1985 = vld [vmem:[%s1977 + $0x38] sm:$0xff]
        %v1986 = vld [vmem:[%s1977 + $0x40] sm:$0xff]
        %v1987 = vld [vmem:[%s1977 + $0x48] sm:$0xff]
        %v1988 = vld [vmem:[%s1977 + $0x50] sm:$0xff]
        %v1989 = vld [vmem:[%s1977 + $0x58] sm:$0xff]
        %v1990 = vld [vmem:[%s1977 + $0x60] sm:$0x11]
        %v1991 = vld [vmem:[%s1977 + $0x68] sm:$0x11]
        %v2006 = vunpack.c.l.b16 %v1978
        %v2007 = vunpack.c.h.b16 %v1978
        %v2008 = vunpack.c.l.b16 %v1979
        %v2009 = vunpack.c.h.b16 %v1979
        %v2010 = vunpack.c.l.b16 %v1980
        %v2011 = vunpack.c.h.b16 %v1980
        %v2012 = vunpack.c.l.b16 %v1981
        %v2013 = vunpack.c.h.b16 %v1981
        %v2014 = vunpack.c.l.b16 %v1982
        %v2015 = vunpack.c.h.b16 %v1982
        %v2016 = vunpack.c.l.b16 %v1983
        %v2017 = vunpack.c.h.b16 %v1983
        %v2018 = vunpack.c.l.b16 %v1984
        %v2019 = vunpack.c.h.b16 %v1984
        %v2020 = vunpack.c.l.b16 %v1985
        %v2021 = vunpack.c.h.b16 %v1985
        %v2022 = vunpack.c.l.b16 %v1986
        %v2023 = vunpack.c.h.b16 %v1986
        %v2024 = vunpack.c.l.b16 %v1987
        %v2025 = vunpack.c.h.b16 %v1987
        %v2026 = vunpack.c.l.b16 %v1988
        %v2027 = vunpack.c.h.b16 %v1988
        %v2028 = vunpack.c.l.b16 %v1989
        %v2029 = vunpack.c.h.b16 %v1989
        %v2030 = vunpack.c.l.b16 %v1990
        %v2031 = vunpack.c.h.b16 %v1990
        %v2032 = vunpack.c.l.b16 %v1991
        %v2033 = vunpack.c.h.b16 %v1991
        %v2034 = vpack.c.b16 %v2010, %v2006
        %v2035 = vpack.c.b16 %v2011, %v2007
        %v2036 = vpack.c.b16 %v2012, %v2008
        %v2037 = vpack.c.b16 %v2013, %v2009
        %v2038 = vpack.c.b16 %v2018, %v2014
        %v2039 = vpack.c.b16 %v2019, %v2015
        %v2040 = vpack.c.b16 %v2020, %v2016
        %v2041 = vpack.c.b16 %v2021, %v2017
        %v2042 = vpack.c.b16 %v2026, %v2022
        %v2043 = vpack.c.b16 %v2027, %v2023
        %v2044 = vpack.c.b16 %v2028, %v2024
        %v2045 = vpack.c.b16 %v2029, %v2025
        %v2046 = vpack.c.b16 %v2030, %v2030
        %v2047 = vpack.c.b16 %v2031, %v2031
        %v2048 = vpack.c.b16 %v2032, %v2032
        %v2049 = vpack.c.b16 %v2033, %v2033
        %2066 = vmatpush.bf16.msra.mxu0 %v660
        %2067 = vmatpush.bf16.msra.mxu0 %v659
        %2068 = vmatpush.bf16.msra.mxu0 %v658
        %2069 = vmatpush.bf16.msra.mxu0 %v657
        %2070 = vmatpush.bf16.msra.mxu0 %v656
        %2071 = vmatpush.bf16.msra.mxu0 %v655
        %2072 = vmatpush.bf16.msra.mxu0 %v654
        %2073 = vmatpush.bf16.msra.mxu0 %v653
        %2074 = vmatmul.bf16.gmra.mxu0 %v2034
        %v2075 = vpop.f32.mrf.mxu0
        %v2076 = vadd.f32 %v449, %v2075
        %v2077 = vpop.f32.mrf.mxu0
        %v2078 = vadd.f32 %v449, %v2077
        %2079 = vmatmul.bf16.gmra.mxu0 %v2038
        %v2080 = vpop.f32.mrf.mxu0
        %v2081 = vadd.f32 %v449, %v2080
        %v2082 = vpop.f32.mrf.mxu0
        %v2083 = vadd.f32 %v449, %v2082
        %2084 = vmatmul.bf16.gmra.mxu0 %v2042
        %v2085 = vpop.f32.mrf.mxu0
        %v2086 = vadd.f32 %v449, %v2085
        %v2087 = vpop.f32.mrf.mxu0
        %v2088 = vadd.f32 %v449, %v2087
        %2089 = vmatmul.bf16.gmra.mxu0 %v2046
        %v2090 = vpop.f32.mrf.mxu0
        %v2091 = vadd.f32 %v449, %v2090
        %v2092 = vpop.f32.mrf.mxu0
        %2093 = vdwg.mxu0
        %2094 = vmatpush.bf16.msra.mxu0 %v668
        %2095 = vmatpush.bf16.msra.mxu0 %v667
        %2096 = vmatpush.bf16.msra.mxu0 %v666
        %2097 = vmatpush.bf16.msra.mxu0 %v665
        %2098 = vmatpush.bf16.msra.mxu0 %v664
        %2099 = vmatpush.bf16.msra.mxu0 %v663
        %2100 = vmatpush.bf16.msra.mxu0 %v662
        %2101 = vmatpush.bf16.msra.mxu0 %v661
        %2102 = vmatmul.bf16.gmra.mxu0 %v2035
        %v2103 = vpop.f32.mrf.mxu0
        %v2104 = vadd.f32 %v2076, %v2103
        %v2105 = vpop.f32.mrf.mxu0
        %v2106 = vadd.f32 %v2078, %v2105
        %2107 = vmatmul.bf16.gmra.mxu0 %v2039
        %v2108 = vpop.f32.mrf.mxu0
        %v2109 = vadd.f32 %v2081, %v2108
        %v2110 = vpop.f32.mrf.mxu0
        %v2111 = vadd.f32 %v2083, %v2110
        %2112 = vmatmul.bf16.gmra.mxu0 %v2043
        %v2113 = vpop.f32.mrf.mxu0
        %v2114 = vadd.f32 %v2086, %v2113
        %v2115 = vpop.f32.mrf.mxu0
        %v2116 = vadd.f32 %v2088, %v2115
        %2117 = vmatmul.bf16.gmra.mxu0 %v2047
        %v2118 = vpop.f32.mrf.mxu0
        %v2119 = vadd.f32 %v2091, %v2118
        %v2120 = vpop.f32.mrf.mxu0
        %2121 = vdwg.mxu0
        %2122 = vmatpush.bf16.msra.mxu0 %v676
        %2123 = vmatpush.bf16.msra.mxu0 %v675
        %2124 = vmatpush.bf16.msra.mxu0 %v674
        %2125 = vmatpush.bf16.msra.mxu0 %v673
        %2126 = vmatpush.bf16.msra.mxu0 %v672
        %2127 = vmatpush.bf16.msra.mxu0 %v671
        %2128 = vmatpush.bf16.msra.mxu0 %v670
        %2129 = vmatpush.bf16.msra.mxu0 %v669
        %2130 = vmatmul.bf16.gmra.mxu0 %v2036
        %v2131 = vpop.f32.mrf.mxu0
        %v2132 = vadd.f32 %v2104, %v2131
        %v2133 = vpop.f32.mrf.mxu0
        %v2134 = vadd.f32 %v2106, %v2133
        %2135 = vmatmul.bf16.gmra.mxu0 %v2040
        %v2136 = vpop.f32.mrf.mxu0
        %v2137 = vadd.f32 %v2109, %v2136
        %v2138 = vpop.f32.mrf.mxu0
        %v2139 = vadd.f32 %v2111, %v2138
        %2140 = vmatmul.bf16.gmra.mxu0 %v2044
        %v2141 = vpop.f32.mrf.mxu0
        %v2142 = vadd.f32 %v2114, %v2141
        %v2143 = vpop.f32.mrf.mxu0
        %v2144 = vadd.f32 %v2116, %v2143
        %2145 = vmatmul.bf16.gmra.mxu0 %v2048
        %v2146 = vpop.f32.mrf.mxu0
        %v2147 = vadd.f32 %v2119, %v2146
        %v2148 = vpop.f32.mrf.mxu0
        %2149 = vdwg.mxu0
        %2150 = vmatpush.bf16.msra.mxu0 %v684
        %2151 = vmatpush.bf16.msra.mxu0 %v683
        %2152 = vmatpush.bf16.msra.mxu0 %v682
        %2153 = vmatpush.bf16.msra.mxu0 %v681
        %2154 = vmatpush.bf16.msra.mxu0 %v680
        %2155 = vmatpush.bf16.msra.mxu0 %v679
        %2156 = vmatpush.bf16.msra.mxu0 %v678
        %2157 = vmatpush.bf16.msra.mxu0 %v677
        %2158 = vmatmul.bf16.gmra.mxu0 %v2037
        %v2159 = vpop.f32.mrf.mxu0
        %v2160 = vadd.f32 %v2132, %v2159
        %v2161 = vpop.f32.mrf.mxu0
        %v2162 = vadd.f32 %v2134, %v2161
        %2163 = vmatmul.bf16.gmra.mxu0 %v2041
        %v2164 = vpop.f32.mrf.mxu0
        %v2165 = vadd.f32 %v2137, %v2164
        %v2166 = vpop.f32.mrf.mxu0
        %v2167 = vadd.f32 %v2139, %v2166
        %2168 = vmatmul.bf16.gmra.mxu0 %v2045
        %v2169 = vpop.f32.mrf.mxu0
        %v2170 = vadd.f32 %v2142, %v2169
        %v2171 = vpop.f32.mrf.mxu0
        %v2172 = vadd.f32 %v2144, %v2171
        %2173 = vmatmul.bf16.gmra.mxu0 %v2049
        %v2174 = vpop.f32.mrf.mxu0
        %v2175 = vadd.f32 %v2147, %v2174
        %v2176 = vpop.f32.mrf.mxu0
        %2177 = vdwg.mxu0
        %v2178 = vmax.f32 %v2160, 0.0
        %v2179 = vmax.f32 %v2162, 0.0
        %v2180 = vmax.f32 %v2165, 0.0
        %v2181 = vmax.f32 %v2167, 0.0
        %v2182 = vmax.f32 %v2170, 0.0
        %v2183 = vmax.f32 %v2172, 0.0
        %v2184 = vmax.f32 %v2175, 0.0
        %v2185 = vmax.f32 %v1970, %v2178
        %v2186 = vmax.f32 %v1971, %v2179
        %v2187 = vmax.f32 %v1972, %v2180
        %v2188 = vmax.f32 %v1973, %v2181
        %v2189 = vmax.f32 %v1974, %v2182
        %v2190 = vmax.f32 %v1975, %v2183
        %v2191 = vmax.f32 %v1976, %v2184
        %s2192 = scalar_lea.vmem %s320, 1232 [#allocation2]
        %v2193 = vld [vmem:[%s2192] sm:$0xff]
        %v2194 = vld [vmem:[%s2192 + $0x8] sm:$0xff]
        %v2195 = vld [vmem:[%s2192 + $0x10] sm:$0xff]
        %v2196 = vld [vmem:[%s2192 + $0x18] sm:$0xff]
        %v2197 = vld [vmem:[%s2192 + $0x20] sm:$0xff]
        %v2198 = vld [vmem:[%s2192 + $0x28] sm:$0xff]
        %v2199 = vld [vmem:[%s2192 + $0x30] sm:$0xff]
        %v2200 = vld [vmem:[%s2192 + $0x38] sm:$0xff]
        %v2201 = vld [vmem:[%s2192 + $0x40] sm:$0xff]
        %v2202 = vld [vmem:[%s2192 + $0x48] sm:$0xff]
        %v2203 = vld [vmem:[%s2192 + $0x50] sm:$0xff]
        %v2204 = vld [vmem:[%s2192 + $0x58] sm:$0xff]
        %v2205 = vld [vmem:[%s2192 + $0x60] sm:$0x11]
        %v2206 = vld [vmem:[%s2192 + $0x68] sm:$0x11]
        %v2221 = vunpack.c.l.b16 %v2193
        %v2222 = vunpack.c.h.b16 %v2193
        %v2223 = vunpack.c.l.b16 %v2194
        %v2224 = vunpack.c.h.b16 %v2194
        %v2225 = vunpack.c.l.b16 %v2195
        %v2226 = vunpack.c.h.b16 %v2195
        %v2227 = vunpack.c.l.b16 %v2196
        %v2228 = vunpack.c.h.b16 %v2196
        %v2229 = vunpack.c.l.b16 %v2197
        %v2230 = vunpack.c.h.b16 %v2197
        %v2231 = vunpack.c.l.b16 %v2198
        %v2232 = vunpack.c.h.b16 %v2198
        %v2233 = vunpack.c.l.b16 %v2199
        %v2234 = vunpack.c.h.b16 %v2199
        %v2235 = vunpack.c.l.b16 %v2200
        %v2236 = vunpack.c.h.b16 %v2200
        %v2237 = vunpack.c.l.b16 %v2201
        %v2238 = vunpack.c.h.b16 %v2201
        %v2239 = vunpack.c.l.b16 %v2202
        %v2240 = vunpack.c.h.b16 %v2202
        %v2241 = vunpack.c.l.b16 %v2203
        %v2242 = vunpack.c.h.b16 %v2203
        %v2243 = vunpack.c.l.b16 %v2204
        %v2244 = vunpack.c.h.b16 %v2204
        %v2245 = vunpack.c.l.b16 %v2205
        %v2246 = vunpack.c.h.b16 %v2205
        %v2247 = vunpack.c.l.b16 %v2206
        %v2248 = vunpack.c.h.b16 %v2206
        %v2249 = vpack.c.b16 %v2225, %v2221
        %v2250 = vpack.c.b16 %v2226, %v2222
        %v2251 = vpack.c.b16 %v2227, %v2223
        %v2252 = vpack.c.b16 %v2228, %v2224
        %v2253 = vpack.c.b16 %v2233, %v2229
        %v2254 = vpack.c.b16 %v2234, %v2230
        %v2255 = vpack.c.b16 %v2235, %v2231
        %v2256 = vpack.c.b16 %v2236, %v2232
        %v2257 = vpack.c.b16 %v2241, %v2237
        %v2258 = vpack.c.b16 %v2242, %v2238
        %v2259 = vpack.c.b16 %v2243, %v2239
        %v2260 = vpack.c.b16 %v2244, %v2240
        %v2261 = vpack.c.b16 %v2245, %v2245
        %v2262 = vpack.c.b16 %v2246, %v2246
        %v2263 = vpack.c.b16 %v2247, %v2247
        %v2264 = vpack.c.b16 %v2248, %v2248
        %2281 = vmatpush.bf16.msra.mxu0 %v660
        %2282 = vmatpush.bf16.msra.mxu0 %v659
        %2283 = vmatpush.bf16.msra.mxu0 %v658
        %2284 = vmatpush.bf16.msra.mxu0 %v657
        %2285 = vmatpush.bf16.msra.mxu0 %v656
        %2286 = vmatpush.bf16.msra.mxu0 %v655
        %2287 = vmatpush.bf16.msra.mxu0 %v654
        %2288 = vmatpush.bf16.msra.mxu0 %v653
        %2289 = vmatmul.bf16.gmra.mxu0 %v2249
        %v2290 = vpop.f32.mrf.mxu0
        %v2291 = vadd.f32 %v449, %v2290
        %v2292 = vpop.f32.mrf.mxu0
        %v2293 = vadd.f32 %v449, %v2292
        %2294 = vmatmul.bf16.gmra.mxu0 %v2253
        %v2295 = vpop.f32.mrf.mxu0
        %v2296 = vadd.f32 %v449, %v2295
        %v2297 = vpop.f32.mrf.mxu0
        %v2298 = vadd.f32 %v449, %v2297
        %2299 = vmatmul.bf16.gmra.mxu0 %v2257
        %v2300 = vpop.f32.mrf.mxu0
        %v2301 = vadd.f32 %v449, %v2300
        %v2302 = vpop.f32.mrf.mxu0
        %v2303 = vadd.f32 %v449, %v2302
        %2304 = vmatmul.bf16.gmra.mxu0 %v2261
        %v2305 = vpop.f32.mrf.mxu0
        %v2306 = vadd.f32 %v449, %v2305
        %v2307 = vpop.f32.mrf.mxu0
        %2308 = vdwg.mxu0
        %2309 = vmatpush.bf16.msra.mxu0 %v668
        %2310 = vmatpush.bf16.msra.mxu0 %v667
        %2311 = vmatpush.bf16.msra.mxu0 %v666
        %2312 = vmatpush.bf16.msra.mxu0 %v665
        %2313 = vmatpush.bf16.msra.mxu0 %v664
        %2314 = vmatpush.bf16.msra.mxu0 %v663
        %2315 = vmatpush.bf16.msra.mxu0 %v662
        %2316 = vmatpush.bf16.msra.mxu0 %v661
        %2317 = vmatmul.bf16.gmra.mxu0 %v2250
        %v2318 = vpop.f32.mrf.mxu0
        %v2319 = vadd.f32 %v2291, %v2318
        %v2320 = vpop.f32.mrf.mxu0
        %v2321 = vadd.f32 %v2293, %v2320
        %2322 = vmatmul.bf16.gmra.mxu0 %v2254
        %v2323 = vpop.f32.mrf.mxu0
        %v2324 = vadd.f32 %v2296, %v2323
        %v2325 = vpop.f32.mrf.mxu0
        %v2326 = vadd.f32 %v2298, %v2325
        %2327 = vmatmul.bf16.gmra.mxu0 %v2258
        %v2328 = vpop.f32.mrf.mxu0
        %v2329 = vadd.f32 %v2301, %v2328
        %v2330 = vpop.f32.mrf.mxu0
        %v2331 = vadd.f32 %v2303, %v2330
        %2332 = vmatmul.bf16.gmra.mxu0 %v2262
        %v2333 = vpop.f32.mrf.mxu0
        %v2334 = vadd.f32 %v2306, %v2333
        %v2335 = vpop.f32.mrf.mxu0
        %2336 = vdwg.mxu0
        %2337 = vmatpush.bf16.msra.mxu0 %v676
        %2338 = vmatpush.bf16.msra.mxu0 %v675
        %2339 = vmatpush.bf16.msra.mxu0 %v674
        %2340 = vmatpush.bf16.msra.mxu0 %v673
        %2341 = vmatpush.bf16.msra.mxu0 %v672
        %2342 = vmatpush.bf16.msra.mxu0 %v671
        %2343 = vmatpush.bf16.msra.mxu0 %v670
        %2344 = vmatpush.bf16.msra.mxu0 %v669
        %2345 = vmatmul.bf16.gmra.mxu0 %v2251
        %v2346 = vpop.f32.mrf.mxu0
        %v2347 = vadd.f32 %v2319, %v2346
        %v2348 = vpop.f32.mrf.mxu0
        %v2349 = vadd.f32 %v2321, %v2348
        %2350 = vmatmul.bf16.gmra.mxu0 %v2255
        %v2351 = vpop.f32.mrf.mxu0
        %v2352 = vadd.f32 %v2324, %v2351
        %v2353 = vpop.f32.mrf.mxu0
        %v2354 = vadd.f32 %v2326, %v2353
        %2355 = vmatmul.bf16.gmra.mxu0 %v2259
        %v2356 = vpop.f32.mrf.mxu0
        %v2357 = vadd.f32 %v2329, %v2356
        %v2358 = vpop.f32.mrf.mxu0
        %v2359 = vadd.f32 %v2331, %v2358
        %2360 = vmatmul.bf16.gmra.mxu0 %v2263
        %v2361 = vpop.f32.mrf.mxu0
        %v2362 = vadd.f32 %v2334, %v2361
        %v2363 = vpop.f32.mrf.mxu0
        %2364 = vdwg.mxu0
        %2365 = vmatpush.bf16.msra.mxu0 %v684
        %2366 = vmatpush.bf16.msra.mxu0 %v683
        %2367 = vmatpush.bf16.msra.mxu0 %v682
        %2368 = vmatpush.bf16.msra.mxu0 %v681
        %2369 = vmatpush.bf16.msra.mxu0 %v680
        %2370 = vmatpush.bf16.msra.mxu0 %v679
        %2371 = vmatpush.bf16.msra.mxu0 %v678
        %2372 = vmatpush.bf16.msra.mxu0 %v677
        %2373 = vmatmul.bf16.gmra.mxu0 %v2252
        %v2374 = vpop.f32.mrf.mxu0
        %v2375 = vadd.f32 %v2347, %v2374
        %v2376 = vpop.f32.mrf.mxu0
        %v2377 = vadd.f32 %v2349, %v2376
        %2378 = vmatmul.bf16.gmra.mxu0 %v2256
        %v2379 = vpop.f32.mrf.mxu0
        %v2380 = vadd.f32 %v2352, %v2379
        %v2381 = vpop.f32.mrf.mxu0
        %v2382 = vadd.f32 %v2354, %v2381
        %2383 = vmatmul.bf16.gmra.mxu0 %v2260
        %v2384 = vpop.f32.mrf.mxu0
        %v2385 = vadd.f32 %v2357, %v2384
        %v2386 = vpop.f32.mrf.mxu0
        %v2387 = vadd.f32 %v2359, %v2386
        %2388 = vmatmul.bf16.gmra.mxu0 %v2264
        %v2389 = vpop.f32.mrf.mxu0
        %v2390 = vadd.f32 %v2362, %v2389
        %v2391 = vpop.f32.mrf.mxu0
        %2392 = vdwg.mxu0
        %v2393 = vmax.f32 %v2375, 0.0
        %v2394 = vmax.f32 %v2377, 0.0
        %v2395 = vmax.f32 %v2380, 0.0
        %v2396 = vmax.f32 %v2382, 0.0
        %v2397 = vmax.f32 %v2385, 0.0
        %v2398 = vmax.f32 %v2387, 0.0
        %v2399 = vmax.f32 %v2390, 0.0
        %v2400 = vmax.f32 %v2185, %v2393
        %v2401 = vmax.f32 %v2186, %v2394
        %v2402 = vmax.f32 %v2187, %v2395
        %v2403 = vmax.f32 %v2188, %v2396
        %v2404 = vmax.f32 %v2189, %v2397
        %v2405 = vmax.f32 %v2190, %v2398
        %v2406 = vmax.f32 %v2191, %v2399
        %v2414 = vrot.slane %v2400, 1
        %v2415 = vrot.slane %v2401, 1
        %v2416 = vsel %vm1488, %v2414, %v2415
        %v2417 = vrot.slane %v2402, 1
        %v2418 = vsel %vm1488, %v2415, %v2417
        %v2419 = vrot.slane %v2403, 1
        %v2420 = vsel %vm1488, %v2417, %v2419
        %v2421 = vrot.slane %v2404, 1
        %v2422 = vsel %vm1488, %v2419, %v2421
        %v2423 = vrot.slane %v2405, 1
        %v2424 = vsel %vm1488, %v2421, %v2423
        %v2425 = vrot.slane %v2406, 1
        %v2426 = vsel %vm1488, %v2423, %v2425
        %v2433 = vmax.f32 %v2400, %v2416
        %v2434 = vmax.f32 %v2401, %v2418
        %v2435 = vmax.f32 %v2402, %v2420
        %v2436 = vmax.f32 %v2403, %v2422
        %v2437 = vmax.f32 %v2404, %v2424
        %v2438 = vmax.f32 %v2405, %v2426
        %2439 = vmatpush.msra.mxu0 0.0
        %2440 = vmatpush.msra.mxu0 0.0
        %2441 = vmatpush.msra.mxu0 0.0
        %2442 = vmatpush.msra.mxu0 0.0
        %2443 = vmatpush.msra.mxu0 0.0
        %2444 = vmatpush.msra.mxu0 0.0
        %2445 = vmatpush.msra.mxu0 0.0
        %2446 = vmatpush.msra.mxu0 0.0
        %2447 = vmatpush.msra.mxu0 0.0
        %2448 = vmatpush.msra.mxu0 0.0
        %2449 = vmatpush.msra.mxu0 %v2438
        %2450 = vmatpush.msra.mxu0 %v2437
        %2451 = vmatpush.msra.mxu0 %v2436
        %2452 = vmatpush.msra.mxu0 %v2435
        %2453 = vmatpush.msra.mxu0 %v2434
        %2454 = vmatpush.msra.mxu0 %v2433
        %2455 = vmatmul.f32.gmra.mxu0 %v1516
        %v2456 = vpop.f32.mrf.mxu0
        %v2457 = vadd.f32 0.0, %v2456
        %2458 = vmatmul.f32.gmra.mxu0 %v1519
        %v2459 = vpop.f32.mrf.mxu0
        %v2460 = vadd.f32 0.0, %v2459
        %2461 = vmatmul.f32.gmra.mxu0 %v1522
        %v2462 = vpop.f32.mrf.mxu0
        %v2463 = vadd.f32 0.0, %v2462
        %2464 = vdwg.mxu0
        %s2465 = scalar_lea.vmem %s364, 24
        %2466 = vst.msk [vmem:[%s2465] sm:$0xff] %vm1550, %v2457
        %2467 = vst.msk [vmem:[%s2465 + $0x8] sm:$0xff] %vm1550, %v2460
        %2468 = vst.msk [vmem:[%s2465 + $0x10] sm:$0xff] %vm1550, %v2463
        %s2469 = scalar_lea.vmem %s320, 448 [#allocation2]
        %v2470 = vld [vmem:[%s2469] sm:$0xff]
        %v2471 = vld [vmem:[%s2469 + $0x8] sm:$0xff]
        %v2472 = vld [vmem:[%s2469 + $0x10] sm:$0xff]
        %v2473 = vld [vmem:[%s2469 + $0x18] sm:$0xff]
        %v2474 = vld [vmem:[%s2469 + $0x20] sm:$0xff]
        %v2475 = vld [vmem:[%s2469 + $0x28] sm:$0xff]
        %v2476 = vld [vmem:[%s2469 + $0x30] sm:$0xff]
        %v2477 = vld [vmem:[%s2469 + $0x38] sm:$0xff]
        %v2478 = vld [vmem:[%s2469 + $0x40] sm:$0xff]
        %v2479 = vld [vmem:[%s2469 + $0x48] sm:$0xff]
        %v2480 = vld [vmem:[%s2469 + $0x50] sm:$0xff]
        %v2481 = vld [vmem:[%s2469 + $0x58] sm:$0xff]
        %v2482 = vld [vmem:[%s2469 + $0x60] sm:$0x11]
        %v2483 = vld [vmem:[%s2469 + $0x68] sm:$0x11]
        %v2498 = vunpack.c.l.b16 %v2470
        %v2499 = vunpack.c.h.b16 %v2470
        %v2500 = vunpack.c.l.b16 %v2471
        %v2501 = vunpack.c.h.b16 %v2471
        %v2502 = vunpack.c.l.b16 %v2472
        %v2503 = vunpack.c.h.b16 %v2472
        %v2504 = vunpack.c.l.b16 %v2473
        %v2505 = vunpack.c.h.b16 %v2473
        %v2506 = vunpack.c.l.b16 %v2474
        %v2507 = vunpack.c.h.b16 %v2474
        %v2508 = vunpack.c.l.b16 %v2475
        %v2509 = vunpack.c.h.b16 %v2475
        %v2510 = vunpack.c.l.b16 %v2476
        %v2511 = vunpack.c.h.b16 %v2476
        %v2512 = vunpack.c.l.b16 %v2477
        %v2513 = vunpack.c.h.b16 %v2477
        %v2514 = vunpack.c.l.b16 %v2478
        %v2515 = vunpack.c.h.b16 %v2478
        %v2516 = vunpack.c.l.b16 %v2479
        %v2517 = vunpack.c.h.b16 %v2479
        %v2518 = vunpack.c.l.b16 %v2480
        %v2519 = vunpack.c.h.b16 %v2480
        %v2520 = vunpack.c.l.b16 %v2481
        %v2521 = vunpack.c.h.b16 %v2481
        %v2522 = vunpack.c.l.b16 %v2482
        %v2523 = vunpack.c.h.b16 %v2482
        %v2524 = vunpack.c.l.b16 %v2483
        %v2525 = vunpack.c.h.b16 %v2483
        %v2526 = vpack.c.b16 %v2502, %v2498
        %v2527 = vpack.c.b16 %v2503, %v2499
        %v2528 = vpack.c.b16 %v2504, %v2500
        %v2529 = vpack.c.b16 %v2505, %v2501
        %v2530 = vpack.c.b16 %v2510, %v2506
        %v2531 = vpack.c.b16 %v2511, %v2507
        %v2532 = vpack.c.b16 %v2512, %v2508
        %v2533 = vpack.c.b16 %v2513, %v2509
        %v2534 = vpack.c.b16 %v2518, %v2514
        %v2535 = vpack.c.b16 %v2519, %v2515
        %v2536 = vpack.c.b16 %v2520, %v2516
        %v2537 = vpack.c.b16 %v2521, %v2517
        %v2538 = vpack.c.b16 %v2522, %v2522
        %v2539 = vpack.c.b16 %v2523, %v2523
        %v2540 = vpack.c.b16 %v2524, %v2524
        %v2541 = vpack.c.b16 %v2525, %v2525
        %2558 = vmatpush.bf16.msra.mxu0 %v660
        %2559 = vmatpush.bf16.msra.mxu0 %v659
        %2560 = vmatpush.bf16.msra.mxu0 %v658
        %2561 = vmatpush.bf16.msra.mxu0 %v657
        %2562 = vmatpush.bf16.msra.mxu0 %v656
        %2563 = vmatpush.bf16.msra.mxu0 %v655
        %2564 = vmatpush.bf16.msra.mxu0 %v654
        %2565 = vmatpush.bf16.msra.mxu0 %v653
        %2566 = vmatmul.bf16.gmra.mxu0 %v2526
        %v2567 = vpop.f32.mrf.mxu0
        %v2568 = vadd.f32 %v449, %v2567
        %v2569 = vpop.f32.mrf.mxu0
        %v2570 = vadd.f32 %v449, %v2569
        %2571 = vmatmul.bf16.gmra.mxu0 %v2530
        %v2572 = vpop.f32.mrf.mxu0
        %v2573 = vadd.f32 %v449, %v2572
        %v2574 = vpop.f32.mrf.mxu0
        %v2575 = vadd.f32 %v449, %v2574
        %2576 = vmatmul.bf16.gmra.mxu0 %v2534
        %v2577 = vpop.f32.mrf.mxu0
        %v2578 = vadd.f32 %v449, %v2577
        %v2579 = vpop.f32.mrf.mxu0
        %v2580 = vadd.f32 %v449, %v2579
        %2581 = vmatmul.bf16.gmra.mxu0 %v2538
        %v2582 = vpop.f32.mrf.mxu0
        %v2583 = vadd.f32 %v449, %v2582
        %v2584 = vpop.f32.mrf.mxu0
        %2585 = vdwg.mxu0
        %2586 = vmatpush.bf16.msra.mxu0 %v668
        %2587 = vmatpush.bf16.msra.mxu0 %v667
        %2588 = vmatpush.bf16.msra.mxu0 %v666
        %2589 = vmatpush.bf16.msra.mxu0 %v665
        %2590 = vmatpush.bf16.msra.mxu0 %v664
        %2591 = vmatpush.bf16.msra.mxu0 %v663
        %2592 = vmatpush.bf16.msra.mxu0 %v662
        %2593 = vmatpush.bf16.msra.mxu0 %v661
        %2594 = vmatmul.bf16.gmra.mxu0 %v2527
        %v2595 = vpop.f32.mrf.mxu0
        %v2596 = vadd.f32 %v2568, %v2595
        %v2597 = vpop.f32.mrf.mxu0
        %v2598 = vadd.f32 %v2570, %v2597
        %2599 = vmatmul.bf16.gmra.mxu0 %v2531
        %v2600 = vpop.f32.mrf.mxu0
        %v2601 = vadd.f32 %v2573, %v2600
        %v2602 = vpop.f32.mrf.mxu0
        %v2603 = vadd.f32 %v2575, %v2602
        %2604 = vmatmul.bf16.gmra.mxu0 %v2535
        %v2605 = vpop.f32.mrf.mxu0
        %v2606 = vadd.f32 %v2578, %v2605
        %v2607 = vpop.f32.mrf.mxu0
        %v2608 = vadd.f32 %v2580, %v2607
        %2609 = vmatmul.bf16.gmra.mxu0 %v2539
        %v2610 = vpop.f32.mrf.mxu0
        %v2611 = vadd.f32 %v2583, %v2610
        %v2612 = vpop.f32.mrf.mxu0
        %2613 = vdwg.mxu0
        %2614 = vmatpush.bf16.msra.mxu0 %v676
        %2615 = vmatpush.bf16.msra.mxu0 %v675
        %2616 = vmatpush.bf16.msra.mxu0 %v674
        %2617 = vmatpush.bf16.msra.mxu0 %v673
        %2618 = vmatpush.bf16.msra.mxu0 %v672
        %2619 = vmatpush.bf16.msra.mxu0 %v671
        %2620 = vmatpush.bf16.msra.mxu0 %v670
        %2621 = vmatpush.bf16.msra.mxu0 %v669
        %2622 = vmatmul.bf16.gmra.mxu0 %v2528
        %v2623 = vpop.f32.mrf.mxu0
        %v2624 = vadd.f32 %v2596, %v2623
        %v2625 = vpop.f32.mrf.mxu0
        %v2626 = vadd.f32 %v2598, %v2625
        %2627 = vmatmul.bf16.gmra.mxu0 %v2532
        %v2628 = vpop.f32.mrf.mxu0
        %v2629 = vadd.f32 %v2601, %v2628
        %v2630 = vpop.f32.mrf.mxu0
        %v2631 = vadd.f32 %v2603, %v2630
        %2632 = vmatmul.bf16.gmra.mxu0 %v2536
        %v2633 = vpop.f32.mrf.mxu0
        %v2634 = vadd.f32 %v2606, %v2633
        %v2635 = vpop.f32.mrf.mxu0
        %v2636 = vadd.f32 %v2608, %v2635
        %2637 = vmatmul.bf16.gmra.mxu0 %v2540
        %v2638 = vpop.f32.mrf.mxu0
        %v2639 = vadd.f32 %v2611, %v2638
        %v2640 = vpop.f32.mrf.mxu0
        %2641 = vdwg.mxu0
        %2642 = vmatpush.bf16.msra.mxu0 %v684
        %2643 = vmatpush.bf16.msra.mxu0 %v683
        %2644 = vmatpush.bf16.msra.mxu0 %v682
        %2645 = vmatpush.bf16.msra.mxu0 %v681
        %2646 = vmatpush.bf16.msra.mxu0 %v680
        %2647 = vmatpush.bf16.msra.mxu0 %v679
        %2648 = vmatpush.bf16.msra.mxu0 %v678
        %2649 = vmatpush.bf16.msra.mxu0 %v677
        %2650 = vmatmul.bf16.gmra.mxu0 %v2529
        %v2651 = vpop.f32.mrf.mxu0
        %v2652 = vadd.f32 %v2624, %v2651
        %v2653 = vpop.f32.mrf.mxu0
        %v2654 = vadd.f32 %v2626, %v2653
        %2655 = vmatmul.bf16.gmra.mxu0 %v2533
        %v2656 = vpop.f32.mrf.mxu0
        %v2657 = vadd.f32 %v2629, %v2656
        %v2658 = vpop.f32.mrf.mxu0
        %v2659 = vadd.f32 %v2631, %v2658
        %2660 = vmatmul.bf16.gmra.mxu0 %v2537
        %v2661 = vpop.f32.mrf.mxu0
        %v2662 = vadd.f32 %v2634, %v2661
        %v2663 = vpop.f32.mrf.mxu0
        %v2664 = vadd.f32 %v2636, %v2663
        %2665 = vmatmul.bf16.gmra.mxu0 %v2541
        %v2666 = vpop.f32.mrf.mxu0
        %v2667 = vadd.f32 %v2639, %v2666
        %v2668 = vpop.f32.mrf.mxu0
        %2669 = vdwg.mxu0
        %v2670 = vmax.f32 %v2652, 0.0
        %v2671 = vmax.f32 %v2654, 0.0
        %v2672 = vmax.f32 %v2657, 0.0
        %v2673 = vmax.f32 %v2659, 0.0
        %v2674 = vmax.f32 %v2662, 0.0
        %v2675 = vmax.f32 %v2664, 0.0
        %v2676 = vmax.f32 %v2667, 0.0
        %s2677 = scalar_lea.vmem %s320, 560 [#allocation2]
        %v2678 = vld [vmem:[%s2677] sm:$0xff]
        %v2679 = vld [vmem:[%s2677 + $0x8] sm:$0xff]
        %v2680 = vld [vmem:[%s2677 + $0x10] sm:$0xff]
        %v2681 = vld [vmem:[%s2677 + $0x18] sm:$0xff]
        %v2682 = vld [vmem:[%s2677 + $0x20] sm:$0xff]
        %v2683 = vld [vmem:[%s2677 + $0x28] sm:$0xff]
        %v2684 = vld [vmem:[%s2677 + $0x30] sm:$0xff]
        %v2685 = vld [vmem:[%s2677 + $0x38] sm:$0xff]
        %v2686 = vld [vmem:[%s2677 + $0x40] sm:$0xff]
        %v2687 = vld [vmem:[%s2677 + $0x48] sm:$0xff]
        %v2688 = vld [vmem:[%s2677 + $0x50] sm:$0xff]
        %v2689 = vld [vmem:[%s2677 + $0x58] sm:$0xff]
        %v2690 = vld [vmem:[%s2677 + $0x60] sm:$0x11]
        %v2691 = vld [vmem:[%s2677 + $0x68] sm:$0x11]
        %v2706 = vunpack.c.l.b16 %v2678
        %v2707 = vunpack.c.h.b16 %v2678
        %v2708 = vunpack.c.l.b16 %v2679
        %v2709 = vunpack.c.h.b16 %v2679
        %v2710 = vunpack.c.l.b16 %v2680
        %v2711 = vunpack.c.h.b16 %v2680
        %v2712 = vunpack.c.l.b16 %v2681
        %v2713 = vunpack.c.h.b16 %v2681
        %v2714 = vunpack.c.l.b16 %v2682
        %v2715 = vunpack.c.h.b16 %v2682
        %v2716 = vunpack.c.l.b16 %v2683
        %v2717 = vunpack.c.h.b16 %v2683
        %v2718 = vunpack.c.l.b16 %v2684
        %v2719 = vunpack.c.h.b16 %v2684
        %v2720 = vunpack.c.l.b16 %v2685
        %v2721 = vunpack.c.h.b16 %v2685
        %v2722 = vunpack.c.l.b16 %v2686
        %v2723 = vunpack.c.h.b16 %v2686
        %v2724 = vunpack.c.l.b16 %v2687
        %v2725 = vunpack.c.h.b16 %v2687
        %v2726 = vunpack.c.l.b16 %v2688
        %v2727 = vunpack.c.h.b16 %v2688
        %v2728 = vunpack.c.l.b16 %v2689
        %v2729 = vunpack.c.h.b16 %v2689
        %v2730 = vunpack.c.l.b16 %v2690
        %v2731 = vunpack.c.h.b16 %v2690
        %v2732 = vunpack.c.l.b16 %v2691
        %v2733 = vunpack.c.h.b16 %v2691
        %v2734 = vpack.c.b16 %v2710, %v2706
        %v2735 = vpack.c.b16 %v2711, %v2707
        %v2736 = vpack.c.b16 %v2712, %v2708
        %v2737 = vpack.c.b16 %v2713, %v2709
        %v2738 = vpack.c.b16 %v2718, %v2714
        %v2739 = vpack.c.b16 %v2719, %v2715
        %v2740 = vpack.c.b16 %v2720, %v2716
        %v2741 = vpack.c.b16 %v2721, %v2717
        %v2742 = vpack.c.b16 %v2726, %v2722
        %v2743 = vpack.c.b16 %v2727, %v2723
        %v2744 = vpack.c.b16 %v2728, %v2724
        %v2745 = vpack.c.b16 %v2729, %v2725
        %v2746 = vpack.c.b16 %v2730, %v2730
        %v2747 = vpack.c.b16 %v2731, %v2731
        %v2748 = vpack.c.b16 %v2732, %v2732
        %v2749 = vpack.c.b16 %v2733, %v2733
        %2766 = vmatpush.bf16.msra.mxu0 %v660
        %2767 = vmatpush.bf16.msra.mxu0 %v659
        %2768 = vmatpush.bf16.msra.mxu0 %v658
        %2769 = vmatpush.bf16.msra.mxu0 %v657
        %2770 = vmatpush.bf16.msra.mxu0 %v656
        %2771 = vmatpush.bf16.msra.mxu0 %v655
        %2772 = vmatpush.bf16.msra.mxu0 %v654
        %2773 = vmatpush.bf16.msra.mxu0 %v653
        %2774 = vmatmul.bf16.gmra.mxu0 %v2734
        %v2775 = vpop.f32.mrf.mxu0
        %v2776 = vadd.f32 %v449, %v2775
        %v2777 = vpop.f32.mrf.mxu0
        %v2778 = vadd.f32 %v449, %v2777
        %2779 = vmatmul.bf16.gmra.mxu0 %v2738
        %v2780 = vpop.f32.mrf.mxu0
        %v2781 = vadd.f32 %v449, %v2780
        %v2782 = vpop.f32.mrf.mxu0
        %v2783 = vadd.f32 %v449, %v2782
        %2784 = vmatmul.bf16.gmra.mxu0 %v2742
        %v2785 = vpop.f32.mrf.mxu0
        %v2786 = vadd.f32 %v449, %v2785
        %v2787 = vpop.f32.mrf.mxu0
        %v2788 = vadd.f32 %v449, %v2787
        %2789 = vmatmul.bf16.gmra.mxu0 %v2746
        %v2790 = vpop.f32.mrf.mxu0
        %v2791 = vadd.f32 %v449, %v2790
        %v2792 = vpop.f32.mrf.mxu0
        %2793 = vdwg.mxu0
        %2794 = vmatpush.bf16.msra.mxu0 %v668
        %2795 = vmatpush.bf16.msra.mxu0 %v667
        %2796 = vmatpush.bf16.msra.mxu0 %v666
        %2797 = vmatpush.bf16.msra.mxu0 %v665
        %2798 = vmatpush.bf16.msra.mxu0 %v664
        %2799 = vmatpush.bf16.msra.mxu0 %v663
        %2800 = vmatpush.bf16.msra.mxu0 %v662
        %2801 = vmatpush.bf16.msra.mxu0 %v661
        %2802 = vmatmul.bf16.gmra.mxu0 %v2735
        %v2803 = vpop.f32.mrf.mxu0
        %v2804 = vadd.f32 %v2776, %v2803
        %v2805 = vpop.f32.mrf.mxu0
        %v2806 = vadd.f32 %v2778, %v2805
        %2807 = vmatmul.bf16.gmra.mxu0 %v2739
        %v2808 = vpop.f32.mrf.mxu0
        %v2809 = vadd.f32 %v2781, %v2808
        %v2810 = vpop.f32.mrf.mxu0
        %v2811 = vadd.f32 %v2783, %v2810
        %2812 = vmatmul.bf16.gmra.mxu0 %v2743
        %v2813 = vpop.f32.mrf.mxu0
        %v2814 = vadd.f32 %v2786, %v2813
        %v2815 = vpop.f32.mrf.mxu0
        %v2816 = vadd.f32 %v2788, %v2815
        %2817 = vmatmul.bf16.gmra.mxu0 %v2747
        %v2818 = vpop.f32.mrf.mxu0
        %v2819 = vadd.f32 %v2791, %v2818
        %v2820 = vpop.f32.mrf.mxu0
        %2821 = vdwg.mxu0
        %2822 = vmatpush.bf16.msra.mxu0 %v676
        %2823 = vmatpush.bf16.msra.mxu0 %v675
        %2824 = vmatpush.bf16.msra.mxu0 %v674
        %2825 = vmatpush.bf16.msra.mxu0 %v673
        %2826 = vmatpush.bf16.msra.mxu0 %v672
        %2827 = vmatpush.bf16.msra.mxu0 %v671
        %2828 = vmatpush.bf16.msra.mxu0 %v670
        %2829 = vmatpush.bf16.msra.mxu0 %v669
        %2830 = vmatmul.bf16.gmra.mxu0 %v2736
        %v2831 = vpop.f32.mrf.mxu0
        %v2832 = vadd.f32 %v2804, %v2831
        %v2833 = vpop.f32.mrf.mxu0
        %v2834 = vadd.f32 %v2806, %v2833
        %2835 = vmatmul.bf16.gmra.mxu0 %v2740
        %v2836 = vpop.f32.mrf.mxu0
        %v2837 = vadd.f32 %v2809, %v2836
        %v2838 = vpop.f32.mrf.mxu0
        %v2839 = vadd.f32 %v2811, %v2838
        %2840 = vmatmul.bf16.gmra.mxu0 %v2744
        %v2841 = vpop.f32.mrf.mxu0
        %v2842 = vadd.f32 %v2814, %v2841
        %v2843 = vpop.f32.mrf.mxu0
        %v2844 = vadd.f32 %v2816, %v2843
        %2845 = vmatmul.bf16.gmra.mxu0 %v2748
        %v2846 = vpop.f32.mrf.mxu0
        %v2847 = vadd.f32 %v2819, %v2846
        %v2848 = vpop.f32.mrf.mxu0
        %2849 = vdwg.mxu0
        %2850 = vmatpush.bf16.msra.mxu0 %v684
        %2851 = vmatpush.bf16.msra.mxu0 %v683
        %2852 = vmatpush.bf16.msra.mxu0 %v682
        %2853 = vmatpush.bf16.msra.mxu0 %v681
        %2854 = vmatpush.bf16.msra.mxu0 %v680
        %2855 = vmatpush.bf16.msra.mxu0 %v679
        %2856 = vmatpush.bf16.msra.mxu0 %v678
        %2857 = vmatpush.bf16.msra.mxu0 %v677
        %2858 = vmatmul.bf16.gmra.mxu0 %v2737
        %v2859 = vpop.f32.mrf.mxu0
        %v2860 = vadd.f32 %v2832, %v2859
        %v2861 = vpop.f32.mrf.mxu0
        %v2862 = vadd.f32 %v2834, %v2861
        %2863 = vmatmul.bf16.gmra.mxu0 %v2741
        %v2864 = vpop.f32.mrf.mxu0
        %v2865 = vadd.f32 %v2837, %v2864
        %v2866 = vpop.f32.mrf.mxu0
        %v2867 = vadd.f32 %v2839, %v2866
        %2868 = vmatmul.bf16.gmra.mxu0 %v2745
        %v2869 = vpop.f32.mrf.mxu0
        %v2870 = vadd.f32 %v2842, %v2869
        %v2871 = vpop.f32.mrf.mxu0
        %v2872 = vadd.f32 %v2844, %v2871
        %2873 = vmatmul.bf16.gmra.mxu0 %v2749
        %v2874 = vpop.f32.mrf.mxu0
        %v2875 = vadd.f32 %v2847, %v2874
        %v2876 = vpop.f32.mrf.mxu0
        %2877 = vdwg.mxu0
        %v2878 = vmax.f32 %v2860, 0.0
        %v2879 = vmax.f32 %v2862, 0.0
        %v2880 = vmax.f32 %v2865, 0.0
        %v2881 = vmax.f32 %v2867, 0.0
        %v2882 = vmax.f32 %v2870, 0.0
        %v2883 = vmax.f32 %v2872, 0.0
        %v2884 = vmax.f32 %v2875, 0.0
        %v2885 = vmax.f32 %v2670, %v2878
        %v2886 = vmax.f32 %v2671, %v2879
        %v2887 = vmax.f32 %v2672, %v2880
        %v2888 = vmax.f32 %v2673, %v2881
        %v2889 = vmax.f32 %v2674, %v2882
        %v2890 = vmax.f32 %v2675, %v2883
        %v2891 = vmax.f32 %v2676, %v2884
        %s2892 = scalar_lea.vmem %s320, 1344 [#allocation2]
        %v2893 = vld [vmem:[%s2892] sm:$0xff]
        %v2894 = vld [vmem:[%s2892 + $0x8] sm:$0xff]
        %v2895 = vld [vmem:[%s2892 + $0x10] sm:$0xff]
        %v2896 = vld [vmem:[%s2892 + $0x18] sm:$0xff]
        %v2897 = vld [vmem:[%s2892 + $0x20] sm:$0xff]
        %v2898 = vld [vmem:[%s2892 + $0x28] sm:$0xff]
        %v2899 = vld [vmem:[%s2892 + $0x30] sm:$0xff]
        %v2900 = vld [vmem:[%s2892 + $0x38] sm:$0xff]
        %v2901 = vld [vmem:[%s2892 + $0x40] sm:$0xff]
        %v2902 = vld [vmem:[%s2892 + $0x48] sm:$0xff]
        %v2903 = vld [vmem:[%s2892 + $0x50] sm:$0xff]
        %v2904 = vld [vmem:[%s2892 + $0x58] sm:$0xff]
        %v2905 = vld [vmem:[%s2892 + $0x60] sm:$0x11]
        %v2906 = vld [vmem:[%s2892 + $0x68] sm:$0x11]
        %v2921 = vunpack.c.l.b16 %v2893
        %v2922 = vunpack.c.h.b16 %v2893
        %v2923 = vunpack.c.l.b16 %v2894
        %v2924 = vunpack.c.h.b16 %v2894
        %v2925 = vunpack.c.l.b16 %v2895
        %v2926 = vunpack.c.h.b16 %v2895
        %v2927 = vunpack.c.l.b16 %v2896
        %v2928 = vunpack.c.h.b16 %v2896
        %v2929 = vunpack.c.l.b16 %v2897
        %v2930 = vunpack.c.h.b16 %v2897
        %v2931 = vunpack.c.l.b16 %v2898
        %v2932 = vunpack.c.h.b16 %v2898
        %v2933 = vunpack.c.l.b16 %v2899
        %v2934 = vunpack.c.h.b16 %v2899
        %v2935 = vunpack.c.l.b16 %v2900
        %v2936 = vunpack.c.h.b16 %v2900
        %v2937 = vunpack.c.l.b16 %v2901
        %v2938 = vunpack.c.h.b16 %v2901
        %v2939 = vunpack.c.l.b16 %v2902
        %v2940 = vunpack.c.h.b16 %v2902
        %v2941 = vunpack.c.l.b16 %v2903
        %v2942 = vunpack.c.h.b16 %v2903
        %v2943 = vunpack.c.l.b16 %v2904
        %v2944 = vunpack.c.h.b16 %v2904
        %v2945 = vunpack.c.l.b16 %v2905
        %v2946 = vunpack.c.h.b16 %v2905
        %v2947 = vunpack.c.l.b16 %v2906
        %v2948 = vunpack.c.h.b16 %v2906
        %v2949 = vpack.c.b16 %v2925, %v2921
        %v2950 = vpack.c.b16 %v2926, %v2922
        %v2951 = vpack.c.b16 %v2927, %v2923
        %v2952 = vpack.c.b16 %v2928, %v2924
        %v2953 = vpack.c.b16 %v2933, %v2929
        %v2954 = vpack.c.b16 %v2934, %v2930
        %v2955 = vpack.c.b16 %v2935, %v2931
        %v2956 = vpack.c.b16 %v2936, %v2932
        %v2957 = vpack.c.b16 %v2941, %v2937
        %v2958 = vpack.c.b16 %v2942, %v2938
        %v2959 = vpack.c.b16 %v2943, %v2939
        %v2960 = vpack.c.b16 %v2944, %v2940
        %v2961 = vpack.c.b16 %v2945, %v2945
        %v2962 = vpack.c.b16 %v2946, %v2946
        %v2963 = vpack.c.b16 %v2947, %v2947
        %v2964 = vpack.c.b16 %v2948, %v2948
        %2981 = vmatpush.bf16.msra.mxu0 %v660
        %2982 = vmatpush.bf16.msra.mxu0 %v659
        %2983 = vmatpush.bf16.msra.mxu0 %v658
        %2984 = vmatpush.bf16.msra.mxu0 %v657
        %2985 = vmatpush.bf16.msra.mxu0 %v656
        %2986 = vmatpush.bf16.msra.mxu0 %v655
        %2987 = vmatpush.bf16.msra.mxu0 %v654
        %2988 = vmatpush.bf16.msra.mxu0 %v653
        %2989 = vmatmul.bf16.gmra.mxu0 %v2949
        %v2990 = vpop.f32.mrf.mxu0
        %v2991 = vadd.f32 %v449, %v2990
        %v2992 = vpop.f32.mrf.mxu0
        %v2993 = vadd.f32 %v449, %v2992
        %2994 = vmatmul.bf16.gmra.mxu0 %v2953
        %v2995 = vpop.f32.mrf.mxu0
        %v2996 = vadd.f32 %v449, %v2995
        %v2997 = vpop.f32.mrf.mxu0
        %v2998 = vadd.f32 %v449, %v2997
        %2999 = vmatmul.bf16.gmra.mxu0 %v2957
        %v3000 = vpop.f32.mrf.mxu0
        %v3001 = vadd.f32 %v449, %v3000
        %v3002 = vpop.f32.mrf.mxu0
        %v3003 = vadd.f32 %v449, %v3002
        %3004 = vmatmul.bf16.gmra.mxu0 %v2961
        %v3005 = vpop.f32.mrf.mxu0
        %v3006 = vadd.f32 %v449, %v3005
        %v3007 = vpop.f32.mrf.mxu0
        %3008 = vdwg.mxu0
        %3009 = vmatpush.bf16.msra.mxu0 %v668
        %3010 = vmatpush.bf16.msra.mxu0 %v667
        %3011 = vmatpush.bf16.msra.mxu0 %v666
        %3012 = vmatpush.bf16.msra.mxu0 %v665
        %3013 = vmatpush.bf16.msra.mxu0 %v664
        %3014 = vmatpush.bf16.msra.mxu0 %v663
        %3015 = vmatpush.bf16.msra.mxu0 %v662
        %3016 = vmatpush.bf16.msra.mxu0 %v661
        %3017 = vmatmul.bf16.gmra.mxu0 %v2950
        %v3018 = vpop.f32.mrf.mxu0
        %v3019 = vadd.f32 %v2991, %v3018
        %v3020 = vpop.f32.mrf.mxu0
        %v3021 = vadd.f32 %v2993, %v3020
        %3022 = vmatmul.bf16.gmra.mxu0 %v2954
        %v3023 = vpop.f32.mrf.mxu0
        %v3024 = vadd.f32 %v2996, %v3023
        %v3025 = vpop.f32.mrf.mxu0
        %v3026 = vadd.f32 %v2998, %v3025
        %3027 = vmatmul.bf16.gmra.mxu0 %v2958
        %v3028 = vpop.f32.mrf.mxu0
        %v3029 = vadd.f32 %v3001, %v3028
        %v3030 = vpop.f32.mrf.mxu0
        %v3031 = vadd.f32 %v3003, %v3030
        %3032 = vmatmul.bf16.gmra.mxu0 %v2962
        %v3033 = vpop.f32.mrf.mxu0
        %v3034 = vadd.f32 %v3006, %v3033
        %v3035 = vpop.f32.mrf.mxu0
        %3036 = vdwg.mxu0
        %3037 = vmatpush.bf16.msra.mxu0 %v676
        %3038 = vmatpush.bf16.msra.mxu0 %v675
        %3039 = vmatpush.bf16.msra.mxu0 %v674
        %3040 = vmatpush.bf16.msra.mxu0 %v673
        %3041 = vmatpush.bf16.msra.mxu0 %v672
        %3042 = vmatpush.bf16.msra.mxu0 %v671
        %3043 = vmatpush.bf16.msra.mxu0 %v670
        %3044 = vmatpush.bf16.msra.mxu0 %v669
        %3045 = vmatmul.bf16.gmra.mxu0 %v2951
        %v3046 = vpop.f32.mrf.mxu0
        %v3047 = vadd.f32 %v3019, %v3046
        %v3048 = vpop.f32.mrf.mxu0
        %v3049 = vadd.f32 %v3021, %v3048
        %3050 = vmatmul.bf16.gmra.mxu0 %v2955
        %v3051 = vpop.f32.mrf.mxu0
        %v3052 = vadd.f32 %v3024, %v3051
        %v3053 = vpop.f32.mrf.mxu0
        %v3054 = vadd.f32 %v3026, %v3053
        %3055 = vmatmul.bf16.gmra.mxu0 %v2959
        %v3056 = vpop.f32.mrf.mxu0
        %v3057 = vadd.f32 %v3029, %v3056
        %v3058 = vpop.f32.mrf.mxu0
        %v3059 = vadd.f32 %v3031, %v3058
        %3060 = vmatmul.bf16.gmra.mxu0 %v2963
        %v3061 = vpop.f32.mrf.mxu0
        %v3062 = vadd.f32 %v3034, %v3061
        %v3063 = vpop.f32.mrf.mxu0
        %3064 = vdwg.mxu0
        %3065 = vmatpush.bf16.msra.mxu0 %v684
        %3066 = vmatpush.bf16.msra.mxu0 %v683
        %3067 = vmatpush.bf16.msra.mxu0 %v682
        %3068 = vmatpush.bf16.msra.mxu0 %v681
        %3069 = vmatpush.bf16.msra.mxu0 %v680
        %3070 = vmatpush.bf16.msra.mxu0 %v679
        %3071 = vmatpush.bf16.msra.mxu0 %v678
        %3072 = vmatpush.bf16.msra.mxu0 %v677
        %3073 = vmatmul.bf16.gmra.mxu0 %v2952
        %v3074 = vpop.f32.mrf.mxu0
        %v3075 = vadd.f32 %v3047, %v3074
        %v3076 = vpop.f32.mrf.mxu0
        %v3077 = vadd.f32 %v3049, %v3076
        %3078 = vmatmul.bf16.gmra.mxu0 %v2956
        %v3079 = vpop.f32.mrf.mxu0
        %v3080 = vadd.f32 %v3052, %v3079
        %v3081 = vpop.f32.mrf.mxu0
        %v3082 = vadd.f32 %v3054, %v3081
        %3083 = vmatmul.bf16.gmra.mxu0 %v2960
        %v3084 = vpop.f32.mrf.mxu0
        %v3085 = vadd.f32 %v3057, %v3084
        %v3086 = vpop.f32.mrf.mxu0
        %v3087 = vadd.f32 %v3059, %v3086
        %3088 = vmatmul.bf16.gmra.mxu0 %v2964
        %v3089 = vpop.f32.mrf.mxu0
        %v3090 = vadd.f32 %v3062, %v3089
        %v3091 = vpop.f32.mrf.mxu0
        %3092 = vdwg.mxu0
        %v3093 = vmax.f32 %v3075, 0.0
        %v3094 = vmax.f32 %v3077, 0.0
        %v3095 = vmax.f32 %v3080, 0.0
        %v3096 = vmax.f32 %v3082, 0.0
        %v3097 = vmax.f32 %v3085, 0.0
        %v3098 = vmax.f32 %v3087, 0.0
        %v3099 = vmax.f32 %v3090, 0.0
        %v3100 = vmax.f32 %v2885, %v3093
        %v3101 = vmax.f32 %v2886, %v3094
        %v3102 = vmax.f32 %v2887, %v3095
        %v3103 = vmax.f32 %v2888, %v3096
        %v3104 = vmax.f32 %v2889, %v3097
        %v3105 = vmax.f32 %v2890, %v3098
        %v3106 = vmax.f32 %v2891, %v3099
        %s3107 = scalar_lea.vmem %s320, 1456 [#allocation2]
        %v3108 = vld [vmem:[%s3107] sm:$0xff]
        %v3109 = vld [vmem:[%s3107 + $0x8] sm:$0xff]
        %v3110 = vld [vmem:[%s3107 + $0x10] sm:$0xff]
        %v3111 = vld [vmem:[%s3107 + $0x18] sm:$0xff]
        %v3112 = vld [vmem:[%s3107 + $0x20] sm:$0xff]
        %v3113 = vld [vmem:[%s3107 + $0x28] sm:$0xff]
        %v3114 = vld [vmem:[%s3107 + $0x30] sm:$0xff]
        %v3115 = vld [vmem:[%s3107 + $0x38] sm:$0xff]
        %v3116 = vld [vmem:[%s3107 + $0x40] sm:$0xff]
        %v3117 = vld [vmem:[%s3107 + $0x48] sm:$0xff]
        %v3118 = vld [vmem:[%s3107 + $0x50] sm:$0xff]
        %v3119 = vld [vmem:[%s3107 + $0x58] sm:$0xff]
        %v3120 = vld [vmem:[%s3107 + $0x60] sm:$0x11]
        %v3121 = vld [vmem:[%s3107 + $0x68] sm:$0x11]
        %v3136 = vunpack.c.l.b16 %v3108
        %v3137 = vunpack.c.h.b16 %v3108
        %v3138 = vunpack.c.l.b16 %v3109
        %v3139 = vunpack.c.h.b16 %v3109
        %v3140 = vunpack.c.l.b16 %v3110
        %v3141 = vunpack.c.h.b16 %v3110
        %v3142 = vunpack.c.l.b16 %v3111
        %v3143 = vunpack.c.h.b16 %v3111
        %v3144 = vunpack.c.l.b16 %v3112
        %v3145 = vunpack.c.h.b16 %v3112
        %v3146 = vunpack.c.l.b16 %v3113
        %v3147 = vunpack.c.h.b16 %v3113
        %v3148 = vunpack.c.l.b16 %v3114
        %v3149 = vunpack.c.h.b16 %v3114
        %v3150 = vunpack.c.l.b16 %v3115
        %v3151 = vunpack.c.h.b16 %v3115
        %v3152 = vunpack.c.l.b16 %v3116
        %v3153 = vunpack.c.h.b16 %v3116
        %v3154 = vunpack.c.l.b16 %v3117
        %v3155 = vunpack.c.h.b16 %v3117
        %v3156 = vunpack.c.l.b16 %v3118
        %v3157 = vunpack.c.h.b16 %v3118
        %v3158 = vunpack.c.l.b16 %v3119
        %v3159 = vunpack.c.h.b16 %v3119
        %v3160 = vunpack.c.l.b16 %v3120
        %v3161 = vunpack.c.h.b16 %v3120
        %v3162 = vunpack.c.l.b16 %v3121
        %v3163 = vunpack.c.h.b16 %v3121
        %v3164 = vpack.c.b16 %v3140, %v3136
        %v3165 = vpack.c.b16 %v3141, %v3137
        %v3166 = vpack.c.b16 %v3142, %v3138
        %v3167 = vpack.c.b16 %v3143, %v3139
        %v3168 = vpack.c.b16 %v3148, %v3144
        %v3169 = vpack.c.b16 %v3149, %v3145
        %v3170 = vpack.c.b16 %v3150, %v3146
        %v3171 = vpack.c.b16 %v3151, %v3147
        %v3172 = vpack.c.b16 %v3156, %v3152
        %v3173 = vpack.c.b16 %v3157, %v3153
        %v3174 = vpack.c.b16 %v3158, %v3154
        %v3175 = vpack.c.b16 %v3159, %v3155
        %v3176 = vpack.c.b16 %v3160, %v3160
        %v3177 = vpack.c.b16 %v3161, %v3161
        %v3178 = vpack.c.b16 %v3162, %v3162
        %v3179 = vpack.c.b16 %v3163, %v3163
        %3196 = vmatpush.bf16.msra.mxu0 %v660
        %3197 = vmatpush.bf16.msra.mxu0 %v659
        %3198 = vmatpush.bf16.msra.mxu0 %v658
        %3199 = vmatpush.bf16.msra.mxu0 %v657
        %3200 = vmatpush.bf16.msra.mxu0 %v656
        %3201 = vmatpush.bf16.msra.mxu0 %v655
        %3202 = vmatpush.bf16.msra.mxu0 %v654
        %3203 = vmatpush.bf16.msra.mxu0 %v653
        %3204 = vmatmul.bf16.gmra.mxu0 %v3164
        %v3205 = vpop.f32.mrf.mxu0
        %v3206 = vadd.f32 %v449, %v3205
        %v3207 = vpop.f32.mrf.mxu0
        %v3208 = vadd.f32 %v449, %v3207
        %3209 = vmatmul.bf16.gmra.mxu0 %v3168
        %v3210 = vpop.f32.mrf.mxu0
        %v3211 = vadd.f32 %v449, %v3210
        %v3212 = vpop.f32.mrf.mxu0
        %v3213 = vadd.f32 %v449, %v3212
        %3214 = vmatmul.bf16.gmra.mxu0 %v3172
        %v3215 = vpop.f32.mrf.mxu0
        %v3216 = vadd.f32 %v449, %v3215
        %v3217 = vpop.f32.mrf.mxu0
        %v3218 = vadd.f32 %v449, %v3217
        %3219 = vmatmul.bf16.gmra.mxu0 %v3176
        %v3220 = vpop.f32.mrf.mxu0
        %v3221 = vadd.f32 %v449, %v3220
        %v3222 = vpop.f32.mrf.mxu0
        %3223 = vdwg.mxu0
        %3224 = vmatpush.bf16.msra.mxu0 %v668
        %3225 = vmatpush.bf16.msra.mxu0 %v667
        %3226 = vmatpush.bf16.msra.mxu0 %v666
        %3227 = vmatpush.bf16.msra.mxu0 %v665
        %3228 = vmatpush.bf16.msra.mxu0 %v664
        %3229 = vmatpush.bf16.msra.mxu0 %v663
        %3230 = vmatpush.bf16.msra.mxu0 %v662
        %3231 = vmatpush.bf16.msra.mxu0 %v661
        %3232 = vmatmul.bf16.gmra.mxu0 %v3165
        %v3233 = vpop.f32.mrf.mxu0
        %v3234 = vadd.f32 %v3206, %v3233
        %v3235 = vpop.f32.mrf.mxu0
        %v3236 = vadd.f32 %v3208, %v3235
        %3237 = vmatmul.bf16.gmra.mxu0 %v3169
        %v3238 = vpop.f32.mrf.mxu0
        %v3239 = vadd.f32 %v3211, %v3238
        %v3240 = vpop.f32.mrf.mxu0
        %v3241 = vadd.f32 %v3213, %v3240
        %3242 = vmatmul.bf16.gmra.mxu0 %v3173
        %v3243 = vpop.f32.mrf.mxu0
        %v3244 = vadd.f32 %v3216, %v3243
        %v3245 = vpop.f32.mrf.mxu0
        %v3246 = vadd.f32 %v3218, %v3245
        %3247 = vmatmul.bf16.gmra.mxu0 %v3177
        %v3248 = vpop.f32.mrf.mxu0
        %v3249 = vadd.f32 %v3221, %v3248
        %v3250 = vpop.f32.mrf.mxu0
        %3251 = vdwg.mxu0
        %3252 = vmatpush.bf16.msra.mxu0 %v676
        %3253 = vmatpush.bf16.msra.mxu0 %v675
        %3254 = vmatpush.bf16.msra.mxu0 %v674
        %3255 = vmatpush.bf16.msra.mxu0 %v673
        %3256 = vmatpush.bf16.msra.mxu0 %v672
        %3257 = vmatpush.bf16.msra.mxu0 %v671
        %3258 = vmatpush.bf16.msra.mxu0 %v670
        %3259 = vmatpush.bf16.msra.mxu0 %v669
        %3260 = vmatmul.bf16.gmra.mxu0 %v3166
        %v3261 = vpop.f32.mrf.mxu0
        %v3262 = vadd.f32 %v3234, %v3261
        %v3263 = vpop.f32.mrf.mxu0
        %v3264 = vadd.f32 %v3236, %v3263
        %3265 = vmatmul.bf16.gmra.mxu0 %v3170
        %v3266 = vpop.f32.mrf.mxu0
        %v3267 = vadd.f32 %v3239, %v3266
        %v3268 = vpop.f32.mrf.mxu0
        %v3269 = vadd.f32 %v3241, %v3268
        %3270 = vmatmul.bf16.gmra.mxu0 %v3174
        %v3271 = vpop.f32.mrf.mxu0
        %v3272 = vadd.f32 %v3244, %v3271
        %v3273 = vpop.f32.mrf.mxu0
        %v3274 = vadd.f32 %v3246, %v3273
        %3275 = vmatmul.bf16.gmra.mxu0 %v3178
        %v3276 = vpop.f32.mrf.mxu0
        %v3277 = vadd.f32 %v3249, %v3276
        %v3278 = vpop.f32.mrf.mxu0
        %3279 = vdwg.mxu0
        %3280 = vmatpush.bf16.msra.mxu0 %v684
        %3281 = vmatpush.bf16.msra.mxu0 %v683
        %3282 = vmatpush.bf16.msra.mxu0 %v682
        %3283 = vmatpush.bf16.msra.mxu0 %v681
        %3284 = vmatpush.bf16.msra.mxu0 %v680
        %3285 = vmatpush.bf16.msra.mxu0 %v679
        %3286 = vmatpush.bf16.msra.mxu0 %v678
        %3287 = vmatpush.bf16.msra.mxu0 %v677
        %3288 = vmatmul.bf16.gmra.mxu0 %v3167
        %v3289 = vpop.f32.mrf.mxu0
        %v3290 = vadd.f32 %v3262, %v3289
        %v3291 = vpop.f32.mrf.mxu0
        %v3292 = vadd.f32 %v3264, %v3291
        %3293 = vmatmul.bf16.gmra.mxu0 %v3171
        %v3294 = vpop.f32.mrf.mxu0
        %v3295 = vadd.f32 %v3267, %v3294
        %v3296 = vpop.f32.mrf.mxu0
        %v3297 = vadd.f32 %v3269, %v3296
        %3298 = vmatmul.bf16.gmra.mxu0 %v3175
        %v3299 = vpop.f32.mrf.mxu0
        %v3300 = vadd.f32 %v3272, %v3299
        %v3301 = vpop.f32.mrf.mxu0
        %v3302 = vadd.f32 %v3274, %v3301
        %3303 = vmatmul.bf16.gmra.mxu0 %v3179
        %v3304 = vpop.f32.mrf.mxu0
        %v3305 = vadd.f32 %v3277, %v3304
        %v3306 = vpop.f32.mrf.mxu0
        %3307 = vdwg.mxu0
        %v3308 = vmax.f32 %v3290, 0.0
        %v3309 = vmax.f32 %v3292, 0.0
        %v3310 = vmax.f32 %v3295, 0.0
        %v3311 = vmax.f32 %v3297, 0.0
        %v3312 = vmax.f32 %v3300, 0.0
        %v3313 = vmax.f32 %v3302, 0.0
        %v3314 = vmax.f32 %v3305, 0.0
        %v3315 = vmax.f32 %v3100, %v3308
        %v3316 = vmax.f32 %v3101, %v3309
        %v3317 = vmax.f32 %v3102, %v3310
        %v3318 = vmax.f32 %v3103, %v3311
        %v3319 = vmax.f32 %v3104, %v3312
        %v3320 = vmax.f32 %v3105, %v3313
        %v3321 = vmax.f32 %v3106, %v3314
        %v3329 = vrot.slane %v3315, 1
        %v3330 = vrot.slane %v3316, 1
        %v3331 = vsel %vm1488, %v3329, %v3330
        %v3332 = vrot.slane %v3317, 1
        %v3333 = vsel %vm1488, %v3330, %v3332
        %v3334 = vrot.slane %v3318, 1
        %v3335 = vsel %vm1488, %v3332, %v3334
        %v3336 = vrot.slane %v3319, 1
        %v3337 = vsel %vm1488, %v3334, %v3336
        %v3338 = vrot.slane %v3320, 1
        %v3339 = vsel %vm1488, %v3336, %v3338
        %v3340 = vrot.slane %v3321, 1
        %v3341 = vsel %vm1488, %v3338, %v3340
        %v3348 = vmax.f32 %v3315, %v3331
        %v3349 = vmax.f32 %v3316, %v3333
        %v3350 = vmax.f32 %v3317, %v3335
        %v3351 = vmax.f32 %v3318, %v3337
        %v3352 = vmax.f32 %v3319, %v3339
        %v3353 = vmax.f32 %v3320, %v3341
        %3354 = vmatpush.msra.mxu0 0.0
        %3355 = vmatpush.msra.mxu0 0.0
        %3356 = vmatpush.msra.mxu0 0.0
        %3357 = vmatpush.msra.mxu0 0.0
        %3358 = vmatpush.msra.mxu0 0.0
        %3359 = vmatpush.msra.mxu0 0.0
        %3360 = vmatpush.msra.mxu0 0.0
        %3361 = vmatpush.msra.mxu0 0.0
        %3362 = vmatpush.msra.mxu0 0.0
        %3363 = vmatpush.msra.mxu0 0.0
        %3364 = vmatpush.msra.mxu0 %v3353
        %3365 = vmatpush.msra.mxu0 %v3352
        %3366 = vmatpush.msra.mxu0 %v3351
        %3367 = vmatpush.msra.mxu0 %v3350
        %3368 = vmatpush.msra.mxu0 %v3349
        %3369 = vmatpush.msra.mxu0 %v3348
        %3370 = vmatmul.f32.gmra.mxu0 %v1516
        %v3371 = vpop.f32.mrf.mxu0
        %v3372 = vadd.f32 0.0, %v3371
        %3373 = vmatmul.f32.gmra.mxu0 %v1519
        %v3374 = vpop.f32.mrf.mxu0
        %v3375 = vadd.f32 0.0, %v3374
        %3376 = vmatmul.f32.gmra.mxu0 %v1522
        %v3377 = vpop.f32.mrf.mxu0
        %v3378 = vadd.f32 0.0, %v3377
        %3379 = vdwg.mxu0
        %s3380 = scalar_lea.vmem %s364, 48
        %3381 = vst.msk [vmem:[%s3380] sm:$0xff] %vm1550, %v3372
        %3382 = vst.msk [vmem:[%s3380 + $0x8] sm:$0xff] %vm1550, %v3375
        %3383 = vst.msk [vmem:[%s3380 + $0x10] sm:$0xff] %vm1550, %v3378
        %s3384 = scalar_lea.vmem %s320, 672 [#allocation2]
        %v3385 = vld [vmem:[%s3384] sm:$0xff]
        %v3386 = vld [vmem:[%s3384 + $0x8] sm:$0xff]
        %v3387 = vld [vmem:[%s3384 + $0x10] sm:$0xff]
        %v3388 = vld [vmem:[%s3384 + $0x18] sm:$0xff]
        %v3389 = vld [vmem:[%s3384 + $0x20] sm:$0xff]
        %v3390 = vld [vmem:[%s3384 + $0x28] sm:$0xff]
        %v3391 = vld [vmem:[%s3384 + $0x30] sm:$0xff]
        %v3392 = vld [vmem:[%s3384 + $0x38] sm:$0xff]
        %v3393 = vld [vmem:[%s3384 + $0x40] sm:$0xff]
        %v3394 = vld [vmem:[%s3384 + $0x48] sm:$0xff]
        %v3395 = vld [vmem:[%s3384 + $0x50] sm:$0xff]
        %v3396 = vld [vmem:[%s3384 + $0x58] sm:$0xff]
        %v3397 = vld [vmem:[%s3384 + $0x60] sm:$0x11]
        %v3398 = vld [vmem:[%s3384 + $0x68] sm:$0x11]
        %v3413 = vunpack.c.l.b16 %v3385
        %v3414 = vunpack.c.h.b16 %v3385
        %v3415 = vunpack.c.l.b16 %v3386
        %v3416 = vunpack.c.h.b16 %v3386
        %v3417 = vunpack.c.l.b16 %v3387
        %v3418 = vunpack.c.h.b16 %v3387
        %v3419 = vunpack.c.l.b16 %v3388
        %v3420 = vunpack.c.h.b16 %v3388
        %v3421 = vunpack.c.l.b16 %v3389
        %v3422 = vunpack.c.h.b16 %v3389
        %v3423 = vunpack.c.l.b16 %v3390
        %v3424 = vunpack.c.h.b16 %v3390
        %v3425 = vunpack.c.l.b16 %v3391
        %v3426 = vunpack.c.h.b16 %v3391
        %v3427 = vunpack.c.l.b16 %v3392
        %v3428 = vunpack.c.h.b16 %v3392
        %v3429 = vunpack.c.l.b16 %v3393
        %v3430 = vunpack.c.h.b16 %v3393
        %v3431 = vunpack.c.l.b16 %v3394
        %v3432 = vunpack.c.h.b16 %v3394
        %v3433 = vunpack.c.l.b16 %v3395
        %v3434 = vunpack.c.h.b16 %v3395
        %v3435 = vunpack.c.l.b16 %v3396
        %v3436 = vunpack.c.h.b16 %v3396
        %v3437 = vunpack.c.l.b16 %v3397
        %v3438 = vunpack.c.h.b16 %v3397
        %v3439 = vunpack.c.l.b16 %v3398
        %v3440 = vunpack.c.h.b16 %v3398
        %v3441 = vpack.c.b16 %v3417, %v3413
        %v3442 = vpack.c.b16 %v3418, %v3414
        %v3443 = vpack.c.b16 %v3419, %v3415
        %v3444 = vpack.c.b16 %v3420, %v3416
        %v3445 = vpack.c.b16 %v3425, %v3421
        %v3446 = vpack.c.b16 %v3426, %v3422
        %v3447 = vpack.c.b16 %v3427, %v3423
        %v3448 = vpack.c.b16 %v3428, %v3424
        %v3449 = vpack.c.b16 %v3433, %v3429
        %v3450 = vpack.c.b16 %v3434, %v3430
        %v3451 = vpack.c.b16 %v3435, %v3431
        %v3452 = vpack.c.b16 %v3436, %v3432
        %v3453 = vpack.c.b16 %v3437, %v3437
        %v3454 = vpack.c.b16 %v3438, %v3438
        %v3455 = vpack.c.b16 %v3439, %v3439
        %v3456 = vpack.c.b16 %v3440, %v3440
        %3473 = vmatpush.bf16.msra.mxu0 %v660
        %3474 = vmatpush.bf16.msra.mxu0 %v659
        %3475 = vmatpush.bf16.msra.mxu0 %v658
        %3476 = vmatpush.bf16.msra.mxu0 %v657
        %3477 = vmatpush.bf16.msra.mxu0 %v656
        %3478 = vmatpush.bf16.msra.mxu0 %v655
        %3479 = vmatpush.bf16.msra.mxu0 %v654
        %3480 = vmatpush.bf16.msra.mxu0 %v653
        %3481 = vmatmul.bf16.gmra.mxu0 %v3441
        %v3482 = vpop.f32.mrf.mxu0
        %v3483 = vadd.f32 %v449, %v3482
        %v3484 = vpop.f32.mrf.mxu0
        %v3485 = vadd.f32 %v449, %v3484
        %3486 = vmatmul.bf16.gmra.mxu0 %v3445
        %v3487 = vpop.f32.mrf.mxu0
        %v3488 = vadd.f32 %v449, %v3487
        %v3489 = vpop.f32.mrf.mxu0
        %v3490 = vadd.f32 %v449, %v3489
        %3491 = vmatmul.bf16.gmra.mxu0 %v3449
        %v3492 = vpop.f32.mrf.mxu0
        %v3493 = vadd.f32 %v449, %v3492
        %v3494 = vpop.f32.mrf.mxu0
        %v3495 = vadd.f32 %v449, %v3494
        %3496 = vmatmul.bf16.gmra.mxu0 %v3453
        %v3497 = vpop.f32.mrf.mxu0
        %v3498 = vadd.f32 %v449, %v3497
        %v3499 = vpop.f32.mrf.mxu0
        %3500 = vdwg.mxu0
        %3501 = vmatpush.bf16.msra.mxu0 %v668
        %3502 = vmatpush.bf16.msra.mxu0 %v667
        %3503 = vmatpush.bf16.msra.mxu0 %v666
        %3504 = vmatpush.bf16.msra.mxu0 %v665
        %3505 = vmatpush.bf16.msra.mxu0 %v664
        %3506 = vmatpush.bf16.msra.mxu0 %v663
        %3507 = vmatpush.bf16.msra.mxu0 %v662
        %3508 = vmatpush.bf16.msra.mxu0 %v661
        %3509 = vmatmul.bf16.gmra.mxu0 %v3442
        %v3510 = vpop.f32.mrf.mxu0
        %v3511 = vadd.f32 %v3483, %v3510
        %v3512 = vpop.f32.mrf.mxu0
        %v3513 = vadd.f32 %v3485, %v3512
        %3514 = vmatmul.bf16.gmra.mxu0 %v3446
        %v3515 = vpop.f32.mrf.mxu0
        %v3516 = vadd.f32 %v3488, %v3515
        %v3517 = vpop.f32.mrf.mxu0
        %v3518 = vadd.f32 %v3490, %v3517
        %3519 = vmatmul.bf16.gmra.mxu0 %v3450
        %v3520 = vpop.f32.mrf.mxu0
        %v3521 = vadd.f32 %v3493, %v3520
        %v3522 = vpop.f32.mrf.mxu0
        %v3523 = vadd.f32 %v3495, %v3522
        %3524 = vmatmul.bf16.gmra.mxu0 %v3454
        %v3525 = vpop.f32.mrf.mxu0
        %v3526 = vadd.f32 %v3498, %v3525
        %v3527 = vpop.f32.mrf.mxu0
        %3528 = vdwg.mxu0
        %3529 = vmatpush.bf16.msra.mxu0 %v676
        %3530 = vmatpush.bf16.msra.mxu0 %v675
        %3531 = vmatpush.bf16.msra.mxu0 %v674
        %3532 = vmatpush.bf16.msra.mxu0 %v673
        %3533 = vmatpush.bf16.msra.mxu0 %v672
        %3534 = vmatpush.bf16.msra.mxu0 %v671
        %3535 = vmatpush.bf16.msra.mxu0 %v670
        %3536 = vmatpush.bf16.msra.mxu0 %v669
        %3537 = vmatmul.bf16.gmra.mxu0 %v3443
        %v3538 = vpop.f32.mrf.mxu0
        %v3539 = vadd.f32 %v3511, %v3538
        %v3540 = vpop.f32.mrf.mxu0
        %v3541 = vadd.f32 %v3513, %v3540
        %3542 = vmatmul.bf16.gmra.mxu0 %v3447
        %v3543 = vpop.f32.mrf.mxu0
        %v3544 = vadd.f32 %v3516, %v3543
        %v3545 = vpop.f32.mrf.mxu0
        %v3546 = vadd.f32 %v3518, %v3545
        %3547 = vmatmul.bf16.gmra.mxu0 %v3451
        %v3548 = vpop.f32.mrf.mxu0
        %v3549 = vadd.f32 %v3521, %v3548
        %v3550 = vpop.f32.mrf.mxu0
        %v3551 = vadd.f32 %v3523, %v3550
        %3552 = vmatmul.bf16.gmra.mxu0 %v3455
        %v3553 = vpop.f32.mrf.mxu0
        %v3554 = vadd.f32 %v3526, %v3553
        %v3555 = vpop.f32.mrf.mxu0
        %3556 = vdwg.mxu0
        %3557 = vmatpush.bf16.msra.mxu0 %v684
        %3558 = vmatpush.bf16.msra.mxu0 %v683
        %3559 = vmatpush.bf16.msra.mxu0 %v682
        %3560 = vmatpush.bf16.msra.mxu0 %v681
        %3561 = vmatpush.bf16.msra.mxu0 %v680
        %3562 = vmatpush.bf16.msra.mxu0 %v679
        %3563 = vmatpush.bf16.msra.mxu0 %v678
        %3564 = vmatpush.bf16.msra.mxu0 %v677
        %3565 = vmatmul.bf16.gmra.mxu0 %v3444
        %v3566 = vpop.f32.mrf.mxu0
        %v3567 = vadd.f32 %v3539, %v3566
        %v3568 = vpop.f32.mrf.mxu0
        %v3569 = vadd.f32 %v3541, %v3568
        %3570 = vmatmul.bf16.gmra.mxu0 %v3448
        %v3571 = vpop.f32.mrf.mxu0
        %v3572 = vadd.f32 %v3544, %v3571
        %v3573 = vpop.f32.mrf.mxu0
        %v3574 = vadd.f32 %v3546, %v3573
        %3575 = vmatmul.bf16.gmra.mxu0 %v3452
        %v3576 = vpop.f32.mrf.mxu0
        %v3577 = vadd.f32 %v3549, %v3576
        %v3578 = vpop.f32.mrf.mxu0
        %v3579 = vadd.f32 %v3551, %v3578
        %3580 = vmatmul.bf16.gmra.mxu0 %v3456
        %v3581 = vpop.f32.mrf.mxu0
        %v3582 = vadd.f32 %v3554, %v3581
        %v3583 = vpop.f32.mrf.mxu0
        %3584 = vdwg.mxu0
        %v3585 = vmax.f32 %v3567, 0.0
        %v3586 = vmax.f32 %v3569, 0.0
        %v3587 = vmax.f32 %v3572, 0.0
        %v3588 = vmax.f32 %v3574, 0.0
        %v3589 = vmax.f32 %v3577, 0.0
        %v3590 = vmax.f32 %v3579, 0.0
        %v3591 = vmax.f32 %v3582, 0.0
        %s3592 = scalar_lea.vmem %s320, 784 [#allocation2]
        %v3593 = vld [vmem:[%s3592] sm:$0xff]
        %v3594 = vld [vmem:[%s3592 + $0x8] sm:$0xff]
        %v3595 = vld [vmem:[%s3592 + $0x10] sm:$0xff]
        %v3596 = vld [vmem:[%s3592 + $0x18] sm:$0xff]
        %v3597 = vld [vmem:[%s3592 + $0x20] sm:$0xff]
        %v3598 = vld [vmem:[%s3592 + $0x28] sm:$0xff]
        %v3599 = vld [vmem:[%s3592 + $0x30] sm:$0xff]
        %v3600 = vld [vmem:[%s3592 + $0x38] sm:$0xff]
        %v3601 = vld [vmem:[%s3592 + $0x40] sm:$0xff]
        %v3602 = vld [vmem:[%s3592 + $0x48] sm:$0xff]
        %v3603 = vld [vmem:[%s3592 + $0x50] sm:$0xff]
        %v3604 = vld [vmem:[%s3592 + $0x58] sm:$0xff]
        %v3605 = vld [vmem:[%s3592 + $0x60] sm:$0x11]
        %v3606 = vld [vmem:[%s3592 + $0x68] sm:$0x11]
        %v3621 = vunpack.c.l.b16 %v3593
        %v3622 = vunpack.c.h.b16 %v3593
        %v3623 = vunpack.c.l.b16 %v3594
        %v3624 = vunpack.c.h.b16 %v3594
        %v3625 = vunpack.c.l.b16 %v3595
        %v3626 = vunpack.c.h.b16 %v3595
        %v3627 = vunpack.c.l.b16 %v3596
        %v3628 = vunpack.c.h.b16 %v3596
        %v3629 = vunpack.c.l.b16 %v3597
        %v3630 = vunpack.c.h.b16 %v3597
        %v3631 = vunpack.c.l.b16 %v3598
        %v3632 = vunpack.c.h.b16 %v3598
        %v3633 = vunpack.c.l.b16 %v3599
        %v3634 = vunpack.c.h.b16 %v3599
        %v3635 = vunpack.c.l.b16 %v3600
        %v3636 = vunpack.c.h.b16 %v3600
        %v3637 = vunpack.c.l.b16 %v3601
        %v3638 = vunpack.c.h.b16 %v3601
        %v3639 = vunpack.c.l.b16 %v3602
        %v3640 = vunpack.c.h.b16 %v3602
        %v3641 = vunpack.c.l.b16 %v3603
        %v3642 = vunpack.c.h.b16 %v3603
        %v3643 = vunpack.c.l.b16 %v3604
        %v3644 = vunpack.c.h.b16 %v3604
        %v3645 = vunpack.c.l.b16 %v3605
        %v3646 = vunpack.c.h.b16 %v3605
        %v3647 = vunpack.c.l.b16 %v3606
        %v3648 = vunpack.c.h.b16 %v3606
        %v3649 = vpack.c.b16 %v3625, %v3621
        %v3650 = vpack.c.b16 %v3626, %v3622
        %v3651 = vpack.c.b16 %v3627, %v3623
        %v3652 = vpack.c.b16 %v3628, %v3624
        %v3653 = vpack.c.b16 %v3633, %v3629
        %v3654 = vpack.c.b16 %v3634, %v3630
        %v3655 = vpack.c.b16 %v3635, %v3631
        %v3656 = vpack.c.b16 %v3636, %v3632
        %v3657 = vpack.c.b16 %v3641, %v3637
        %v3658 = vpack.c.b16 %v3642, %v3638
        %v3659 = vpack.c.b16 %v3643, %v3639
        %v3660 = vpack.c.b16 %v3644, %v3640
        %v3661 = vpack.c.b16 %v3645, %v3645
        %v3662 = vpack.c.b16 %v3646, %v3646
        %v3663 = vpack.c.b16 %v3647, %v3647
        %v3664 = vpack.c.b16 %v3648, %v3648
        %3681 = vmatpush.bf16.msra.mxu0 %v660
        %3682 = vmatpush.bf16.msra.mxu0 %v659
        %3683 = vmatpush.bf16.msra.mxu0 %v658
        %3684 = vmatpush.bf16.msra.mxu0 %v657
        %3685 = vmatpush.bf16.msra.mxu0 %v656
        %3686 = vmatpush.bf16.msra.mxu0 %v655
        %3687 = vmatpush.bf16.msra.mxu0 %v654
        %3688 = vmatpush.bf16.msra.mxu0 %v653
        %3689 = vmatmul.bf16.gmra.mxu0 %v3649
        %v3690 = vpop.f32.mrf.mxu0
        %v3691 = vadd.f32 %v449, %v3690
        %v3692 = vpop.f32.mrf.mxu0
        %v3693 = vadd.f32 %v449, %v3692
        %3694 = vmatmul.bf16.gmra.mxu0 %v3653
        %v3695 = vpop.f32.mrf.mxu0
        %v3696 = vadd.f32 %v449, %v3695
        %v3697 = vpop.f32.mrf.mxu0
        %v3698 = vadd.f32 %v449, %v3697
        %3699 = vmatmul.bf16.gmra.mxu0 %v3657
        %v3700 = vpop.f32.mrf.mxu0
        %v3701 = vadd.f32 %v449, %v3700
        %v3702 = vpop.f32.mrf.mxu0
        %v3703 = vadd.f32 %v449, %v3702
        %3704 = vmatmul.bf16.gmra.mxu0 %v3661
        %v3705 = vpop.f32.mrf.mxu0
        %v3706 = vadd.f32 %v449, %v3705
        %v3707 = vpop.f32.mrf.mxu0
        %3708 = vdwg.mxu0
        %3709 = vmatpush.bf16.msra.mxu0 %v668
        %3710 = vmatpush.bf16.msra.mxu0 %v667
        %3711 = vmatpush.bf16.msra.mxu0 %v666
        %3712 = vmatpush.bf16.msra.mxu0 %v665
        %3713 = vmatpush.bf16.msra.mxu0 %v664
        %3714 = vmatpush.bf16.msra.mxu0 %v663
        %3715 = vmatpush.bf16.msra.mxu0 %v662
        %3716 = vmatpush.bf16.msra.mxu0 %v661
        %3717 = vmatmul.bf16.gmra.mxu0 %v3650
        %v3718 = vpop.f32.mrf.mxu0
        %v3719 = vadd.f32 %v3691, %v3718
        %v3720 = vpop.f32.mrf.mxu0
        %v3721 = vadd.f32 %v3693, %v3720
        %3722 = vmatmul.bf16.gmra.mxu0 %v3654
        %v3723 = vpop.f32.mrf.mxu0
        %v3724 = vadd.f32 %v3696, %v3723
        %v3725 = vpop.f32.mrf.mxu0
        %v3726 = vadd.f32 %v3698, %v3725
        %3727 = vmatmul.bf16.gmra.mxu0 %v3658
        %v3728 = vpop.f32.mrf.mxu0
        %v3729 = vadd.f32 %v3701, %v3728
        %v3730 = vpop.f32.mrf.mxu0
        %v3731 = vadd.f32 %v3703, %v3730
        %3732 = vmatmul.bf16.gmra.mxu0 %v3662
        %v3733 = vpop.f32.mrf.mxu0
        %v3734 = vadd.f32 %v3706, %v3733
        %v3735 = vpop.f32.mrf.mxu0
        %3736 = vdwg.mxu0
        %3737 = vmatpush.bf16.msra.mxu0 %v676
        %3738 = vmatpush.bf16.msra.mxu0 %v675
        %3739 = vmatpush.bf16.msra.mxu0 %v674
        %3740 = vmatpush.bf16.msra.mxu0 %v673
        %3741 = vmatpush.bf16.msra.mxu0 %v672
        %3742 = vmatpush.bf16.msra.mxu0 %v671
        %3743 = vmatpush.bf16.msra.mxu0 %v670
        %3744 = vmatpush.bf16.msra.mxu0 %v669
        %3745 = vmatmul.bf16.gmra.mxu0 %v3651
        %v3746 = vpop.f32.mrf.mxu0
        %v3747 = vadd.f32 %v3719, %v3746
        %v3748 = vpop.f32.mrf.mxu0
        %v3749 = vadd.f32 %v3721, %v3748
        %3750 = vmatmul.bf16.gmra.mxu0 %v3655
        %v3751 = vpop.f32.mrf.mxu0
        %v3752 = vadd.f32 %v3724, %v3751
        %v3753 = vpop.f32.mrf.mxu0
        %v3754 = vadd.f32 %v3726, %v3753
        %3755 = vmatmul.bf16.gmra.mxu0 %v3659
        %v3756 = vpop.f32.mrf.mxu0
        %v3757 = vadd.f32 %v3729, %v3756
        %v3758 = vpop.f32.mrf.mxu0
        %v3759 = vadd.f32 %v3731, %v3758
        %3760 = vmatmul.bf16.gmra.mxu0 %v3663
        %v3761 = vpop.f32.mrf.mxu0
        %v3762 = vadd.f32 %v3734, %v3761
        %v3763 = vpop.f32.mrf.mxu0
        %3764 = vdwg.mxu0
        %3765 = vmatpush.bf16.msra.mxu0 %v684
        %3766 = vmatpush.bf16.msra.mxu0 %v683
        %3767 = vmatpush.bf16.msra.mxu0 %v682
        %3768 = vmatpush.bf16.msra.mxu0 %v681
        %3769 = vmatpush.bf16.msra.mxu0 %v680
        %3770 = vmatpush.bf16.msra.mxu0 %v679
        %3771 = vmatpush.bf16.msra.mxu0 %v678
        %3772 = vmatpush.bf16.msra.mxu0 %v677
        %3773 = vmatmul.bf16.gmra.mxu0 %v3652
        %v3774 = vpop.f32.mrf.mxu0
        %v3775 = vadd.f32 %v3747, %v3774
        %v3776 = vpop.f32.mrf.mxu0
        %v3777 = vadd.f32 %v3749, %v3776
        %3778 = vmatmul.bf16.gmra.mxu0 %v3656
        %v3779 = vpop.f32.mrf.mxu0
        %v3780 = vadd.f32 %v3752, %v3779
        %v3781 = vpop.f32.mrf.mxu0
        %v3782 = vadd.f32 %v3754, %v3781
        %3783 = vmatmul.bf16.gmra.mxu0 %v3660
        %v3784 = vpop.f32.mrf.mxu0
        %v3785 = vadd.f32 %v3757, %v3784
        %v3786 = vpop.f32.mrf.mxu0
        %v3787 = vadd.f32 %v3759, %v3786
        %3788 = vmatmul.bf16.gmra.mxu0 %v3664
        %v3789 = vpop.f32.mrf.mxu0
        %v3790 = vadd.f32 %v3762, %v3789
        %v3791 = vpop.f32.mrf.mxu0
        %3792 = vdwg.mxu0
        %v3793 = vmax.f32 %v3775, 0.0
        %v3794 = vmax.f32 %v3777, 0.0
        %v3795 = vmax.f32 %v3780, 0.0
        %v3796 = vmax.f32 %v3782, 0.0
        %v3797 = vmax.f32 %v3785, 0.0
        %v3798 = vmax.f32 %v3787, 0.0
        %v3799 = vmax.f32 %v3790, 0.0
        %v3800 = vmax.f32 %v3585, %v3793
        %v3801 = vmax.f32 %v3586, %v3794
        %v3802 = vmax.f32 %v3587, %v3795
        %v3803 = vmax.f32 %v3588, %v3796
        %v3804 = vmax.f32 %v3589, %v3797
        %v3805 = vmax.f32 %v3590, %v3798
        %v3806 = vmax.f32 %v3591, %v3799
        %s3807 = scalar_lea.vmem %s320, 1568 [#allocation2]
        %v3808 = vld [vmem:[%s3807] sm:$0xff]
        %v3809 = vld [vmem:[%s3807 + $0x8] sm:$0xff]
        %v3810 = vld [vmem:[%s3807 + $0x10] sm:$0xff]
        %v3811 = vld [vmem:[%s3807 + $0x18] sm:$0xff]
        %v3812 = vld [vmem:[%s3807 + $0x20] sm:$0xff]
        %v3813 = vld [vmem:[%s3807 + $0x28] sm:$0xff]
        %v3814 = vld [vmem:[%s3807 + $0x30] sm:$0xff]
        %v3815 = vld [vmem:[%s3807 + $0x38] sm:$0xff]
        %v3816 = vld [vmem:[%s3807 + $0x40] sm:$0xff]
        %v3817 = vld [vmem:[%s3807 + $0x48] sm:$0xff]
        %v3818 = vld [vmem:[%s3807 + $0x50] sm:$0xff]
        %v3819 = vld [vmem:[%s3807 + $0x58] sm:$0xff]
        %v3820 = vld [vmem:[%s3807 + $0x60] sm:$0x11]
        %v3821 = vld [vmem:[%s3807 + $0x68] sm:$0x11]
        %v3836 = vunpack.c.l.b16 %v3808
        %v3837 = vunpack.c.h.b16 %v3808
        %v3838 = vunpack.c.l.b16 %v3809
        %v3839 = vunpack.c.h.b16 %v3809
        %v3840 = vunpack.c.l.b16 %v3810
        %v3841 = vunpack.c.h.b16 %v3810
        %v3842 = vunpack.c.l.b16 %v3811
        %v3843 = vunpack.c.h.b16 %v3811
        %v3844 = vunpack.c.l.b16 %v3812
        %v3845 = vunpack.c.h.b16 %v3812
        %v3846 = vunpack.c.l.b16 %v3813
        %v3847 = vunpack.c.h.b16 %v3813
        %v3848 = vunpack.c.l.b16 %v3814
        %v3849 = vunpack.c.h.b16 %v3814
        %v3850 = vunpack.c.l.b16 %v3815
        %v3851 = vunpack.c.h.b16 %v3815
        %v3852 = vunpack.c.l.b16 %v3816
        %v3853 = vunpack.c.h.b16 %v3816
        %v3854 = vunpack.c.l.b16 %v3817
        %v3855 = vunpack.c.h.b16 %v3817
        %v3856 = vunpack.c.l.b16 %v3818
        %v3857 = vunpack.c.h.b16 %v3818
        %v3858 = vunpack.c.l.b16 %v3819
        %v3859 = vunpack.c.h.b16 %v3819
        %v3860 = vunpack.c.l.b16 %v3820
        %v3861 = vunpack.c.h.b16 %v3820
        %v3862 = vunpack.c.l.b16 %v3821
        %v3863 = vunpack.c.h.b16 %v3821
        %v3864 = vpack.c.b16 %v3840, %v3836
        %v3865 = vpack.c.b16 %v3841, %v3837
        %v3866 = vpack.c.b16 %v3842, %v3838
        %v3867 = vpack.c.b16 %v3843, %v3839
        %v3868 = vpack.c.b16 %v3848, %v3844
        %v3869 = vpack.c.b16 %v3849, %v3845
        %v3870 = vpack.c.b16 %v3850, %v3846
        %v3871 = vpack.c.b16 %v3851, %v3847
        %v3872 = vpack.c.b16 %v3856, %v3852
        %v3873 = vpack.c.b16 %v3857, %v3853
        %v3874 = vpack.c.b16 %v3858, %v3854
        %v3875 = vpack.c.b16 %v3859, %v3855
        %v3876 = vpack.c.b16 %v3860, %v3860
        %v3877 = vpack.c.b16 %v3861, %v3861
        %v3878 = vpack.c.b16 %v3862, %v3862
        %v3879 = vpack.c.b16 %v3863, %v3863
        %3896 = vmatpush.bf16.msra.mxu0 %v660
        %3897 = vmatpush.bf16.msra.mxu0 %v659
        %3898 = vmatpush.bf16.msra.mxu0 %v658
        %3899 = vmatpush.bf16.msra.mxu0 %v657
        %3900 = vmatpush.bf16.msra.mxu0 %v656
        %3901 = vmatpush.bf16.msra.mxu0 %v655
        %3902 = vmatpush.bf16.msra.mxu0 %v654
        %3903 = vmatpush.bf16.msra.mxu0 %v653
        %3904 = vmatmul.bf16.gmra.mxu0 %v3864
        %v3905 = vpop.f32.mrf.mxu0
        %v3906 = vadd.f32 %v449, %v3905
        %v3907 = vpop.f32.mrf.mxu0
        %v3908 = vadd.f32 %v449, %v3907
        %3909 = vmatmul.bf16.gmra.mxu0 %v3868
        %v3910 = vpop.f32.mrf.mxu0
        %v3911 = vadd.f32 %v449, %v3910
        %v3912 = vpop.f32.mrf.mxu0
        %v3913 = vadd.f32 %v449, %v3912
        %3914 = vmatmul.bf16.gmra.mxu0 %v3872
        %v3915 = vpop.f32.mrf.mxu0
        %v3916 = vadd.f32 %v449, %v3915
        %v3917 = vpop.f32.mrf.mxu0
        %v3918 = vadd.f32 %v449, %v3917
        %3919 = vmatmul.bf16.gmra.mxu0 %v3876
        %v3920 = vpop.f32.mrf.mxu0
        %v3921 = vadd.f32 %v449, %v3920
        %v3922 = vpop.f32.mrf.mxu0
        %3923 = vdwg.mxu0
        %3924 = vmatpush.bf16.msra.mxu0 %v668
        %3925 = vmatpush.bf16.msra.mxu0 %v667
        %3926 = vmatpush.bf16.msra.mxu0 %v666
        %3927 = vmatpush.bf16.msra.mxu0 %v665
        %3928 = vmatpush.bf16.msra.mxu0 %v664
        %3929 = vmatpush.bf16.msra.mxu0 %v663
        %3930 = vmatpush.bf16.msra.mxu0 %v662
        %3931 = vmatpush.bf16.msra.mxu0 %v661
        %3932 = vmatmul.bf16.gmra.mxu0 %v3865
        %v3933 = vpop.f32.mrf.mxu0
        %v3934 = vadd.f32 %v3906, %v3933
        %v3935 = vpop.f32.mrf.mxu0
        %v3936 = vadd.f32 %v3908, %v3935
        %3937 = vmatmul.bf16.gmra.mxu0 %v3869
        %v3938 = vpop.f32.mrf.mxu0
        %v3939 = vadd.f32 %v3911, %v3938
        %v3940 = vpop.f32.mrf.mxu0
        %v3941 = vadd.f32 %v3913, %v3940
        %3942 = vmatmul.bf16.gmra.mxu0 %v3873
        %v3943 = vpop.f32.mrf.mxu0
        %v3944 = vadd.f32 %v3916, %v3943
        %v3945 = vpop.f32.mrf.mxu0
        %v3946 = vadd.f32 %v3918, %v3945
        %3947 = vmatmul.bf16.gmra.mxu0 %v3877
        %v3948 = vpop.f32.mrf.mxu0
        %v3949 = vadd.f32 %v3921, %v3948
        %v3950 = vpop.f32.mrf.mxu0
        %3951 = vdwg.mxu0
        %3952 = vmatpush.bf16.msra.mxu0 %v676
        %3953 = vmatpush.bf16.msra.mxu0 %v675
        %3954 = vmatpush.bf16.msra.mxu0 %v674
        %3955 = vmatpush.bf16.msra.mxu0 %v673
        %3956 = vmatpush.bf16.msra.mxu0 %v672
        %3957 = vmatpush.bf16.msra.mxu0 %v671
        %3958 = vmatpush.bf16.msra.mxu0 %v670
        %3959 = vmatpush.bf16.msra.mxu0 %v669
        %3960 = vmatmul.bf16.gmra.mxu0 %v3866
        %v3961 = vpop.f32.mrf.mxu0
        %v3962 = vadd.f32 %v3934, %v3961
        %v3963 = vpop.f32.mrf.mxu0
        %v3964 = vadd.f32 %v3936, %v3963
        %3965 = vmatmul.bf16.gmra.mxu0 %v3870
        %v3966 = vpop.f32.mrf.mxu0
        %v3967 = vadd.f32 %v3939, %v3966
        %v3968 = vpop.f32.mrf.mxu0
        %v3969 = vadd.f32 %v3941, %v3968
        %3970 = vmatmul.bf16.gmra.mxu0 %v3874
        %v3971 = vpop.f32.mrf.mxu0
        %v3972 = vadd.f32 %v3944, %v3971
        %v3973 = vpop.f32.mrf.mxu0
        %v3974 = vadd.f32 %v3946, %v3973
        %3975 = vmatmul.bf16.gmra.mxu0 %v3878
        %v3976 = vpop.f32.mrf.mxu0
        %v3977 = vadd.f32 %v3949, %v3976
        %v3978 = vpop.f32.mrf.mxu0
        %3979 = vdwg.mxu0
        %3980 = vmatpush.bf16.msra.mxu0 %v684
        %3981 = vmatpush.bf16.msra.mxu0 %v683
        %3982 = vmatpush.bf16.msra.mxu0 %v682
        %3983 = vmatpush.bf16.msra.mxu0 %v681
        %3984 = vmatpush.bf16.msra.mxu0 %v680
        %3985 = vmatpush.bf16.msra.mxu0 %v679
        %3986 = vmatpush.bf16.msra.mxu0 %v678
        %3987 = vmatpush.bf16.msra.mxu0 %v677
        %3988 = vmatmul.bf16.gmra.mxu0 %v3867
        %v3989 = vpop.f32.mrf.mxu0
        %v3990 = vadd.f32 %v3962, %v3989
        %v3991 = vpop.f32.mrf.mxu0
        %v3992 = vadd.f32 %v3964, %v3991
        %3993 = vmatmul.bf16.gmra.mxu0 %v3871
        %v3994 = vpop.f32.mrf.mxu0
        %v3995 = vadd.f32 %v3967, %v3994
        %v3996 = vpop.f32.mrf.mxu0
        %v3997 = vadd.f32 %v3969, %v3996
        %3998 = vmatmul.bf16.gmra.mxu0 %v3875
        %v3999 = vpop.f32.mrf.mxu0
        %v4000 = vadd.f32 %v3972, %v3999
        %v4001 = vpop.f32.mrf.mxu0
        %v4002 = vadd.f32 %v3974, %v4001
        %4003 = vmatmul.bf16.gmra.mxu0 %v3879
        %v4004 = vpop.f32.mrf.mxu0
        %v4005 = vadd.f32 %v3977, %v4004
        %v4006 = vpop.f32.mrf.mxu0
        %4007 = vdwg.mxu0
        %v4008 = vmax.f32 %v3990, 0.0
        %v4009 = vmax.f32 %v3992, 0.0
        %v4010 = vmax.f32 %v3995, 0.0
        %v4011 = vmax.f32 %v3997, 0.0
        %v4012 = vmax.f32 %v4000, 0.0
        %v4013 = vmax.f32 %v4002, 0.0
        %v4014 = vmax.f32 %v4005, 0.0
        %v4015 = vmax.f32 %v3800, %v4008
        %v4016 = vmax.f32 %v3801, %v4009
        %v4017 = vmax.f32 %v3802, %v4010
        %v4018 = vmax.f32 %v3803, %v4011
        %v4019 = vmax.f32 %v3804, %v4012
        %v4020 = vmax.f32 %v3805, %v4013
        %v4021 = vmax.f32 %v3806, %v4014
        %s4022 = scalar_lea.vmem %s320, 1680 [#allocation2]
        %v4023 = vld [vmem:[%s4022] sm:$0xff]
        %v4024 = vld [vmem:[%s4022 + $0x8] sm:$0xff]
        %v4025 = vld [vmem:[%s4022 + $0x10] sm:$0xff]
        %v4026 = vld [vmem:[%s4022 + $0x18] sm:$0xff]
        %v4027 = vld [vmem:[%s4022 + $0x20] sm:$0xff]
        %v4028 = vld [vmem:[%s4022 + $0x28] sm:$0xff]
        %v4029 = vld [vmem:[%s4022 + $0x30] sm:$0xff]
        %v4030 = vld [vmem:[%s4022 + $0x38] sm:$0xff]
        %v4031 = vld [vmem:[%s4022 + $0x40] sm:$0xff]
        %v4032 = vld [vmem:[%s4022 + $0x48] sm:$0xff]
        %v4033 = vld [vmem:[%s4022 + $0x50] sm:$0xff]
        %v4034 = vld [vmem:[%s4022 + $0x58] sm:$0xff]
        %v4035 = vld [vmem:[%s4022 + $0x60] sm:$0x11]
        %v4036 = vld [vmem:[%s4022 + $0x68] sm:$0x11]
        %v4051 = vunpack.c.l.b16 %v4023
        %v4052 = vunpack.c.h.b16 %v4023
        %v4053 = vunpack.c.l.b16 %v4024
        %v4054 = vunpack.c.h.b16 %v4024
        %v4055 = vunpack.c.l.b16 %v4025
        %v4056 = vunpack.c.h.b16 %v4025
        %v4057 = vunpack.c.l.b16 %v4026
        %v4058 = vunpack.c.h.b16 %v4026
        %v4059 = vunpack.c.l.b16 %v4027
        %v4060 = vunpack.c.h.b16 %v4027
        %v4061 = vunpack.c.l.b16 %v4028
        %v4062 = vunpack.c.h.b16 %v4028
        %v4063 = vunpack.c.l.b16 %v4029
        %v4064 = vunpack.c.h.b16 %v4029
        %v4065 = vunpack.c.l.b16 %v4030
        %v4066 = vunpack.c.h.b16 %v4030
        %v4067 = vunpack.c.l.b16 %v4031
        %v4068 = vunpack.c.h.b16 %v4031
        %v4069 = vunpack.c.l.b16 %v4032
        %v4070 = vunpack.c.h.b16 %v4032
        %v4071 = vunpack.c.l.b16 %v4033
        %v4072 = vunpack.c.h.b16 %v4033
        %v4073 = vunpack.c.l.b16 %v4034
        %v4074 = vunpack.c.h.b16 %v4034
        %v4075 = vunpack.c.l.b16 %v4035
        %v4076 = vunpack.c.h.b16 %v4035
        %v4077 = vunpack.c.l.b16 %v4036
        %v4078 = vunpack.c.h.b16 %v4036
        %v4079 = vpack.c.b16 %v4055, %v4051
        %v4080 = vpack.c.b16 %v4056, %v4052
        %v4081 = vpack.c.b16 %v4057, %v4053
        %v4082 = vpack.c.b16 %v4058, %v4054
        %v4083 = vpack.c.b16 %v4063, %v4059
        %v4084 = vpack.c.b16 %v4064, %v4060
        %v4085 = vpack.c.b16 %v4065, %v4061
        %v4086 = vpack.c.b16 %v4066, %v4062
        %v4087 = vpack.c.b16 %v4071, %v4067
        %v4088 = vpack.c.b16 %v4072, %v4068
        %v4089 = vpack.c.b16 %v4073, %v4069
        %v4090 = vpack.c.b16 %v4074, %v4070
        %v4091 = vpack.c.b16 %v4075, %v4075
        %v4092 = vpack.c.b16 %v4076, %v4076
        %v4093 = vpack.c.b16 %v4077, %v4077
        %v4094 = vpack.c.b16 %v4078, %v4078
        %4111 = vmatpush.bf16.msra.mxu0 %v660
        %4112 = vmatpush.bf16.msra.mxu0 %v659
        %4113 = vmatpush.bf16.msra.mxu0 %v658
        %4114 = vmatpush.bf16.msra.mxu0 %v657
        %4115 = vmatpush.bf16.msra.mxu0 %v656
        %4116 = vmatpush.bf16.msra.mxu0 %v655
        %4117 = vmatpush.bf16.msra.mxu0 %v654
        %4118 = vmatpush.bf16.msra.mxu0 %v653
        %4119 = vmatmul.bf16.gmra.mxu0 %v4079
        %v4120 = vpop.f32.mrf.mxu0
        %v4121 = vadd.f32 %v449, %v4120
        %v4122 = vpop.f32.mrf.mxu0
        %v4123 = vadd.f32 %v449, %v4122
        %4124 = vmatmul.bf16.gmra.mxu0 %v4083
        %v4125 = vpop.f32.mrf.mxu0
        %v4126 = vadd.f32 %v449, %v4125
        %v4127 = vpop.f32.mrf.mxu0
        %v4128 = vadd.f32 %v449, %v4127
        %4129 = vmatmul.bf16.gmra.mxu0 %v4087
        %v4130 = vpop.f32.mrf.mxu0
        %v4131 = vadd.f32 %v449, %v4130
        %v4132 = vpop.f32.mrf.mxu0
        %v4133 = vadd.f32 %v449, %v4132
        %4134 = vmatmul.bf16.gmra.mxu0 %v4091
        %v4135 = vpop.f32.mrf.mxu0
        %v4136 = vadd.f32 %v449, %v4135
        %v4137 = vpop.f32.mrf.mxu0
        %4138 = vdwg.mxu0
        %4139 = vmatpush.bf16.msra.mxu0 %v668
        %4140 = vmatpush.bf16.msra.mxu0 %v667
        %4141 = vmatpush.bf16.msra.mxu0 %v666
        %4142 = vmatpush.bf16.msra.mxu0 %v665
        %4143 = vmatpush.bf16.msra.mxu0 %v664
        %4144 = vmatpush.bf16.msra.mxu0 %v663
        %4145 = vmatpush.bf16.msra.mxu0 %v662
        %4146 = vmatpush.bf16.msra.mxu0 %v661
        %4147 = vmatmul.bf16.gmra.mxu0 %v4080
        %v4148 = vpop.f32.mrf.mxu0
        %v4149 = vadd.f32 %v4121, %v4148
        %v4150 = vpop.f32.mrf.mxu0
        %v4151 = vadd.f32 %v4123, %v4150
        %4152 = vmatmul.bf16.gmra.mxu0 %v4084
        %v4153 = vpop.f32.mrf.mxu0
        %v4154 = vadd.f32 %v4126, %v4153
        %v4155 = vpop.f32.mrf.mxu0
        %v4156 = vadd.f32 %v4128, %v4155
        %4157 = vmatmul.bf16.gmra.mxu0 %v4088
        %v4158 = vpop.f32.mrf.mxu0
        %v4159 = vadd.f32 %v4131, %v4158
        %v4160 = vpop.f32.mrf.mxu0
        %v4161 = vadd.f32 %v4133, %v4160
        %4162 = vmatmul.bf16.gmra.mxu0 %v4092
        %v4163 = vpop.f32.mrf.mxu0
        %v4164 = vadd.f32 %v4136, %v4163
        %v4165 = vpop.f32.mrf.mxu0
        %4166 = vdwg.mxu0
        %4167 = vmatpush.bf16.msra.mxu0 %v676
        %4168 = vmatpush.bf16.msra.mxu0 %v675
        %4169 = vmatpush.bf16.msra.mxu0 %v674
        %4170 = vmatpush.bf16.msra.mxu0 %v673
        %4171 = vmatpush.bf16.msra.mxu0 %v672
        %4172 = vmatpush.bf16.msra.mxu0 %v671
        %4173 = vmatpush.bf16.msra.mxu0 %v670
        %4174 = vmatpush.bf16.msra.mxu0 %v669
        %4175 = vmatmul.bf16.gmra.mxu0 %v4081
        %v4176 = vpop.f32.mrf.mxu0
        %v4177 = vadd.f32 %v4149, %v4176
        %v4178 = vpop.f32.mrf.mxu0
        %v4179 = vadd.f32 %v4151, %v4178
        %4180 = vmatmul.bf16.gmra.mxu0 %v4085
        %v4181 = vpop.f32.mrf.mxu0
        %v4182 = vadd.f32 %v4154, %v4181
        %v4183 = vpop.f32.mrf.mxu0
        %v4184 = vadd.f32 %v4156, %v4183
        %4185 = vmatmul.bf16.gmra.mxu0 %v4089
        %v4186 = vpop.f32.mrf.mxu0
        %v4187 = vadd.f32 %v4159, %v4186
        %v4188 = vpop.f32.mrf.mxu0
        %v4189 = vadd.f32 %v4161, %v4188
        %4190 = vmatmul.bf16.gmra.mxu0 %v4093
        %v4191 = vpop.f32.mrf.mxu0
        %v4192 = vadd.f32 %v4164, %v4191
        %v4193 = vpop.f32.mrf.mxu0
        %4194 = vdwg.mxu0
        %4195 = vmatpush.bf16.msra.mxu0 %v684
        %4196 = vmatpush.bf16.msra.mxu0 %v683
        %4197 = vmatpush.bf16.msra.mxu0 %v682
        %4198 = vmatpush.bf16.msra.mxu0 %v681
        %4199 = vmatpush.bf16.msra.mxu0 %v680
        %4200 = vmatpush.bf16.msra.mxu0 %v679
        %4201 = vmatpush.bf16.msra.mxu0 %v678
        %4202 = vmatpush.bf16.msra.mxu0 %v677
        %4203 = vmatmul.bf16.gmra.mxu0 %v4082
        %v4204 = vpop.f32.mrf.mxu0
        %v4205 = vadd.f32 %v4177, %v4204
        %v4206 = vpop.f32.mrf.mxu0
        %v4207 = vadd.f32 %v4179, %v4206
        %4208 = vmatmul.bf16.gmra.mxu0 %v4086
        %v4209 = vpop.f32.mrf.mxu0
        %v4210 = vadd.f32 %v4182, %v4209
        %v4211 = vpop.f32.mrf.mxu0
        %v4212 = vadd.f32 %v4184, %v4211
        %4213 = vmatmul.bf16.gmra.mxu0 %v4090
        %v4214 = vpop.f32.mrf.mxu0
        %v4215 = vadd.f32 %v4187, %v4214
        %v4216 = vpop.f32.mrf.mxu0
        %v4217 = vadd.f32 %v4189, %v4216
        %4218 = vmatmul.bf16.gmra.mxu0 %v4094
        %v4219 = vpop.f32.mrf.mxu0
        %v4220 = vadd.f32 %v4192, %v4219
        %v4221 = vpop.f32.mrf.mxu0
        %4222 = vdwg.mxu0
        %v4223 = vmax.f32 %v4205, 0.0
        %v4224 = vmax.f32 %v4207, 0.0
        %v4225 = vmax.f32 %v4210, 0.0
        %v4226 = vmax.f32 %v4212, 0.0
        %v4227 = vmax.f32 %v4215, 0.0
        %v4228 = vmax.f32 %v4217, 0.0
        %v4229 = vmax.f32 %v4220, 0.0
        %v4230 = vmax.f32 %v4015, %v4223
        %v4231 = vmax.f32 %v4016, %v4224
        %v4232 = vmax.f32 %v4017, %v4225
        %v4233 = vmax.f32 %v4018, %v4226
        %v4234 = vmax.f32 %v4019, %v4227
        %v4235 = vmax.f32 %v4020, %v4228
        %v4236 = vmax.f32 %v4021, %v4229
        %v4244 = vrot.slane %v4230, 1
        %v4245 = vrot.slane %v4231, 1
        %v4246 = vsel %vm1488, %v4244, %v4245
        %v4247 = vrot.slane %v4232, 1
        %v4248 = vsel %vm1488, %v4245, %v4247
        %v4249 = vrot.slane %v4233, 1
        %v4250 = vsel %vm1488, %v4247, %v4249
        %v4251 = vrot.slane %v4234, 1
        %v4252 = vsel %vm1488, %v4249, %v4251
        %v4253 = vrot.slane %v4235, 1
        %v4254 = vsel %vm1488, %v4251, %v4253
        %v4255 = vrot.slane %v4236, 1
        %v4256 = vsel %vm1488, %v4253, %v4255
        %v4263 = vmax.f32 %v4230, %v4246
        %v4264 = vmax.f32 %v4231, %v4248
        %v4265 = vmax.f32 %v4232, %v4250
        %v4266 = vmax.f32 %v4233, %v4252
        %v4267 = vmax.f32 %v4234, %v4254
        %v4268 = vmax.f32 %v4235, %v4256
        %4269 = vmatpush.msra.mxu0 0.0
        %4270 = vmatpush.msra.mxu0 0.0
        %4271 = vmatpush.msra.mxu0 0.0
        %4272 = vmatpush.msra.mxu0 0.0
        %4273 = vmatpush.msra.mxu0 0.0
        %4274 = vmatpush.msra.mxu0 0.0
        %4275 = vmatpush.msra.mxu0 0.0
        %4276 = vmatpush.msra.mxu0 0.0
        %4277 = vmatpush.msra.mxu0 0.0
        %4278 = vmatpush.msra.mxu0 0.0
        %4279 = vmatpush.msra.mxu0 %v4268
        %4280 = vmatpush.msra.mxu0 %v4267
        %4281 = vmatpush.msra.mxu0 %v4266
        %4282 = vmatpush.msra.mxu0 %v4265
        %4283 = vmatpush.msra.mxu0 %v4264
        %4284 = vmatpush.msra.mxu0 %v4263
        %4285 = vmatmul.f32.gmra.mxu0 %v1516
        %v4286 = vpop.f32.mrf.mxu0
        %v4287 = vadd.f32 0.0, %v4286
        %4288 = vmatmul.f32.gmra.mxu0 %v1519
        %v4289 = vpop.f32.mrf.mxu0
        %v4290 = vadd.f32 0.0, %v4289
        %4291 = vmatmul.f32.gmra.mxu0 %v1522
        %v4292 = vpop.f32.mrf.mxu0
        %v4293 = vadd.f32 0.0, %v4292
        %4294 = vdwg.mxu0
        %s4295 = scalar_lea.vmem %s364, 72
        %4296 = vst.msk [vmem:[%s4295] sm:$0xff] %vm1550, %v4287
        %4297 = vst.msk [vmem:[%s4295 + $0x8] sm:$0xff] %vm1550, %v4290
        %4298 = vst.msk [vmem:[%s4295 + $0x10] sm:$0xff] %vm1550, %v4293
        %s4299 = smul.u32 4, %s20
        %p4300 = scmp.lt.s32.totalorder %s19, 1
        %s4301 = scalar_select %p4300, %s19, 1
        %p4302 = scmp.lt.s32.totalorder %s4299, 23
        %s4303 = scalar_select %p4302, %s4299, 23
        %s4304 = smul.addr %s4303, 3
        %s4305 = smul.addr %s4301, 72
        %s4306 = sadd.s32 %s4304, %s4305
        %s4307 = smul.addr %s4306, 8
        %s4308 = scalar_lea.vmem %s4, %s4307
        // Predicated region
        $region67: #{dqn_forward.2} parent=61 // pred_check
          %p4309 = pneg %p138
        $region68: #{dqn_forward.2} parent=61 // pred_check_branch
          %4311 = sbr.rel (%p4309) target = $region70
        $region69: #{dqn_forward.2} parent=61 // pred_region
          %s4312 = smul.u32 4, %s20
        $region70: #{dqn_forward.2} parent=61 // pred_fallthru
          _
      $region62: #{dqn_forward.2} parent=5 // pred_fallthru
        _
      %p4313 = scmp.le.s32.totalorder 2, %s10
      // Predicated region
      $region71: #{dqn_forward.2} parent=5 // pred_check
        %p4314 = pneg %p4313
      $region72: #{dqn_forward.2} parent=5 // pred_check_branch
        %4316 = sbr.rel (%p4314) target = $region74
      $region73: #{dqn_forward.2} parent=5 // pred_region
        %s4317 = ssub.s32 %s10, 2
        // Predicated region
        $region75: #{dqn_forward.2} parent=73 // pred_check
          %p4318 = pneg %p144
        $region76: #{dqn_forward.2} parent=73 // pred_check_branch
          %4320 = sbr.rel (%p4318) target = $region78
        $region77: #{dqn_forward.2} parent=73 // pred_region
          %s4321 = smul.u32 4, %s22
          %p4322 = scmp.lt.s32.totalorder %s21, 1
          %s4323 = scalar_select %p4322, %s21, 1
          %p4324 = scmp.lt.s32.totalorder %s4321, 23
          %s4325 = scalar_select %p4324, %s4321, 23
          %s4326 = smul.addr %s4325, 3
          %s4327 = smul.addr %s4323, 72
          %s4328 = sadd.s32 %s4326, %s4327
          %s4329 = smul.addr %s4328, 8
          %s4330 = scalar_lea.vmem %s4, %s4329
        $region78: #{dqn_forward.2} parent=73 // pred_fallthru
          _
      $region74: #{dqn_forward.2} parent=5 // pred_fallthru
        _
    $region6: #{dqn_forward.2} parent=1 // loop_footer
      %s14 = sadd.s32 1, %s10
    $region7: #{dqn_forward.2} parent=1 // loop_footer_branch
      %9 = sbr.rel target = $region3
    $region8: #{dqn_forward.2} parent=1 // loop_exit
      _

// kernel: dqn_forward.3
$region0: #{dqn_forward.3}
  #allocation0 [shape = 'u32[]', space=smem, size = 0x4, offset = 0x4, fixed_abs, tag = 'smem constant byte address 0x4 - core index']
  #allocation1 [shape = 'u32[72,128]{1,0:T(1,128)}', space=vmem, size = 0x9000, scoped, tag = 'internal scratch']
  %s0 = inlined_call_operand.vmem [shape: f32[2,289,384], index: 0, kind: input, shape index: {}]
  %s1 = inlined_call_operand.vmem [shape: f32[384,4], index: 1, kind: input, shape index: {}]
  %s2 = inlined_call_operand.vmem [shape: f32[1,4], index: 2, kind: input, shape index: {}]
  %s3 = inlined_call_operand.vmem [shape: f32[2,256,64], index: 3, kind: input, shape index: {}]
  %s4 = inlined_call_operand.vmem [shape: f32[1,64], index: 4, kind: input, shape index: {}]
  %s5 = inlined_call_operand.vmem [shape: f32[64,4], index: 5, kind: input, shape index: {}]
  %s6 = inlined_call_operand.vmem [shape: f32[1,4], index: 6, kind: input, shape index: {}]
  %s7 = inlined_call_operand.hbm [shape: f32[2,4], index: 7, kind: output, shape index: {}]
  %s8 = sld [smem:[#allocation0]]
  $region38: #{dqn_forward.3} parent=0
    _
  %s10 = ssub.s32 1, %s8
  %s11 = scalar_select 0, %s10, %s8
  $region1: #{dqn_forward.3} parent=0
    #allocation2 [shape = 'u8[1024]{0}', space=vmem, size = 0x400, scoped, tag = 'output window, operand 0, single buffered']
    #allocation3 [shape = 's32[1]{0}', space=sflag, size = 0x4, scoped, tag = 'scoped memory for dqn_forward.3']
    %12 = vsyncpa [#allocation3], 0
    // Predicated region
    $region2: #{dqn_forward.3} parent=1 // pred_check
      _
    $region3: #{dqn_forward.3} parent=1 // pred_check_branch
      %14 = sbr.rel (0) target = $region5
    $region4: #{dqn_forward.3} parent=1 // pred_region
      _
    $region5: #{dqn_forward.3} parent=1 // pred_fallthru
      _
    // Predicated region
    $region6: #{dqn_forward.3} parent=1 // pred_check
      _
    $region7: #{dqn_forward.3} parent=1 // pred_check_branch
      %16 = sbr.rel (0) target = $region9
    $region8: #{dqn_forward.3} parent=1 // pred_region
      _
    $region9: #{dqn_forward.3} parent=1 // pred_fallthru
      _
    // Predicated region
    $region10: #{dqn_forward.3} parent=1 // pred_check
      _
    $region11: #{dqn_forward.3} parent=1 // pred_check_branch
      %18 = sbr.rel (0) target = $region13
    $region12: #{dqn_forward.3} parent=1 // pred_region
      _
    $region13: #{dqn_forward.3} parent=1 // pred_fallthru
      _
    // Predicated region
    $region14: #{dqn_forward.3} parent=1 // pred_check
      _
    $region15: #{dqn_forward.3} parent=1 // pred_check_branch
      %20 = sbr.rel (0) target = $region17
    $region16: #{dqn_forward.3} parent=1 // pred_region
      _
    $region17: #{dqn_forward.3} parent=1 // pred_fallthru
      _
    // Predicated region
    $region18: #{dqn_forward.3} parent=1 // pred_check
      _
    $region19: #{dqn_forward.3} parent=1 // pred_check_branch
      %22 = sbr.rel (0) target = $region21
    $region20: #{dqn_forward.3} parent=1 // pred_region
      _
    $region21: #{dqn_forward.3} parent=1 // pred_fallthru
      _
    // Predicated region
    $region22: #{dqn_forward.3} parent=1 // pred_check
      _
    $region23: #{dqn_forward.3} parent=1 // pred_check_branch
      %24 = sbr.rel (0) target = $region25
    $region24: #{dqn_forward.3} parent=1 // pred_region
      _
    $region25: #{dqn_forward.3} parent=1 // pred_fallthru
      _
    // Predicated region
    $region26: #{dqn_forward.3} parent=1 // pred_check
      _
    $region27: #{dqn_forward.3} parent=1 // pred_check_branch
      %26 = sbr.rel (0) target = $region29
    $region28: #{dqn_forward.3} parent=1 // pred_region
      _
    $region29: #{dqn_forward.3} parent=1 // pred_fallthru
      _
    %v27 = vld [vmem:[%s1] sm:$0xff]
    %v28 = vld [vmem:[%s1 + $0x8] sm:$0xff]
    %v29 = vld [vmem:[%s1 + $0x10] sm:$0xff]
    %v30 = vld [vmem:[%s1 + $0x18] sm:$0xff]
    %v31 = vld [vmem:[%s1 + $0x20] sm:$0xff]
    %v32 = vld [vmem:[%s1 + $0x28] sm:$0xff]
    %v33 = vld [vmem:[%s1 + $0x30] sm:$0xff]
    %v34 = vld [vmem:[%s1 + $0x38] sm:$0xff]
    %v35 = vld [vmem:[%s1 + $0x40] sm:$0xff]
    %v36 = vld [vmem:[%s1 + $0x48] sm:$0xff]
    %v37 = vld [vmem:[%s1 + $0x50] sm:$0xff]
    %v38 = vld [vmem:[%s1 + $0x58] sm:$0xff]
    %v39 = vld [vmem:[%s1 + $0x60] sm:$0xff]
    %v40 = vld [vmem:[%s1 + $0x68] sm:$0xff]
    %v41 = vld [vmem:[%s1 + $0x70] sm:$0xff]
    %v42 = vld [vmem:[%s1 + $0x78] sm:$0xff]
    %v43 = vld [vmem:[%s1 + $0x80] sm:$0xff]
    %v44 = vld [vmem:[%s1 + $0x88] sm:$0xff]
    %v45 = vld [vmem:[%s1 + $0x90] sm:$0xff]
    %v46 = vld [vmem:[%s1 + $0x98] sm:$0xff]
    %v47 = vld [vmem:[%s1 + $0xa0] sm:$0xff]
    %v48 = vld [vmem:[%s1 + $0xa8] sm:$0xff]
    %v49 = vld [vmem:[%s1 + $0xb0] sm:$0xff]
    %v50 = vld [vmem:[%s1 + $0xb8] sm:$0xff]
    %v51 = vld [vmem:[%s1 + $0xc0] sm:$0xff]
    %v52 = vld [vmem:[%s1 + $0xc8] sm:$0xff]
    %v53 = vld [vmem:[%s1 + $0xd0] sm:$0xff]
    %v54 = vld [vmem:[%s1 + $0xd8] sm:$0xff]
    %v55 = vld [vmem:[%s1 + $0xe0] sm:$0xff]
    %v56 = vld [vmem:[%s1 + $0xe8] sm:$0xff]
    %v57 = vld [vmem:[%s1 + $0xf0] sm:$0xff]
    %v58 = vld [vmem:[%s1 + $0xf8] sm:$0xff]
    %v59 = vld [vmem:[%s1 + $0x100] sm:$0xff]
    %v60 = vld [vmem:[%s1 + $0x108] sm:$0xff]
    %v61 = vld [vmem:[%s1 + $0x110] sm:$0xff]
    %v62 = vld [vmem:[%s1 + $0x118] sm:$0xff]
    %v63 = vld [vmem:[%s1 + $0x120] sm:$0xff]
    %v64 = vld [vmem:[%s1 + $0x128] sm:$0xff]
    %v65 = vld [vmem:[%s1 + $0x130] sm:$0xff]
    %v66 = vld [vmem:[%s1 + $0x138] sm:$0xff]
    %v67 = vld [vmem:[%s1 + $0x140] sm:$0xff]
    %v68 = vld [vmem:[%s1 + $0x148] sm:$0xff]
    %v69 = vld [vmem:[%s1 + $0x150] sm:$0xff]
    %v70 = vld [vmem:[%s1 + $0x158] sm:$0xff]
    %v71 = vld [vmem:[%s1 + $0x160] sm:$0xff]
    %v72 = vld [vmem:[%s1 + $0x168] sm:$0xff]
    %v73 = vld [vmem:[%s1 + $0x170] sm:$0xff]
    %v74 = vld [vmem:[%s1 + $0x178] sm:$0xff]
    %v75 = vld [vmem:[%s0] sm:$0xff]
    %v76 = vld [vmem:[%s0 + $0x8] sm:$0xff]
    %v77 = vld [vmem:[%s0 + $0x10] sm:$0xff]
    %v78 = vld [vmem:[%s0 + $0x18] sm:$0xff]
    %v79 = vld [vmem:[%s0 + $0x20] sm:$0xff]
    %v80 = vld [vmem:[%s0 + $0x28] sm:$0xff]
    %v81 = vld [vmem:[%s0 + $0x30] sm:$0xff]
    %v82 = vld [vmem:[%s0 + $0x38] sm:$0xff]
    %v83 = vld [vmem:[%s0 + $0x40] sm:$0xff]
    %v84 = vld [vmem:[%s0 + $0x48] sm:$0xff]
    %v85 = vld [vmem:[%s0 + $0x50] sm:$0xff]
    %v86 = vld [vmem:[%s0 + $0x58] sm:$0xff]
    %v87 = vld [vmem:[%s0 + $0x60] sm:$0xff]
    %v88 = vld [vmem:[%s0 + $0x68] sm:$0xff]
    %v89 = vld [vmem:[%s0 + $0x70] sm:$0xff]
    %v90 = vld [vmem:[%s0 + $0x78] sm:$0xff]
    %v91 = vld [vmem:[%s0 + $0x80] sm:$0xff]
    %v92 = vld [vmem:[%s0 + $0x88] sm:$0xff]
    %v93 = vld [vmem:[%s0 + $0x90] sm:$0xff]
    %v94 = vld [vmem:[%s0 + $0x98] sm:$0xff]
    %v95 = vld [vmem:[%s0 + $0xa0] sm:$0xff]
    %v96 = vld [vmem:[%s0 + $0xa8] sm:$0xff]
    %v97 = vld [vmem:[%s0 + $0xb0] sm:$0xff]
    %v98 = vld [vmem:[%s0 + $0xb8] sm:$0xff]
    %v99 = vld [vmem:[%s0 + $0xc0] sm:$0xff]
    %v100 = vld [vmem:[%s0 + $0xc8] sm:$0xff]
    %v101 = vld [vmem:[%s0 + $0xd0] sm:$0xff]
    %v102 = vld [vmem:[%s0 + $0xd8] sm:$0xff]
    %v103 = vld [vmem:[%s0 + $0xe0] sm:$0xff]
    %v104 = vld [vmem:[%s0 + $0xe8] sm:$0xff]
    %v105 = vld [vmem:[%s0 + $0xf0] sm:$0xff]
    %v106 = vld [vmem:[%s0 + $0xf8] sm:$0xff]
    %v107 = vld [vmem:[%s0 + $0x100] sm:$0xff]
    %v108 = vld [vmem:[%s0 + $0x108] sm:$0xff]
    %v109 = vld [vmem:[%s0 + $0x110] sm:$0xff]
    %v110 = vld [vmem:[%s0 + $0x118] sm:$0xff]
    %v111 = vld [vmem:[%s0 + $0x120] sm:$0xff]
    %v112 = vld [vmem:[%s0 + $0x128] sm:$0xff]
    %v113 = vld [vmem:[%s0 + $0x130] sm:$0xff]
    %v114 = vld [vmem:[%s0 + $0x138] sm:$0xff]
    %v115 = vld [vmem:[%s0 + $0x140] sm:$0xff]
    %v116 = vld [vmem:[%s0 + $0x148] sm:$0xff]
    %v117 = vld [vmem:[%s0 + $0x150] sm:$0xff]
    %v118 = vld [vmem:[%s0 + $0x158] sm:$0xff]
    %v119 = vld [vmem:[%s0 + $0x160] sm:$0xff]
    %v120 = vld [vmem:[%s0 + $0x168] sm:$0xff]
    %v121 = vld [vmem:[%s0 + $0x170] sm:$0xff]
    %v122 = vld [vmem:[%s0 + $0x178] sm:$0xff]
    %v123 = vld [vmem:[%s0 + $0x180] sm:$0xff]
    %v124 = vld [vmem:[%s0 + $0x188] sm:$0xff]
    %v125 = vld [vmem:[%s0 + $0x190] sm:$0xff]
    %v126 = vld [vmem:[%s0 + $0x198] sm:$0xff]
    %v127 = vld [vmem:[%s0 + $0x1a0] sm:$0xff]
    %v128 = vld [vmem:[%s0 + $0x1a8] sm:$0xff]
    %v129 = vld [vmem:[%s0 + $0x1b0] sm:$0xff]
    %v130 = vld [vmem:[%s0 + $0x1b8] sm:$0xff]
    %v131 = vld [vmem:[%s0 + $0x1c0] sm:$0xff]
    %v132 = vld [vmem:[%s0 + $0x1c8] sm:$0xff]
    %v133 = vld [vmem:[%s0 + $0x1d0] sm:$0xff]
    %v134 = vld [vmem:[%s0 + $0x1d8] sm:$0xff]
    %v135 = vld [vmem:[%s0 + $0x1e0] sm:$0xff]
    %v136 = vld [vmem:[%s0 + $0x1e8] sm:$0xff]
    %v137 = vld [vmem:[%s0 + $0x1f0] sm:$0xff]
    %v138 = vld [vmem:[%s0 + $0x1f8] sm:$0xff]
    %v139 = vld [vmem:[%s0 + $0x200] sm:$0xff]
    %v140 = vld [vmem:[%s0 + $0x208] sm:$0xff]
    %v141 = vld [vmem:[%s0 + $0x210] sm:$0xff]
    %v142 = vld [vmem:[%s0 + $0x218] sm:$0xff]
    %v143 = vld [vmem:[%s0 + $0x220] sm:$0xff]
    %v144 = vld [vmem:[%s0 + $0x228] sm:$0xff]
    %v145 = vld [vmem:[%s0 + $0x230] sm:$0xff]
    %v146 = vld [vmem:[%s0 + $0x238] sm:$0xff]
    %v147 = vld [vmem:[%s0 + $0x240] sm:$0xff]
    %v148 = vld [vmem:[%s0 + $0x248] sm:$0xff]
    %v149 = vld [vmem:[%s0 + $0x250] sm:$0xff]
    %v150 = vld [vmem:[%s0 + $0x258] sm:$0xff]
    %v151 = vld [vmem:[%s0 + $0x260] sm:$0xff]
    %v152 = vld [vmem:[%s0 + $0x268] sm:$0xff]
    %v153 = vld [vmem:[%s0 + $0x270] sm:$0xff]
    %v154 = vld [vmem:[%s0 + $0x278] sm:$0xff]
    %v155 = vld [vmem:[%s0 + $0x280] sm:$0xff]
    %v156 = vld [vmem:[%s0 + $0x288] sm:$0xff]
    %v157 = vld [vmem:[%s0 + $0x290] sm:$0xff]
    %v158 = vld [vmem:[%s0 + $0x298] sm:$0xff]
    %v159 = vld [vmem:[%s0 + $0x2a0] sm:$0xff]
    %v160 = vld [vmem:[%s0 + $0x2a8] sm:$0xff]
    %v161 = vld [vmem:[%s0 + $0x2b0] sm:$0xff]
    %v162 = vld [vmem:[%s0 + $0x2b8] sm:$0xff]
    %v163 = vld [vmem:[%s0 + $0x2c0] sm:$0xff]
    %v164 = vld [vmem:[%s0 + $0x2c8] sm:$0xff]
    %v165 = vld [vmem:[%s0 + $0x2d0] sm:$0xff]
    %v166 = vld [vmem:[%s0 + $0x2d8] sm:$0xff]
    %v167 = vld [vmem:[%s0 + $0x2e0] sm:$0xff]
    %v168 = vld [vmem:[%s0 + $0x2e8] sm:$0xff]
    %v169 = vld [vmem:[%s0 + $0x2f0] sm:$0xff]
    %v170 = vld [vmem:[%s0 + $0x2f8] sm:$0xff]
    %v171 = vld [vmem:[%s0 + $0x300] sm:$0xff]
    %v172 = vld [vmem:[%s0 + $0x308] sm:$0xff]
    %v173 = vld [vmem:[%s0 + $0x310] sm:$0xff]
    %v174 = vld [vmem:[%s0 + $0x318] sm:$0xff]
    %v175 = vld [vmem:[%s0 + $0x320] sm:$0xff]
    %v176 = vld [vmem:[%s0 + $0x328] sm:$0xff]
    %v177 = vld [vmem:[%s0 + $0x330] sm:$0xff]
    %v178 = vld [vmem:[%s0 + $0x338] sm:$0xff]
    %v179 = vld [vmem:[%s0 + $0x340] sm:$0xff]
    %v180 = vld [vmem:[%s0 + $0x348] sm:$0xff]
    %v181 = vld [vmem:[%s0 + $0x350] sm:$0xff]
    %v182 = vld [vmem:[%s0 + $0x358] sm:$0xff]
    %v183 = vld [vmem:[%s0 + $0x360] sm:$0x1]
    %v184 = vld [vmem:[%s0 + $0x368] sm:$0x1]
    %v185 = vld [vmem:[%s0 + $0x370] sm:$0x1]
    %v186 = vld [vmem:[%s2] sm:$0x1]
    %v188 = vperm.slane %v186, 0
    %190 = vmatpush.msra.mxu0 %v42
    %191 = vmatpush.msra.mxu0 %v41
    %192 = vmatpush.msra.mxu0 %v40
    %193 = vmatpush.msra.mxu0 %v39
    %194 = vmatpush.msra.mxu0 %v38
    %195 = vmatpush.msra.mxu0 %v37
    %196 = vmatpush.msra.mxu0 %v36
    %197 = vmatpush.msra.mxu0 %v35
    %198 = vmatpush.msra.mxu0 %v34
    %199 = vmatpush.msra.mxu0 %v33
    %200 = vmatpush.msra.mxu0 %v32
    %201 = vmatpush.msra.mxu0 %v31
    %202 = vmatpush.msra.mxu0 %v30
    %203 = vmatpush.msra.mxu0 %v29
    %204 = vmatpush.msra.mxu0 %v28
    %205 = vmatpush.msra.mxu0 %v27
    %206 = vmatmul.f32.gmra.mxu0 %v75
    %v207 = vpop.f32.mrf.mxu0
    %v208 = vadd.f32 %v188, %v207
    %209 = vmatmul.f32.gmra.mxu0 %v78
    %v210 = vpop.f32.mrf.mxu0
    %v211 = vadd.f32 %v188, %v210
    %212 = vmatmul.f32.gmra.mxu0 %v81
    %v213 = vpop.f32.mrf.mxu0
    %v214 = vadd.f32 %v188, %v213
    %215 = vmatmul.f32.gmra.mxu0 %v84
    %v216 = vpop.f32.mrf.mxu0
    %v217 = vadd.f32 %v188, %v216
    %218 = vmatmul.f32.gmra.mxu0 %v87
    %v219 = vpop.f32.mrf.mxu0
    %v220 = vadd.f32 %v188, %v219
    %221 = vmatmul.f32.gmra.mxu0 %v90
    %v222 = vpop.f32.mrf.mxu0
    %v223 = vadd.f32 %v188, %v222
    %224 = vmatmul.f32.gmra.mxu0 %v93
    %v225 = vpop.f32.mrf.mxu0
    %v226 = vadd.f32 %v188, %v225
    %227 = vmatmul.f32.gmra.mxu0 %v96
    %v228 = vpop.f32.mrf.mxu0
    %v229 = vadd.f32 %v188, %v228
    %230 = vmatmul.f32.gmra.mxu0 %v99
    %v231 = vpop.f32.mrf.mxu0
    %v232 = vadd.f32 %v188, %v231
    %233 = vmatmul.f32.gmra.mxu0 %v102
    %v234 = vpop.f32.mrf.mxu0
    %v235 = vadd.f32 %v188, %v234
    %236 = vmatmul.f32.gmra.mxu0 %v105
    %v237 = vpop.f32.mrf.mxu0
    %v238 = vadd.f32 %v188, %v237
    %239 = vmatmul.f32.gmra.mxu0 %v108
    %v240 = vpop.f32.mrf.mxu0
    %v241 = vadd.f32 %v188, %v240
    %242 = vmatmul.f32.gmra.mxu0 %v111
    %v243 = vpop.f32.mrf.mxu0
    %v244 = vadd.f32 %v188, %v243
    %245 = vmatmul.f32.gmra.mxu0 %v114
    %v246 = vpop.f32.mrf.mxu0
    %v247 = vadd.f32 %v188, %v246
    %248 = vmatmul.f32.gmra.mxu0 %v117
    %v249 = vpop.f32.mrf.mxu0
    %v250 = vadd.f32 %v188, %v249
    %251 = vmatmul.f32.gmra.mxu0 %v120
    %v252 = vpop.f32.mrf.mxu0
    %v253 = vadd.f32 %v188, %v252
    %254 = vmatmul.f32.gmra.mxu0 %v123
    %v255 = vpop.f32.mrf.mxu0
    %v256 = vadd.f32 %v188, %v255
    %257 = vmatmul.f32.gmra.mxu0 %v126
    %v258 = vpop.f32.mrf.mxu0
    %v259 = vadd.f32 %v188, %v258
    %260 = vmatmul.f32.gmra.mxu0 %v129
    %v261 = vpop.f32.mrf.mxu0
    %v262 = vadd.f32 %v188, %v261
    %263 = vmatmul.f32.gmra.mxu0 %v132
    %v264 = vpop.f32.mrf.mxu0
    %v265 = vadd.f32 %v188, %v264
    %266 = vmatmul.f32.gmra.mxu0 %v135
    %v267 = vpop.f32.mrf.mxu0
    %v268 = vadd.f32 %v188, %v267
    %269 = vmatmul.f32.gmra.mxu0 %v138
    %v270 = vpop.f32.mrf.mxu0
    %v271 = vadd.f32 %v188, %v270
    %272 = vmatmul.f32.gmra.mxu0 %v141
    %v273 = vpop.f32.mrf.mxu0
    %v274 = vadd.f32 %v188, %v273
    %275 = vmatmul.f32.gmra.mxu0 %v144
    %v276 = vpop.f32.mrf.mxu0
    %v277 = vadd.f32 %v188, %v276
    %278 = vmatmul.f32.gmra.mxu0 %v147
    %v279 = vpop.f32.mrf.mxu0
    %v280 = vadd.f32 %v188, %v279
    %281 = vmatmul.f32.gmra.mxu0 %v150
    %v282 = vpop.f32.mrf.mxu0
    %v283 = vadd.f32 %v188, %v282
    %284 = vmatmul.f32.gmra.mxu0 %v153
    %v285 = vpop.f32.mrf.mxu0
    %v286 = vadd.f32 %v188, %v285
    %287 = vmatmul.f32.gmra.mxu0 %v156
    %v288 = vpop.f32.mrf.mxu0
    %v289 = vadd.f32 %v188, %v288
    %290 = vmatmul.f32.gmra.mxu0 %v159
    %v291 = vpop.f32.mrf.mxu0
    %v292 = vadd.f32 %v188, %v291
    %293 = vmatmul.f32.gmra.mxu0 %v162
    %v294 = vpop.f32.mrf.mxu0
    %v295 = vadd.f32 %v188, %v294
    %296 = vmatmul.f32.gmra.mxu0 %v165
    %v297 = vpop.f32.mrf.mxu0
    %v298 = vadd.f32 %v188, %v297
    %299 = vmatmul.f32.gmra.mxu0 %v168
    %v300 = vpop.f32.mrf.mxu0
    %v301 = vadd.f32 %v188, %v300
    %302 = vmatmul.f32.gmra.mxu0 %v171
    %v303 = vpop.f32.mrf.mxu0
    %v304 = vadd.f32 %v188, %v303
    %305 = vmatmul.f32.gmra.mxu0 %v174
    %v306 = vpop.f32.mrf.mxu0
    %v307 = vadd.f32 %v188, %v306
    %308 = vmatmul.f32.gmra.mxu0 %v177
    %v309 = vpop.f32.mrf.mxu0
    %v310 = vadd.f32 %v188, %v309
    %311 = vmatmul.f32.gmra.mxu0 %v180
    %v312 = vpop.f32.mrf.mxu0
    %313 = vmatmul.f32.gmra.mxu0 %v183
    %v314 = vpop.f32.mrf.mxu0
    %315 = vdwg.mxu0
    %316 = vmatpush.msra.mxu0 %v58
    %317 = vmatpush.msra.mxu0 %v57
    %318 = vmatpush.msra.mxu0 %v56
    %319 = vmatpush.msra.mxu0 %v55
    %320 = vmatpush.msra.mxu0 %v54
    %321 = vmatpush.msra.mxu0 %v53
    %322 = vmatpush.msra.mxu0 %v52
    %323 = vmatpush.msra.mxu0 %v51
    %324 = vmatpush.msra.mxu0 %v50
    %325 = vmatpush.msra.mxu0 %v49
    %326 = vmatpush.msra.mxu0 %v48
    %327 = vmatpush.msra.mxu0 %v47
    %328 = vmatpush.msra.mxu0 %v46
    %329 = vmatpush.msra.mxu0 %v45
    %330 = vmatpush.msra.mxu0 %v44
    %331 = vmatpush.msra.mxu0 %v43
    %332 = vmatmul.f32.gmra.mxu0 %v76
    %v333 = vpop.f32.mrf.mxu0
    %v334 = vadd.f32 %v208, %v333
    %335 = vmatmul.f32.gmra.mxu0 %v79
    %v336 = vpop.f32.mrf.mxu0
    %v337 = vadd.f32 %v211, %v336
    %338 = vmatmul.f32.gmra.mxu0 %v82
    %v339 = vpop.f32.mrf.mxu0
    %v340 = vadd.f32 %v214, %v339
    %341 = vmatmul.f32.gmra.mxu0 %v85
    %v342 = vpop.f32.mrf.mxu0
    %v343 = vadd.f32 %v217, %v342
    %344 = vmatmul.f32.gmra.mxu0 %v88
    %v345 = vpop.f32.mrf.mxu0
    %v346 = vadd.f32 %v220, %v345
    %347 = vmatmul.f32.gmra.mxu0 %v91
    %v348 = vpop.f32.mrf.mxu0
    %v349 = vadd.f32 %v223, %v348
    %350 = vmatmul.f32.gmra.mxu0 %v94
    %v351 = vpop.f32.mrf.mxu0
    %v352 = vadd.f32 %v226, %v351
    %353 = vmatmul.f32.gmra.mxu0 %v97
    %v354 = vpop.f32.mrf.mxu0
    %v355 = vadd.f32 %v229, %v354
    %356 = vmatmul.f32.gmra.mxu0 %v100
    %v357 = vpop.f32.mrf.mxu0
    %v358 = vadd.f32 %v232, %v357
    %359 = vmatmul.f32.gmra.mxu0 %v103
    %v360 = vpop.f32.mrf.mxu0
    %v361 = vadd.f32 %v235, %v360
    %362 = vmatmul.f32.gmra.mxu0 %v106
    %v363 = vpop.f32.mrf.mxu0
    %v364 = vadd.f32 %v238, %v363
    %365 = vmatmul.f32.gmra.mxu0 %v109
    %v366 = vpop.f32.mrf.mxu0
    %v367 = vadd.f32 %v241, %v366
    %368 = vmatmul.f32.gmra.mxu0 %v112
    %v369 = vpop.f32.mrf.mxu0
    %v370 = vadd.f32 %v244, %v369
    %371 = vmatmul.f32.gmra.mxu0 %v115
    %v372 = vpop.f32.mrf.mxu0
    %v373 = vadd.f32 %v247, %v372
    %374 = vmatmul.f32.gmra.mxu0 %v118
    %v375 = vpop.f32.mrf.mxu0
    %v376 = vadd.f32 %v250, %v375
    %377 = vmatmul.f32.gmra.mxu0 %v121
    %v378 = vpop.f32.mrf.mxu0
    %v379 = vadd.f32 %v253, %v378
    %380 = vmatmul.f32.gmra.mxu0 %v124
    %v381 = vpop.f32.mrf.mxu0
    %v382 = vadd.f32 %v256, %v381
    %383 = vmatmul.f32.gmra.mxu0 %v127
    %v384 = vpop.f32.mrf.mxu0
    %v385 = vadd.f32 %v259, %v384
    %386 = vmatmul.f32.gmra.mxu0 %v130
    %v387 = vpop.f32.mrf.mxu0
    %v388 = vadd.f32 %v262, %v387
    %389 = vmatmul.f32.gmra.mxu0 %v133
    %v390 = vpop.f32.mrf.mxu0
    %v391 = vadd.f32 %v265, %v390
    %392 = vmatmul.f32.gmra.mxu0 %v136
    %v393 = vpop.f32.mrf.mxu0
    %v394 = vadd.f32 %v268, %v393
    %395 = vmatmul.f32.gmra.mxu0 %v139
    %v396 = vpop.f32.mrf.mxu0
    %v397 = vadd.f32 %v271, %v396
    %398 = vmatmul.f32.gmra.mxu0 %v142
    %v399 = vpop.f32.mrf.mxu0
    %v400 = vadd.f32 %v274, %v399
    %401 = vmatmul.f32.gmra.mxu0 %v145
    %v402 = vpop.f32.mrf.mxu0
    %v403 = vadd.f32 %v277, %v402
    %404 = vmatmul.f32.gmra.mxu0 %v148
    %v405 = vpop.f32.mrf.mxu0
    %v406 = vadd.f32 %v280, %v405
    %407 = vmatmul.f32.gmra.mxu0 %v151
    %v408 = vpop.f32.mrf.mxu0
    %v409 = vadd.f32 %v283, %v408
    %410 = vmatmul.f32.gmra.mxu0 %v154
    %v411 = vpop.f32.mrf.mxu0
    %v412 = vadd.f32 %v286, %v411
    %413 = vmatmul.f32.gmra.mxu0 %v157
    %v414 = vpop.f32.mrf.mxu0
    %v415 = vadd.f32 %v289, %v414
    %416 = vmatmul.f32.gmra.mxu0 %v160
    %v417 = vpop.f32.mrf.mxu0
    %v418 = vadd.f32 %v292, %v417
    %419 = vmatmul.f32.gmra.mxu0 %v163
    %v420 = vpop.f32.mrf.mxu0
    %v421 = vadd.f32 %v295, %v420
    %422 = vmatmul.f32.gmra.mxu0 %v166
    %v423 = vpop.f32.mrf.mxu0
    %v424 = vadd.f32 %v298, %v423
    %425 = vmatmul.f32.gmra.mxu0 %v169
    %v426 = vpop.f32.mrf.mxu0
    %v427 = vadd.f32 %v301, %v426
    %428 = vmatmul.f32.gmra.mxu0 %v172
    %v429 = vpop.f32.mrf.mxu0
    %v430 = vadd.f32 %v304, %v429
    %431 = vmatmul.f32.gmra.mxu0 %v175
    %v432 = vpop.f32.mrf.mxu0
    %v433 = vadd.f32 %v307, %v432
    %434 = vmatmul.f32.gmra.mxu0 %v178
    %v435 = vpop.f32.mrf.mxu0
    %v436 = vadd.f32 %v310, %v435
    %437 = vmatmul.f32.gmra.mxu0 %v181
    %v438 = vpop.f32.mrf.mxu0
    %439 = vmatmul.f32.gmra.mxu0 %v184
    %v440 = vpop.f32.mrf.mxu0
    %441 = vdwg.mxu0
    %442 = vmatpush.msra.mxu0 %v74
    %443 = vmatpush.msra.mxu0 %v73
    %444 = vmatpush.msra.mxu0 %v72
    %445 = vmatpush.msra.mxu0 %v71
    %446 = vmatpush.msra.mxu0 %v70
    %447 = vmatpush.msra.mxu0 %v69
    %448 = vmatpush.msra.mxu0 %v68
    %449 = vmatpush.msra.mxu0 %v67
    %450 = vmatpush.msra.mxu0 %v66
    %451 = vmatpush.msra.mxu0 %v65
    %452 = vmatpush.msra.mxu0 %v64
    %453 = vmatpush.msra.mxu0 %v63
    %454 = vmatpush.msra.mxu0 %v62
    %455 = vmatpush.msra.mxu0 %v61
    %456 = vmatpush.msra.mxu0 %v60
    %457 = vmatpush.msra.mxu0 %v59
    %458 = vmatmul.f32.gmra.mxu0 %v77
    %v459 = vpop.f32.mrf.mxu0
    %v460 = vadd.f32 %v334, %v459
    %461 = vmatmul.f32.gmra.mxu0 %v80
    %v462 = vpop.f32.mrf.mxu0
    %v463 = vadd.f32 %v337, %v462
    %464 = vmatmul.f32.gmra.mxu0 %v83
    %v465 = vpop.f32.mrf.mxu0
    %v466 = vadd.f32 %v340, %v465
    %467 = vmatmul.f32.gmra.mxu0 %v86
    %v468 = vpop.f32.mrf.mxu0
    %v469 = vadd.f32 %v343, %v468
    %470 = vmatmul.f32.gmra.mxu0 %v89
    %v471 = vpop.f32.mrf.mxu0
    %v472 = vadd.f32 %v346, %v471
    %473 = vmatmul.f32.gmra.mxu0 %v92
    %v474 = vpop.f32.mrf.mxu0
    %v475 = vadd.f32 %v349, %v474
    %476 = vmatmul.f32.gmra.mxu0 %v95
    %v477 = vpop.f32.mrf.mxu0
    %v478 = vadd.f32 %v352, %v477
    %479 = vmatmul.f32.gmra.mxu0 %v98
    %v480 = vpop.f32.mrf.mxu0
    %v481 = vadd.f32 %v355, %v480
    %482 = vmatmul.f32.gmra.mxu0 %v101
    %v483 = vpop.f32.mrf.mxu0
    %v484 = vadd.f32 %v358, %v483
    %485 = vmatmul.f32.gmra.mxu0 %v104
    %v486 = vpop.f32.mrf.mxu0
    %v487 = vadd.f32 %v361, %v486
    %488 = vmatmul.f32.gmra.mxu0 %v107
    %v489 = vpop.f32.mrf.mxu0
    %v490 = vadd.f32 %v364, %v489
    %491 = vmatmul.f32.gmra.mxu0 %v110
    %v492 = vpop.f32.mrf.mxu0
    %v493 = vadd.f32 %v367, %v492
    %494 = vmatmul.f32.gmra.mxu0 %v113
    %v495 = vpop.f32.mrf.mxu0
    %v496 = vadd.f32 %v370, %v495
    %497 = vmatmul.f32.gmra.mxu0 %v116
    %v498 = vpop.f32.mrf.mxu0
    %v499 = vadd.f32 %v373, %v498
    %500 = vmatmul.f32.gmra.mxu0 %v119
    %v501 = vpop.f32.mrf.mxu0
    %v502 = vadd.f32 %v376, %v501
    %503 = vmatmul.f32.gmra.mxu0 %v122
    %v504 = vpop.f32.mrf.mxu0
    %v505 = vadd.f32 %v379, %v504
    %506 = vmatmul.f32.gmra.mxu0 %v125
    %v507 = vpop.f32.mrf.mxu0
    %v508 = vadd.f32 %v382, %v507
    %509 = vmatmul.f32.gmra.mxu0 %v128
    %v510 = vpop.f32.mrf.mxu0
    %v511 = vadd.f32 %v385, %v510
    %512 = vmatmul.f32.gmra.mxu0 %v131
    %v513 = vpop.f32.mrf.mxu0
    %v514 = vadd.f32 %v388, %v513
    %515 = vmatmul.f32.gmra.mxu0 %v134
    %v516 = vpop.f32.mrf.mxu0
    %v517 = vadd.f32 %v391, %v516
    %518 = vmatmul.f32.gmra.mxu0 %v137
    %v519 = vpop.f32.mrf.mxu0
    %v520 = vadd.f32 %v394, %v519
    %521 = vmatmul.f32.gmra.mxu0 %v140
    %v522 = vpop.f32.mrf.mxu0
    %v523 = vadd.f32 %v397, %v522
    %524 = vmatmul.f32.gmra.mxu0 %v143
    %v525 = vpop.f32.mrf.mxu0
    %v526 = vadd.f32 %v400, %v525
    %527 = vmatmul.f32.gmra.mxu0 %v146
    %v528 = vpop.f32.mrf.mxu0
    %v529 = vadd.f32 %v403, %v528
    %530 = vmatmul.f32.gmra.mxu0 %v149
    %v531 = vpop.f32.mrf.mxu0
    %v532 = vadd.f32 %v406, %v531
    %533 = vmatmul.f32.gmra.mxu0 %v152
    %v534 = vpop.f32.mrf.mxu0
    %v535 = vadd.f32 %v409, %v534
    %536 = vmatmul.f32.gmra.mxu0 %v155
    %v537 = vpop.f32.mrf.mxu0
    %v538 = vadd.f32 %v412, %v537
    %539 = vmatmul.f32.gmra.mxu0 %v158
    %v540 = vpop.f32.mrf.mxu0
    %v541 = vadd.f32 %v415, %v540
    %542 = vmatmul.f32.gmra.mxu0 %v161
    %v543 = vpop.f32.mrf.mxu0
    %v544 = vadd.f32 %v418, %v543
    %545 = vmatmul.f32.gmra.mxu0 %v164
    %v546 = vpop.f32.mrf.mxu0
    %v547 = vadd.f32 %v421, %v546
    %548 = vmatmul.f32.gmra.mxu0 %v167
    %v549 = vpop.f32.mrf.mxu0
    %v550 = vadd.f32 %v424, %v549
    %551 = vmatmul.f32.gmra.mxu0 %v170
    %v552 = vpop.f32.mrf.mxu0
    %v553 = vadd.f32 %v427, %v552
    %554 = vmatmul.f32.gmra.mxu0 %v173
    %v555 = vpop.f32.mrf.mxu0
    %v556 = vadd.f32 %v430, %v555
    %557 = vmatmul.f32.gmra.mxu0 %v176
    %v558 = vpop.f32.mrf.mxu0
    %v559 = vadd.f32 %v433, %v558
    %560 = vmatmul.f32.gmra.mxu0 %v179
    %v561 = vpop.f32.mrf.mxu0
    %v562 = vadd.f32 %v436, %v561
    %563 = vmatmul.f32.gmra.mxu0 %v182
    %v564 = vpop.f32.mrf.mxu0
    %565 = vmatmul.f32.gmra.mxu0 %v185
    %v566 = vpop.f32.mrf.mxu0
    %567 = vdwg.mxu0
    %v568 = vmax.f32 %v460, 0.0
    %v569 = vmax.f32 %v463, 0.0
    %v570 = vmax.f32 %v466, 0.0
    %v571 = vmax.f32 %v469, 0.0
    %v572 = vmax.f32 %v472, 0.0
    %v573 = vmax.f32 %v475, 0.0
    %v574 = vmax.f32 %v478, 0.0
    %v575 = vmax.f32 %v481, 0.0
    %v576 = vmax.f32 %v484, 0.0
    %v577 = vmax.f32 %v487, 0.0
    %v578 = vmax.f32 %v490, 0.0
    %v579 = vmax.f32 %v493, 0.0
    %v580 = vmax.f32 %v496, 0.0
    %v581 = vmax.f32 %v499, 0.0
    %v582 = vmax.f32 %v502, 0.0
    %v583 = vmax.f32 %v505, 0.0
    %v584 = vmax.f32 %v508, 0.0
    %v585 = vmax.f32 %v511, 0.0
    %v586 = vmax.f32 %v514, 0.0
    %v587 = vmax.f32 %v517, 0.0
    %v588 = vmax.f32 %v520, 0.0
    %v589 = vmax.f32 %v523, 0.0
    %v590 = vmax.f32 %v526, 0.0
    %v591 = vmax.f32 %v529, 0.0
    %v592 = vmax.f32 %v532, 0.0
    %v593 = vmax.f32 %v535, 0.0
    %v594 = vmax.f32 %v538, 0.0
    %v595 = vmax.f32 %v541, 0.0
    %v596 = vmax.f32 %v544, 0.0
    %v597 = vmax.f32 %v547, 0.0
    %v598 = vmax.f32 %v550, 0.0
    %v599 = vmax.f32 %v553, 0.0
    %v600 = vmax.f32 %v556, 0.0
    %v601 = vmax.f32 %v559, 0.0
    %v602 = vmax.f32 %v562, 0.0
    %v603 = vld [vmem:[%s4] sm:$0x1]
    %639 = vrot.lane.b32.xlu0 %v568, 127
    %v640 = vpop.permute.xlu0 %639
    %641 = vrot.lane.b32.xlu0 %v569, 127
    %v642 = vpop.permute.xlu0 %641
    %643 = vrot.lane.b32.xlu0 %v570, 127
    %v644 = vpop.permute.xlu0 %643
    %645 = vrot.lane.b32.xlu0 %v571, 127
    %v646 = vpop.permute.xlu0 %645
    %647 = vrot.lane.b32.xlu0 %v572, 127
    %v648 = vpop.permute.xlu0 %647
    %649 = vrot.lane.b32.xlu0 %v573, 127
    %v650 = vpop.permute.xlu0 %649
    %651 = vrot.lane.b32.xlu0 %v574, 127
    %v652 = vpop.permute.xlu0 %651
    %653 = vrot.lane.b32.xlu0 %v575, 127
    %v654 = vpop.permute.xlu0 %653
    %655 = vrot.lane.b32.xlu0 %v576, 127
    %v656 = vpop.permute.xlu0 %655
    %657 = vrot.lane.b32.xlu0 %v577, 127
    %v658 = vpop.permute.xlu0 %657
    %659 = vrot.lane.b32.xlu0 %v578, 127
    %v660 = vpop.permute.xlu0 %659
    %661 = vrot.lane.b32.xlu0 %v579, 127
    %v662 = vpop.permute.xlu0 %661
    %663 = vrot.lane.b32.xlu0 %v580, 127
    %v664 = vpop.permute.xlu0 %663
    %665 = vrot.lane.b32.xlu0 %v581, 127
    %v666 = vpop.permute.xlu0 %665
    %667 = vrot.lane.b32.xlu0 %v582, 127
    %v668 = vpop.permute.xlu0 %667
    %669 = vrot.lane.b32.xlu0 %v583, 127
    %v670 = vpop.permute.xlu0 %669
    %671 = vrot.lane.b32.xlu0 %v584, 127
    %v672 = vpop.permute.xlu0 %671
    %673 = vrot.lane.b32.xlu0 %v585, 127
    %v674 = vpop.permute.xlu0 %673
    %675 = vrot.lane.b32.xlu0 %v586, 127
    %v676 = vpop.permute.xlu0 %675
    %677 = vrot.lane.b32.xlu0 %v587, 127
    %v678 = vpop.permute.xlu0 %677
    %679 = vrot.lane.b32.xlu0 %v588, 127
    %v680 = vpop.permute.xlu0 %679
    %681 = vrot.lane.b32.xlu0 %v589, 127
    %v682 = vpop.permute.xlu0 %681
    %683 = vrot.lane.b32.xlu0 %v590, 127
    %v684 = vpop.permute.xlu0 %683
    %685 = vrot.lane.b32.xlu0 %v591, 127
    %v686 = vpop.permute.xlu0 %685
    %687 = vrot.lane.b32.xlu0 %v592, 127
    %v688 = vpop.permute.xlu0 %687
    %689 = vrot.lane.b32.xlu0 %v593, 127
    %v690 = vpop.permute.xlu0 %689
    %691 = vrot.lane.b32.xlu0 %v594, 127
    %v692 = vpop.permute.xlu0 %691
    %693 = vrot.lane.b32.xlu0 %v595, 127
    %v694 = vpop.permute.xlu0 %693
    %695 = vrot.lane.b32.xlu0 %v596, 127
    %v696 = vpop.permute.xlu0 %695
    %697 = vrot.lane.b32.xlu0 %v597, 127
    %v698 = vpop.permute.xlu0 %697
    %699 = vrot.lane.b32.xlu0 %v598, 127
    %v700 = vpop.permute.xlu0 %699
    %701 = vrot.lane.b32.xlu0 %v599, 127
    %v702 = vpop.permute.xlu0 %701
    %703 = vrot.lane.b32.xlu0 %v600, 127
    %v704 = vpop.permute.xlu0 %703
    %705 = vrot.lane.b32.xlu0 %v601, 127
    %v706 = vpop.permute.xlu0 %705
    %707 = vrot.lane.b32.xlu0 %v602, 127
    %v708 = vpop.permute.xlu0 %707
    %v744 = vmax.f32 %v568, %v640
    %v745 = vmax.f32 %v569, %v642
    %v746 = vmax.f32 %v570, %v644
    %v747 = vmax.f32 %v571, %v646
    %v748 = vmax.f32 %v572, %v648
    %v749 = vmax.f32 %v573, %v650
    %v750 = vmax.f32 %v574, %v652
    %v751 = vmax.f32 %v575, %v654
    %v752 = vmax.f32 %v576, %v656
    %v753 = vmax.f32 %v577, %v658
    %v754 = vmax.f32 %v578, %v660
    %v755 = vmax.f32 %v579, %v662
    %v756 = vmax.f32 %v580, %v664
    %v757 = vmax.f32 %v581, %v666
    %v758 = vmax.f32 %v582, %v668
    %v759 = vmax.f32 %v583, %v670
    %v760 = vmax.f32 %v584, %v672
    %v761 = vmax.f32 %v585, %v674
    %v762 = vmax.f32 %v586, %v676
    %v763 = vmax.f32 %v587, %v678
    %v764 = vmax.f32 %v588, %v680
    %v765 = vmax.f32 %v589, %v682
    %v766 = vmax.f32 %v590, %v684
    %v767 = vmax.f32 %v591, %v686
    %v768 = vmax.f32 %v592, %v688
    %v769 = vmax.f32 %v593, %v690
    %v770 = vmax.f32 %v594, %v692
    %v771 = vmax.f32 %v595, %v694
    %v772 = vmax.f32 %v596, %v696
    %v773 = vmax.f32 %v597, %v698
    %v774 = vmax.f32 %v598, %v700
    %v775 = vmax.f32 %v599, %v702
    %v776 = vmax.f32 %v600, %v704
    %v777 = vmax.f32 %v601, %v706
    %v778 = vmax.f32 %v602, %v708
    %vm812 = vcmask 1046528
    %v813 = vrot.slane %v744, 1
    %v814 = vrot.slane %v745, 1
    %v815 = vsel %vm812, %v813, %v814
    %v816 = vrot.slane %v746, 1
    %v817 = vsel %vm812, %v814, %v816
    %v818 = vrot.slane %v747, 1
    %v819 = vsel %vm812, %v816, %v818
    %v820 = vrot.slane %v748, 1
    %v821 = vsel %vm812, %v818, %v820
    %v822 = vrot.slane %v749, 1
    %v823 = vsel %vm812, %v820, %v822
    %v824 = vrot.slane %v750, 1
    %v825 = vsel %vm812, %v822, %v824
    %v826 = vrot.slane %v751, 1
    %v827 = vsel %vm812, %v824, %v826
    %v828 = vrot.slane %v752, 1
    %v829 = vsel %vm812, %v826, %v828
    %v830 = vrot.slane %v753, 1
    %v831 = vsel %vm812, %v828, %v830
    %v832 = vrot.slane %v754, 1
    %v833 = vsel %vm812, %v830, %v832
    %v834 = vrot.slane %v755, 1
    %v835 = vsel %vm812, %v832, %v834
    %v836 = vrot.slane %v756, 1
    %v837 = vsel %vm812, %v834, %v836
    %v838 = vrot.slane %v757, 1
    %v839 = vsel %vm812, %v836, %v838
    %v840 = vrot.slane %v758, 1
    %v841 = vsel %vm812, %v838, %v840
    %v842 = vrot.slane %v759, 1
    %v843 = vsel %vm812, %v840, %v842
    %v844 = vrot.slane %v760, 1
    %v845 = vsel %vm812, %v842, %v844
    %v846 = vrot.slane %v761, 1
    %v847 = vsel %vm812, %v844, %v846
    %v848 = vrot.slane %v762, 1
    %v849 = vsel %vm812, %v846, %v848
    %v850 = vrot.slane %v763, 1
    %v851 = vsel %vm812, %v848, %v850
    %v852 = vrot.slane %v764, 1
    %v853 = vsel %vm812, %v850, %v852
    %v854 = vrot.slane %v765, 1
    %v855 = vsel %vm812, %v852, %v854
    %v856 = vrot.slane %v766, 1
    %v857 = vsel %vm812, %v854, %v856
    %v858 = vrot.slane %v767, 1
    %v859 = vsel %vm812, %v856, %v858
    %v860 = vrot.slane %v768, 1
    %v861 = vsel %vm812, %v858, %v860
    %v862 = vrot.slane %v769, 1
    %v863 = vsel %vm812, %v860, %v862
    %v864 = vrot.slane %v770, 1
    %v865 = vsel %vm812, %v862, %v864
    %v866 = vrot.slane %v771, 1
    %v867 = vsel %vm812, %v864, %v866
    %v868 = vrot.slane %v772, 1
    %v869 = vsel %vm812, %v866, %v868
    %v870 = vrot.slane %v773, 1
    %v871 = vsel %vm812, %v868, %v870
    %v872 = vrot.slane %v774, 1
    %v873 = vsel %vm812, %v870, %v872
    %v874 = vrot.slane %v775, 1
    %v875 = vsel %vm812, %v872, %v874
    %v876 = vrot.slane %v776, 1
    %v877 = vsel %vm812, %v874, %v876
    %v910 = vmax.f32 %v744, %v815
    %v911 = vmax.f32 %v745, %v817
    %v912 = vmax.f32 %v746, %v819
    %v913 = vmax.f32 %v747, %v821
    %v914 = vmax.f32 %v748, %v823
    %v915 = vmax.f32 %v749, %v825
    %v916 = vmax.f32 %v750, %v827
    %v917 = vmax.f32 %v751, %v829
    %v918 = vmax.f32 %v752, %v831
    %v919 = vmax.f32 %v753, %v833
    %v920 = vmax.f32 %v754, %v835
    %v921 = vmax.f32 %v755, %v837
    %v922 = vmax.f32 %v756, %v839
    %v923 = vmax.f32 %v757, %v841
    %v924 = vmax.f32 %v758, %v843
    %v925 = vmax.f32 %v759, %v845
    %v926 = vmax.f32 %v760, %v847
    %v927 = vmax.f32 %v761, %v849
    %v928 = vmax.f32 %v762, %v851
    %v929 = vmax.f32 %v763, %v853
    %v930 = vmax.f32 %v764, %v855
    %v931 = vmax.f32 %v765, %v857
    %v932 = vmax.f32 %v766, %v859
    %v933 = vmax.f32 %v767, %v861
    %v934 = vmax.f32 %v768, %v863
    %v935 = vmax.f32 %v769, %v865
    %v936 = vmax.f32 %v770, %v867
    %v937 = vmax.f32 %v771, %v869
    %v938 = vmax.f32 %v772, %v871
    %v939 = vmax.f32 %v773, %v873
    %v940 = vmax.f32 %v774, %v875
    %v941 = vmax.f32 %v775, %v877
    %v944 = vrot.slane %v777, 1
    %v945 = vsel %vm812, %v876, %v944
    %v946 = vrot.slane %v778, 1
    %v947 = vsel %vm812, %v944, %v946
    %v951 = vmax.f32 %v776, %v945
    %v952 = vmax.f32 %v777, %v947
    %v953 = vmax.f32 %v778, %v946
    %v987 = vrot.slane %v912, 1
    %v988 = vrot.slane %v913, 1
    %v989 = vsel %vm812, %v987, %v988
    %v990 = vrot.slane %v914, 1
    %v991 = vsel %vm812, %v988, %v990
    %v992 = vrot.slane %v915, 1
    %v993 = vsel %vm812, %v990, %v992
    %v994 = vrot.slane %v916, 1
    %v995 = vsel %vm812, %v992, %v994
    %v996 = vrot.slane %v917, 1
    %v997 = vsel %vm812, %v994, %v996
    %v998 = vrot.slane %v918, 1
    %v999 = vsel %vm812, %v996, %v998
    %v1000 = vrot.slane %v919, 1
    %v1001 = vsel %vm812, %v998, %v1000
    %v1002 = vrot.slane %v920, 1
    %v1003 = vsel %vm812, %v1000, %v1002
    %v1004 = vrot.slane %v921, 1
    %v1005 = vsel %vm812, %v1002, %v1004
    %v1006 = vrot.slane %v922, 1
    %v1007 = vsel %vm812, %v1004, %v1006
    %v1008 = vrot.slane %v923, 1
    %v1009 = vsel %vm812, %v1006, %v1008
    %v1010 = vrot.slane %v924, 1
    %v1011 = vsel %vm812, %v1008, %v1010
    %v1012 = vrot.slane %v925, 1
    %v1013 = vsel %vm812, %v1010, %v1012
    %v1014 = vrot.slane %v926, 1
    %v1015 = vsel %vm812, %v1012, %v1014
    %v1016 = vrot.slane %v927, 1
    %v1017 = vsel %vm812, %v1014, %v1016
    %v1018 = vrot.slane %v928, 1
    %v1019 = vsel %vm812, %v1016, %v1018
    %v1020 = vrot.slane %v929, 1
    %v1021 = vsel %vm812, %v1018, %v1020
    %v1022 = vrot.slane %v930, 1
    %v1023 = vsel %vm812, %v1020, %v1022
    %v1024 = vrot.slane %v931, 1
    %v1025 = vsel %vm812, %v1022, %v1024
    %v1026 = vrot.slane %v932, 1
    %v1027 = vsel %vm812, %v1024, %v1026
    %v1028 = vrot.slane %v933, 1
    %v1029 = vsel %vm812, %v1026, %v1028
    %v1030 = vrot.slane %v934, 1
    %v1031 = vsel %vm812, %v1028, %v1030
    %v1032 = vrot.slane %v935, 1
    %v1033 = vsel %vm812, %v1030, %v1032
    %v1034 = vrot.slane %v936, 1
    %v1035 = vsel %vm812, %v1032, %v1034
    %v1036 = vrot.slane %v937, 1
    %v1037 = vsel %vm812, %v1034, %v1036
    %v1038 = vrot.slane %v938, 1
    %v1039 = vsel %vm812, %v1036, %v1038
    %v1040 = vrot.slane %v939, 1
    %v1041 = vsel %vm812, %v1038, %v1040
    %v1042 = vrot.slane %v940, 1
    %v1043 = vsel %vm812, %v1040, %v1042
    %v1044 = vrot.slane %v941, 1
    %v1045 = vsel %vm812, %v1042, %v1044
    %v1046 = vrot.slane %v951, 1
    %v1047 = vsel %vm812, %v1044, %v1046
    %v1048 = vrot.slane %v952, 1
    %v1049 = vsel %vm812, %v1046, %v1048
    %v1050 = vrot.slane %v953, 1
    %v1051 = vsel %vm812, %v1048, %v1050
    %v1084 = vmax.f32 %v910, %v989
    %v1085 = vmax.f32 %v911, %v991
    %v1086 = vmax.f32 %v912, %v993
    %v1087 = vmax.f32 %v913, %v995
    %v1088 = vmax.f32 %v914, %v997
    %v1089 = vmax.f32 %v915, %v999
    %v1090 = vmax.f32 %v916, %v1001
    %v1091 = vmax.f32 %v917, %v1003
    %v1092 = vmax.f32 %v918, %v1005
    %v1093 = vmax.f32 %v919, %v1007
    %v1094 = vmax.f32 %v920, %v1009
    %v1095 = vmax.f32 %v921, %v1011
    %v1096 = vmax.f32 %v922, %v1013
    %v1097 = vmax.f32 %v923, %v1015
    %v1098 = vmax.f32 %v924, %v1017
    %v1099 = vmax.f32 %v925, %v1019
    %v1100 = vmax.f32 %v926, %v1021
    %v1101 = vmax.f32 %v927, %v1023
    %v1102 = vmax.f32 %v928, %v1025
    %v1103 = vmax.f32 %v929, %v1027
    %v1104 = vmax.f32 %v930, %v1029
    %v1105 = vmax.f32 %v931, %v1031
    %v1106 = vmax.f32 %v932, %v1033
    %v1107 = vmax.f32 %v933, %v1035
    %v1108 = vmax.f32 %v934, %v1037
    %v1109 = vmax.f32 %v935, %v1039
    %v1110 = vmax.f32 %v936, %v1041
    %v1111 = vmax.f32 %v937, %v1043
    %v1112 = vmax.f32 %v938, %v1045
    %v1113 = vmax.f32 %v939, %v1047
    %v1114 = vmax.f32 %v940, %v1049
    %v1115 = vmax.f32 %v941, %v1051
    %v1116 = vld [vmem:[%s3] sm:$0xff]
    %v1117 = vld [vmem:[%s3 + $0x8] sm:$0xff]
    %v1118 = vld [vmem:[%s3 + $0x10] sm:$0xff]
    %v1119 = vld [vmem:[%s3 + $0x18] sm:$0xff]
    %v1120 = vld [vmem:[%s3 + $0x20] sm:$0xff]
    %v1121 = vld [vmem:[%s3 + $0x28] sm:$0xff]
    %v1122 = vld [vmem:[%s3 + $0x30] sm:$0xff]
    %v1123 = vld [vmem:[%s3 + $0x38] sm:$0xff]
    %v1124 = vld [vmem:[%s3 + $0x40] sm:$0xff]
    %v1125 = vld [vmem:[%s3 + $0x48] sm:$0xff]
    %v1126 = vld [vmem:[%s3 + $0x50] sm:$0xff]
    %v1127 = vld [vmem:[%s3 + $0x58] sm:$0xff]
    %v1128 = vld [vmem:[%s3 + $0x60] sm:$0xff]
    %v1129 = vld [vmem:[%s3 + $0x68] sm:$0xff]
    %v1130 = vld [vmem:[%s3 + $0x70] sm:$0xff]
    %v1131 = vld [vmem:[%s3 + $0x78] sm:$0xff]
    %v1132 = vld [vmem:[%s3 + $0x80] sm:$0xff]
    %v1133 = vld [vmem:[%s3 + $0x88] sm:$0xff]
    %v1134 = vld [vmem:[%s3 + $0x90] sm:$0xff]
    %v1135 = vld [vmem:[%s3 + $0x98] sm:$0xff]
    %v1136 = vld [vmem:[%s3 + $0xa0] sm:$0xff]
    %v1137 = vld [vmem:[%s3 + $0xa8] sm:$0xff]
    %v1138 = vld [vmem:[%s3 + $0xb0] sm:$0xff]
    %v1139 = vld [vmem:[%s3 + $0xb8] sm:$0xff]
    %v1140 = vld [vmem:[%s3 + $0xc0] sm:$0xff]
    %v1141 = vld [vmem:[%s3 + $0xc8] sm:$0xff]
    %v1142 = vld [vmem:[%s3 + $0xd0] sm:$0xff]
    %v1143 = vld [vmem:[%s3 + $0xd8] sm:$0xff]
    %v1144 = vld [vmem:[%s3 + $0xe0] sm:$0xff]
    %v1145 = vld [vmem:[%s3 + $0xe8] sm:$0xff]
    %v1146 = vld [vmem:[%s3 + $0xf0] sm:$0xff]
    %v1147 = vld [vmem:[%s3 + $0xf8] sm:$0xff]
    %1149 = vset.pattern.permute.xlu0 0
    %1150 = vperm.xlu0 %1149, %v1084
    %v1151 = vpop.permute.xlu0 %1150
    %1154 = vset.pattern.permute.xlu0 0
    %1155 = vperm.xlu0 %1154, %v1085
    %v1156 = vpop.permute.xlu0 %1155
    %1159 = vset.pattern.permute.xlu0 0
    %1160 = vperm.xlu0 %1159, %v1086
    %v1161 = vpop.permute.xlu0 %1160
    %1164 = vset.pattern.permute.xlu0 0
    %1165 = vperm.xlu0 %1164, %v1087
    %v1166 = vpop.permute.xlu0 %1165
    %1169 = vset.pattern.permute.xlu0 0
    %1170 = vperm.xlu0 %1169, %v1088
    %v1171 = vpop.permute.xlu0 %1170
    %1174 = vset.pattern.permute.xlu0 0
    %1175 = vperm.xlu0 %1174, %v1089
    %v1176 = vpop.permute.xlu0 %1175
    %1179 = vset.pattern.permute.xlu0 0
    %1180 = vperm.xlu0 %1179, %v1090
    %v1181 = vpop.permute.xlu0 %1180
    %1184 = vset.pattern.permute.xlu0 0
    %1185 = vperm.xlu0 %1184, %v1091
    %v1186 = vpop.permute.xlu0 %1185
    %1189 = vset.pattern.permute.xlu0 0
    %1190 = vperm.xlu0 %1189, %v1092
    %v1191 = vpop.permute.xlu0 %1190
    %1194 = vset.pattern.permute.xlu0 0
    %1195 = vperm.xlu0 %1194, %v1093
    %v1196 = vpop.permute.xlu0 %1195
    %1199 = vset.pattern.permute.xlu0 0
    %1200 = vperm.xlu0 %1199, %v1094
    %v1201 = vpop.permute.xlu0 %1200
    %1204 = vset.pattern.permute.xlu0 0
    %1205 = vperm.xlu0 %1204, %v1095
    %v1206 = vpop.permute.xlu0 %1205
    %1209 = vset.pattern.permute.xlu0 0
    %1210 = vperm.xlu0 %1209, %v1096
    %v1211 = vpop.permute.xlu0 %1210
    %1214 = vset.pattern.permute.xlu0 0
    %1215 = vperm.xlu0 %1214, %v1097
    %v1216 = vpop.permute.xlu0 %1215
    %1219 = vset.pattern.permute.xlu0 0
    %1220 = vperm.xlu0 %1219, %v1098
    %v1221 = vpop.permute.xlu0 %1220
    %1224 = vset.pattern.permute.xlu0 0
    %1225 = vperm.xlu0 %1224, %v1099
    %v1226 = vpop.permute.xlu0 %1225
    %1229 = vset.pattern.permute.xlu0 0
    %1230 = vperm.xlu0 %1229, %v1100
    %v1231 = vpop.permute.xlu0 %1230
    %1234 = vset.pattern.permute.xlu0 0
    %1235 = vperm.xlu0 %1234, %v1101
    %v1236 = vpop.permute.xlu0 %1235
    %1239 = vset.pattern.permute.xlu0 0
    %1240 = vperm.xlu0 %1239, %v1102
    %v1241 = vpop.permute.xlu0 %1240
    %1244 = vset.pattern.permute.xlu0 0
    %1245 = vperm.xlu0 %1244, %v1103
    %v1246 = vpop.permute.xlu0 %1245
    %1249 = vset.pattern.permute.xlu0 0
    %1250 = vperm.xlu0 %1249, %v1104
    %v1251 = vpop.permute.xlu0 %1250
    %1254 = vset.pattern.permute.xlu0 0
    %1255 = vperm.xlu0 %1254, %v1105
    %v1256 = vpop.permute.xlu0 %1255
    %1259 = vset.pattern.permute.xlu0 0
    %1260 = vperm.xlu0 %1259, %v1106
    %v1261 = vpop.permute.xlu0 %1260
    %1264 = vset.pattern.permute.xlu0 0
    %1265 = vperm.xlu0 %1264, %v1107
    %v1266 = vpop.permute.xlu0 %1265
    %1269 = vset.pattern.permute.xlu0 0
    %1270 = vperm.xlu0 %1269, %v1108
    %v1271 = vpop.permute.xlu0 %1270
    %1274 = vset.pattern.permute.xlu0 0
    %1275 = vperm.xlu0 %1274, %v1109
    %v1276 = vpop.permute.xlu0 %1275
    %1279 = vset.pattern.permute.xlu0 0
    %1280 = vperm.xlu0 %1279, %v1110
    %v1281 = vpop.permute.xlu0 %1280
    %1284 = vset.pattern.permute.xlu0 0
    %1285 = vperm.xlu0 %1284, %v1111
    %v1286 = vpop.permute.xlu0 %1285
    %1289 = vset.pattern.permute.xlu0 0
    %1290 = vperm.xlu0 %1289, %v1112
    %v1291 = vpop.permute.xlu0 %1290
    %1294 = vset.pattern.permute.xlu0 0
    %1295 = vperm.xlu0 %1294, %v1113
    %v1296 = vpop.permute.xlu0 %1295
    %1299 = vset.pattern.permute.xlu0 0
    %1300 = vperm.xlu0 %1299, %v1114
    %v1301 = vpop.permute.xlu0 %1300
    %1304 = vset.pattern.permute.xlu0 0
    %1305 = vperm.xlu0 %1304, %v1115
    %v1306 = vpop.permute.xlu0 %1305
    %v1308 = vmul.f32 %v1116, %v1151
    %v1309 = vmul.f32 %v1117, %v1156
    %v1310 = vmul.f32 %v1118, %v1161
    %v1311 = vmul.f32 %v1119, %v1166
    %v1312 = vmul.f32 %v1120, %v1171
    %v1313 = vmul.f32 %v1121, %v1176
    %v1314 = vmul.f32 %v1122, %v1181
    %v1315 = vmul.f32 %v1123, %v1186
    %v1316 = vmul.f32 %v1124, %v1191
    %v1317 = vmul.f32 %v1125, %v1196
    %v1318 = vmul.f32 %v1126, %v1201
    %v1319 = vmul.f32 %v1127, %v1206
    %v1320 = vmul.f32 %v1128, %v1211
    %v1321 = vmul.f32 %v1129, %v1216
    %v1322 = vmul.f32 %v1130, %v1221
    %v1323 = vmul.f32 %v1131, %v1226
    %v1324 = vmul.f32 %v1132, %v1231
    %v1325 = vmul.f32 %v1133, %v1236
    %v1326 = vmul.f32 %v1134, %v1241
    %v1327 = vmul.f32 %v1135, %v1246
    %v1328 = vmul.f32 %v1136, %v1251
    %v1329 = vmul.f32 %v1137, %v1256
    %v1330 = vmul.f32 %v1138, %v1261
    %v1331 = vmul.f32 %v1139, %v1266
    %v1332 = vmul.f32 %v1140, %v1271
    %v1333 = vmul.f32 %v1141, %v1276
    %v1334 = vmul.f32 %v1142, %v1281
    %v1335 = vmul.f32 %v1143, %v1286
    %v1336 = vmul.f32 %v1144, %v1291
    %v1337 = vmul.f32 %v1145, %v1296
    %v1338 = vmul.f32 %v1146, %v1301
    %v1339 = vmul.f32 %v1147, %v1306
    %vm1340 = vcmask 523264
    %v1341 = vsel %vm1340, %v1308, 0.0
    %v1342 = vsel %vm1340, %v1309, 0.0
    %v1343 = vadd.f32 %v1341, %v1342
    %v1344 = vsel %vm1340, %v1310, 0.0
    %v1345 = vadd.f32 %v1343, %v1344
    %v1346 = vsel %vm1340, %v1311, 0.0
    %v1347 = vadd.f32 %v1345, %v1346
    %v1348 = vsel %vm1340, %v1312, 0.0
    %v1349 = vadd.f32 %v1347, %v1348
    %v1350 = vsel %vm1340, %v1313, 0.0
    %v1351 = vadd.f32 %v1349, %v1350
    %v1352 = vsel %vm1340, %v1314, 0.0
    %v1353 = vadd.f32 %v1351, %v1352
    %v1354 = vsel %vm1340, %v1315, 0.0
    %v1355 = vadd.f32 %v1353, %v1354
    %v1356 = vsel %vm1340, %v1316, 0.0
    %v1357 = vadd.f32 %v1355, %v1356
    %v1358 = vsel %vm1340, %v1317, 0.0
    %v1359 = vadd.f32 %v1357, %v1358
    %v1360 = vsel %vm1340, %v1318, 0.0
    %v1361 = vadd.f32 %v1359, %v1360
    %v1362 = vsel %vm1340, %v1319, 0.0
    %v1363 = vadd.f32 %v1361, %v1362
    %v1364 = vsel %vm1340, %v1320, 0.0
    %v1365 = vadd.f32 %v1363, %v1364
    %v1366 = vsel %vm1340, %v1321, 0.0
    %v1367 = vadd.f32 %v1365, %v1366
    %v1368 = vsel %vm1340, %v1322, 0.0
    %v1369 = vadd.f32 %v1367, %v1368
    %v1370 = vsel %vm1340, %v1323, 0.0
    %v1371 = vadd.f32 %v1369, %v1370
    %v1372 = vsel %vm1340, %v1324, 0.0
    %v1373 = vadd.f32 %v1371, %v1372
    %v1374 = vsel %vm1340, %v1325, 0.0
    %v1375 = vadd.f32 %v1373, %v1374
    %v1376 = vsel %vm1340, %v1326, 0.0
    %v1377 = vadd.f32 %v1375, %v1376
    %v1378 = vsel %vm1340, %v1327, 0.0
    %v1379 = vadd.f32 %v1377, %v1378
    %v1380 = vsel %vm1340, %v1328, 0.0
    %v1381 = vadd.f32 %v1379, %v1380
    %v1382 = vsel %vm1340, %v1329, 0.0
    %v1383 = vadd.f32 %v1381, %v1382
    %v1384 = vsel %vm1340, %v1330, 0.0
    %v1385 = vadd.f32 %v1383, %v1384
    %v1386 = vsel %vm1340, %v1331, 0.0
    %v1387 = vadd.f32 %v1385, %v1386
    %v1388 = vsel %vm1340, %v1332, 0.0
    %v1389 = vadd.f32 %v1387, %v1388
    %v1390 = vsel %vm1340, %v1333, 0.0
    %v1391 = vadd.f32 %v1389, %v1390
    %v1392 = vsel %vm1340, %v1334, 0.0
    %v1393 = vadd.f32 %v1391, %v1392
    %v1394 = vsel %vm1340, %v1335, 0.0
    %v1395 = vadd.f32 %v1393, %v1394
    %v1396 = vsel %vm1340, %v1336, 0.0
    %v1397 = vadd.f32 %v1395, %v1396
    %v1398 = vsel %vm1340, %v1337, 0.0
    %v1399 = vadd.f32 %v1397, %v1398
    %v1400 = vsel %vm1340, %v1338, 0.0
    %v1401 = vadd.f32 %v1399, %v1400
    %v1402 = vsel %vm1340, %v1339, 0.0
    %v1403 = vadd.f32 %v1401, %v1402
    %v1404 = vrot.slane %v1403, 4
    %v1405 = vadd.f32 %v1403, %v1404
    %v1406 = vrot.slane %v1405, 2
    %v1407 = vadd.f32 %v1405, %v1406
    %v1408 = vrot.slane %v1407, 1
    %v1409 = vadd.f32 %v1407, %v1408
    %v1410 = vadd.f32 %v603, %v1409
    %s1411 = scalar_lea.vmem %s3, 256
    %v1412 = vld [vmem:[%s1411] sm:$0xff]
    %v1413 = vld [vmem:[%s1411 + $0x8] sm:$0xff]
    %v1414 = vld [vmem:[%s1411 + $0x10] sm:$0xff]
    %v1415 = vld [vmem:[%s1411 + $0x18] sm:$0xff]
    %v1416 = vld [vmem:[%s1411 + $0x20] sm:$0xff]
    %v1417 = vld [vmem:[%s1411 + $0x28] sm:$0xff]
    %v1418 = vld [vmem:[%s1411 + $0x30] sm:$0xff]
    %v1419 = vld [vmem:[%s1411 + $0x38] sm:$0xff]
    %v1420 = vld [vmem:[%s1411 + $0x40] sm:$0xff]
    %v1421 = vld [vmem:[%s1411 + $0x48] sm:$0xff]
    %v1422 = vld [vmem:[%s1411 + $0x50] sm:$0xff]
    %v1423 = vld [vmem:[%s1411 + $0x58] sm:$0xff]
    %v1424 = vld [vmem:[%s1411 + $0x60] sm:$0xff]
    %v1425 = vld [vmem:[%s1411 + $0x68] sm:$0xff]
    %v1426 = vld [vmem:[%s1411 + $0x70] sm:$0xff]
    %v1427 = vld [vmem:[%s1411 + $0x78] sm:$0xff]
    %v1428 = vld [vmem:[%s1411 + $0x80] sm:$0xff]
    %v1429 = vld [vmem:[%s1411 + $0x88] sm:$0xff]
    %v1430 = vld [vmem:[%s1411 + $0x90] sm:$0xff]
    %v1431 = vld [vmem:[%s1411 + $0x98] sm:$0xff]
    %v1432 = vld [vmem:[%s1411 + $0xa0] sm:$0xff]
    %v1433 = vld [vmem:[%s1411 + $0xa8] sm:$0xff]
    %v1434 = vld [vmem:[%s1411 + $0xb0] sm:$0xff]
    %v1435 = vld [vmem:[%s1411 + $0xb8] sm:$0xff]
    %v1436 = vld [vmem:[%s1411 + $0xc0] sm:$0xff]
    %v1437 = vld [vmem:[%s1411 + $0xc8] sm:$0xff]
    %v1438 = vld [vmem:[%s1411 + $0xd0] sm:$0xff]
    %v1439 = vld [vmem:[%s1411 + $0xd8] sm:$0xff]
    %v1440 = vld [vmem:[%s1411 + $0xe0] sm:$0xff]
    %v1441 = vld [vmem:[%s1411 + $0xe8] sm:$0xff]
    %v1442 = vld [vmem:[%s1411 + $0xf0] sm:$0xff]
    %v1443 = vld [vmem:[%s1411 + $0xf8] sm:$0xff]
    %1444 = vset.pattern.permute.xlu0 2
    %1445 = vperm.xlu0 %1444, %v1084
    %v1446 = vpop.permute.xlu0 %1445
    %1448 = vset.pattern.permute.xlu0 2
    %1449 = vperm.xlu0 %1448, %v1085
    %v1450 = vpop.permute.xlu0 %1449
    %1452 = vset.pattern.permute.xlu0 2
    %1453 = vperm.xlu0 %1452, %v1086
    %v1454 = vpop.permute.xlu0 %1453
    %1456 = vset.pattern.permute.xlu0 2
    %1457 = vperm.xlu0 %1456, %v1087
    %v1458 = vpop.permute.xlu0 %1457
    %1460 = vset.pattern.permute.xlu0 2
    %1461 = vperm.xlu0 %1460, %v1088
    %v1462 = vpop.permute.xlu0 %1461
    %1464 = vset.pattern.permute.xlu0 2
    %1465 = vperm.xlu0 %1464, %v1089
    %v1466 = vpop.permute.xlu0 %1465
    %1468 = vset.pattern.permute.xlu0 2
    %1469 = vperm.xlu0 %1468, %v1090
    %v1470 = vpop.permute.xlu0 %1469
    %1472 = vset.pattern.permute.xlu0 2
    %1473 = vperm.xlu0 %1472, %v1091
    %v1474 = vpop.permute.xlu0 %1473
    %1476 = vset.pattern.permute.xlu0 2
    %1477 = vperm.xlu0 %1476, %v1092
    %v1478 = vpop.permute.xlu0 %1477
    %1480 = vset.pattern.permute.xlu0 2
    %1481 = vperm.xlu0 %1480, %v1093
    %v1482 = vpop.permute.xlu0 %1481
    %1484 = vset.pattern.permute.xlu0 2
    %1485 = vperm.xlu0 %1484, %v1094
    %v1486 = vpop.permute.xlu0 %1485
    %1488 = vset.pattern.permute.xlu0 2
    %1489 = vperm.xlu0 %1488, %v1095
    %v1490 = vpop.permute.xlu0 %1489
    %1492 = vset.pattern.permute.xlu0 2
    %1493 = vperm.xlu0 %1492, %v1096
    %v1494 = vpop.permute.xlu0 %1493
    %1496 = vset.pattern.permute.xlu0 2
    %1497 = vperm.xlu0 %1496, %v1097
    %v1498 = vpop.permute.xlu0 %1497
    %1500 = vset.pattern.permute.xlu0 2
    %1501 = vperm.xlu0 %1500, %v1098
    %v1502 = vpop.permute.xlu0 %1501
    %1504 = vset.pattern.permute.xlu0 2
    %1505 = vperm.xlu0 %1504, %v1099
    %v1506 = vpop.permute.xlu0 %1505
    %1508 = vset.pattern.permute.xlu0 2
    %1509 = vperm.xlu0 %1508, %v1100
    %v1510 = vpop.permute.xlu0 %1509
    %1512 = vset.pattern.permute.xlu0 2
    %1513 = vperm.xlu0 %1512, %v1101
    %v1514 = vpop.permute.xlu0 %1513
    %1516 = vset.pattern.permute.xlu0 2
    %1517 = vperm.xlu0 %1516, %v1102
    %v1518 = vpop.permute.xlu0 %1517
    %1520 = vset.pattern.permute.xlu0 2
    %1521 = vperm.xlu0 %1520, %v1103
    %v1522 = vpop.permute.xlu0 %1521
    %1524 = vset.pattern.permute.xlu0 2
    %1525 = vperm.xlu0 %1524, %v1104
    %v1526 = vpop.permute.xlu0 %1525
    %1528 = vset.pattern.permute.xlu0 2
    %1529 = vperm.xlu0 %1528, %v1105
    %v1530 = vpop.permute.xlu0 %1529
    %1532 = vset.pattern.permute.xlu0 2
    %1533 = vperm.xlu0 %1532, %v1106
    %v1534 = vpop.permute.xlu0 %1533
    %1536 = vset.pattern.permute.xlu0 2
    %1537 = vperm.xlu0 %1536, %v1107
    %v1538 = vpop.permute.xlu0 %1537
    %1540 = vset.pattern.permute.xlu0 2
    %1541 = vperm.xlu0 %1540, %v1108
    %v1542 = vpop.permute.xlu0 %1541
    %1544 = vset.pattern.permute.xlu0 2
    %1545 = vperm.xlu0 %1544, %v1109
    %v1546 = vpop.permute.xlu0 %1545
    %1548 = vset.pattern.permute.xlu0 2
    %1549 = vperm.xlu0 %1548, %v1110
    %v1550 = vpop.permute.xlu0 %1549
    %1552 = vset.pattern.permute.xlu0 2
    %1553 = vperm.xlu0 %1552, %v1111
    %v1554 = vpop.permute.xlu0 %1553
    %1556 = vset.pattern.permute.xlu0 2
    %1557 = vperm.xlu0 %1556, %v1112
    %v1558 = vpop.permute.xlu0 %1557
    %1560 = vset.pattern.permute.xlu0 2
    %1561 = vperm.xlu0 %1560, %v1113
    %v1562 = vpop.permute.xlu0 %1561
    %1564 = vset.pattern.permute.xlu0 2
    %1565 = vperm.xlu0 %1564, %v1114
    %v1566 = vpop.permute.xlu0 %1565
    %1568 = vset.pattern.permute.xlu0 2
    %1569 = vperm.xlu0 %1568, %v1115
    %v1570 = vpop.permute.xlu0 %1569
    %v1572 = vmul.f32 %v1412, %v1446
    %v1573 = vmul.f32 %v1413, %v1450
    %v1574 = vmul.f32 %v1414, %v1454
    %v1575 = vmul.f32 %v1415, %v1458
    %v1576 = vmul.f32 %v1416, %v1462
    %v1577 = vmul.f32 %v1417, %v1466
    %v1578 = vmul.f32 %v1418, %v1470
    %v1579 = vmul.f32 %v1419, %v1474
    %v1580 = vmul.f32 %v1420, %v1478
    %v1581 = vmul.f32 %v1421, %v1482
    %v1582 = vmul.f32 %v1422, %v1486
    %v1583 = vmul.f32 %v1423, %v1490
    %v1584 = vmul.f32 %v1424, %v1494
    %v1585 = vmul.f32 %v1425, %v1498
    %v1586 = vmul.f32 %v1426, %v1502
    %v1587 = vmul.f32 %v1427, %v1506
    %v1588 = vmul.f32 %v1428, %v1510
    %v1589 = vmul.f32 %v1429, %v1514
    %v1590 = vmul.f32 %v1430, %v1518
    %v1591 = vmul.f32 %v1431, %v1522
    %v1592 = vmul.f32 %v1432, %v1526
    %v1593 = vmul.f32 %v1433, %v1530
    %v1594 = vmul.f32 %v1434, %v1534
    %v1595 = vmul.f32 %v1435, %v1538
    %v1596 = vmul.f32 %v1436, %v1542
    %v1597 = vmul.f32 %v1437, %v1546
    %v1598 = vmul.f32 %v1438, %v1550
    %v1599 = vmul.f32 %v1439, %v1554
    %v1600 = vmul.f32 %v1440, %v1558
    %v1601 = vmul.f32 %v1441, %v1562
    %v1602 = vmul.f32 %v1442, %v1566
    %v1603 = vmul.f32 %v1443, %v1570
    %v1604 = vsel %vm1340, %v1572, 0.0
    %v1605 = vsel %vm1340, %v1573, 0.0
    %v1606 = vadd.f32 %v1604, %v1605
    %v1607 = vsel %vm1340, %v1574, 0.0
    %v1608 = vadd.f32 %v1606, %v1607
    %v1609 = vsel %vm1340, %v1575, 0.0
    %v1610 = vadd.f32 %v1608, %v1609
    %v1611 = vsel %vm1340, %v1576, 0.0
    %v1612 = vadd.f32 %v1610, %v1611
    %v1613 = vsel %vm1340, %v1577, 0.0
    %v1614 = vadd.f32 %v1612, %v1613
    %v1615 = vsel %vm1340, %v1578, 0.0
    %v1616 = vadd.f32 %v1614, %v1615
    %v1617 = vsel %vm1340, %v1579, 0.0
    %v1618 = vadd.f32 %v1616, %v1617
    %v1619 = vsel %vm1340, %v1580, 0.0
    %v1620 = vadd.f32 %v1618, %v1619
    %v1621 = vsel %vm1340, %v1581, 0.0
    %v1622 = vadd.f32 %v1620, %v1621
    %v1623 = vsel %vm1340, %v1582, 0.0
    %v1624 = vadd.f32 %v1622, %v1623
    %v1625 = vsel %vm1340, %v1583, 0.0
    %v1626 = vadd.f32 %v1624, %v1625
    %v1627 = vsel %vm1340, %v1584, 0.0
    %v1628 = vadd.f32 %v1626, %v1627
    %v1629 = vsel %vm1340, %v1585, 0.0
    %v1630 = vadd.f32 %v1628, %v1629
    %v1631 = vsel %vm1340, %v1586, 0.0
    %v1632 = vadd.f32 %v1630, %v1631
    %v1633 = vsel %vm1340, %v1587, 0.0
    %v1634 = vadd.f32 %v1632, %v1633
    %v1635 = vsel %vm1340, %v1588, 0.0
    %v1636 = vadd.f32 %v1634, %v1635
    %v1637 = vsel %vm1340, %v1589, 0.0
    %v1638 = vadd.f32 %v1636, %v1637
    %v1639 = vsel %vm1340, %v1590, 0.0
    %v1640 = vadd.f32 %v1638, %v1639
    %v1641 = vsel %vm1340, %v1591, 0.0
    %v1642 = vadd.f32 %v1640, %v1641
    %v1643 = vsel %vm1340, %v1592, 0.0
    %v1644 = vadd.f32 %v1642, %v1643
    %v1645 = vsel %vm1340, %v1593, 0.0
    %v1646 = vadd.f32 %v1644, %v1645
    %v1647 = vsel %vm1340, %v1594, 0.0
    %v1648 = vadd.f32 %v1646, %v1647
    %v1649 = vsel %vm1340, %v1595, 0.0
    %v1650 = vadd.f32 %v1648, %v1649
    %v1651 = vsel %vm1340, %v1596, 0.0
    %v1652 = vadd.f32 %v1650, %v1651
    %v1653 = vsel %vm1340, %v1597, 0.0
    %v1654 = vadd.f32 %v1652, %v1653
    %v1655 = vsel %vm1340, %v1598, 0.0
    %v1656 = vadd.f32 %v1654, %v1655
    %v1657 = vsel %vm1340, %v1599, 0.0
    %v1658 = vadd.f32 %v1656, %v1657
    %v1659 = vsel %vm1340, %v1600, 0.0
    %v1660 = vadd.f32 %v1658, %v1659
    %v1661 = vsel %vm1340, %v1601, 0.0
    %v1662 = vadd.f32 %v1660, %v1661
    %v1663 = vsel %vm1340, %v1602, 0.0
    %v1664 = vadd.f32 %v1662, %v1663
    %v1665 = vsel %vm1340, %v1603, 0.0
    %v1666 = vadd.f32 %v1664, %v1665
    %v1667 = vrot.slane %v1666, 4
    %v1668 = vadd.f32 %v1666, %v1667
    %v1669 = vrot.slane %v1668, 2
    %v1670 = vadd.f32 %v1668, %v1669
    %v1671 = vrot.slane %v1670, 1
    %v1672 = vadd.f32 %v1670, %v1671
    %v1673 = vadd.f32 %v1410, %v1672
    %v1674 = vmax.f32 %v1673, 0.0
    %v1675 = vld [vmem:[%s5] sm:$0xff]
    %v1676 = vld [vmem:[%s5 + $0x8] sm:$0xff]
    %v1677 = vld [vmem:[%s5 + $0x10] sm:$0xff]
    %v1678 = vld [vmem:[%s5 + $0x18] sm:$0xff]
    %v1679 = vld [vmem:[%s5 + $0x20] sm:$0xff]
    %v1680 = vld [vmem:[%s5 + $0x28] sm:$0xff]
    %v1681 = vld [vmem:[%s5 + $0x30] sm:$0xff]
    %v1682 = vld [vmem:[%s5 + $0x38] sm:$0xff]
    %v1683 = vld [vmem:[%s6] sm:$0x1]
    %v1685 = vsel %vm1340, %v1674, 0
    %1687 = vmatpush.msra.mxu0 0.0
    %1688 = vmatpush.msra.mxu0 0.0
    %1689 = vmatpush.msra.mxu0 0.0
    %1690 = vmatpush.msra.mxu0 0.0
    %1691 = vmatpush.msra.mxu0 0.0
    %1692 = vmatpush.msra.mxu0 0.0
    %1693 = vmatpush.msra.mxu0 0.0
    %1694 = vmatpush.msra.mxu0 0.0
    %1695 = vmatpush.msra.mxu0 %v1682
    %1696 = vmatpush.msra.mxu0 %v1681
    %1697 = vmatpush.msra.mxu0 %v1680
    %1698 = vmatpush.msra.mxu0 %v1679
    %1699 = vmatpush.msra.mxu0 %v1678
    %1700 = vmatpush.msra.mxu0 %v1677
    %1701 = vmatpush.msra.mxu0 %v1676
    %1702 = vmatpush.msra.mxu0 %v1675
    %1703 = vmatmul.f32.gmra.mxu0 %v1685
    %v1704 = vpop.f32.mrf.mxu0
    %v1705 = vadd.f32 %v1683, %v1704
    %1706 = vdwg.mxu0
    %s1707 = scalar_lea.vmem %s0, 888
    %v1708 = vld [vmem:[%s1707] sm:$0xff]
    %v1709 = vld [vmem:[%s1707 + $0x8] sm:$0xff]
    %v1710 = vld [vmem:[%s1707 + $0x10] sm:$0xff]
    %v1711 = vld [vmem:[%s1707 + $0x18] sm:$0xff]
    %v1712 = vld [vmem:[%s1707 + $0x20] sm:$0xff]
    %v1713 = vld [vmem:[%s1707 + $0x28] sm:$0xff]
    %v1714 = vld [vmem:[%s1707 + $0x30] sm:$0xff]
    %v1715 = vld [vmem:[%s1707 + $0x38] sm:$0xff]
    %v1716 = vld [vmem:[%s1707 + $0x40] sm:$0xff]
    %v1717 = vld [vmem:[%s1707 + $0x48] sm:$0xff]
    %v1718 = vld [vmem:[%s1707 + $0x50] sm:$0xff]
    %v1719 = vld [vmem:[%s1707 + $0x58] sm:$0xff]
    %v1720 = vld [vmem:[%s1707 + $0x60] sm:$0xff]
    %v1721 = vld [vmem:[%s1707 + $0x68] sm:$0xff]
    %v1722 = vld [vmem:[%s1707 + $0x70] sm:$0xff]
    %v1723 = vld [vmem:[%s1707 + $0x78] sm:$0xff]
    %v1724 = vld [vmem:[%s1707 + $0x80] sm:$0xff]
    %v1725 = vld [vmem:[%s1707 + $0x88] sm:$0xff]
    %v1726 = vld [vmem:[%s1707 + $0x90] sm:$0xff]
    %v1727 = vld [vmem:[%s1707 + $0x98] sm:$0xff]
    %v1728 = vld [vmem:[%s1707 + $0xa0] sm:$0xff]
    %v1729 = vld [vmem:[%s1707 + $0xa8] sm:$0xff]
    %v1730 = vld [vmem:[%s1707 + $0xb0] sm:$0xff]
    %v1731 = vld [vmem:[%s1707 + $0xb8] sm:$0xff]
    %v1732 = vld [vmem:[%s1707 + $0xc0] sm:$0xff]
    %v1733 = vld [vmem:[%s1707 + $0xc8] sm:$0xff]
    %v1734 = vld [vmem:[%s1707 + $0xd0] sm:$0xff]
    %v1735 = vld [vmem:[%s1707 + $0xd8] sm:$0xff]
    %v1736 = vld [vmem:[%s1707 + $0xe0] sm:$0xff]
    %v1737 = vld [vmem:[%s1707 + $0xe8] sm:$0xff]
    %v1738 = vld [vmem:[%s1707 + $0xf0] sm:$0xff]
    %v1739 = vld [vmem:[%s1707 + $0xf8] sm:$0xff]
    %v1740 = vld [vmem:[%s1707 + $0x100] sm:$0xff]
    %v1741 = vld [vmem:[%s1707 + $0x108] sm:$0xff]
    %v1742 = vld [vmem:[%s1707 + $0x110] sm:$0xff]
    %v1743 = vld [vmem:[%s1707 + $0x118] sm:$0xff]
    %v1744 = vld [vmem:[%s1707 + $0x120] sm:$0xff]
    %v1745 = vld [vmem:[%s1707 + $0x128] sm:$0xff]
    %v1746 = vld [vmem:[%s1707 + $0x130] sm:$0xff]
    %v1747 = vld [vmem:[%s1707 + $0x138] sm:$0xff]
    %v1748 = vld [vmem:[%s1707 + $0x140] sm:$0xff]
    %v1749 = vld [vmem:[%s1707 + $0x148] sm:$0xff]
    %v1750 = vld [vmem:[%s1707 + $0x150] sm:$0xff]
    %v1751 = vld [vmem:[%s1707 + $0x158] sm:$0xff]
    %v1752 = vld [vmem:[%s1707 + $0x160] sm:$0xff]
    %v1753 = vld [vmem:[%s1707 + $0x168] sm:$0xff]
    %v1754 = vld [vmem:[%s1707 + $0x170] sm:$0xff]
    %v1755 = vld [vmem:[%s1707 + $0x178] sm:$0xff]
    %v1756 = vld [vmem:[%s1707 + $0x180] sm:$0xff]
    %v1757 = vld [vmem:[%s1707 + $0x188] sm:$0xff]
    %v1758 = vld [vmem:[%s1707 + $0x190] sm:$0xff]
    %v1759 = vld [vmem:[%s1707 + $0x198] sm:$0xff]
    %v1760 = vld [vmem:[%s1707 + $0x1a0] sm:$0xff]
    %v1761 = vld [vmem:[%s1707 + $0x1a8] sm:$0xff]
    %v1762 = vld [vmem:[%s1707 + $0x1b0] sm:$0xff]
    %v1763 = vld [vmem:[%s1707 + $0x1b8] sm:$0xff]
    %v1764 = vld [vmem:[%s1707 + $0x1c0] sm:$0xff]
    %v1765 = vld [vmem:[%s1707 + $0x1c8] sm:$0xff]
    %v1766 = vld [vmem:[%s1707 + $0x1d0] sm:$0xff]
    %v1767 = vld [vmem:[%s1707 + $0x1d8] sm:$0xff]
    %v1768 = vld [vmem:[%s1707 + $0x1e0] sm:$0xff]
    %v1769 = vld [vmem:[%s1707 + $0x1e8] sm:$0xff]
    %v1770 = vld [vmem:[%s1707 + $0x1f0] sm:$0xff]
    %v1771 = vld [vmem:[%s1707 + $0x1f8] sm:$0xff]
    %v1772 = vld [vmem:[%s1707 + $0x200] sm:$0xff]
    %v1773 = vld [vmem:[%s1707 + $0x208] sm:$0xff]
    %v1774 = vld [vmem:[%s1707 + $0x210] sm:$0xff]
    %v1775 = vld [vmem:[%s1707 + $0x218] sm:$0xff]
    %v1776 = vld [vmem:[%s1707 + $0x220] sm:$0xff]
    %v1777 = vld [vmem:[%s1707 + $0x228] sm:$0xff]
    %v1778 = vld [vmem:[%s1707 + $0x230] sm:$0xff]
    %v1779 = vld [vmem:[%s1707 + $0x238] sm:$0xff]
    %v1780 = vld [vmem:[%s1707 + $0x240] sm:$0xff]
    %v1781 = vld [vmem:[%s1707 + $0x248] sm:$0xff]
    %v1782 = vld [vmem:[%s1707 + $0x250] sm:$0xff]
    %v1783 = vld [vmem:[%s1707 + $0x258] sm:$0xff]
    %v1784 = vld [vmem:[%s1707 + $0x260] sm:$0xff]
    %v1785 = vld [vmem:[%s1707 + $0x268] sm:$0xff]
    %v1786 = vld [vmem:[%s1707 + $0x270] sm:$0xff]
    %v1787 = vld [vmem:[%s1707 + $0x278] sm:$0xff]
    %v1788 = vld [vmem:[%s1707 + $0x280] sm:$0xff]
    %v1789 = vld [vmem:[%s1707 + $0x288] sm:$0xff]
    %v1790 = vld [vmem:[%s1707 + $0x290] sm:$0xff]
    %v1791 = vld [vmem:[%s1707 + $0x298] sm:$0xff]
    %v1792 = vld [vmem:[%s1707 + $0x2a0] sm:$0xff]
    %v1793 = vld [vmem:[%s1707 + $0x2a8] sm:$0xff]
    %v1794 = vld [vmem:[%s1707 + $0x2b0] sm:$0xff]
    %v1795 = vld [vmem:[%s1707 + $0x2b8] sm:$0xff]
    %v1796 = vld [vmem:[%s1707 + $0x2c0] sm:$0xff]
    %v1797 = vld [vmem:[%s1707 + $0x2c8] sm:$0xff]
    %v1798 = vld [vmem:[%s1707 + $0x2d0] sm:$0xff]
    %v1799 = vld [vmem:[%s1707 + $0x2d8] sm:$0xff]
    %v1800 = vld [vmem:[%s1707 + $0x2e0] sm:$0xff]
    %v1801 = vld [vmem:[%s1707 + $0x2e8] sm:$0xff]
    %v1802 = vld [vmem:[%s1707 + $0x2f0] sm:$0xff]
    %v1803 = vld [vmem:[%s1707 + $0x2f8] sm:$0xff]
    %v1804 = vld [vmem:[%s1707 + $0x300] sm:$0xff]
    %v1805 = vld [vmem:[%s1707 + $0x308] sm:$0xff]
    %v1806 = vld [vmem:[%s1707 + $0x310] sm:$0xff]
    %v1807 = vld [vmem:[%s1707 + $0x318] sm:$0xff]
    %v1808 = vld [vmem:[%s1707 + $0x320] sm:$0xff]
    %v1809 = vld [vmem:[%s1707 + $0x328] sm:$0xff]
    %v1810 = vld [vmem:[%s1707 + $0x330] sm:$0xff]
    %v1811 = vld [vmem:[%s1707 + $0x338] sm:$0xff]
    %v1812 = vld [vmem:[%s1707 + $0x340] sm:$0xff]
    %v1813 = vld [vmem:[%s1707 + $0x348] sm:$0xff]
    %v1814 = vld [vmem:[%s1707 + $0x350] sm:$0xff]
    %v1815 = vld [vmem:[%s1707 + $0x358] sm:$0xff]
    %v1816 = vld [vmem:[%s1707 + $0x360] sm:$0x1]
    %v1817 = vld [vmem:[%s1707 + $0x368] sm:$0x1]
    %v1818 = vld [vmem:[%s1707 + $0x370] sm:$0x1]
    %1819 = vmatpush.msra.mxu0 %v42
    %1820 = vmatpush.msra.mxu0 %v41
    %1821 = vmatpush.msra.mxu0 %v40
    %1822 = vmatpush.msra.mxu0 %v39
    %1823 = vmatpush.msra.mxu0 %v38
    %1824 = vmatpush.msra.mxu0 %v37
    %1825 = vmatpush.msra.mxu0 %v36
    %1826 = vmatpush.msra.mxu0 %v35
    %1827 = vmatpush.msra.mxu0 %v34
    %1828 = vmatpush.msra.mxu0 %v33
    %1829 = vmatpush.msra.mxu0 %v32
    %1830 = vmatpush.msra.mxu0 %v31
    %1831 = vmatpush.msra.mxu0 %v30
    %1832 = vmatpush.msra.mxu0 %v29
    %1833 = vmatpush.msra.mxu0 %v28
    %1834 = vmatpush.msra.mxu0 %v27
    %1835 = vmatmul.f32.gmra.mxu0 %v1708
    %v1836 = vpop.f32.mrf.mxu0
    %v1837 = vadd.f32 %v188, %v1836
    %1838 = vmatmul.f32.gmra.mxu0 %v1711
    %v1839 = vpop.f32.mrf.mxu0
    %v1840 = vadd.f32 %v188, %v1839
    %1841 = vmatmul.f32.gmra.mxu0 %v1714
    %v1842 = vpop.f32.mrf.mxu0
    %v1843 = vadd.f32 %v188, %v1842
    %1844 = vmatmul.f32.gmra.mxu0 %v1717
    %v1845 = vpop.f32.mrf.mxu0
    %v1846 = vadd.f32 %v188, %v1845
    %1847 = vmatmul.f32.gmra.mxu0 %v1720
    %v1848 = vpop.f32.mrf.mxu0
    %v1849 = vadd.f32 %v188, %v1848
    %1850 = vmatmul.f32.gmra.mxu0 %v1723
    %v1851 = vpop.f32.mrf.mxu0
    %v1852 = vadd.f32 %v188, %v1851
    %1853 = vmatmul.f32.gmra.mxu0 %v1726
    %v1854 = vpop.f32.mrf.mxu0
    %v1855 = vadd.f32 %v188, %v1854
    %1856 = vmatmul.f32.gmra.mxu0 %v1729
    %v1857 = vpop.f32.mrf.mxu0
    %v1858 = vadd.f32 %v188, %v1857
    %1859 = vmatmul.f32.gmra.mxu0 %v1732
    %v1860 = vpop.f32.mrf.mxu0
    %v1861 = vadd.f32 %v188, %v1860
    %1862 = vmatmul.f32.gmra.mxu0 %v1735
    %v1863 = vpop.f32.mrf.mxu0
    %v1864 = vadd.f32 %v188, %v1863
    %1865 = vmatmul.f32.gmra.mxu0 %v1738
    %v1866 = vpop.f32.mrf.mxu0
    %v1867 = vadd.f32 %v188, %v1866
    %1868 = vmatmul.f32.gmra.mxu0 %v1741
    %v1869 = vpop.f32.mrf.mxu0
    %v1870 = vadd.f32 %v188, %v1869
    %1871 = vmatmul.f32.gmra.mxu0 %v1744
    %v1872 = vpop.f32.mrf.mxu0
    %v1873 = vadd.f32 %v188, %v1872
    %1874 = vmatmul.f32.gmra.mxu0 %v1747
    %v1875 = vpop.f32.mrf.mxu0
    %v1876 = vadd.f32 %v188, %v1875
    %1877 = vmatmul.f32.gmra.mxu0 %v1750
    %v1878 = vpop.f32.mrf.mxu0
    %v1879 = vadd.f32 %v188, %v1878
    %1880 = vmatmul.f32.gmra.mxu0 %v1753
    %v1881 = vpop.f32.mrf.mxu0
    %v1882 = vadd.f32 %v188, %v1881
    %1883 = vmatmul.f32.gmra.mxu0 %v1756
    %v1884 = vpop.f32.mrf.mxu0
    %v1885 = vadd.f32 %v188, %v1884
    %1886 = vmatmul.f32.gmra.mxu0 %v1759
    %v1887 = vpop.f32.mrf.mxu0
    %v1888 = vadd.f32 %v188, %v1887
    %1889 = vmatmul.f32.gmra.mxu0 %v1762
    %v1890 = vpop.f32.mrf.mxu0
    %v1891 = vadd.f32 %v188, %v1890
    %1892 = vmatmul.f32.gmra.mxu0 %v1765
    %v1893 = vpop.f32.mrf.mxu0
    %v1894 = vadd.f32 %v188, %v1893
    %1895 = vmatmul.f32.gmra.mxu0 %v1768
    %v1896 = vpop.f32.mrf.mxu0
    %v1897 = vadd.f32 %v188, %v1896
    %1898 = vmatmul.f32.gmra.mxu0 %v1771
    %v1899 = vpop.f32.mrf.mxu0
    %v1900 = vadd.f32 %v188, %v1899
    %1901 = vmatmul.f32.gmra.mxu0 %v1774
    %v1902 = vpop.f32.mrf.mxu0
    %v1903 = vadd.f32 %v188, %v1902
    %1904 = vmatmul.f32.gmra.mxu0 %v1777
    %v1905 = vpop.f32.mrf.mxu0
    %v1906 = vadd.f32 %v188, %v1905
    %1907 = vmatmul.f32.gmra.mxu0 %v1780
    %v1908 = vpop.f32.mrf.mxu0
    %v1909 = vadd.f32 %v188, %v1908
    %1910 = vmatmul.f32.gmra.mxu0 %v1783
    %v1911 = vpop.f32.mrf.mxu0
    %v1912 = vadd.f32 %v188, %v1911
    %1913 = vmatmul.f32.gmra.mxu0 %v1786
    %v1914 = vpop.f32.mrf.mxu0
    %v1915 = vadd.f32 %v188, %v1914
    %1916 = vmatmul.f32.gmra.mxu0 %v1789
    %v1917 = vpop.f32.mrf.mxu0
    %v1918 = vadd.f32 %v188, %v1917
    %1919 = vmatmul.f32.gmra.mxu0 %v1792
    %v1920 = vpop.f32.mrf.mxu0
    %v1921 = vadd.f32 %v188, %v1920
    %1922 = vmatmul.f32.gmra.mxu0 %v1795
    %v1923 = vpop.f32.mrf.mxu0
    %v1924 = vadd.f32 %v188, %v1923
    %1925 = vmatmul.f32.gmra.mxu0 %v1798
    %v1926 = vpop.f32.mrf.mxu0
    %v1927 = vadd.f32 %v188, %v1926
    %1928 = vmatmul.f32.gmra.mxu0 %v1801
    %v1929 = vpop.f32.mrf.mxu0
    %v1930 = vadd.f32 %v188, %v1929
    %1931 = vmatmul.f32.gmra.mxu0 %v1804
    %v1932 = vpop.f32.mrf.mxu0
    %v1933 = vadd.f32 %v188, %v1932
    %1934 = vmatmul.f32.gmra.mxu0 %v1807
    %v1935 = vpop.f32.mrf.mxu0
    %v1936 = vadd.f32 %v188, %v1935
    %1937 = vmatmul.f32.gmra.mxu0 %v1810
    %v1938 = vpop.f32.mrf.mxu0
    %v1939 = vadd.f32 %v188, %v1938
    %1940 = vmatmul.f32.gmra.mxu0 %v1813
    %v1941 = vpop.f32.mrf.mxu0
    %1942 = vmatmul.f32.gmra.mxu0 %v1816
    %v1943 = vpop.f32.mrf.mxu0
    %1944 = vdwg.mxu0
    %1945 = vmatpush.msra.mxu0 %v58
    %1946 = vmatpush.msra.mxu0 %v57
    %1947 = vmatpush.msra.mxu0 %v56
    %1948 = vmatpush.msra.mxu0 %v55
    %1949 = vmatpush.msra.mxu0 %v54
    %1950 = vmatpush.msra.mxu0 %v53
    %1951 = vmatpush.msra.mxu0 %v52
    %1952 = vmatpush.msra.mxu0 %v51
    %1953 = vmatpush.msra.mxu0 %v50
    %1954 = vmatpush.msra.mxu0 %v49
    %1955 = vmatpush.msra.mxu0 %v48
    %1956 = vmatpush.msra.mxu0 %v47
    %1957 = vmatpush.msra.mxu0 %v46
    %1958 = vmatpush.msra.mxu0 %v45
    %1959 = vmatpush.msra.mxu0 %v44
    %1960 = vmatpush.msra.mxu0 %v43
    %1961 = vmatmul.f32.gmra.mxu0 %v1709
    %v1962 = vpop.f32.mrf.mxu0
    %v1963 = vadd.f32 %v1837, %v1962
    %1964 = vmatmul.f32.gmra.mxu0 %v1712
    %v1965 = vpop.f32.mrf.mxu0
    %v1966 = vadd.f32 %v1840, %v1965
    %1967 = vmatmul.f32.gmra.mxu0 %v1715
    %v1968 = vpop.f32.mrf.mxu0
    %v1969 = vadd.f32 %v1843, %v1968
    %1970 = vmatmul.f32.gmra.mxu0 %v1718
    %v1971 = vpop.f32.mrf.mxu0
    %v1972 = vadd.f32 %v1846, %v1971
    %1973 = vmatmul.f32.gmra.mxu0 %v1721
    %v1974 = vpop.f32.mrf.mxu0
    %v1975 = vadd.f32 %v1849, %v1974
    %1976 = vmatmul.f32.gmra.mxu0 %v1724
    %v1977 = vpop.f32.mrf.mxu0
    %v1978 = vadd.f32 %v1852, %v1977
    %1979 = vmatmul.f32.gmra.mxu0 %v1727
    %v1980 = vpop.f32.mrf.mxu0
    %v1981 = vadd.f32 %v1855, %v1980
    %1982 = vmatmul.f32.gmra.mxu0 %v1730
    %v1983 = vpop.f32.mrf.mxu0
    %v1984 = vadd.f32 %v1858, %v1983
    %1985 = vmatmul.f32.gmra.mxu0 %v1733
    %v1986 = vpop.f32.mrf.mxu0
    %v1987 = vadd.f32 %v1861, %v1986
    %1988 = vmatmul.f32.gmra.mxu0 %v1736
    %v1989 = vpop.f32.mrf.mxu0
    %v1990 = vadd.f32 %v1864, %v1989
    %1991 = vmatmul.f32.gmra.mxu0 %v1739
    %v1992 = vpop.f32.mrf.mxu0
    %v1993 = vadd.f32 %v1867, %v1992
    %1994 = vmatmul.f32.gmra.mxu0 %v1742
    %v1995 = vpop.f32.mrf.mxu0
    %v1996 = vadd.f32 %v1870, %v1995
    %1997 = vmatmul.f32.gmra.mxu0 %v1745
    %v1998 = vpop.f32.mrf.mxu0
    %v1999 = vadd.f32 %v1873, %v1998
    %2000 = vmatmul.f32.gmra.mxu0 %v1748
    %v2001 = vpop.f32.mrf.mxu0
    %v2002 = vadd.f32 %v1876, %v2001
    %2003 = vmatmul.f32.gmra.mxu0 %v1751
    %v2004 = vpop.f32.mrf.mxu0
    %v2005 = vadd.f32 %v1879, %v2004
    %2006 = vmatmul.f32.gmra.mxu0 %v1754
    %v2007 = vpop.f32.mrf.mxu0
    %v2008 = vadd.f32 %v1882, %v2007
    %2009 = vmatmul.f32.gmra.mxu0 %v1757
    %v2010 = vpop.f32.mrf.mxu0
    %v2011 = vadd.f32 %v1885, %v2010
    %2012 = vmatmul.f32.gmra.mxu0 %v1760
    %v2013 = vpop.f32.mrf.mxu0
    %v2014 = vadd.f32 %v1888, %v2013
    %2015 = vmatmul.f32.gmra.mxu0 %v1763
    %v2016 = vpop.f32.mrf.mxu0
    %v2017 = vadd.f32 %v1891, %v2016
    %2018 = vmatmul.f32.gmra.mxu0 %v1766
    %v2019 = vpop.f32.mrf.mxu0
    %v2020 = vadd.f32 %v1894, %v2019
    %2021 = vmatmul.f32.gmra.mxu0 %v1769
    %v2022 = vpop.f32.mrf.mxu0
    %v2023 = vadd.f32 %v1897, %v2022
    %2024 = vmatmul.f32.gmra.mxu0 %v1772
    %v2025 = vpop.f32.mrf.mxu0
    %v2026 = vadd.f32 %v1900, %v2025
    %2027 = vmatmul.f32.gmra.mxu0 %v1775
    %v2028 = vpop.f32.mrf.mxu0
    %v2029 = vadd.f32 %v1903, %v2028
    %2030 = vmatmul.f32.gmra.mxu0 %v1778
    %v2031 = vpop.f32.mrf.mxu0
    %v2032 = vadd.f32 %v1906, %v2031
    %2033 = vmatmul.f32.gmra.mxu0 %v1781
    %v2034 = vpop.f32.mrf.mxu0
    %v2035 = vadd.f32 %v1909, %v2034
    %2036 = vmatmul.f32.gmra.mxu0 %v1784
    %v2037 = vpop.f32.mrf.mxu0
    %v2038 = vadd.f32 %v1912, %v2037
    %2039 = vmatmul.f32.gmra.mxu0 %v1787
    %v2040 = vpop.f32.mrf.mxu0
    %v2041 = vadd.f32 %v1915, %v2040
    %2042 = vmatmul.f32.gmra.mxu0 %v1790
    %v2043 = vpop.f32.mrf.mxu0
    %v2044 = vadd.f32 %v1918, %v2043
    %2045 = vmatmul.f32.gmra.mxu0 %v1793
    %v2046 = vpop.f32.mrf.mxu0
    %v2047 = vadd.f32 %v1921, %v2046
    %2048 = vmatmul.f32.gmra.mxu0 %v1796
    %v2049 = vpop.f32.mrf.mxu0
    %v2050 = vadd.f32 %v1924, %v2049
    %2051 = vmatmul.f32.gmra.mxu0 %v1799
    %v2052 = vpop.f32.mrf.mxu0
    %v2053 = vadd.f32 %v1927, %v2052
    %2054 = vmatmul.f32.gmra.mxu0 %v1802
    %v2055 = vpop.f32.mrf.mxu0
    %v2056 = vadd.f32 %v1930, %v2055
    %2057 = vmatmul.f32.gmra.mxu0 %v1805
    %v2058 = vpop.f32.mrf.mxu0
    %v2059 = vadd.f32 %v1933, %v2058
    %2060 = vmatmul.f32.gmra.mxu0 %v1808
    %v2061 = vpop.f32.mrf.mxu0
    %v2062 = vadd.f32 %v1936, %v2061
    %2063 = vmatmul.f32.gmra.mxu0 %v1811
    %v2064 = vpop.f32.mrf.mxu0
    %v2065 = vadd.f32 %v1939, %v2064
    %2066 = vmatmul.f32.gmra.mxu0 %v1814
    %v2067 = vpop.f32.mrf.mxu0
    %2068 = vmatmul.f32.gmra.mxu0 %v1817
    %v2069 = vpop.f32.mrf.mxu0
    %2070 = vdwg.mxu0
    %2071 = vmatpush.msra.mxu0 %v74
    %2072 = vmatpush.msra.mxu0 %v73
    %2073 = vmatpush.msra.mxu0 %v72
    %2074 = vmatpush.msra.mxu0 %v71
    %2075 = vmatpush.msra.mxu0 %v70
    %2076 = vmatpush.msra.mxu0 %v69
    %2077 = vmatpush.msra.mxu0 %v68
    %2078 = vmatpush.msra.mxu0 %v67
    %2079 = vmatpush.msra.mxu0 %v66
    %2080 = vmatpush.msra.mxu0 %v65
    %2081 = vmatpush.msra.mxu0 %v64
    %2082 = vmatpush.msra.mxu0 %v63
    %2083 = vmatpush.msra.mxu0 %v62
    %2084 = vmatpush.msra.mxu0 %v61
    %2085 = vmatpush.msra.mxu0 %v60
    %2086 = vmatpush.msra.mxu0 %v59
    %2087 = vmatmul.f32.gmra.mxu0 %v1710
    %v2088 = vpop.f32.mrf.mxu0
    %v2089 = vadd.f32 %v1963, %v2088
    %2090 = vmatmul.f32.gmra.mxu0 %v1713
    %v2091 = vpop.f32.mrf.mxu0
    %v2092 = vadd.f32 %v1966, %v2091
    %2093 = vmatmul.f32.gmra.mxu0 %v1716
    %v2094 = vpop.f32.mrf.mxu0
    %v2095 = vadd.f32 %v1969, %v2094
    %2096 = vmatmul.f32.gmra.mxu0 %v1719
    %v2097 = vpop.f32.mrf.mxu0
    %v2098 = vadd.f32 %v1972, %v2097
    %2099 = vmatmul.f32.gmra.mxu0 %v1722
    %v2100 = vpop.f32.mrf.mxu0
    %v2101 = vadd.f32 %v1975, %v2100
    %2102 = vmatmul.f32.gmra.mxu0 %v1725
    %v2103 = vpop.f32.mrf.mxu0
    %v2104 = vadd.f32 %v1978, %v2103
    %2105 = vmatmul.f32.gmra.mxu0 %v1728
    %v2106 = vpop.f32.mrf.mxu0
    %v2107 = vadd.f32 %v1981, %v2106
    %2108 = vmatmul.f32.gmra.mxu0 %v1731
    %v2109 = vpop.f32.mrf.mxu0
    %v2110 = vadd.f32 %v1984, %v2109
    %2111 = vmatmul.f32.gmra.mxu0 %v1734
    %v2112 = vpop.f32.mrf.mxu0
    %v2113 = vadd.f32 %v1987, %v2112
    %2114 = vmatmul.f32.gmra.mxu0 %v1737
    %v2115 = vpop.f32.mrf.mxu0
    %v2116 = vadd.f32 %v1990, %v2115
    %2117 = vmatmul.f32.gmra.mxu0 %v1740
    %v2118 = vpop.f32.mrf.mxu0
    %v2119 = vadd.f32 %v1993, %v2118
    %2120 = vmatmul.f32.gmra.mxu0 %v1743
    %v2121 = vpop.f32.mrf.mxu0
    %v2122 = vadd.f32 %v1996, %v2121
    %2123 = vmatmul.f32.gmra.mxu0 %v1746
    %v2124 = vpop.f32.mrf.mxu0
    %v2125 = vadd.f32 %v1999, %v2124
    %2126 = vmatmul.f32.gmra.mxu0 %v1749
    %v2127 = vpop.f32.mrf.mxu0
    %v2128 = vadd.f32 %v2002, %v2127
    %2129 = vmatmul.f32.gmra.mxu0 %v1752
    %v2130 = vpop.f32.mrf.mxu0
    %v2131 = vadd.f32 %v2005, %v2130
    %2132 = vmatmul.f32.gmra.mxu0 %v1755
    %v2133 = vpop.f32.mrf.mxu0
    %v2134 = vadd.f32 %v2008, %v2133
    %2135 = vmatmul.f32.gmra.mxu0 %v1758
    %v2136 = vpop.f32.mrf.mxu0
    %v2137 = vadd.f32 %v2011, %v2136
    %2138 = vmatmul.f32.gmra.mxu0 %v1761
    %v2139 = vpop.f32.mrf.mxu0
    %v2140 = vadd.f32 %v2014, %v2139
    %2141 = vmatmul.f32.gmra.mxu0 %v1764
    %v2142 = vpop.f32.mrf.mxu0
    %v2143 = vadd.f32 %v2017, %v2142
    %2144 = vmatmul.f32.gmra.mxu0 %v1767
    %v2145 = vpop.f32.mrf.mxu0
    %v2146 = vadd.f32 %v2020, %v2145
    %2147 = vmatmul.f32.gmra.mxu0 %v1770
    %v2148 = vpop.f32.mrf.mxu0
    %v2149 = vadd.f32 %v2023, %v2148
    %2150 = vmatmul.f32.gmra.mxu0 %v1773
    %v2151 = vpop.f32.mrf.mxu0
    %v2152 = vadd.f32 %v2026, %v2151
    %2153 = vmatmul.f32.gmra.mxu0 %v1776
    %v2154 = vpop.f32.mrf.mxu0
    %v2155 = vadd.f32 %v2029, %v2154
    %2156 = vmatmul.f32.gmra.mxu0 %v1779
    %v2157 = vpop.f32.mrf.mxu0
    %v2158 = vadd.f32 %v2032, %v2157
    %2159 = vmatmul.f32.gmra.mxu0 %v1782
    %v2160 = vpop.f32.mrf.mxu0
    %v2161 = vadd.f32 %v2035, %v2160
    %2162 = vmatmul.f32.gmra.mxu0 %v1785
    %v2163 = vpop.f32.mrf.mxu0
    %v2164 = vadd.f32 %v2038, %v2163
    %2165 = vmatmul.f32.gmra.mxu0 %v1788
    %v2166 = vpop.f32.mrf.mxu0
    %v2167 = vadd.f32 %v2041, %v2166
    %2168 = vmatmul.f32.gmra.mxu0 %v1791
    %v2169 = vpop.f32.mrf.mxu0
    %v2170 = vadd.f32 %v2044, %v2169
    %2171 = vmatmul.f32.gmra.mxu0 %v1794
    %v2172 = vpop.f32.mrf.mxu0
    %v2173 = vadd.f32 %v2047, %v2172
    %2174 = vmatmul.f32.gmra.mxu0 %v1797
    %v2175 = vpop.f32.mrf.mxu0
    %v2176 = vadd.f32 %v2050, %v2175
    %2177 = vmatmul.f32.gmra.mxu0 %v1800
    %v2178 = vpop.f32.mrf.mxu0
    %v2179 = vadd.f32 %v2053, %v2178
    %2180 = vmatmul.f32.gmra.mxu0 %v1803
    %v2181 = vpop.f32.mrf.mxu0
    %v2182 = vadd.f32 %v2056, %v2181
    %2183 = vmatmul.f32.gmra.mxu0 %v1806
    %v2184 = vpop.f32.mrf.mxu0
    %v2185 = vadd.f32 %v2059, %v2184
    %2186 = vmatmul.f32.gmra.mxu0 %v1809
    %v2187 = vpop.f32.mrf.mxu0
    %v2188 = vadd.f32 %v2062, %v2187
    %2189 = vmatmul.f32.gmra.mxu0 %v1812
    %v2190 = vpop.f32.mrf.mxu0
    %v2191 = vadd.f32 %v2065, %v2190
    %2192 = vmatmul.f32.gmra.mxu0 %v1815
    %v2193 = vpop.f32.mrf.mxu0
    %2194 = vmatmul.f32.gmra.mxu0 %v1818
    %v2195 = vpop.f32.mrf.mxu0
    %2196 = vdwg.mxu0
    %v2197 = vmax.f32 %v2089, 0.0
    %v2198 = vmax.f32 %v2092, 0.0
    %v2199 = vmax.f32 %v2095, 0.0
    %v2200 = vmax.f32 %v2098, 0.0
    %v2201 = vmax.f32 %v2101, 0.0
    %v2202 = vmax.f32 %v2104, 0.0
    %v2203 = vmax.f32 %v2107, 0.0
    %v2204 = vmax.f32 %v2110, 0.0
    %v2205 = vmax.f32 %v2113, 0.0
    %v2206 = vmax.f32 %v2116, 0.0
    %v2207 = vmax.f32 %v2119, 0.0
    %v2208 = vmax.f32 %v2122, 0.0
    %v2209 = vmax.f32 %v2125, 0.0
    %v2210 = vmax.f32 %v2128, 0.0
    %v2211 = vmax.f32 %v2131, 0.0
    %v2212 = vmax.f32 %v2134, 0.0
    %v2213 = vmax.f32 %v2137, 0.0
    %v2214 = vmax.f32 %v2140, 0.0
    %v2215 = vmax.f32 %v2143, 0.0
    %v2216 = vmax.f32 %v2146, 0.0
    %v2217 = vmax.f32 %v2149, 0.0
    %v2218 = vmax.f32 %v2152, 0.0
    %v2219 = vmax.f32 %v2155, 0.0
    %v2220 = vmax.f32 %v2158, 0.0
    %v2221 = vmax.f32 %v2161, 0.0
    %v2222 = vmax.f32 %v2164, 0.0
    %v2223 = vmax.f32 %v2167, 0.0
    %v2224 = vmax.f32 %v2170, 0.0
    %v2225 = vmax.f32 %v2173, 0.0
    %v2226 = vmax.f32 %v2176, 0.0
    %v2227 = vmax.f32 %v2179, 0.0
    %v2228 = vmax.f32 %v2182, 0.0
    %v2229 = vmax.f32 %v2185, 0.0
    %v2230 = vmax.f32 %v2188, 0.0
    %v2231 = vmax.f32 %v2191, 0.0
    %2267 = vrot.lane.b32.xlu0 %v2197, 127
    %v2268 = vpop.permute.xlu0 %2267
    %2269 = vrot.lane.b32.xlu0 %v2198, 127
    %v2270 = vpop.permute.xlu0 %2269
    %2271 = vrot.lane.b32.xlu0 %v2199, 127
    %v2272 = vpop.permute.xlu0 %2271
    %2273 = vrot.lane.b32.xlu0 %v2200, 127
    %v2274 = vpop.permute.xlu0 %2273
    %2275 = vrot.lane.b32.xlu0 %v2201, 127
    %v2276 = vpop.permute.xlu0 %2275
    %2277 = vrot.lane.b32.xlu0 %v2202, 127
    %v2278 = vpop.permute.xlu0 %2277
    %2279 = vrot.lane.b32.xlu0 %v2203, 127
    %v2280 = vpop.permute.xlu0 %2279
    %2281 = vrot.lane.b32.xlu0 %v2204, 127
    %v2282 = vpop.permute.xlu0 %2281
    %2283 = vrot.lane.b32.xlu0 %v2205, 127
    %v2284 = vpop.permute.xlu0 %2283
    %2285 = vrot.lane.b32.xlu0 %v2206, 127
    %v2286 = vpop.permute.xlu0 %2285
    %2287 = vrot.lane.b32.xlu0 %v2207, 127
    %v2288 = vpop.permute.xlu0 %2287
    %2289 = vrot.lane.b32.xlu0 %v2208, 127
    %v2290 = vpop.permute.xlu0 %2289
    %2291 = vrot.lane.b32.xlu0 %v2209, 127
    %v2292 = vpop.permute.xlu0 %2291
    %2293 = vrot.lane.b32.xlu0 %v2210, 127
    %v2294 = vpop.permute.xlu0 %2293
    %2295 = vrot.lane.b32.xlu0 %v2211, 127
    %v2296 = vpop.permute.xlu0 %2295
    %2297 = vrot.lane.b32.xlu0 %v2212, 127
    %v2298 = vpop.permute.xlu0 %2297
    %2299 = vrot.lane.b32.xlu0 %v2213, 127
    %v2300 = vpop.permute.xlu0 %2299
    %2301 = vrot.lane.b32.xlu0 %v2214, 127
    %v2302 = vpop.permute.xlu0 %2301
    %2303 = vrot.lane.b32.xlu0 %v2215, 127
    %v2304 = vpop.permute.xlu0 %2303
    %2305 = vrot.lane.b32.xlu0 %v2216, 127
    %v2306 = vpop.permute.xlu0 %2305
    %2307 = vrot.lane.b32.xlu0 %v2217, 127
    %v2308 = vpop.permute.xlu0 %2307
    %2309 = vrot.lane.b32.xlu0 %v2218, 127
    %v2310 = vpop.permute.xlu0 %2309
    %2311 = vrot.lane.b32.xlu0 %v2219, 127
    %v2312 = vpop.permute.xlu0 %2311
    %2313 = vrot.lane.b32.xlu0 %v2220, 127
    %v2314 = vpop.permute.xlu0 %2313
    %2315 = vrot.lane.b32.xlu0 %v2221, 127
    %v2316 = vpop.permute.xlu0 %2315
    %2317 = vrot.lane.b32.xlu0 %v2222, 127
    %v2318 = vpop.permute.xlu0 %2317
    %2319 = vrot.lane.b32.xlu0 %v2223, 127
    %v2320 = vpop.permute.xlu0 %2319
    %2321 = vrot.lane.b32.xlu0 %v2224, 127
    %v2322 = vpop.permute.xlu0 %2321
    %2323 = vrot.lane.b32.xlu0 %v2225, 127
    %v2324 = vpop.permute.xlu0 %2323
    %2325 = vrot.lane.b32.xlu0 %v2226, 127
    %v2326 = vpop.permute.xlu0 %2325
    %2327 = vrot.lane.b32.xlu0 %v2227, 127
    %v2328 = vpop.permute.xlu0 %2327
    %2329 = vrot.lane.b32.xlu0 %v2228, 127
    %v2330 = vpop.permute.xlu0 %2329
    %2331 = vrot.lane.b32.xlu0 %v2229, 127
    %v2332 = vpop.permute.xlu0 %2331
    %2333 = vrot.lane.b32.xlu0 %v2230, 127
    %v2334 = vpop.permute.xlu0 %2333
    %2335 = vrot.lane.b32.xlu0 %v2231, 127
    %v2336 = vpop.permute.xlu0 %2335
    %v2372 = vmax.f32 %v2197, %v2268
    %v2373 = vmax.f32 %v2198, %v2270
    %v2374 = vmax.f32 %v2199, %v2272
    %v2375 = vmax.f32 %v2200, %v2274
    %v2376 = vmax.f32 %v2201, %v2276
    %v2377 = vmax.f32 %v2202, %v2278
    %v2378 = vmax.f32 %v2203, %v2280
    %v2379 = vmax.f32 %v2204, %v2282
    %v2380 = vmax.f32 %v2205, %v2284
    %v2381 = vmax.f32 %v2206, %v2286
    %v2382 = vmax.f32 %v2207, %v2288
    %v2383 = vmax.f32 %v2208, %v2290
    %v2384 = vmax.f32 %v2209, %v2292
    %v2385 = vmax.f32 %v2210, %v2294
    %v2386 = vmax.f32 %v2211, %v2296
    %v2387 = vmax.f32 %v2212, %v2298
    %v2388 = vmax.f32 %v2213, %v2300
    %v2389 = vmax.f32 %v2214, %v2302
    %v2390 = vmax.f32 %v2215, %v2304
    %v2391 = vmax.f32 %v2216, %v2306
    %v2392 = vmax.f32 %v2217, %v2308
    %v2393 = vmax.f32 %v2218, %v2310
    %v2394 = vmax.f32 %v2219, %v2312
    %v2395 = vmax.f32 %v2220, %v2314
    %v2396 = vmax.f32 %v2221, %v2316
    %v2397 = vmax.f32 %v2222, %v2318
    %v2398 = vmax.f32 %v2223, %v2320
    %v2399 = vmax.f32 %v2224, %v2322
    %v2400 = vmax.f32 %v2225, %v2324
    %v2401 = vmax.f32 %v2226, %v2326
    %v2402 = vmax.f32 %v2227, %v2328
    %v2403 = vmax.f32 %v2228, %v2330
    %v2404 = vmax.f32 %v2229, %v2332
    %v2405 = vmax.f32 %v2230, %v2334
    %v2406 = vmax.f32 %v2231, %v2336
    %v2440 = vrot.slane %v2372, 1
    %v2441 = vrot.slane %v2373, 1
    %v2442 = vsel %vm812, %v2440, %v2441
    %v2443 = vrot.slane %v2374, 1
    %v2444 = vsel %vm812, %v2441, %v2443
    %v2445 = vrot.slane %v2375, 1
    %v2446 = vsel %vm812, %v2443, %v2445
    %v2447 = vrot.slane %v2376, 1
    %v2448 = vsel %vm812, %v2445, %v2447
    %v2449 = vrot.slane %v2377, 1
    %v2450 = vsel %vm812, %v2447, %v2449
    %v2451 = vrot.slane %v2378, 1
    %v2452 = vsel %vm812, %v2449, %v2451
    %v2453 = vrot.slane %v2379, 1
    %v2454 = vsel %vm812, %v2451, %v2453
    %v2455 = vrot.slane %v2380, 1
    %v2456 = vsel %vm812, %v2453, %v2455
    %v2457 = vrot.slane %v2381, 1
    %v2458 = vsel %vm812, %v2455, %v2457
    %v2459 = vrot.slane %v2382, 1
    %v2460 = vsel %vm812, %v2457, %v2459
    %v2461 = vrot.slane %v2383, 1
    %v2462 = vsel %vm812, %v2459, %v2461
    %v2463 = vrot.slane %v2384, 1
    %v2464 = vsel %vm812, %v2461, %v2463
    %v2465 = vrot.slane %v2385, 1
    %v2466 = vsel %vm812, %v2463, %v2465
    %v2467 = vrot.slane %v2386, 1
    %v2468 = vsel %vm812, %v2465, %v2467
    %v2469 = vrot.slane %v2387, 1
    %v2470 = vsel %vm812, %v2467, %v2469
    %v2471 = vrot.slane %v2388, 1
    %v2472 = vsel %vm812, %v2469, %v2471
    %v2473 = vrot.slane %v2389, 1
    %v2474 = vsel %vm812, %v2471, %v2473
    %v2475 = vrot.slane %v2390, 1
    %v2476 = vsel %vm812, %v2473, %v2475
    %v2477 = vrot.slane %v2391, 1
    %v2478 = vsel %vm812, %v2475, %v2477
    %v2479 = vrot.slane %v2392, 1
    %v2480 = vsel %vm812, %v2477, %v2479
    %v2481 = vrot.slane %v2393, 1
    %v2482 = vsel %vm812, %v2479, %v2481
    %v2483 = vrot.slane %v2394, 1
    %v2484 = vsel %vm812, %v2481, %v2483
    %v2485 = vrot.slane %v2395, 1
    %v2486 = vsel %vm812, %v2483, %v2485
    %v2487 = vrot.slane %v2396, 1
    %v2488 = vsel %vm812, %v2485, %v2487
    %v2489 = vrot.slane %v2397, 1
    %v2490 = vsel %vm812, %v2487, %v2489
    %v2491 = vrot.slane %v2398, 1
    %v2492 = vsel %vm812, %v2489, %v2491
    %v2493 = vrot.slane %v2399, 1
    %v2494 = vsel %vm812, %v2491, %v2493
    %v2495 = vrot.slane %v2400, 1
    %v2496 = vsel %vm812, %v2493, %v2495
    %v2497 = vrot.slane %v2401, 1
    %v2498 = vsel %vm812, %v2495, %v2497
    %v2499 = vrot.slane %v2402, 1
    %v2500 = vsel %vm812, %v2497, %v2499
    %v2501 = vrot.slane %v2403, 1
    %v2502 = vsel %vm812, %v2499, %v2501
    %v2503 = vrot.slane %v2404, 1
    %v2504 = vsel %vm812, %v2501, %v2503
    %v2537 = vmax.f32 %v2372, %v2442
    %v2538 = vmax.f32 %v2373, %v2444
    %v2539 = vmax.f32 %v2374, %v2446
    %v2540 = vmax.f32 %v2375, %v2448
    %v2541 = vmax.f32 %v2376, %v2450
    %v2542 = vmax.f32 %v2377, %v2452
    %v2543 = vmax.f32 %v2378, %v2454
    %v2544 = vmax.f32 %v2379, %v2456
    %v2545 = vmax.f32 %v2380, %v2458
    %v2546 = vmax.f32 %v2381, %v2460
    %v2547 = vmax.f32 %v2382, %v2462
    %v2548 = vmax.f32 %v2383, %v2464
    %v2549 = vmax.f32 %v2384, %v2466
    %v2550 = vmax.f32 %v2385, %v2468
    %v2551 = vmax.f32 %v2386, %v2470
    %v2552 = vmax.f32 %v2387, %v2472
    %v2553 = vmax.f32 %v2388, %v2474
    %v2554 = vmax.f32 %v2389, %v2476
    %v2555 = vmax.f32 %v2390, %v2478
    %v2556 = vmax.f32 %v2391, %v2480
    %v2557 = vmax.f32 %v2392, %v2482
    %v2558 = vmax.f32 %v2393, %v2484
    %v2559 = vmax.f32 %v2394, %v2486
    %v2560 = vmax.f32 %v2395, %v2488
    %v2561 = vmax.f32 %v2396, %v2490
    %v2562 = vmax.f32 %v2397, %v2492
    %v2563 = vmax.f32 %v2398, %v2494
    %v2564 = vmax.f32 %v2399, %v2496
    %v2565 = vmax.f32 %v2400, %v2498
    %v2566 = vmax.f32 %v2401, %v2500
    %v2567 = vmax.f32 %v2402, %v2502
    %v2568 = vmax.f32 %v2403, %v2504
    %v2571 = vrot.slane %v2405, 1
    %v2572 = vsel %vm812, %v2503, %v2571
    %v2573 = vrot.slane %v2406, 1
    %v2574 = vsel %vm812, %v2571, %v2573
    %v2578 = vmax.f32 %v2404, %v2572
    %v2579 = vmax.f32 %v2405, %v2574
    %v2580 = vmax.f32 %v2406, %v2573
    %v2614 = vrot.slane %v2539, 1
    %v2615 = vrot.slane %v2540, 1
    %v2616 = vsel %vm812, %v2614, %v2615
    %v2617 = vrot.slane %v2541, 1
    %v2618 = vsel %vm812, %v2615, %v2617
    %v2619 = vrot.slane %v2542, 1
    %v2620 = vsel %vm812, %v2617, %v2619
    %v2621 = vrot.slane %v2543, 1
    %v2622 = vsel %vm812, %v2619, %v2621
    %v2623 = vrot.slane %v2544, 1
    %v2624 = vsel %vm812, %v2621, %v2623
    %v2625 = vrot.slane %v2545, 1
    %v2626 = vsel %vm812, %v2623, %v2625
    %v2627 = vrot.slane %v2546, 1
    %v2628 = vsel %vm812, %v2625, %v2627
    %v2629 = vrot.slane %v2547, 1
    %v2630 = vsel %vm812, %v2627, %v2629
    %v2631 = vrot.slane %v2548, 1
    %v2632 = vsel %vm812, %v2629, %v2631
    %v2633 = vrot.slane %v2549, 1
    %v2634 = vsel %vm812, %v2631, %v2633
    %v2635 = vrot.slane %v2550, 1
    %v2636 = vsel %vm812, %v2633, %v2635
    %v2637 = vrot.slane %v2551, 1
    %v2638 = vsel %vm812, %v2635, %v2637
    %v2639 = vrot.slane %v2552, 1
    %v2640 = vsel %vm812, %v2637, %v2639
    %v2641 = vrot.slane %v2553, 1
    %v2642 = vsel %vm812, %v2639, %v2641
    %v2643 = vrot.slane %v2554, 1
    %v2644 = vsel %vm812, %v2641, %v2643
    %v2645 = vrot.slane %v2555, 1
    %v2646 = vsel %vm812, %v2643, %v2645
    %v2647 = vrot.slane %v2556, 1
    %v2648 = vsel %vm812, %v2645, %v2647
    %v2649 = vrot.slane %v2557, 1
    %v2650 = vsel %vm812, %v2647, %v2649
    %v2651 = vrot.slane %v2558, 1
    %v2652 = vsel %vm812, %v2649, %v2651
    %v2653 = vrot.slane %v2559, 1
    %v2654 = vsel %vm812, %v2651, %v2653
    %v2655 = vrot.slane %v2560, 1
    %v2656 = vsel %vm812, %v2653, %v2655
    %v2657 = vrot.slane %v2561, 1
    %v2658 = vsel %vm812, %v2655, %v2657
    %v2659 = vrot.slane %v2562, 1
    %v2660 = vsel %vm812, %v2657, %v2659
    %v2661 = vrot.slane %v2563, 1
    %v2662 = vsel %vm812, %v2659, %v2661
    %v2663 = vrot.slane %v2564, 1
    %v2664 = vsel %vm812, %v2661, %v2663
    %v2665 = vrot.slane %v2565, 1
    %v2666 = vsel %vm812, %v2663, %v2665
    %v2667 = vrot.slane %v2566, 1
    %v2668 = vsel %vm812, %v2665, %v2667
    %v2669 = vrot.slane %v2567, 1
    %v2670 = vsel %vm812, %v2667, %v2669
    %v2671 = vrot.slane %v2568, 1
    %v2672 = vsel %vm812, %v2669, %v2671
    %v2673 = vrot.slane %v2578, 1
    %v2674 = vsel %vm812, %v2671, %v2673
    %v2675 = vrot.slane %v2579, 1
    %v2676 = vsel %vm812, %v2673, %v2675
    %v2677 = vrot.slane %v2580, 1
    %v2678 = vsel %vm812, %v2675, %v2677
    %v2711 = vmax.f32 %v2537, %v2616
    %v2712 = vmax.f32 %v2538, %v2618
    %v2713 = vmax.f32 %v2539, %v2620
    %v2714 = vmax.f32 %v2540, %v2622
    %v2715 = vmax.f32 %v2541, %v2624
    %v2716 = vmax.f32 %v2542, %v2626
    %v2717 = vmax.f32 %v2543, %v2628
    %v2718 = vmax.f32 %v2544, %v2630
    %v2719 = vmax.f32 %v2545, %v2632
    %v2720 = vmax.f32 %v2546, %v2634
    %v2721 = vmax.f32 %v2547, %v2636
    %v2722 = vmax.f32 %v2548, %v2638
    %v2723 = vmax.f32 %v2549, %v2640
    %v2724 = vmax.f32 %v2550, %v2642
    %v2725 = vmax.f32 %v2551, %v2644
    %v2726 = vmax.f32 %v2552, %v2646
    %v2727 = vmax.f32 %v2553, %v2648
    %v2728 = vmax.f32 %v2554, %v2650
    %v2729 = vmax.f32 %v2555, %v2652
    %v2730 = vmax.f32 %v2556, %v2654
    %v2731 = vmax.f32 %v2557, %v2656
    %v2732 = vmax.f32 %v2558, %v2658
    %v2733 = vmax.f32 %v2559, %v2660
    %v2734 = vmax.f32 %v2560, %v2662
    %v2735 = vmax.f32 %v2561, %v2664
    %v2736 = vmax.f32 %v2562, %v2666
    %v2737 = vmax.f32 %v2563, %v2668
    %v2738 = vmax.f32 %v2564, %v2670
    %v2739 = vmax.f32 %v2565, %v2672
    %v2740 = vmax.f32 %v2566, %v2674
    %v2741 = vmax.f32 %v2567, %v2676
    %v2742 = vmax.f32 %v2568, %v2678
    %2744 = vset.pattern.permute.xlu0 0
    %2745 = vperm.xlu0 %2744, %v2711
    %v2746 = vpop.permute.xlu0 %2745
    %2749 = vset.pattern.permute.xlu0 0
    %2750 = vperm.xlu0 %2749, %v2712
    %v2751 = vpop.permute.xlu0 %2750
    %2754 = vset.pattern.permute.xlu0 0
    %2755 = vperm.xlu0 %2754, %v2713
    %v2756 = vpop.permute.xlu0 %2755
    %2759 = vset.pattern.permute.xlu0 0
    %2760 = vperm.xlu0 %2759, %v2714
    %v2761 = vpop.permute.xlu0 %2760
    %2764 = vset.pattern.permute.xlu0 0
    %2765 = vperm.xlu0 %2764, %v2715
    %v2766 = vpop.permute.xlu0 %2765
    %2769 = vset.pattern.permute.xlu0 0
    %2770 = vperm.xlu0 %2769, %v2716
    %v2771 = vpop.permute.xlu0 %2770
    %2774 = vset.pattern.permute.xlu0 0
    %2775 = vperm.xlu0 %2774, %v2717
    %v2776 = vpop.permute.xlu0 %2775
    %2779 = vset.pattern.permute.xlu0 0
    %2780 = vperm.xlu0 %2779, %v2718
    %v2781 = vpop.permute.xlu0 %2780
    %2784 = vset.pattern.permute.xlu0 0
    %2785 = vperm.xlu0 %2784, %v2719
    %v2786 = vpop.permute.xlu0 %2785
    %2789 = vset.pattern.permute.xlu0 0
    %2790 = vperm.xlu0 %2789, %v2720
    %v2791 = vpop.permute.xlu0 %2790
    %2794 = vset.pattern.permute.xlu0 0
    %2795 = vperm.xlu0 %2794, %v2721
    %v2796 = vpop.permute.xlu0 %2795
    %2799 = vset.pattern.permute.xlu0 0
    %2800 = vperm.xlu0 %2799, %v2722
    %v2801 = vpop.permute.xlu0 %2800
    %2804 = vset.pattern.permute.xlu0 0
    %2805 = vperm.xlu0 %2804, %v2723
    %v2806 = vpop.permute.xlu0 %2805
    %2809 = vset.pattern.permute.xlu0 0
    %2810 = vperm.xlu0 %2809, %v2724
    %v2811 = vpop.permute.xlu0 %2810
    %2814 = vset.pattern.permute.xlu0 0
    %2815 = vperm.xlu0 %2814, %v2725
    %v2816 = vpop.permute.xlu0 %2815
    %2819 = vset.pattern.permute.xlu0 0
    %2820 = vperm.xlu0 %2819, %v2726
    %v2821 = vpop.permute.xlu0 %2820
    %2824 = vset.pattern.permute.xlu0 0
    %2825 = vperm.xlu0 %2824, %v2727
    %v2826 = vpop.permute.xlu0 %2825
    %2829 = vset.pattern.permute.xlu0 0
    %2830 = vperm.xlu0 %2829, %v2728
    %v2831 = vpop.permute.xlu0 %2830
    %2834 = vset.pattern.permute.xlu0 0
    %2835 = vperm.xlu0 %2834, %v2729
    %v2836 = vpop.permute.xlu0 %2835
    %2839 = vset.pattern.permute.xlu0 0
    %2840 = vperm.xlu0 %2839, %v2730
    %v2841 = vpop.permute.xlu0 %2840
    %2844 = vset.pattern.permute.xlu0 0
    %2845 = vperm.xlu0 %2844, %v2731
    %v2846 = vpop.permute.xlu0 %2845
    %2849 = vset.pattern.permute.xlu0 0
    %2850 = vperm.xlu0 %2849, %v2732
    %v2851 = vpop.permute.xlu0 %2850
    %2854 = vset.pattern.permute.xlu0 0
    %2855 = vperm.xlu0 %2854, %v2733
    %v2856 = vpop.permute.xlu0 %2855
    %2859 = vset.pattern.permute.xlu0 0
    %2860 = vperm.xlu0 %2859, %v2734
    %v2861 = vpop.permute.xlu0 %2860
    %2864 = vset.pattern.permute.xlu0 0
    %2865 = vperm.xlu0 %2864, %v2735
    %v2866 = vpop.permute.xlu0 %2865
    %2869 = vset.pattern.permute.xlu0 0
    %2870 = vperm.xlu0 %2869, %v2736
    %v2871 = vpop.permute.xlu0 %2870
    %2874 = vset.pattern.permute.xlu0 0
    %2875 = vperm.xlu0 %2874, %v2737
    %v2876 = vpop.permute.xlu0 %2875
    %2879 = vset.pattern.permute.xlu0 0
    %2880 = vperm.xlu0 %2879, %v2738
    %v2881 = vpop.permute.xlu0 %2880
    %2884 = vset.pattern.permute.xlu0 0
    %2885 = vperm.xlu0 %2884, %v2739
    %v2886 = vpop.permute.xlu0 %2885
    %2889 = vset.pattern.permute.xlu0 0
    %2890 = vperm.xlu0 %2889, %v2740
    %v2891 = vpop.permute.xlu0 %2890
    %2894 = vset.pattern.permute.xlu0 0
    %2895 = vperm.xlu0 %2894, %v2741
    %v2896 = vpop.permute.xlu0 %2895
    %2899 = vset.pattern.permute.xlu0 0
    %2900 = vperm.xlu0 %2899, %v2742
    %v2901 = vpop.permute.xlu0 %2900
    %v2903 = vmul.f32 %v1116, %v2746
    %v2904 = vmul.f32 %v1117, %v2751
    %v2905 = vmul.f32 %v1118, %v2756
    %v2906 = vmul.f32 %v1119, %v2761
    %v2907 = vmul.f32 %v1120, %v2766
    %v2908 = vmul.f32 %v1121, %v2771
    %v2909 = vmul.f32 %v1122, %v2776
    %v2910 = vmul.f32 %v1123, %v2781
    %v2911 = vmul.f32 %v1124, %v2786
    %v2912 = vmul.f32 %v1125, %v2791
    %v2913 = vmul.f32 %v1126, %v2796
    %v2914 = vmul.f32 %v1127, %v2801
    %v2915 = vmul.f32 %v1128, %v2806
    %v2916 = vmul.f32 %v1129, %v2811
    %v2917 = vmul.f32 %v1130, %v2816
    %v2918 = vmul.f32 %v1131, %v2821
    %v2919 = vmul.f32 %v1132, %v2826
    %v2920 = vmul.f32 %v1133, %v2831
    %v2921 = vmul.f32 %v1134, %v2836
    %v2922 = vmul.f32 %v1135, %v2841
    %v2923 = vmul.f32 %v1136, %v2846
    %v2924 = vmul.f32 %v1137, %v2851
    %v2925 = vmul.f32 %v1138, %v2856
    %v2926 = vmul.f32 %v1139, %v2861
    %v2927 = vmul.f32 %v1140, %v2866
    %v2928 = vmul.f32 %v1141, %v2871
    %v2929 = vmul.f32 %v1142, %v2876
    %v2930 = vmul.f32 %v1143, %v2881
    %v2931 = vmul.f32 %v1144, %v2886
    %v2932 = vmul.f32 %v1145, %v2891
    %v2933 = vmul.f32 %v1146, %v2896
    %v2934 = vmul.f32 %v1147, %v2901
    %v2935 = vsel %vm1340, %v2903, 0.0
    %v2936 = vsel %vm1340, %v2904, 0.0
    %v2937 = vadd.f32 %v2935, %v2936
    %v2938 = vsel %vm1340, %v2905, 0.0
    %v2939 = vadd.f32 %v2937, %v2938
    %v2940 = vsel %vm1340, %v2906, 0.0
    %v2941 = vadd.f32 %v2939, %v2940
    %v2942 = vsel %vm1340, %v2907, 0.0
    %v2943 = vadd.f32 %v2941, %v2942
    %v2944 = vsel %vm1340, %v2908, 0.0
    %v2945 = vadd.f32 %v2943, %v2944
    %v2946 = vsel %vm1340, %v2909, 0.0
    %v2947 = vadd.f32 %v2945, %v2946
    %v2948 = vsel %vm1340, %v2910, 0.0
    %v2949 = vadd.f32 %v2947, %v2948
    %v2950 = vsel %vm1340, %v2911, 0.0
    %v2951 = vadd.f32 %v2949, %v2950
    %v2952 = vsel %vm1340, %v2912, 0.0
    %v2953 = vadd.f32 %v2951, %v2952
    %v2954 = vsel %vm1340, %v2913, 0.0
    %v2955 = vadd.f32 %v2953, %v2954
    %v2956 = vsel %vm1340, %v2914, 0.0
    %v2957 = vadd.f32 %v2955, %v2956
    %v2958 = vsel %vm1340, %v2915, 0.0
    %v2959 = vadd.f32 %v2957, %v2958
    %v2960 = vsel %vm1340, %v2916, 0.0
    %v2961 = vadd.f32 %v2959, %v2960
    %v2962 = vsel %vm1340, %v2917, 0.0
    %v2963 = vadd.f32 %v2961, %v2962
    %v2964 = vsel %vm1340, %v2918, 0.0
    %v2965 = vadd.f32 %v2963, %v2964
    %v2966 = vsel %vm1340, %v2919, 0.0
    %v2967 = vadd.f32 %v2965, %v2966
    %v2968 = vsel %vm1340, %v2920, 0.0
    %v2969 = vadd.f32 %v2967, %v2968
    %v2970 = vsel %vm1340, %v2921, 0.0
    %v2971 = vadd.f32 %v2969, %v2970
    %v2972 = vsel %vm1340, %v2922, 0.0
    %v2973 = vadd.f32 %v2971, %v2972
    %v2974 = vsel %vm1340, %v2923, 0.0
    %v2975 = vadd.f32 %v2973, %v2974
    %v2976 = vsel %vm1340, %v2924, 0.0
    %v2977 = vadd.f32 %v2975, %v2976
    %v2978 = vsel %vm1340, %v2925, 0.0
    %v2979 = vadd.f32 %v2977, %v2978
    %v2980 = vsel %vm1340, %v2926, 0.0
    %v2981 = vadd.f32 %v2979, %v2980
    %v2982 = vsel %vm1340, %v2927, 0.0
    %v2983 = vadd.f32 %v2981, %v2982
    %v2984 = vsel %vm1340, %v2928, 0.0
    %v2985 = vadd.f32 %v2983, %v2984
    %v2986 = vsel %vm1340, %v2929, 0.0
    %v2987 = vadd.f32 %v2985, %v2986
    %v2988 = vsel %vm1340, %v2930, 0.0
    %v2989 = vadd.f32 %v2987, %v2988
    %v2990 = vsel %vm1340, %v2931, 0.0
    %v2991 = vadd.f32 %v2989, %v2990
    %v2992 = vsel %vm1340, %v2932, 0.0
    %v2993 = vadd.f32 %v2991, %v2992
    %v2994 = vsel %vm1340, %v2933, 0.0
    %v2995 = vadd.f32 %v2993, %v2994
    %v2996 = vsel %vm1340, %v2934, 0.0
    %v2997 = vadd.f32 %v2995, %v2996
    %v2998 = vrot.slane %v2997, 4
    %v2999 = vadd.f32 %v2997, %v2998
    %v3000 = vrot.slane %v2999, 2
    %v3001 = vadd.f32 %v2999, %v3000
    %v3002 = vrot.slane %v3001, 1
    %v3003 = vadd.f32 %v3001, %v3002
    %v3004 = vadd.f32 %v603, %v3003
    %3005 = vset.pattern.permute.xlu0 2
    %3006 = vperm.xlu0 %3005, %v2711
    %v3007 = vpop.permute.xlu0 %3006
    %3009 = vset.pattern.permute.xlu0 2
    %3010 = vperm.xlu0 %3009, %v2712
    %v3011 = vpop.permute.xlu0 %3010
    %3013 = vset.pattern.permute.xlu0 2
    %3014 = vperm.xlu0 %3013, %v2713
    %v3015 = vpop.permute.xlu0 %3014
    %3017 = vset.pattern.permute.xlu0 2
    %3018 = vperm.xlu0 %3017, %v2714
    %v3019 = vpop.permute.xlu0 %3018
    %3021 = vset.pattern.permute.xlu0 2
    %3022 = vperm.xlu0 %3021, %v2715
    %v3023 = vpop.permute.xlu0 %3022
    %3025 = vset.pattern.permute.xlu0 2
    %3026 = vperm.xlu0 %3025, %v2716
    %v3027 = vpop.permute.xlu0 %3026
    %3029 = vset.pattern.permute.xlu0 2
    %3030 = vperm.xlu0 %3029, %v2717
    %v3031 = vpop.permute.xlu0 %3030
    %3033 = vset.pattern.permute.xlu0 2
    %3034 = vperm.xlu0 %3033, %v2718
    %v3035 = vpop.permute.xlu0 %3034
    %3037 = vset.pattern.permute.xlu0 2
    %3038 = vperm.xlu0 %3037, %v2719
    %v3039 = vpop.permute.xlu0 %3038
    %3041 = vset.pattern.permute.xlu0 2
    %3042 = vperm.xlu0 %3041, %v2720
    %v3043 = vpop.permute.xlu0 %3042
    %3045 = vset.pattern.permute.xlu0 2
    %3046 = vperm.xlu0 %3045, %v2721
    %v3047 = vpop.permute.xlu0 %3046
    %3049 = vset.pattern.permute.xlu0 2
    %3050 = vperm.xlu0 %3049, %v2722
    %v3051 = vpop.permute.xlu0 %3050
    %3053 = vset.pattern.permute.xlu0 2
    %3054 = vperm.xlu0 %3053, %v2723
    %v3055 = vpop.permute.xlu0 %3054
    %3057 = vset.pattern.permute.xlu0 2
    %3058 = vperm.xlu0 %3057, %v2724
    %v3059 = vpop.permute.xlu0 %3058
    %3061 = vset.pattern.permute.xlu0 2
    %3062 = vperm.xlu0 %3061, %v2725
    %v3063 = vpop.permute.xlu0 %3062
    %3065 = vset.pattern.permute.xlu0 2
    %3066 = vperm.xlu0 %3065, %v2726
    %v3067 = vpop.permute.xlu0 %3066
    %3069 = vset.pattern.permute.xlu0 2
    %3070 = vperm.xlu0 %3069, %v2727
    %v3071 = vpop.permute.xlu0 %3070
    %3073 = vset.pattern.permute.xlu0 2
    %3074 = vperm.xlu0 %3073, %v2728
    %v3075 = vpop.permute.xlu0 %3074
    %3077 = vset.pattern.permute.xlu0 2
    %3078 = vperm.xlu0 %3077, %v2729
    %v3079 = vpop.permute.xlu0 %3078
    %3081 = vset.pattern.permute.xlu0 2
    %3082 = vperm.xlu0 %3081, %v2730
    %v3083 = vpop.permute.xlu0 %3082
    %3085 = vset.pattern.permute.xlu0 2
    %3086 = vperm.xlu0 %3085, %v2731
    %v3087 = vpop.permute.xlu0 %3086
    %3089 = vset.pattern.permute.xlu0 2
    %3090 = vperm.xlu0 %3089, %v2732
    %v3091 = vpop.permute.xlu0 %3090
    %3093 = vset.pattern.permute.xlu0 2
    %3094 = vperm.xlu0 %3093, %v2733
    %v3095 = vpop.permute.xlu0 %3094
    %3097 = vset.pattern.permute.xlu0 2
    %3098 = vperm.xlu0 %3097, %v2734
    %v3099 = vpop.permute.xlu0 %3098
    %3101 = vset.pattern.permute.xlu0 2
    %3102 = vperm.xlu0 %3101, %v2735
    %v3103 = vpop.permute.xlu0 %3102
    %3105 = vset.pattern.permute.xlu0 2
    %3106 = vperm.xlu0 %3105, %v2736
    %v3107 = vpop.permute.xlu0 %3106
    %3109 = vset.pattern.permute.xlu0 2
    %3110 = vperm.xlu0 %3109, %v2737
    %v3111 = vpop.permute.xlu0 %3110
    %3113 = vset.pattern.permute.xlu0 2
    %3114 = vperm.xlu0 %3113, %v2738
    %v3115 = vpop.permute.xlu0 %3114
    %3117 = vset.pattern.permute.xlu0 2
    %3118 = vperm.xlu0 %3117, %v2739
    %v3119 = vpop.permute.xlu0 %3118
    %3121 = vset.pattern.permute.xlu0 2
    %3122 = vperm.xlu0 %3121, %v2740
    %v3123 = vpop.permute.xlu0 %3122
    %3125 = vset.pattern.permute.xlu0 2
    %3126 = vperm.xlu0 %3125, %v2741
    %v3127 = vpop.permute.xlu0 %3126
    %3129 = vset.pattern.permute.xlu0 2
    %3130 = vperm.xlu0 %3129, %v2742
    %v3131 = vpop.permute.xlu0 %3130
    %v3133 = vmul.f32 %v1412, %v3007
    %v3134 = vmul.f32 %v1413, %v3011
    %v3135 = vmul.f32 %v1414, %v3015
    %v3136 = vmul.f32 %v1415, %v3019
    %v3137 = vmul.f32 %v1416, %v3023
    %v3138 = vmul.f32 %v1417, %v3027
    %v3139 = vmul.f32 %v1418, %v3031
    %v3140 = vmul.f32 %v1419, %v3035
    %v3141 = vmul.f32 %v1420, %v3039
    %v3142 = vmul.f32 %v1421, %v3043
    %v3143 = vmul.f32 %v1422, %v3047
    %v3144 = vmul.f32 %v1423, %v3051
    %v3145 = vmul.f32 %v1424, %v3055
    %v3146 = vmul.f32 %v1425, %v3059
    %v3147 = vmul.f32 %v1426, %v3063
    %v3148 = vmul.f32 %v1427, %v3067
    %v3149 = vmul.f32 %v1428, %v3071
    %v3150 = vmul.f32 %v1429, %v3075
    %v3151 = vmul.f32 %v1430, %v3079
    %v3152 = vmul.f32 %v1431, %v3083
    %v3153 = vmul.f32 %v1432, %v3087
    %v3154 = vmul.f32 %v1433, %v3091
    %v3155 = vmul.f32 %v1434, %v3095
    %v3156 = vmul.f32 %v1435, %v3099
    %v3157 = vmul.f32 %v1436, %v3103
    %v3158 = vmul.f32 %v1437, %v3107
    %v3159 = vmul.f32 %v1438, %v3111
    %v3160 = vmul.f32 %v1439, %v3115
    %v3161 = vmul.f32 %v1440, %v3119
    %v3162 = vmul.f32 %v1441, %v3123
    %v3163 = vmul.f32 %v1442, %v3127
    %v3164 = vmul.f32 %v1443, %v3131
    %v3165 = vsel %vm1340, %v3133, 0.0
    %v3166 = vsel %vm1340, %v3134, 0.0
    %v3167 = vadd.f32 %v3165, %v3166
    %v3168 = vsel %vm1340, %v3135, 0.0
    %v3169 = vadd.f32 %v3167, %v3168
    %v3170 = vsel %vm1340, %v3136, 0.0
    %v3171 = vadd.f32 %v3169, %v3170
    %v3172 = vsel %vm1340, %v3137, 0.0
    %v3173 = vadd.f32 %v3171, %v3172
    %v3174 = vsel %vm1340, %v3138, 0.0
    %v3175 = vadd.f32 %v3173, %v3174
    %v3176 = vsel %vm1340, %v3139, 0.0
    %v3177 = vadd.f32 %v3175, %v3176
    %v3178 = vsel %vm1340, %v3140, 0.0
    %v3179 = vadd.f32 %v3177, %v3178
    %v3180 = vsel %vm1340, %v3141, 0.0
    %v3181 = vadd.f32 %v3179, %v3180
    %v3182 = vsel %vm1340, %v3142, 0.0
    %v3183 = vadd.f32 %v3181, %v3182
    %v3184 = vsel %vm1340, %v3143, 0.0
    %v3185 = vadd.f32 %v3183, %v3184
    %v3186 = vsel %vm1340, %v3144, 0.0
    %v3187 = vadd.f32 %v3185, %v3186
    %v3188 = vsel %vm1340, %v3145, 0.0
    %v3189 = vadd.f32 %v3187, %v3188
    %v3190 = vsel %vm1340, %v3146, 0.0
    %v3191 = vadd.f32 %v3189, %v3190
    %v3192 = vsel %vm1340, %v3147, 0.0
    %v3193 = vadd.f32 %v3191, %v3192
    %v3194 = vsel %vm1340, %v3148, 0.0
    %v3195 = vadd.f32 %v3193, %v3194
    %v3196 = vsel %vm1340, %v3149, 0.0
    %v3197 = vadd.f32 %v3195, %v3196
    %v3198 = vsel %vm1340, %v3150, 0.0
    %v3199 = vadd.f32 %v3197, %v3198
    %v3200 = vsel %vm1340, %v3151, 0.0
    %v3201 = vadd.f32 %v3199, %v3200
    %v3202 = vsel %vm1340, %v3152, 0.0
    %v3203 = vadd.f32 %v3201, %v3202
    %v3204 = vsel %vm1340, %v3153, 0.0
    %v3205 = vadd.f32 %v3203, %v3204
    %v3206 = vsel %vm1340, %v3154, 0.0
    %v3207 = vadd.f32 %v3205, %v3206
    %v3208 = vsel %vm1340, %v3155, 0.0
    %v3209 = vadd.f32 %v3207, %v3208
    %v3210 = vsel %vm1340, %v3156, 0.0
    %v3211 = vadd.f32 %v3209, %v3210
    %v3212 = vsel %vm1340, %v3157, 0.0
    %v3213 = vadd.f32 %v3211, %v3212
    %v3214 = vsel %vm1340, %v3158, 0.0
    %v3215 = vadd.f32 %v3213, %v3214
    %v3216 = vsel %vm1340, %v3159, 0.0
    %v3217 = vadd.f32 %v3215, %v3216
    %v3218 = vsel %vm1340, %v3160, 0.0
    %v3219 = vadd.f32 %v3217, %v3218
    %v3220 = vsel %vm1340, %v3161, 0.0
    %v3221 = vadd.f32 %v3219, %v3220
    %v3222 = vsel %vm1340, %v3162, 0.0
    %v3223 = vadd.f32 %v3221, %v3222
    %v3224 = vsel %vm1340, %v3163, 0.0
    %v3225 = vadd.f32 %v3223, %v3224
    %v3226 = vsel %vm1340, %v3164, 0.0
    %v3227 = vadd.f32 %v3225, %v3226
    %v3228 = vrot.slane %v3227, 4
    %v3229 = vadd.f32 %v3227, %v3228
    %v3230 = vrot.slane %v3229, 2
    %v3231 = vadd.f32 %v3229, %v3230
    %v3232 = vrot.slane %v3231, 1
    %v3233 = vadd.f32 %v3231, %v3232
    %v3234 = vadd.f32 %v3004, %v3233
    %v3235 = vmax.f32 %v3234, 0.0
    %v3237 = vsel %vm1340, %v3235, 0
    %3239 = vmatpush.msra.mxu0 0.0
    %3240 = vmatpush.msra.mxu0 0.0
    %3241 = vmatpush.msra.mxu0 0.0
    %3242 = vmatpush.msra.mxu0 0.0
    %3243 = vmatpush.msra.mxu0 0.0
    %3244 = vmatpush.msra.mxu0 0.0
    %3245 = vmatpush.msra.mxu0 0.0
    %3246 = vmatpush.msra.mxu0 0.0
    %3247 = vmatpush.msra.mxu0 %v1682
    %3248 = vmatpush.msra.mxu0 %v1681
    %3249 = vmatpush.msra.mxu0 %v1680
    %3250 = vmatpush.msra.mxu0 %v1679
    %3251 = vmatpush.msra.mxu0 %v1678
    %3252 = vmatpush.msra.mxu0 %v1677
    %3253 = vmatpush.msra.mxu0 %v1676
    %3254 = vmatpush.msra.mxu0 %v1675
    %3255 = vmatmul.f32.gmra.mxu0 %v3237
    %v3256 = vpop.f32.mrf.mxu0
    %v3257 = vadd.f32 %v1683, %v3256
    %3258 = vdwg.mxu0
    %v3260 = vrot.slane %v3257, 7
    %vm3262 = vcmask 1040384
    %v3263 = vsel %vm3262, %v1705, %v3260
    %vm3264 = vcmask 25600
    %3265 = vst.msk [vmem:[#allocation2] sm:$0x3] %vm3264, %v3263
    // Predicated region
    $region30: #{dqn_forward.3} parent=1 // pred_check
      _
    $region31: #{dqn_forward.3} parent=1 // pred_check_branch
      %3267 = sbr.rel (0) target = $region33
    $region32: #{dqn_forward.3} parent=1 // pred_region
      %3269 = vsyncadd [#allocation3], 0
      %s3271 = sshll.u32 [#allocation2], 4
      %s3272 = int_to_ptr.vmem [resolvable:$true] %s3271
      %s3273 = sshll.u32 %s7, 4
      %s3274 = int_to_ptr.hbm [resolvable:$true] %s3273
      %3276 = dma.vmem_to_hbm [thread:$0]  %s3272, 32, %s3274, [#allocation3]
    $region33: #{dqn_forward.3} parent=1 // pred_fallthru
      _
    // Predicated region
    $region34: #{dqn_forward.3} parent=1 // pred_check
      _
    $region35: #{dqn_forward.3} parent=1 // pred_check_branch
      %3278 = sbr.rel (0) target = $region37
    $region36: #{dqn_forward.3} parent=1 // pred_region
      %3280 = dma.done [#allocation3], 32
    $region37: #{dqn_forward.3} parent=1 // pred_fallthru
      _
    %3281 = vsyncpa [#allocation3], 1

</llo_original>
